<compile_context>
chip_gen: v7x
topology: tpu7x:2x2x1
jax: 0.10.0
libtpu: 0.0.40
codegen_flags: <defaults>
</compile_context>

<pallas_src>
import numpy as np

import jax
import jax.numpy as jnp
from jax import lax
from jax.experimental import pallas as pl
from jax.experimental.pallas import tpu as pltpu

H = 32        # hidden size == embedding dim
V = 128       # vocab size
T = 8         # encoder input sequence length
MAX_LEN = 8   # greedy decode steps (max_length)
SOS = 1       # SOS_token


# ----------------------------- kernel helpers ---------------------------------

def _gru_step(gi, h, wh, bh):
    """PyTorch GRU cell with the input-side gates `gi` precomputed.

    gi: [1, 3H] = x @ Wi + bi ;  h: [1, H] ;  wh: [H, 3H] ;  bh: [1, 3H].
    Gate order r, z, n.
    """
    gh = jnp.dot(h, wh, preferred_element_type=jnp.float32) + bh
    r = jax.nn.sigmoid(gi[:, 0:H] + gh[:, 0:H])
    z = jax.nn.sigmoid(gi[:, H:2 * H] + gh[:, H:2 * H])
    n = jnp.tanh(gi[:, 2 * H:3 * H] + r * gh[:, 2 * H:3 * H])
    return (1.0 - z) * n + z * h


# ------------------------- fused encoder + decode kernel ------------------------

def _greedy_search_kernel(seq_ref, len_ref, emb_ref,
                          wi_f, wh_f, bi_f, bh_f,
                          wi_b, wh_b, bi_b, bh_b,
                          wi_d, wh_d, bi_d, bh_d,
                          concat_w, concat_b, out_w, out_b,
                          tokens_ref, scores_ref,
                          emb_seq, gi_f, gi_b, enc_fwd, enc_bwd,
                          h_scratch, tok_scratch):
    L = len_ref[0]

    # ------------------------------- encoder -----------------------------------
    # Gather the embeddings of the whole input sequence once.
    for t in range(T):
        emb_seq[pl.ds(t, 1), :] = emb_ref[pl.ds(seq_ref[t], 1), :]

    # Input-side gate pre-activations for both directions: one batched matmul each.
    gi_f[...] = (jnp.dot(emb_seq[...], wi_f[...], preferred_element_type=jnp.float32)
                 + bi_f[...])
    gi_b[...] = (jnp.dot(emb_seq[...], wi_b[...], preferred_element_type=jnp.float32)
                 + bi_b[...])

    enc_fwd[...] = jnp.zeros_like(enc_fwd)
    enc_bwd[...] = jnp.zeros_like(enc_bwd)

    # Backward direction first, so h_scratch ends holding the FORWARD final hidden,
    # which seeds the decoder (encoder_hidden[:n_layers]).
    wh_b_v, bh_b_v = wh_b[...], bh_b[...]
    h_scratch[...] = jnp.zeros_like(h_scratch)
    for i in range(T):
        @pl.when(i < L)
        def _():
            t = L - 1 - i
            h_new = _gru_step(gi_b[pl.ds(t, 1), :], h_scratch[...], wh_b_v, bh_b_v)
            h_scratch[...] = h_new
            enc_bwd[pl.ds(t, 1), :] = h_new

    wh_f_v, bh_f_v = wh_f[...], bh_f[...]
    h_scratch[...] = jnp.zeros_like(h_scratch)
    for t in range(T):
        @pl.when(t < L)
        def _():
            h_new = _gru_step(gi_f[pl.ds(t, 1), :], h_scratch[...], wh_f_v, bh_f_v)
            h_scratch[...] = h_new
            enc_fwd[pl.ds(t, 1), :] = h_new

    # Sum of the two directions (tutorial encoder) and its transpose, kept on-chip.
    enc = enc_fwd[...] + enc_bwd[...]        # [T, H]
    enc_t = enc.T                            # [H, T]  (one-time transpose)

    # ----------------------------- greedy decode --------------------------------
    wi_d_v, wh_d_v = wi_d[...], wh_d[...]
    bi_d_v, bh_d_v = bi_d[...], bh_d[...]
    w_cat_h = concat_w[0:H, :]               # half applied to rnn_output
    w_cat_c = concat_w[H:2 * H, :]           # half applied to context
    b_cat = concat_b[...]
    out_w_v, out_b_v = out_w[...], out_b[...]

    mask = lax.broadcasted_iota(jnp.int32, (1, T), 1) < L
    vocab_iota = lax.broadcasted_iota(jnp.int32, (1, V), 1)
    neg_big = jnp.float32(-1e30)

    tok_scratch[0] = SOS

    def step(t, carry):
        tok = tok_scratch[0]
        x = emb_ref[pl.ds(tok, 1), :]                                     # [1, H]
        gi = jnp.dot(x, wi_d_v, preferred_element_type=jnp.float32) + bi_d_v
        h_new = _gru_step(gi, h_scratch[...], wh_d_v, bh_d_v)
        h_scratch[...] = h_new

        # Luong "dot" attention.
        att = jnp.dot(h_new, enc_t, preferred_element_type=jnp.float32)   # [1, T]
        att = jnp.where(mask, att, neg_big)
        attn = jax.nn.softmax(att, axis=1)
        context = jnp.dot(attn, enc, preferred_element_type=jnp.float32)  # [1, H]

        concat_out = jnp.tanh(
            jnp.dot(h_new, w_cat_h, preferred_element_type=jnp.float32)
            + jnp.dot(context, w_cat_c, preferred_element_type=jnp.float32)
            + b_cat)
        logits = (jnp.dot(concat_out, out_w_v, preferred_element_type=jnp.float32)
                  + out_b_v)                                              # [1, V]

        m = jnp.max(logits)
        score = 1.0 / jnp.sum(jnp.exp(logits - m))       # == softmax prob of the argmax
        idx = jnp.min(jnp.where(logits == m, vocab_iota, V))   # first argmax

        tokens_ref[t] = idx
        scores_ref[t] = score
        tok_scratch[0] = idx
        return carry

    lax.fori_loop(0, MAX_LEN, step, 0, unroll=True)


# --------------------------------- wrapper --------------------------------------

_VMEM = pl.BlockSpec(memory_space=pltpu.MemorySpace.VMEM)
_SMEM = pl.BlockSpec(memory_space=pltpu.MemorySpace.SMEM)


@jax.jit
def _run_greedy_search(params, input_seq, input_length):
    f, b, d = params["enc_f"], params["enc_b"], params["dec"]
    return pl.pallas_call(
        _greedy_search_kernel,
        out_shape=(jax.ShapeDtypeStruct((MAX_LEN,), jnp.int32),
                   jax.ShapeDtypeStruct((MAX_LEN,), jnp.float32)),
        in_specs=[_SMEM, _SMEM] + [_VMEM] * 17,
        out_specs=(_SMEM, _SMEM),
        scratch_shapes=[
            pltpu.VMEM((T, H), jnp.float32),        # gathered input embeddings
            pltpu.VMEM((T, 3 * H), jnp.float32),    # fwd input-gate pre-activations
            pltpu.VMEM((T, 3 * H), jnp.float32),    # bwd input-gate pre-activations
            pltpu.VMEM((T, H), jnp.float32),        # fwd encoder outputs
            pltpu.VMEM((T, H), jnp.float32),        # bwd encoder outputs
            pltpu.VMEM((1, H), jnp.float32),        # recurrent hidden state
            pltpu.SMEM((1,), jnp.int32),            # current decoder input token
        ],
    )(input_seq, input_length, params["embedding"],
      f["wi"], f["wh"], f["bi"], f["bh"],
      b["wi"], b["wh"], b["bi"], b["bh"],
      d["wi"], d["wh"], d["bi"], d["bh"],
      params["concat_w"], params["concat_b"], params["out_w"], params["out_b"])


def greedy_search_decoder(params, input_seq, input_length, max_length=MAX_LEN):
    assert max_length == MAX_LEN  # max_length is compiled into the kernel
    return _run_greedy_search(params, input_seq, input_length)


# --------------------------- deterministic params ------------------------------

def init_params(key):
    ks = jax.random.split(key, 17)
    m = lambda k, shape, s=0.1: s * jax.random.normal(k, shape, jnp.float32)
    gru = lambda k1, k2, k3, k4: dict(
        wi=m(k1, (H, 3 * H)), wh=m(k2, (H, 3 * H)),
        bi=m(k3, (1, 3 * H)), bh=m(k4, (1, 3 * H)))
    return dict(
        embedding=m(ks[0], (V, H), 0.3),
        enc_f=gru(ks[1], ks[2], ks[3], ks[4]),
        enc_b=gru(ks[5], ks[6], ks[7], ks[8]),
        dec=gru(ks[9], ks[10], ks[11], ks[12]),
        concat_w=m(ks[13], (2 * H, H)),
        concat_b=m(ks[14], (1, H)),
        out_w=m(ks[15], (H, V), 0.5),
        out_b=m(ks[16], (1, V)),
    )


# ------------------------------ pure reference ---------------------------------

def reference_greedy(params, input_seq, input_length, max_length):
    p = jax.tree_util.tree_map(lambda a: np.asarray(a, np.float64), params)
    seq = np.asarray(input_seq)
    L = int(np.asarray(input_length)[0])
    sigmoid = lambda x: 1.0 / (1.0 + np.exp(-x))

    def cell(x, h, g):
        gi = x @ g["wi"] + g["bi"]
        gh = h @ g["wh"] + g["bh"]
        r = sigmoid(gi[:, :H] + gh[:, :H])
        z = sigmoid(gi[:, H:2 * H] + gh[:, H:2 * H])
        n = np.tanh(gi[:, 2 * H:] + r * gh[:, 2 * H:])
        return (1.0 - z) * n + z * h

    def softmax(x):
        x = x - x.max(axis=-1, keepdims=True)
        e = np.exp(x)
        return e / e.sum(axis=-1, keepdims=True)

    emb = p["embedding"]
    enc_out = np.zeros((T, H))
    h = np.zeros((1, H))
    for t in range(L):
        h = cell(emb[seq[t]:seq[t] + 1], h, p["enc_f"])
        enc_out[t] = h[0]
    h_fwd = h.copy()
    h = np.zeros((1, H))
    for t in range(L - 1, -1, -1):
        h = cell(emb[seq[t]:seq[t] + 1], h, p["enc_b"])
        enc_out[t] += h[0]

    dh, tok = h_fwd, SOS
    tokens, scores = [], []
    mask = (np.arange(T) < L)[None, :]
    for _ in range(max_length):
        dh = cell(emb[tok:tok + 1], dh, p["dec"])
        att = dh @ enc_out.T
        att = np.where(mask, att, -1e30)
        attn = softmax(att)
        context = attn @ enc_out
        concat_out = np.tanh(np.concatenate([dh, context], axis=1) @ p["concat_w"]
                             + p["concat_b"])
        probs = softmax(concat_out @ p["out_w"] + p["out_b"])
        idx = int(np.argmax(probs[0]))
        tokens.append(idx)
        scores.append(float(probs[0, idx]))
        tok = idx
    return np.array(tokens, np.int32), np.array(scores, np.float32)


# ----------------------------------- main ---------------------------------------

if __name__ == "__main__":
    key = jax.random.PRNGKey(0)
    pkey, skey = jax.random.split(key)
    params = init_params(pkey)

    input_seq = jax.random.randint(skey, (T,), 2, V, dtype=jnp.int32)
    input_length = jnp.array([T], dtype=jnp.int32)

    all_tokens, all_scores = greedy_search_decoder(params, input_seq, input_length, MAX_LEN)
    jax.block_until_ready((all_tokens, all_scores))

    tokens_np = np.asarray(all_tokens)
    scores_np = np.asarray(all_scores)
    assert tokens_np.shape == (MAX_LEN,) and scores_np.shape == (MAX_LEN,)
    assert np.all(np.isfinite(scores_np))
    assert np.all((tokens_np >= 0) & (tokens_np < V))

    ref_tokens, ref_scores = reference_greedy(params, input_seq, input_length, MAX_LEN)
    if not np.array_equal(tokens_np, ref_tokens):
        raise AssertionError(f"token mismatch: kernel={tokens_np} ref={ref_tokens}")
    np.testing.assert_allclose(scores_np, ref_scores, rtol=5e-3, atol=5e-3)

    print("KERNEL_OK")
</pallas_src>

<mosaic_0001>
module attributes {stable_mosaic.version = 11 : i64} {
  func.func @_greedy_search_kernel(%arg0: memref<8xi32, #tpu.memory_space<smem>>, %arg1: memref<1xi32, #tpu.memory_space<smem>>, %arg2: memref<128x32xf32, #tpu.memory_space<vmem>>, %arg3: memref<32x96xf32, #tpu.memory_space<vmem>>, %arg4: memref<32x96xf32, #tpu.memory_space<vmem>>, %arg5: memref<1x96xf32, #tpu.memory_space<vmem>>, %arg6: memref<1x96xf32, #tpu.memory_space<vmem>>, %arg7: memref<32x96xf32, #tpu.memory_space<vmem>>, %arg8: memref<32x96xf32, #tpu.memory_space<vmem>>, %arg9: memref<1x96xf32, #tpu.memory_space<vmem>>, %arg10: memref<1x96xf32, #tpu.memory_space<vmem>>, %arg11: memref<32x96xf32, #tpu.memory_space<vmem>>, %arg12: memref<32x96xf32, #tpu.memory_space<vmem>>, %arg13: memref<1x96xf32, #tpu.memory_space<vmem>>, %arg14: memref<1x96xf32, #tpu.memory_space<vmem>>, %arg15: memref<64x32xf32, #tpu.memory_space<vmem>>, %arg16: memref<1x32xf32, #tpu.memory_space<vmem>>, %arg17: memref<32x128xf32, #tpu.memory_space<vmem>>, %arg18: memref<1x128xf32, #tpu.memory_space<vmem>>, %arg19: memref<8xi32, #tpu.memory_space<smem>>, %arg20: memref<8xf32, #tpu.memory_space<smem>>, %arg21: memref<8x32xf32, #tpu.memory_space<vmem>>, %arg22: memref<8x96xf32, #tpu.memory_space<vmem>>, %arg23: memref<8x96xf32, #tpu.memory_space<vmem>>, %arg24: memref<8x32xf32, #tpu.memory_space<vmem>>, %arg25: memref<8x32xf32, #tpu.memory_space<vmem>>, %arg26: memref<1x32xf32, #tpu.memory_space<vmem>>, %arg27: memref<1xi32, #tpu.memory_space<smem>>) attributes {dimension_semantics = [], scalar_prefetch = 0 : i64, scratch_operands = 7 : i64, tpu.core_type = #tpu.core_type<tc>} {
    %c0 = arith.constant 0 : index
    %0 = memref.load %arg1[%c0] : memref<1xi32, #tpu.memory_space<smem>>
    %c0_0 = arith.constant 0 : index
    %1 = memref.load %arg0[%c0_0] : memref<8xi32, #tpu.memory_space<smem>>
    %2 = arith.index_cast %1 : i32 to index
    %c0_1 = arith.constant 0 : index
    %3 = vector.load %arg2[%2, %c0_1] : memref<128x32xf32, #tpu.memory_space<vmem>>, vector<1x32xf32>
    %c0_2 = arith.constant 0 : index
    %c0_3 = arith.constant 0 : index
    %4 = vector.load %arg21[%c0_2, %c0_3] : memref<8x32xf32, #tpu.memory_space<vmem>>, vector<1x32xf32>
    tpu.vector_store %arg21[%c0_2, %c0_3], %3 {strides = array<i32>} : memref<8x32xf32, #tpu.memory_space<vmem>>, vector<1x32xf32>,
    %c1 = arith.constant 1 : index
    %5 = memref.load %arg0[%c1] : memref<8xi32, #tpu.memory_space<smem>>
    %6 = arith.index_cast %5 : i32 to index
    %c0_4 = arith.constant 0 : index
    %7 = vector.load %arg2[%6, %c0_4] : memref<128x32xf32, #tpu.memory_space<vmem>>, vector<1x32xf32>
    %c1_5 = arith.constant 1 : index
    %c0_6 = arith.constant 0 : index
    %8 = vector.load %arg21[%c1_5, %c0_6] : memref<8x32xf32, #tpu.memory_space<vmem>>, vector<1x32xf32>
    tpu.vector_store %arg21[%c1_5, %c0_6], %7 {strides = array<i32>} : memref<8x32xf32, #tpu.memory_space<vmem>>, vector<1x32xf32>,
    %c2 = arith.constant 2 : index
    %9 = memref.load %arg0[%c2] : memref<8xi32, #tpu.memory_space<smem>>
    %10 = arith.index_cast %9 : i32 to index
    %c0_7 = arith.constant 0 : index
    %11 = vector.load %arg2[%10, %c0_7] : memref<128x32xf32, #tpu.memory_space<vmem>>, vector<1x32xf32>
    %c2_8 = arith.constant 2 : index
    %c0_9 = arith.constant 0 : index
    %12 = vector.load %arg21[%c2_8, %c0_9] : memref<8x32xf32, #tpu.memory_space<vmem>>, vector<1x32xf32>
    tpu.vector_store %arg21[%c2_8, %c0_9], %11 {strides = array<i32>} : memref<8x32xf32, #tpu.memory_space<vmem>>, vector<1x32xf32>,
    %c3 = arith.constant 3 : index
    %13 = memref.load %arg0[%c3] : memref<8xi32, #tpu.memory_space<smem>>
    %14 = arith.index_cast %13 : i32 to index
    %c0_10 = arith.constant 0 : index
    %15 = vector.load %arg2[%14, %c0_10] : memref<128x32xf32, #tpu.memory_space<vmem>>, vector<1x32xf32>
    %c3_11 = arith.constant 3 : index
    %c0_12 = arith.constant 0 : index
    %16 = vector.load %arg21[%c3_11, %c0_12] : memref<8x32xf32, #tpu.memory_space<vmem>>, vector<1x32xf32>
    tpu.vector_store %arg21[%c3_11, %c0_12], %15 {strides = array<i32>} : memref<8x32xf32, #tpu.memory_space<vmem>>, vector<1x32xf32>,
    %c4 = arith.constant 4 : index
    %17 = memref.load %arg0[%c4] : memref<8xi32, #tpu.memory_space<smem>>
    %18 = arith.index_cast %17 : i32 to index
    %c0_13 = arith.constant 0 : index
    %19 = vector.load %arg2[%18, %c0_13] : memref<128x32xf32, #tpu.memory_space<vmem>>, vector<1x32xf32>
    %c4_14 = arith.constant 4 : index
    %c0_15 = arith.constant 0 : index
    %20 = vector.load %arg21[%c4_14, %c0_15] : memref<8x32xf32, #tpu.memory_space<vmem>>, vector<1x32xf32>
    tpu.vector_store %arg21[%c4_14, %c0_15], %19 {strides = array<i32>} : memref<8x32xf32, #tpu.memory_space<vmem>>, vector<1x32xf32>,
    %c5 = arith.constant 5 : index
    %21 = memref.load %arg0[%c5] : memref<8xi32, #tpu.memory_space<smem>>
    %22 = arith.index_cast %21 : i32 to index
    %c0_16 = arith.constant 0 : index
    %23 = vector.load %arg2[%22, %c0_16] : memref<128x32xf32, #tpu.memory_space<vmem>>, vector<1x32xf32>
    %c5_17 = arith.constant 5 : index
    %c0_18 = arith.constant 0 : index
    %24 = vector.load %arg21[%c5_17, %c0_18] : memref<8x32xf32, #tpu.memory_space<vmem>>, vector<1x32xf32>
    tpu.vector_store %arg21[%c5_17, %c0_18], %23 {strides = array<i32>} : memref<8x32xf32, #tpu.memory_space<vmem>>, vector<1x32xf32>,
    %c6 = arith.constant 6 : index
    %25 = memref.load %arg0[%c6] : memref<8xi32, #tpu.memory_space<smem>>
    %26 = arith.index_cast %25 : i32 to index
    %c0_19 = arith.constant 0 : index
    %27 = vector.load %arg2[%26, %c0_19] : memref<128x32xf32, #tpu.memory_space<vmem>>, vector<1x32xf32>
    %c6_20 = arith.constant 6 : index
    %c0_21 = arith.constant 0 : index
    %28 = vector.load %arg21[%c6_20, %c0_21] : memref<8x32xf32, #tpu.memory_space<vmem>>, vector<1x32xf32>
    tpu.vector_store %arg21[%c6_20, %c0_21], %27 {strides = array<i32>} : memref<8x32xf32, #tpu.memory_space<vmem>>, vector<1x32xf32>,
    %c7 = arith.constant 7 : index
    %29 = memref.load %arg0[%c7] : memref<8xi32, #tpu.memory_space<smem>>
    %30 = arith.index_cast %29 : i32 to index
    %c0_22 = arith.constant 0 : index
    %31 = vector.load %arg2[%30, %c0_22] : memref<128x32xf32, #tpu.memory_space<vmem>>, vector<1x32xf32>
    %c7_23 = arith.constant 7 : index
    %c0_24 = arith.constant 0 : index
    %32 = vector.load %arg21[%c7_23, %c0_24] : memref<8x32xf32, #tpu.memory_space<vmem>>, vector<1x32xf32>
    tpu.vector_store %arg21[%c7_23, %c0_24], %31 {strides = array<i32>} : memref<8x32xf32, #tpu.memory_space<vmem>>, vector<1x32xf32>,
    %c0_25 = arith.constant 0 : index
    %c0_26 = arith.constant 0 : index
    %33 = vector.load %arg21[%c0_25, %c0_26] : memref<8x32xf32, #tpu.memory_space<vmem>>, vector<8x32xf32>
    %c0_27 = arith.constant 0 : index
    %c0_28 = arith.constant 0 : index
    %34 = vector.load %arg3[%c0_27, %c0_28] : memref<32x96xf32, #tpu.memory_space<vmem>>, vector<32x96xf32>
    %cst = arith.constant dense<0.000000e+00> : vector<8x96xf32>
    %35 = tpu.matmul %33, %34, %cst {dimension_numbers = #tpu.dot_dimension_numbers<[1], [0], [0], [1], [0, 0, 1, 1], [], []>} : vector<8x32xf32>, vector<32x96xf32>, vector<8x96xf32> -> vector<8x96xf32>
    %c0_29 = arith.constant 0 : index
    %c0_30 = arith.constant 0 : index
    %36 = vector.load %arg5[%c0_29, %c0_30] : memref<1x96xf32, #tpu.memory_space<vmem>>, vector<1x96xf32>
    %37 = vector.broadcast %36 : vector<1x96xf32> to vector<8x96xf32>
    %38 = arith.addf %35, %37 : vector<8x96xf32>
    %c0_31 = arith.constant 0 : index
    %c0_32 = arith.constant 0 : index
    %39 = vector.load %arg22[%c0_31, %c0_32] : memref<8x96xf32, #tpu.memory_space<vmem>>, vector<8x96xf32>
    tpu.vector_store %arg22[%c0_31, %c0_32], %38 {strides = array<i32>} : memref<8x96xf32, #tpu.memory_space<vmem>>, vector<8x96xf32>,
    %c0_33 = arith.constant 0 : index
    %c0_34 = arith.constant 0 : index
    %40 = vector.load %arg21[%c0_33, %c0_34] : memref<8x32xf32, #tpu.memory_space<vmem>>, vector<8x32xf32>
    %c0_35 = arith.constant 0 : index
    %c0_36 = arith.constant 0 : index
    %41 = vector.load %arg7[%c0_35, %c0_36] : memref<32x96xf32, #tpu.memory_space<vmem>>, vector<32x96xf32>
    %cst_37 = arith.constant dense<0.000000e+00> : vector<8x96xf32>
    %42 = tpu.matmul %40, %41, %cst_37 {dimension_numbers = #tpu.dot_dimension_numbers<[1], [0], [0], [1], [0, 0, 1, 1], [], []>} : vector<8x32xf32>, vector<32x96xf32>, vector<8x96xf32> -> vector<8x96xf32>
    %c0_38 = arith.constant 0 : index
    %c0_39 = arith.constant 0 : index
    %43 = vector.load %arg9[%c0_38, %c0_39] : memref<1x96xf32, #tpu.memory_space<vmem>>, vector<1x96xf32>
    %44 = vector.broadcast %43 : vector<1x96xf32> to vector<8x96xf32>
    %45 = arith.addf %42, %44 : vector<8x96xf32>
    %c0_40 = arith.constant 0 : index
    %c0_41 = arith.constant 0 : index
    %46 = vector.load %arg23[%c0_40, %c0_41] : memref<8x96xf32, #tpu.memory_space<vmem>>, vector<8x96xf32>
    tpu.vector_store %arg23[%c0_40, %c0_41], %45 {strides = array<i32>} : memref<8x96xf32, #tpu.memory_space<vmem>>, vector<8x96xf32>,
    %cst_42 = arith.constant 0.000000e+00 : f32
    %47 = vector.broadcast %cst_42 : f32 to vector<8x32xf32>
    %c0_43 = arith.constant 0 : index
    %c0_44 = arith.constant 0 : index
    %48 = vector.load %arg24[%c0_43, %c0_44] : memref<8x32xf32, #tpu.memory_space<vmem>>, vector<8x32xf32>
    tpu.vector_store %arg24[%c0_43, %c0_44], %47 {strides = array<i32>} : memref<8x32xf32, #tpu.memory_space<vmem>>, vector<8x32xf32>,
    %cst_45 = arith.constant 0.000000e+00 : f32
    %49 = vector.broadcast %cst_45 : f32 to vector<8x32xf32>
    %c0_46 = arith.constant 0 : index
    %c0_47 = arith.constant 0 : index
    %50 = vector.load %arg25[%c0_46, %c0_47] : memref<8x32xf32, #tpu.memory_space<vmem>>, vector<8x32xf32>
    tpu.vector_store %arg25[%c0_46, %c0_47], %49 {strides = array<i32>} : memref<8x32xf32, #tpu.memory_space<vmem>>, vector<8x32xf32>,
    %c0_48 = arith.constant 0 : index
    %c0_49 = arith.constant 0 : index
    %51 = vector.load %arg8[%c0_48, %c0_49] : memref<32x96xf32, #tpu.memory_space<vmem>>, vector<32x96xf32>
    %c0_50 = arith.constant 0 : index
    %c0_51 = arith.constant 0 : index
    %52 = vector.load %arg10[%c0_50, %c0_51] : memref<1x96xf32, #tpu.memory_space<vmem>>, vector<1x96xf32>
    %cst_52 = arith.constant 0.000000e+00 : f32
    %53 = vector.broadcast %cst_52 : f32 to vector<1x32xf32>
    %c0_53 = arith.constant 0 : index
    %c0_54 = arith.constant 0 : index
    %54 = vector.load %arg26[%c0_53, %c0_54] : memref<1x32xf32, #tpu.memory_space<vmem>>, vector<1x32xf32>
    tpu.vector_store %arg26[%c0_53, %c0_54], %53 {strides = array<i32>} : memref<1x32xf32, #tpu.memory_space<vmem>>, vector<1x32xf32>,
    %c0_i32 = arith.constant 0 : i32
    %55 = arith.cmpi sgt, %0, %c0_i32 : i32
    %56 = arith.extui %55 : i1 to i32
    %c0_i32_55 = arith.constant 0 : i32
    %57 = arith.cmpi ne, %56, %c0_i32_55 : i32
    scf.if %57 {
      %c1_i32_317 = arith.constant 1 : i32
      %781 = arith.subi %0, %c1_i32_317 : i32
      %c0_i32_318 = arith.constant 0 : i32
      %782 = arith.subi %781, %c0_i32_318 : i32
      %783 = arith.index_cast %782 : i32 to index
      %c0_319 = arith.constant 0 : index
      %784 = vector.load %arg23[%783, %c0_319] : memref<8x96xf32, #tpu.memory_space<vmem>>, vector<1x96xf32>
      %c0_320 = arith.constant 0 : index
      %c0_321 = arith.constant 0 : index
      %785 = vector.load %arg26[%c0_320, %c0_321] : memref<1x32xf32, #tpu.memory_space<vmem>>, vector<1x32xf32>
      %cst_322 = arith.constant dense<0.000000e+00> : vector<1x96xf32>
      %786 = tpu.matmul %785, %51, %cst_322 {dimension_numbers = #tpu.dot_dimension_numbers<[1], [0], [0], [1], [0, 0, 1, 1], [], []>} : vector<1x32xf32>, vector<32x96xf32>, vector<1x96xf32> -> vector<1x96xf32>
      %787 = arith.addf %786, %52 : vector<1x96xf32>
      %788 = vector.extract_strided_slice %784 {offsets = [0, 0], sizes = [1, 32], strides = [1, 1]} : vector<1x96xf32> to vector<1x32xf32>
      %789 = vector.extract_strided_slice %787 {offsets = [0, 0], sizes = [1, 32], strides = [1, 1]} : vector<1x96xf32> to vector<1x32xf32>
      %790 = arith.addf %788, %789 : vector<1x32xf32>
      %791 = arith.negf %790 : vector<1x32xf32>
      %792 = math.exp %791 : vector<1x32xf32>
      %cst_323 = arith.constant 1.000000e+00 : f32
      %793 = vector.broadcast %cst_323 : f32 to vector<1x32xf32>
      %794 = arith.addf %793, %792 : vector<1x32xf32>
      %795 = arith.divf %793, %794 : vector<1x32xf32>
      %796 = vector.extract_strided_slice %784 {offsets = [0, 32], sizes = [1, 32], strides = [1, 1]} : vector<1x96xf32> to vector<1x32xf32>
      %797 = vector.extract_strided_slice %787 {offsets = [0, 32], sizes = [1, 32], strides = [1, 1]} : vector<1x96xf32> to vector<1x32xf32>
      %798 = arith.addf %796, %797 : vector<1x32xf32>
      %799 = arith.negf %798 : vector<1x32xf32>
      %800 = math.exp %799 : vector<1x32xf32>
      %cst_324 = arith.constant 1.000000e+00 : f32
      %801 = vector.broadcast %cst_324 : f32 to vector<1x32xf32>
      %802 = arith.addf %801, %800 : vector<1x32xf32>
      %803 = arith.divf %801, %802 : vector<1x32xf32>
      %804 = vector.extract_strided_slice %784 {offsets = [0, 64], sizes = [1, 32], strides = [1, 1]} : vector<1x96xf32> to vector<1x32xf32>
      %805 = vector.extract_strided_slice %787 {offsets = [0, 64], sizes = [1, 32], strides = [1, 1]} : vector<1x96xf32> to vector<1x32xf32>
      %806 = arith.mulf %795, %805 : vector<1x32xf32>
      %807 = arith.addf %804, %806 : vector<1x32xf32>
      %808 = math.tanh %807 : vector<1x32xf32>
      %cst_325 = arith.constant 1.000000e+00 : f32
      %809 = vector.broadcast %cst_325 : f32 to vector<1x32xf32>
      %810 = arith.subf %809, %803 : vector<1x32xf32>
      %811 = arith.mulf %810, %808 : vector<1x32xf32>
      %812 = arith.mulf %803, %785 : vector<1x32xf32>
      %813 = arith.addf %811, %812 : vector<1x32xf32>
      %c0_326 = arith.constant 0 : index
      %c0_327 = arith.constant 0 : index
      %814 = vector.load %arg26[%c0_326, %c0_327] : memref<1x32xf32, #tpu.memory_space<vmem>>, vector<1x32xf32>
      tpu.vector_store %arg26[%c0_326, %c0_327], %813 {strides = array<i32>} : memref<1x32xf32, #tpu.memory_space<vmem>>, vector<1x32xf32>,
      %815 = arith.index_cast %782 : i32 to index
      %c0_328 = arith.constant 0 : index
      %816 = vector.load %arg25[%815, %c0_328] : memref<8x32xf32, #tpu.memory_space<vmem>>, vector<1x32xf32>
      tpu.vector_store %arg25[%815, %c0_328], %813 {strides = array<i32>} : memref<8x32xf32, #tpu.memory_space<vmem>>, vector<1x32xf32>,
    } else {
    }
    %c1_i32 = arith.constant 1 : i32
    %58 = arith.cmpi sgt, %0, %c1_i32 : i32
    %59 = arith.extui %58 : i1 to i32
    %c0_i32_56 = arith.constant 0 : i32
    %60 = arith.cmpi ne, %59, %c0_i32_56 : i32
    scf.if %60 {
      %c1_i32_317 = arith.constant 1 : i32
      %781 = arith.subi %0, %c1_i32_317 : i32
      %c1_i32_318 = arith.constant 1 : i32
      %782 = arith.subi %781, %c1_i32_318 : i32
      %783 = arith.index_cast %782 : i32 to index
      %c0_319 = arith.constant 0 : index
      %784 = vector.load %arg23[%783, %c0_319] : memref<8x96xf32, #tpu.memory_space<vmem>>, vector<1x96xf32>
      %c0_320 = arith.constant 0 : index
      %c0_321 = arith.constant 0 : index
      %785 = vector.load %arg26[%c0_320, %c0_321] : memref<1x32xf32, #tpu.memory_space<vmem>>, vector<1x32xf32>
      %cst_322 = arith.constant dense<0.000000e+00> : vector<1x96xf32>
      %786 = tpu.matmul %785, %51, %cst_322 {dimension_numbers = #tpu.dot_dimension_numbers<[1], [0], [0], [1], [0, 0, 1, 1], [], []>} : vector<1x32xf32>, vector<32x96xf32>, vector<1x96xf32> -> vector<1x96xf32>
      %787 = arith.addf %786, %52 : vector<1x96xf32>
      %788 = vector.extract_strided_slice %784 {offsets = [0, 0], sizes = [1, 32], strides = [1, 1]} : vector<1x96xf32> to vector<1x32xf32>
      %789 = vector.extract_strided_slice %787 {offsets = [0, 0], sizes = [1, 32], strides = [1, 1]} : vector<1x96xf32> to vector<1x32xf32>
      %790 = arith.addf %788, %789 : vector<1x32xf32>
      %791 = arith.negf %790 : vector<1x32xf32>
      %792 = math.exp %791 : vector<1x32xf32>
      %cst_323 = arith.constant 1.000000e+00 : f32
      %793 = vector.broadcast %cst_323 : f32 to vector<1x32xf32>
      %794 = arith.addf %793, %792 : vector<1x32xf32>
      %795 = arith.divf %793, %794 : vector<1x32xf32>
      %796 = vector.extract_strided_slice %784 {offsets = [0, 32], sizes = [1, 32], strides = [1, 1]} : vector<1x96xf32> to vector<1x32xf32>
      %797 = vector.extract_strided_slice %787 {offsets = [0, 32], sizes = [1, 32], strides = [1, 1]} : vector<1x96xf32> to vector<1x32xf32>
      %798 = arith.addf %796, %797 : vector<1x32xf32>
      %799 = arith.negf %798 : vector<1x32xf32>
      %800 = math.exp %799 : vector<1x32xf32>
      %cst_324 = arith.constant 1.000000e+00 : f32
      %801 = vector.broadcast %cst_324 : f32 to vector<1x32xf32>
      %802 = arith.addf %801, %800 : vector<1x32xf32>
      %803 = arith.divf %801, %802 : vector<1x32xf32>
      %804 = vector.extract_strided_slice %784 {offsets = [0, 64], sizes = [1, 32], strides = [1, 1]} : vector<1x96xf32> to vector<1x32xf32>
      %805 = vector.extract_strided_slice %787 {offsets = [0, 64], sizes = [1, 32], strides = [1, 1]} : vector<1x96xf32> to vector<1x32xf32>
      %806 = arith.mulf %795, %805 : vector<1x32xf32>
      %807 = arith.addf %804, %806 : vector<1x32xf32>
      %808 = math.tanh %807 : vector<1x32xf32>
      %cst_325 = arith.constant 1.000000e+00 : f32
      %809 = vector.broadcast %cst_325 : f32 to vector<1x32xf32>
      %810 = arith.subf %809, %803 : vector<1x32xf32>
      %811 = arith.mulf %810, %808 : vector<1x32xf32>
      %812 = arith.mulf %803, %785 : vector<1x32xf32>
      %813 = arith.addf %811, %812 : vector<1x32xf32>
      %c0_326 = arith.constant 0 : index
      %c0_327 = arith.constant 0 : index
      %814 = vector.load %arg26[%c0_326, %c0_327] : memref<1x32xf32, #tpu.memory_space<vmem>>, vector<1x32xf32>
      tpu.vector_store %arg26[%c0_326, %c0_327], %813 {strides = array<i32>} : memref<1x32xf32, #tpu.memory_space<vmem>>, vector<1x32xf32>,
      %815 = arith.index_cast %782 : i32 to index
      %c0_328 = arith.constant 0 : index
      %816 = vector.load %arg25[%815, %c0_328] : memref<8x32xf32, #tpu.memory_space<vmem>>, vector<1x32xf32>
      tpu.vector_store %arg25[%815, %c0_328], %813 {strides = array<i32>} : memref<8x32xf32, #tpu.memory_space<vmem>>, vector<1x32xf32>,
    } else {
    }
    %c2_i32 = arith.constant 2 : i32
    %61 = arith.cmpi sgt, %0, %c2_i32 : i32
    %62 = arith.extui %61 : i1 to i32
    %c0_i32_57 = arith.constant 0 : i32
    %63 = arith.cmpi ne, %62, %c0_i32_57 : i32
    scf.if %63 {
      %c1_i32_317 = arith.constant 1 : i32
      %781 = arith.subi %0, %c1_i32_317 : i32
      %c2_i32_318 = arith.constant 2 : i32
      %782 = arith.subi %781, %c2_i32_318 : i32
      %783 = arith.index_cast %782 : i32 to index
      %c0_319 = arith.constant 0 : index
      %784 = vector.load %arg23[%783, %c0_319] : memref<8x96xf32, #tpu.memory_space<vmem>>, vector<1x96xf32>
      %c0_320 = arith.constant 0 : index
      %c0_321 = arith.constant 0 : index
      %785 = vector.load %arg26[%c0_320, %c0_321] : memref<1x32xf32, #tpu.memory_space<vmem>>, vector<1x32xf32>
      %cst_322 = arith.constant dense<0.000000e+00> : vector<1x96xf32>
      %786 = tpu.matmul %785, %51, %cst_322 {dimension_numbers = #tpu.dot_dimension_numbers<[1], [0], [0], [1], [0, 0, 1, 1], [], []>} : vector<1x32xf32>, vector<32x96xf32>, vector<1x96xf32> -> vector<1x96xf32>
      %787 = arith.addf %786, %52 : vector<1x96xf32>
      %788 = vector.extract_strided_slice %784 {offsets = [0, 0], sizes = [1, 32], strides = [1, 1]} : vector<1x96xf32> to vector<1x32xf32>
      %789 = vector.extract_strided_slice %787 {offsets = [0, 0], sizes = [1, 32], strides = [1, 1]} : vector<1x96xf32> to vector<1x32xf32>
      %790 = arith.addf %788, %789 : vector<1x32xf32>
      %791 = arith.negf %790 : vector<1x32xf32>
      %792 = math.exp %791 : vector<1x32xf32>
      %cst_323 = arith.constant 1.000000e+00 : f32
      %793 = vector.broadcast %cst_323 : f32 to vector<1x32xf32>
      %794 = arith.addf %793, %792 : vector<1x32xf32>
      %795 = arith.divf %793, %794 : vector<1x32xf32>
      %796 = vector.extract_strided_slice %784 {offsets = [0, 32], sizes = [1, 32], strides = [1, 1]} : vector<1x96xf32> to vector<1x32xf32>
      %797 = vector.extract_strided_slice %787 {offsets = [0, 32], sizes = [1, 32], strides = [1, 1]} : vector<1x96xf32> to vector<1x32xf32>
      %798 = arith.addf %796, %797 : vector<1x32xf32>
      %799 = arith.negf %798 : vector<1x32xf32>
      %800 = math.exp %799 : vector<1x32xf32>
      %cst_324 = arith.constant 1.000000e+00 : f32
      %801 = vector.broadcast %cst_324 : f32 to vector<1x32xf32>
      %802 = arith.addf %801, %800 : vector<1x32xf32>
      %803 = arith.divf %801, %802 : vector<1x32xf32>
      %804 = vector.extract_strided_slice %784 {offsets = [0, 64], sizes = [1, 32], strides = [1, 1]} : vector<1x96xf32> to vector<1x32xf32>
      %805 = vector.extract_strided_slice %787 {offsets = [0, 64], sizes = [1, 32], strides = [1, 1]} : vector<1x96xf32> to vector<1x32xf32>
      %806 = arith.mulf %795, %805 : vector<1x32xf32>
      %807 = arith.addf %804, %806 : vector<1x32xf32>
      %808 = math.tanh %807 : vector<1x32xf32>
      %cst_325 = arith.constant 1.000000e+00 : f32
      %809 = vector.broadcast %cst_325 : f32 to vector<1x32xf32>
      %810 = arith.subf %809, %803 : vector<1x32xf32>
      %811 = arith.mulf %810, %808 : vector<1x32xf32>
      %812 = arith.mulf %803, %785 : vector<1x32xf32>
      %813 = arith.addf %811, %812 : vector<1x32xf32>
      %c0_326 = arith.constant 0 : index
      %c0_327 = arith.constant 0 : index
      %814 = vector.load %arg26[%c0_326, %c0_327] : memref<1x32xf32, #tpu.memory_space<vmem>>, vector<1x32xf32>
      tpu.vector_store %arg26[%c0_326, %c0_327], %813 {strides = array<i32>} : memref<1x32xf32, #tpu.memory_space<vmem>>, vector<1x32xf32>,
      %815 = arith.index_cast %782 : i32 to index
      %c0_328 = arith.constant 0 : index
      %816 = vector.load %arg25[%815, %c0_328] : memref<8x32xf32, #tpu.memory_space<vmem>>, vector<1x32xf32>
      tpu.vector_store %arg25[%815, %c0_328], %813 {strides = array<i32>} : memref<8x32xf32, #tpu.memory_space<vmem>>, vector<1x32xf32>,
    } else {
    }
    %c3_i32 = arith.constant 3 : i32
    %64 = arith.cmpi sgt, %0, %c3_i32 : i32
    %65 = arith.extui %64 : i1 to i32
    %c0_i32_58 = arith.constant 0 : i32
    %66 = arith.cmpi ne, %65, %c0_i32_58 : i32
    scf.if %66 {
      %c1_i32_317 = arith.constant 1 : i32
      %781 = arith.subi %0, %c1_i32_317 : i32
      %c3_i32_318 = arith.constant 3 : i32
      %782 = arith.subi %781, %c3_i32_318 : i32
      %783 = arith.index_cast %782 : i32 to index
      %c0_319 = arith.constant 0 : index
      %784 = vector.load %arg23[%783, %c0_319] : memref<8x96xf32, #tpu.memory_space<vmem>>, vector<1x96xf32>
      %c0_320 = arith.constant 0 : index
      %c0_321 = arith.constant 0 : index
      %785 = vector.load %arg26[%c0_320, %c0_321] : memref<1x32xf32, #tpu.memory_space<vmem>>, vector<1x32xf32>
      %cst_322 = arith.constant dense<0.000000e+00> : vector<1x96xf32>
      %786 = tpu.matmul %785, %51, %cst_322 {dimension_numbers = #tpu.dot_dimension_numbers<[1], [0], [0], [1], [0, 0, 1, 1], [], []>} : vector<1x32xf32>, vector<32x96xf32>, vector<1x96xf32> -> vector<1x96xf32>
      %787 = arith.addf %786, %52 : vector<1x96xf32>
      %788 = vector.extract_strided_slice %784 {offsets = [0, 0], sizes = [1, 32], strides = [1, 1]} : vector<1x96xf32> to vector<1x32xf32>
      %789 = vector.extract_strided_slice %787 {offsets = [0, 0], sizes = [1, 32], strides = [1, 1]} : vector<1x96xf32> to vector<1x32xf32>
      %790 = arith.addf %788, %789 : vector<1x32xf32>
      %791 = arith.negf %790 : vector<1x32xf32>
      %792 = math.exp %791 : vector<1x32xf32>
      %cst_323 = arith.constant 1.000000e+00 : f32
      %793 = vector.broadcast %cst_323 : f32 to vector<1x32xf32>
      %794 = arith.addf %793, %792 : vector<1x32xf32>
      %795 = arith.divf %793, %794 : vector<1x32xf32>
      %796 = vector.extract_strided_slice %784 {offsets = [0, 32], sizes = [1, 32], strides = [1, 1]} : vector<1x96xf32> to vector<1x32xf32>
      %797 = vector.extract_strided_slice %787 {offsets = [0, 32], sizes = [1, 32], strides = [1, 1]} : vector<1x96xf32> to vector<1x32xf32>
      %798 = arith.addf %796, %797 : vector<1x32xf32>
      %799 = arith.negf %798 : vector<1x32xf32>
      %800 = math.exp %799 : vector<1x32xf32>
      %cst_324 = arith.constant 1.000000e+00 : f32
      %801 = vector.broadcast %cst_324 : f32 to vector<1x32xf32>
      %802 = arith.addf %801, %800 : vector<1x32xf32>
      %803 = arith.divf %801, %802 : vector<1x32xf32>
      %804 = vector.extract_strided_slice %784 {offsets = [0, 64], sizes = [1, 32], strides = [1, 1]} : vector<1x96xf32> to vector<1x32xf32>
      %805 = vector.extract_strided_slice %787 {offsets = [0, 64], sizes = [1, 32], strides = [1, 1]} : vector<1x96xf32> to vector<1x32xf32>
      %806 = arith.mulf %795, %805 : vector<1x32xf32>
      %807 = arith.addf %804, %806 : vector<1x32xf32>
      %808 = math.tanh %807 : vector<1x32xf32>
      %cst_325 = arith.constant 1.000000e+00 : f32
      %809 = vector.broadcast %cst_325 : f32 to vector<1x32xf32>
      %810 = arith.subf %809, %803 : vector<1x32xf32>
      %811 = arith.mulf %810, %808 : vector<1x32xf32>
      %812 = arith.mulf %803, %785 : vector<1x32xf32>
      %813 = arith.addf %811, %812 : vector<1x32xf32>
      %c0_326 = arith.constant 0 : index
      %c0_327 = arith.constant 0 : index
      %814 = vector.load %arg26[%c0_326, %c0_327] : memref<1x32xf32, #tpu.memory_space<vmem>>, vector<1x32xf32>
      tpu.vector_store %arg26[%c0_326, %c0_327], %813 {strides = array<i32>} : memref<1x32xf32, #tpu.memory_space<vmem>>, vector<1x32xf32>,
      %815 = arith.index_cast %782 : i32 to index
      %c0_328 = arith.constant 0 : index
      %816 = vector.load %arg25[%815, %c0_328] : memref<8x32xf32, #tpu.memory_space<vmem>>, vector<1x32xf32>
      tpu.vector_store %arg25[%815, %c0_328], %813 {strides = array<i32>} : memref<8x32xf32, #tpu.memory_space<vmem>>, vector<1x32xf32>,
    } else {
    }
    %c4_i32 = arith.constant 4 : i32
    %67 = arith.cmpi sgt, %0, %c4_i32 : i32
    %68 = arith.extui %67 : i1 to i32
    %c0_i32_59 = arith.constant 0 : i32
    %69 = arith.cmpi ne, %68, %c0_i32_59 : i32
    scf.if %69 {
      %c1_i32_317 = arith.constant 1 : i32
      %781 = arith.subi %0, %c1_i32_317 : i32
      %c4_i32_318 = arith.constant 4 : i32
      %782 = arith.subi %781, %c4_i32_318 : i32
      %783 = arith.index_cast %782 : i32 to index
      %c0_319 = arith.constant 0 : index
      %784 = vector.load %arg23[%783, %c0_319] : memref<8x96xf32, #tpu.memory_space<vmem>>, vector<1x96xf32>
      %c0_320 = arith.constant 0 : index
      %c0_321 = arith.constant 0 : index
      %785 = vector.load %arg26[%c0_320, %c0_321] : memref<1x32xf32, #tpu.memory_space<vmem>>, vector<1x32xf32>
      %cst_322 = arith.constant dense<0.000000e+00> : vector<1x96xf32>
      %786 = tpu.matmul %785, %51, %cst_322 {dimension_numbers = #tpu.dot_dimension_numbers<[1], [0], [0], [1], [0, 0, 1, 1], [], []>} : vector<1x32xf32>, vector<32x96xf32>, vector<1x96xf32> -> vector<1x96xf32>
      %787 = arith.addf %786, %52 : vector<1x96xf32>
      %788 = vector.extract_strided_slice %784 {offsets = [0, 0], sizes = [1, 32], strides = [1, 1]} : vector<1x96xf32> to vector<1x32xf32>
      %789 = vector.extract_strided_slice %787 {offsets = [0, 0], sizes = [1, 32], strides = [1, 1]} : vector<1x96xf32> to vector<1x32xf32>
      %790 = arith.addf %788, %789 : vector<1x32xf32>
      %791 = arith.negf %790 : vector<1x32xf32>
      %792 = math.exp %791 : vector<1x32xf32>
      %cst_323 = arith.constant 1.000000e+00 : f32
      %793 = vector.broadcast %cst_323 : f32 to vector<1x32xf32>
      %794 = arith.addf %793, %792 : vector<1x32xf32>
      %795 = arith.divf %793, %794 : vector<1x32xf32>
      %796 = vector.extract_strided_slice %784 {offsets = [0, 32], sizes = [1, 32], strides = [1, 1]} : vector<1x96xf32> to vector<1x32xf32>
      %797 = vector.extract_strided_slice %787 {offsets = [0, 32], sizes = [1, 32], strides = [1, 1]} : vector<1x96xf32> to vector<1x32xf32>
      %798 = arith.addf %796, %797 : vector<1x32xf32>
      %799 = arith.negf %798 : vector<1x32xf32>
      %800 = math.exp %799 : vector<1x32xf32>
      %cst_324 = arith.constant 1.000000e+00 : f32
      %801 = vector.broadcast %cst_324 : f32 to vector<1x32xf32>
      %802 = arith.addf %801, %800 : vector<1x32xf32>
      %803 = arith.divf %801, %802 : vector<1x32xf32>
      %804 = vector.extract_strided_slice %784 {offsets = [0, 64], sizes = [1, 32], strides = [1, 1]} : vector<1x96xf32> to vector<1x32xf32>
      %805 = vector.extract_strided_slice %787 {offsets = [0, 64], sizes = [1, 32], strides = [1, 1]} : vector<1x96xf32> to vector<1x32xf32>
      %806 = arith.mulf %795, %805 : vector<1x32xf32>
      %807 = arith.addf %804, %806 : vector<1x32xf32>
      %808 = math.tanh %807 : vector<1x32xf32>
      %cst_325 = arith.constant 1.000000e+00 : f32
      %809 = vector.broadcast %cst_325 : f32 to vector<1x32xf32>
      %810 = arith.subf %809, %803 : vector<1x32xf32>
      %811 = arith.mulf %810, %808 : vector<1x32xf32>
      %812 = arith.mulf %803, %785 : vector<1x32xf32>
      %813 = arith.addf %811, %812 : vector<1x32xf32>
      %c0_326 = arith.constant 0 : index
      %c0_327 = arith.constant 0 : index
      %814 = vector.load %arg26[%c0_326, %c0_327] : memref<1x32xf32, #tpu.memory_space<vmem>>, vector<1x32xf32>
      tpu.vector_store %arg26[%c0_326, %c0_327], %813 {strides = array<i32>} : memref<1x32xf32, #tpu.memory_space<vmem>>, vector<1x32xf32>,
      %815 = arith.index_cast %782 : i32 to index
      %c0_328 = arith.constant 0 : index
      %816 = vector.load %arg25[%815, %c0_328] : memref<8x32xf32, #tpu.memory_space<vmem>>, vector<1x32xf32>
      tpu.vector_store %arg25[%815, %c0_328], %813 {strides = array<i32>} : memref<8x32xf32, #tpu.memory_space<vmem>>, vector<1x32xf32>,
    } else {
    }
    %c5_i32 = arith.constant 5 : i32
    %70 = arith.cmpi sgt, %0, %c5_i32 : i32
    %71 = arith.extui %70 : i1 to i32
    %c0_i32_60 = arith.constant 0 : i32
    %72 = arith.cmpi ne, %71, %c0_i32_60 : i32
    scf.if %72 {
      %c1_i32_317 = arith.constant 1 : i32
      %781 = arith.subi %0, %c1_i32_317 : i32
      %c5_i32_318 = arith.constant 5 : i32
      %782 = arith.subi %781, %c5_i32_318 : i32
      %783 = arith.index_cast %782 : i32 to index
      %c0_319 = arith.constant 0 : index
      %784 = vector.load %arg23[%783, %c0_319] : memref<8x96xf32, #tpu.memory_space<vmem>>, vector<1x96xf32>
      %c0_320 = arith.constant 0 : index
      %c0_321 = arith.constant 0 : index
      %785 = vector.load %arg26[%c0_320, %c0_321] : memref<1x32xf32, #tpu.memory_space<vmem>>, vector<1x32xf32>
      %cst_322 = arith.constant dense<0.000000e+00> : vector<1x96xf32>
      %786 = tpu.matmul %785, %51, %cst_322 {dimension_numbers = #tpu.dot_dimension_numbers<[1], [0], [0], [1], [0, 0, 1, 1], [], []>} : vector<1x32xf32>, vector<32x96xf32>, vector<1x96xf32> -> vector<1x96xf32>
      %787 = arith.addf %786, %52 : vector<1x96xf32>
      %788 = vector.extract_strided_slice %784 {offsets = [0, 0], sizes = [1, 32], strides = [1, 1]} : vector<1x96xf32> to vector<1x32xf32>
      %789 = vector.extract_strided_slice %787 {offsets = [0, 0], sizes = [1, 32], strides = [1, 1]} : vector<1x96xf32> to vector<1x32xf32>
      %790 = arith.addf %788, %789 : vector<1x32xf32>
      %791 = arith.negf %790 : vector<1x32xf32>
      %792 = math.exp %791 : vector<1x32xf32>
      %cst_323 = arith.constant 1.000000e+00 : f32
      %793 = vector.broadcast %cst_323 : f32 to vector<1x32xf32>
      %794 = arith.addf %793, %792 : vector<1x32xf32>
      %795 = arith.divf %793, %794 : vector<1x32xf32>
      %796 = vector.extract_strided_slice %784 {offsets = [0, 32], sizes = [1, 32], strides = [1, 1]} : vector<1x96xf32> to vector<1x32xf32>
      %797 = vector.extract_strided_slice %787 {offsets = [0, 32], sizes = [1, 32], strides = [1, 1]} : vector<1x96xf32> to vector<1x32xf32>
      %798 = arith.addf %796, %797 : vector<1x32xf32>
      %799 = arith.negf %798 : vector<1x32xf32>
      %800 = math.exp %799 : vector<1x32xf32>
      %cst_324 = arith.constant 1.000000e+00 : f32
      %801 = vector.broadcast %cst_324 : f32 to vector<1x32xf32>
      %802 = arith.addf %801, %800 : vector<1x32xf32>
      %803 = arith.divf %801, %802 : vector<1x32xf32>
      %804 = vector.extract_strided_slice %784 {offsets = [0, 64], sizes = [1, 32], strides = [1, 1]} : vector<1x96xf32> to vector<1x32xf32>
      %805 = vector.extract_strided_slice %787 {offsets = [0, 64], sizes = [1, 32], strides = [1, 1]} : vector<1x96xf32> to vector<1x32xf32>
      %806 = arith.mulf %795, %805 : vector<1x32xf32>
      %807 = arith.addf %804, %806 : vector<1x32xf32>
      %808 = math.tanh %807 : vector<1x32xf32>
      %cst_325 = arith.constant 1.000000e+00 : f32
      %809 = vector.broadcast %cst_325 : f32 to vector<1x32xf32>
      %810 = arith.subf %809, %803 : vector<1x32xf32>
      %811 = arith.mulf %810, %808 : vector<1x32xf32>
      %812 = arith.mulf %803, %785 : vector<1x32xf32>
      %813 = arith.addf %811, %812 : vector<1x32xf32>
      %c0_326 = arith.constant 0 : index
      %c0_327 = arith.constant 0 : index
      %814 = vector.load %arg26[%c0_326, %c0_327] : memref<1x32xf32, #tpu.memory_space<vmem>>, vector<1x32xf32>
      tpu.vector_store %arg26[%c0_326, %c0_327], %813 {strides = array<i32>} : memref<1x32xf32, #tpu.memory_space<vmem>>, vector<1x32xf32>,
      %815 = arith.index_cast %782 : i32 to index
      %c0_328 = arith.constant 0 : index
      %816 = vector.load %arg25[%815, %c0_328] : memref<8x32xf32, #tpu.memory_space<vmem>>, vector<1x32xf32>
      tpu.vector_store %arg25[%815, %c0_328], %813 {strides = array<i32>} : memref<8x32xf32, #tpu.memory_space<vmem>>, vector<1x32xf32>,
    } else {
    }
    %c6_i32 = arith.constant 6 : i32
    %73 = arith.cmpi sgt, %0, %c6_i32 : i32
    %74 = arith.extui %73 : i1 to i32
    %c0_i32_61 = arith.constant 0 : i32
    %75 = arith.cmpi ne, %74, %c0_i32_61 : i32
    scf.if %75 {
      %c1_i32_317 = arith.constant 1 : i32
      %781 = arith.subi %0, %c1_i32_317 : i32
      %c6_i32_318 = arith.constant 6 : i32
      %782 = arith.subi %781, %c6_i32_318 : i32
      %783 = arith.index_cast %782 : i32 to index
      %c0_319 = arith.constant 0 : index
      %784 = vector.load %arg23[%783, %c0_319] : memref<8x96xf32, #tpu.memory_space<vmem>>, vector<1x96xf32>
      %c0_320 = arith.constant 0 : index
      %c0_321 = arith.constant 0 : index
      %785 = vector.load %arg26[%c0_320, %c0_321] : memref<1x32xf32, #tpu.memory_space<vmem>>, vector<1x32xf32>
      %cst_322 = arith.constant dense<0.000000e+00> : vector<1x96xf32>
      %786 = tpu.matmul %785, %51, %cst_322 {dimension_numbers = #tpu.dot_dimension_numbers<[1], [0], [0], [1], [0, 0, 1, 1], [], []>} : vector<1x32xf32>, vector<32x96xf32>, vector<1x96xf32> -> vector<1x96xf32>
      %787 = arith.addf %786, %52 : vector<1x96xf32>
      %788 = vector.extract_strided_slice %784 {offsets = [0, 0], sizes = [1, 32], strides = [1, 1]} : vector<1x96xf32> to vector<1x32xf32>
      %789 = vector.extract_strided_slice %787 {offsets = [0, 0], sizes = [1, 32], strides = [1, 1]} : vector<1x96xf32> to vector<1x32xf32>
      %790 = arith.addf %788, %789 : vector<1x32xf32>
      %791 = arith.negf %790 : vector<1x32xf32>
      %792 = math.exp %791 : vector<1x32xf32>
      %cst_323 = arith.constant 1.000000e+00 : f32
      %793 = vector.broadcast %cst_323 : f32 to vector<1x32xf32>
      %794 = arith.addf %793, %792 : vector<1x32xf32>
      %795 = arith.divf %793, %794 : vector<1x32xf32>
      %796 = vector.extract_strided_slice %784 {offsets = [0, 32], sizes = [1, 32], strides = [1, 1]} : vector<1x96xf32> to vector<1x32xf32>
      %797 = vector.extract_strided_slice %787 {offsets = [0, 32], sizes = [1, 32], strides = [1, 1]} : vector<1x96xf32> to vector<1x32xf32>
      %798 = arith.addf %796, %797 : vector<1x32xf32>
      %799 = arith.negf %798 : vector<1x32xf32>
      %800 = math.exp %799 : vector<1x32xf32>
      %cst_324 = arith.constant 1.000000e+00 : f32
      %801 = vector.broadcast %cst_324 : f32 to vector<1x32xf32>
      %802 = arith.addf %801, %800 : vector<1x32xf32>
      %803 = arith.divf %801, %802 : vector<1x32xf32>
      %804 = vector.extract_strided_slice %784 {offsets = [0, 64], sizes = [1, 32], strides = [1, 1]} : vector<1x96xf32> to vector<1x32xf32>
      %805 = vector.extract_strided_slice %787 {offsets = [0, 64], sizes = [1, 32], strides = [1, 1]} : vector<1x96xf32> to vector<1x32xf32>
      %806 = arith.mulf %795, %805 : vector<1x32xf32>
      %807 = arith.addf %804, %806 : vector<1x32xf32>
      %808 = math.tanh %807 : vector<1x32xf32>
      %cst_325 = arith.constant 1.000000e+00 : f32
      %809 = vector.broadcast %cst_325 : f32 to vector<1x32xf32>
      %810 = arith.subf %809, %803 : vector<1x32xf32>
      %811 = arith.mulf %810, %808 : vector<1x32xf32>
      %812 = arith.mulf %803, %785 : vector<1x32xf32>
      %813 = arith.addf %811, %812 : vector<1x32xf32>
      %c0_326 = arith.constant 0 : index
      %c0_327 = arith.constant 0 : index
      %814 = vector.load %arg26[%c0_326, %c0_327] : memref<1x32xf32, #tpu.memory_space<vmem>>, vector<1x32xf32>
      tpu.vector_store %arg26[%c0_326, %c0_327], %813 {strides = array<i32>} : memref<1x32xf32, #tpu.memory_space<vmem>>, vector<1x32xf32>,
      %815 = arith.index_cast %782 : i32 to index
      %c0_328 = arith.constant 0 : index
      %816 = vector.load %arg25[%815, %c0_328] : memref<8x32xf32, #tpu.memory_space<vmem>>, vector<1x32xf32>
      tpu.vector_store %arg25[%815, %c0_328], %813 {strides = array<i32>} : memref<8x32xf32, #tpu.memory_space<vmem>>, vector<1x32xf32>,
    } else {
    }
    %c7_i32 = arith.constant 7 : i32
    %76 = arith.cmpi sgt, %0, %c7_i32 : i32
    %77 = arith.extui %76 : i1 to i32
    %c0_i32_62 = arith.constant 0 : i32
    %78 = arith.cmpi ne, %77, %c0_i32_62 : i32
    scf.if %78 {
      %c1_i32_317 = arith.constant 1 : i32
      %781 = arith.subi %0, %c1_i32_317 : i32
      %c7_i32_318 = arith.constant 7 : i32
      %782 = arith.subi %781, %c7_i32_318 : i32
      %783 = arith.index_cast %782 : i32 to index
      %c0_319 = arith.constant 0 : index
      %784 = vector.load %arg23[%783, %c0_319] : memref<8x96xf32, #tpu.memory_space<vmem>>, vector<1x96xf32>
      %c0_320 = arith.constant 0 : index
      %c0_321 = arith.constant 0 : index
      %785 = vector.load %arg26[%c0_320, %c0_321] : memref<1x32xf32, #tpu.memory_space<vmem>>, vector<1x32xf32>
      %cst_322 = arith.constant dense<0.000000e+00> : vector<1x96xf32>
      %786 = tpu.matmul %785, %51, %cst_322 {dimension_numbers = #tpu.dot_dimension_numbers<[1], [0], [0], [1], [0, 0, 1, 1], [], []>} : vector<1x32xf32>, vector<32x96xf32>, vector<1x96xf32> -> vector<1x96xf32>
      %787 = arith.addf %786, %52 : vector<1x96xf32>
      %788 = vector.extract_strided_slice %784 {offsets = [0, 0], sizes = [1, 32], strides = [1, 1]} : vector<1x96xf32> to vector<1x32xf32>
      %789 = vector.extract_strided_slice %787 {offsets = [0, 0], sizes = [1, 32], strides = [1, 1]} : vector<1x96xf32> to vector<1x32xf32>
      %790 = arith.addf %788, %789 : vector<1x32xf32>
      %791 = arith.negf %790 : vector<1x32xf32>
      %792 = math.exp %791 : vector<1x32xf32>
      %cst_323 = arith.constant 1.000000e+00 : f32
      %793 = vector.broadcast %cst_323 : f32 to vector<1x32xf32>
      %794 = arith.addf %793, %792 : vector<1x32xf32>
      %795 = arith.divf %793, %794 : vector<1x32xf32>
      %796 = vector.extract_strided_slice %784 {offsets = [0, 32], sizes = [1, 32], strides = [1, 1]} : vector<1x96xf32> to vector<1x32xf32>
      %797 = vector.extract_strided_slice %787 {offsets = [0, 32], sizes = [1, 32], strides = [1, 1]} : vector<1x96xf32> to vector<1x32xf32>
      %798 = arith.addf %796, %797 : vector<1x32xf32>
      %799 = arith.negf %798 : vector<1x32xf32>
      %800 = math.exp %799 : vector<1x32xf32>
      %cst_324 = arith.constant 1.000000e+00 : f32
      %801 = vector.broadcast %cst_324 : f32 to vector<1x32xf32>
      %802 = arith.addf %801, %800 : vector<1x32xf32>
      %803 = arith.divf %801, %802 : vector<1x32xf32>
      %804 = vector.extract_strided_slice %784 {offsets = [0, 64], sizes = [1, 32], strides = [1, 1]} : vector<1x96xf32> to vector<1x32xf32>
      %805 = vector.extract_strided_slice %787 {offsets = [0, 64], sizes = [1, 32], strides = [1, 1]} : vector<1x96xf32> to vector<1x32xf32>
      %806 = arith.mulf %795, %805 : vector<1x32xf32>
      %807 = arith.addf %804, %806 : vector<1x32xf32>
      %808 = math.tanh %807 : vector<1x32xf32>
      %cst_325 = arith.constant 1.000000e+00 : f32
      %809 = vector.broadcast %cst_325 : f32 to vector<1x32xf32>
      %810 = arith.subf %809, %803 : vector<1x32xf32>
      %811 = arith.mulf %810, %808 : vector<1x32xf32>
      %812 = arith.mulf %803, %785 : vector<1x32xf32>
      %813 = arith.addf %811, %812 : vector<1x32xf32>
      %c0_326 = arith.constant 0 : index
      %c0_327 = arith.constant 0 : index
      %814 = vector.load %arg26[%c0_326, %c0_327] : memref<1x32xf32, #tpu.memory_space<vmem>>, vector<1x32xf32>
      tpu.vector_store %arg26[%c0_326, %c0_327], %813 {strides = array<i32>} : memref<1x32xf32, #tpu.memory_space<vmem>>, vector<1x32xf32>,
      %815 = arith.index_cast %782 : i32 to index
      %c0_328 = arith.constant 0 : index
      %816 = vector.load %arg25[%815, %c0_328] : memref<8x32xf32, #tpu.memory_space<vmem>>, vector<1x32xf32>
      tpu.vector_store %arg25[%815, %c0_328], %813 {strides = array<i32>} : memref<8x32xf32, #tpu.memory_space<vmem>>, vector<1x32xf32>,
    } else {
    }
    %c0_63 = arith.constant 0 : index
    %c0_64 = arith.constant 0 : index
    %79 = vector.load %arg4[%c0_63, %c0_64] : memref<32x96xf32, #tpu.memory_space<vmem>>, vector<32x96xf32>
    %c0_65 = arith.constant 0 : index
    %c0_66 = arith.constant 0 : index
    %80 = vector.load %arg6[%c0_65, %c0_66] : memref<1x96xf32, #tpu.memory_space<vmem>>, vector<1x96xf32>
    %cst_67 = arith.constant 0.000000e+00 : f32
    %81 = vector.broadcast %cst_67 : f32 to vector<1x32xf32>
    %c0_68 = arith.constant 0 : index
    %c0_69 = arith.constant 0 : index
    %82 = vector.load %arg26[%c0_68, %c0_69] : memref<1x32xf32, #tpu.memory_space<vmem>>, vector<1x32xf32>
    tpu.vector_store %arg26[%c0_68, %c0_69], %81 {strides = array<i32>} : memref<1x32xf32, #tpu.memory_space<vmem>>, vector<1x32xf32>,
    %c0_i32_70 = arith.constant 0 : i32
    %83 = arith.cmpi sgt, %0, %c0_i32_70 : i32
    %84 = arith.extui %83 : i1 to i32
    %c0_i32_71 = arith.constant 0 : i32
    %85 = arith.cmpi ne, %84, %c0_i32_71 : i32
    scf.if %85 {
      %c0_317 = arith.constant 0 : index
      %c0_318 = arith.constant 0 : index
      %781 = vector.load %arg22[%c0_317, %c0_318] : memref<8x96xf32, #tpu.memory_space<vmem>>, vector<1x96xf32>
      %c0_319 = arith.constant 0 : index
      %c0_320 = arith.constant 0 : index
      %782 = vector.load %arg26[%c0_319, %c0_320] : memref<1x32xf32, #tpu.memory_space<vmem>>, vector<1x32xf32>
      %cst_321 = arith.constant dense<0.000000e+00> : vector<1x96xf32>
      %783 = tpu.matmul %782, %79, %cst_321 {dimension_numbers = #tpu.dot_dimension_numbers<[1], [0], [0], [1], [0, 0, 1, 1], [], []>} : vector<1x32xf32>, vector<32x96xf32>, vector<1x96xf32> -> vector<1x96xf32>
      %784 = arith.addf %783, %80 : vector<1x96xf32>
      %785 = vector.extract_strided_slice %781 {offsets = [0, 0], sizes = [1, 32], strides = [1, 1]} : vector<1x96xf32> to vector<1x32xf32>
      %786 = vector.extract_strided_slice %784 {offsets = [0, 0], sizes = [1, 32], strides = [1, 1]} : vector<1x96xf32> to vector<1x32xf32>
      %787 = arith.addf %785, %786 : vector<1x32xf32>
      %788 = arith.negf %787 : vector<1x32xf32>
      %789 = math.exp %788 : vector<1x32xf32>
      %cst_322 = arith.constant 1.000000e+00 : f32
      %790 = vector.broadcast %cst_322 : f32 to vector<1x32xf32>
      %791 = arith.addf %790, %789 : vector<1x32xf32>
      %792 = arith.divf %790, %791 : vector<1x32xf32>
      %793 = vector.extract_strided_slice %781 {offsets = [0, 32], sizes = [1, 32], strides = [1, 1]} : vector<1x96xf32> to vector<1x32xf32>
      %794 = vector.extract_strided_slice %784 {offsets = [0, 32], sizes = [1, 32], strides = [1, 1]} : vector<1x96xf32> to vector<1x32xf32>
      %795 = arith.addf %793, %794 : vector<1x32xf32>
      %796 = arith.negf %795 : vector<1x32xf32>
      %797 = math.exp %796 : vector<1x32xf32>
      %cst_323 = arith.constant 1.000000e+00 : f32
      %798 = vector.broadcast %cst_323 : f32 to vector<1x32xf32>
      %799 = arith.addf %798, %797 : vector<1x32xf32>
      %800 = arith.divf %798, %799 : vector<1x32xf32>
      %801 = vector.extract_strided_slice %781 {offsets = [0, 64], sizes = [1, 32], strides = [1, 1]} : vector<1x96xf32> to vector<1x32xf32>
      %802 = vector.extract_strided_slice %784 {offsets = [0, 64], sizes = [1, 32], strides = [1, 1]} : vector<1x96xf32> to vector<1x32xf32>
      %803 = arith.mulf %792, %802 : vector<1x32xf32>
      %804 = arith.addf %801, %803 : vector<1x32xf32>
      %805 = math.tanh %804 : vector<1x32xf32>
      %cst_324 = arith.constant 1.000000e+00 : f32
      %806 = vector.broadcast %cst_324 : f32 to vector<1x32xf32>
      %807 = arith.subf %806, %800 : vector<1x32xf32>
      %808 = arith.mulf %807, %805 : vector<1x32xf32>
      %809 = arith.mulf %800, %782 : vector<1x32xf32>
      %810 = arith.addf %808, %809 : vector<1x32xf32>
      %c0_325 = arith.constant 0 : index
      %c0_326 = arith.constant 0 : index
      %811 = vector.load %arg26[%c0_325, %c0_326] : memref<1x32xf32, #tpu.memory_space<vmem>>, vector<1x32xf32>
      tpu.vector_store %arg26[%c0_325, %c0_326], %810 {strides = array<i32>} : memref<1x32xf32, #tpu.memory_space<vmem>>, vector<1x32xf32>,
      %c0_327 = arith.constant 0 : index
      %c0_328 = arith.constant 0 : index
      %812 = vector.load %arg24[%c0_327, %c0_328] : memref<8x32xf32, #tpu.memory_space<vmem>>, vector<1x32xf32>
      tpu.vector_store %arg24[%c0_327, %c0_328], %810 {strides = array<i32>} : memref<8x32xf32, #tpu.memory_space<vmem>>, vector<1x32xf32>,
    } else {
    }
    %c1_i32_72 = arith.constant 1 : i32
    %86 = arith.cmpi sgt, %0, %c1_i32_72 : i32
    %87 = arith.extui %86 : i1 to i32
    %c0_i32_73 = arith.constant 0 : i32
    %88 = arith.cmpi ne, %87, %c0_i32_73 : i32
    scf.if %88 {
      %c1_317 = arith.constant 1 : index
      %c0_318 = arith.constant 0 : index
      %781 = vector.load %arg22[%c1_317, %c0_318] : memref<8x96xf32, #tpu.memory_space<vmem>>, vector<1x96xf32>
      %c0_319 = arith.constant 0 : index
      %c0_320 = arith.constant 0 : index
      %782 = vector.load %arg26[%c0_319, %c0_320] : memref<1x32xf32, #tpu.memory_space<vmem>>, vector<1x32xf32>
      %cst_321 = arith.constant dense<0.000000e+00> : vector<1x96xf32>
      %783 = tpu.matmul %782, %79, %cst_321 {dimension_numbers = #tpu.dot_dimension_numbers<[1], [0], [0], [1], [0, 0, 1, 1], [], []>} : vector<1x32xf32>, vector<32x96xf32>, vector<1x96xf32> -> vector<1x96xf32>
      %784 = arith.addf %783, %80 : vector<1x96xf32>
      %785 = vector.extract_strided_slice %781 {offsets = [0, 0], sizes = [1, 32], strides = [1, 1]} : vector<1x96xf32> to vector<1x32xf32>
      %786 = vector.extract_strided_slice %784 {offsets = [0, 0], sizes = [1, 32], strides = [1, 1]} : vector<1x96xf32> to vector<1x32xf32>
      %787 = arith.addf %785, %786 : vector<1x32xf32>
      %788 = arith.negf %787 : vector<1x32xf32>
      %789 = math.exp %788 : vector<1x32xf32>
      %cst_322 = arith.constant 1.000000e+00 : f32
      %790 = vector.broadcast %cst_322 : f32 to vector<1x32xf32>
      %791 = arith.addf %790, %789 : vector<1x32xf32>
      %792 = arith.divf %790, %791 : vector<1x32xf32>
      %793 = vector.extract_strided_slice %781 {offsets = [0, 32], sizes = [1, 32], strides = [1, 1]} : vector<1x96xf32> to vector<1x32xf32>
      %794 = vector.extract_strided_slice %784 {offsets = [0, 32], sizes = [1, 32], strides = [1, 1]} : vector<1x96xf32> to vector<1x32xf32>
      %795 = arith.addf %793, %794 : vector<1x32xf32>
      %796 = arith.negf %795 : vector<1x32xf32>
      %797 = math.exp %796 : vector<1x32xf32>
      %cst_323 = arith.constant 1.000000e+00 : f32
      %798 = vector.broadcast %cst_323 : f32 to vector<1x32xf32>
      %799 = arith.addf %798, %797 : vector<1x32xf32>
      %800 = arith.divf %798, %799 : vector<1x32xf32>
      %801 = vector.extract_strided_slice %781 {offsets = [0, 64], sizes = [1, 32], strides = [1, 1]} : vector<1x96xf32> to vector<1x32xf32>
      %802 = vector.extract_strided_slice %784 {offsets = [0, 64], sizes = [1, 32], strides = [1, 1]} : vector<1x96xf32> to vector<1x32xf32>
      %803 = arith.mulf %792, %802 : vector<1x32xf32>
      %804 = arith.addf %801, %803 : vector<1x32xf32>
      %805 = math.tanh %804 : vector<1x32xf32>
      %cst_324 = arith.constant 1.000000e+00 : f32
      %806 = vector.broadcast %cst_324 : f32 to vector<1x32xf32>
      %807 = arith.subf %806, %800 : vector<1x32xf32>
      %808 = arith.mulf %807, %805 : vector<1x32xf32>
      %809 = arith.mulf %800, %782 : vector<1x32xf32>
      %810 = arith.addf %808, %809 : vector<1x32xf32>
      %c0_325 = arith.constant 0 : index
      %c0_326 = arith.constant 0 : index
      %811 = vector.load %arg26[%c0_325, %c0_326] : memref<1x32xf32, #tpu.memory_space<vmem>>, vector<1x32xf32>
      tpu.vector_store %arg26[%c0_325, %c0_326], %810 {strides = array<i32>} : memref<1x32xf32, #tpu.memory_space<vmem>>, vector<1x32xf32>,
      %c1_327 = arith.constant 1 : index
      %c0_328 = arith.constant 0 : index
      %812 = vector.load %arg24[%c1_327, %c0_328] : memref<8x32xf32, #tpu.memory_space<vmem>>, vector<1x32xf32>
      tpu.vector_store %arg24[%c1_327, %c0_328], %810 {strides = array<i32>} : memref<8x32xf32, #tpu.memory_space<vmem>>, vector<1x32xf32>,
    } else {
    }
    %c2_i32_74 = arith.constant 2 : i32
    %89 = arith.cmpi sgt, %0, %c2_i32_74 : i32
    %90 = arith.extui %89 : i1 to i32
    %c0_i32_75 = arith.constant 0 : i32
    %91 = arith.cmpi ne, %90, %c0_i32_75 : i32
    scf.if %91 {
      %c2_317 = arith.constant 2 : index
      %c0_318 = arith.constant 0 : index
      %781 = vector.load %arg22[%c2_317, %c0_318] : memref<8x96xf32, #tpu.memory_space<vmem>>, vector<1x96xf32>
      %c0_319 = arith.constant 0 : index
      %c0_320 = arith.constant 0 : index
      %782 = vector.load %arg26[%c0_319, %c0_320] : memref<1x32xf32, #tpu.memory_space<vmem>>, vector<1x32xf32>
      %cst_321 = arith.constant dense<0.000000e+00> : vector<1x96xf32>
      %783 = tpu.matmul %782, %79, %cst_321 {dimension_numbers = #tpu.dot_dimension_numbers<[1], [0], [0], [1], [0, 0, 1, 1], [], []>} : vector<1x32xf32>, vector<32x96xf32>, vector<1x96xf32> -> vector<1x96xf32>
      %784 = arith.addf %783, %80 : vector<1x96xf32>
      %785 = vector.extract_strided_slice %781 {offsets = [0, 0], sizes = [1, 32], strides = [1, 1]} : vector<1x96xf32> to vector<1x32xf32>
      %786 = vector.extract_strided_slice %784 {offsets = [0, 0], sizes = [1, 32], strides = [1, 1]} : vector<1x96xf32> to vector<1x32xf32>
      %787 = arith.addf %785, %786 : vector<1x32xf32>
      %788 = arith.negf %787 : vector<1x32xf32>
      %789 = math.exp %788 : vector<1x32xf32>
      %cst_322 = arith.constant 1.000000e+00 : f32
      %790 = vector.broadcast %cst_322 : f32 to vector<1x32xf32>
      %791 = arith.addf %790, %789 : vector<1x32xf32>
      %792 = arith.divf %790, %791 : vector<1x32xf32>
      %793 = vector.extract_strided_slice %781 {offsets = [0, 32], sizes = [1, 32], strides = [1, 1]} : vector<1x96xf32> to vector<1x32xf32>
      %794 = vector.extract_strided_slice %784 {offsets = [0, 32], sizes = [1, 32], strides = [1, 1]} : vector<1x96xf32> to vector<1x32xf32>
      %795 = arith.addf %793, %794 : vector<1x32xf32>
      %796 = arith.negf %795 : vector<1x32xf32>
      %797 = math.exp %796 : vector<1x32xf32>
      %cst_323 = arith.constant 1.000000e+00 : f32
      %798 = vector.broadcast %cst_323 : f32 to vector<1x32xf32>
      %799 = arith.addf %798, %797 : vector<1x32xf32>
      %800 = arith.divf %798, %799 : vector<1x32xf32>
      %801 = vector.extract_strided_slice %781 {offsets = [0, 64], sizes = [1, 32], strides = [1, 1]} : vector<1x96xf32> to vector<1x32xf32>
      %802 = vector.extract_strided_slice %784 {offsets = [0, 64], sizes = [1, 32], strides = [1, 1]} : vector<1x96xf32> to vector<1x32xf32>
      %803 = arith.mulf %792, %802 : vector<1x32xf32>
      %804 = arith.addf %801, %803 : vector<1x32xf32>
      %805 = math.tanh %804 : vector<1x32xf32>
      %cst_324 = arith.constant 1.000000e+00 : f32
      %806 = vector.broadcast %cst_324 : f32 to vector<1x32xf32>
      %807 = arith.subf %806, %800 : vector<1x32xf32>
      %808 = arith.mulf %807, %805 : vector<1x32xf32>
      %809 = arith.mulf %800, %782 : vector<1x32xf32>
      %810 = arith.addf %808, %809 : vector<1x32xf32>
      %c0_325 = arith.constant 0 : index
      %c0_326 = arith.constant 0 : index
      %811 = vector.load %arg26[%c0_325, %c0_326] : memref<1x32xf32, #tpu.memory_space<vmem>>, vector<1x32xf32>
      tpu.vector_store %arg26[%c0_325, %c0_326], %810 {strides = array<i32>} : memref<1x32xf32, #tpu.memory_space<vmem>>, vector<1x32xf32>,
      %c2_327 = arith.constant 2 : index
      %c0_328 = arith.constant 0 : index
      %812 = vector.load %arg24[%c2_327, %c0_328] : memref<8x32xf32, #tpu.memory_space<vmem>>, vector<1x32xf32>
      tpu.vector_store %arg24[%c2_327, %c0_328], %810 {strides = array<i32>} : memref<8x32xf32, #tpu.memory_space<vmem>>, vector<1x32xf32>,
    } else {
    }
    %c3_i32_76 = arith.constant 3 : i32
    %92 = arith.cmpi sgt, %0, %c3_i32_76 : i32
    %93 = arith.extui %92 : i1 to i32
    %c0_i32_77 = arith.constant 0 : i32
    %94 = arith.cmpi ne, %93, %c0_i32_77 : i32
    scf.if %94 {
      %c3_317 = arith.constant 3 : index
      %c0_318 = arith.constant 0 : index
      %781 = vector.load %arg22[%c3_317, %c0_318] : memref<8x96xf32, #tpu.memory_space<vmem>>, vector<1x96xf32>
      %c0_319 = arith.constant 0 : index
      %c0_320 = arith.constant 0 : index
      %782 = vector.load %arg26[%c0_319, %c0_320] : memref<1x32xf32, #tpu.memory_space<vmem>>, vector<1x32xf32>
      %cst_321 = arith.constant dense<0.000000e+00> : vector<1x96xf32>
      %783 = tpu.matmul %782, %79, %cst_321 {dimension_numbers = #tpu.dot_dimension_numbers<[1], [0], [0], [1], [0, 0, 1, 1], [], []>} : vector<1x32xf32>, vector<32x96xf32>, vector<1x96xf32> -> vector<1x96xf32>
      %784 = arith.addf %783, %80 : vector<1x96xf32>
      %785 = vector.extract_strided_slice %781 {offsets = [0, 0], sizes = [1, 32], strides = [1, 1]} : vector<1x96xf32> to vector<1x32xf32>
      %786 = vector.extract_strided_slice %784 {offsets = [0, 0], sizes = [1, 32], strides = [1, 1]} : vector<1x96xf32> to vector<1x32xf32>
      %787 = arith.addf %785, %786 : vector<1x32xf32>
      %788 = arith.negf %787 : vector<1x32xf32>
      %789 = math.exp %788 : vector<1x32xf32>
      %cst_322 = arith.constant 1.000000e+00 : f32
      %790 = vector.broadcast %cst_322 : f32 to vector<1x32xf32>
      %791 = arith.addf %790, %789 : vector<1x32xf32>
      %792 = arith.divf %790, %791 : vector<1x32xf32>
      %793 = vector.extract_strided_slice %781 {offsets = [0, 32], sizes = [1, 32], strides = [1, 1]} : vector<1x96xf32> to vector<1x32xf32>
      %794 = vector.extract_strided_slice %784 {offsets = [0, 32], sizes = [1, 32], strides = [1, 1]} : vector<1x96xf32> to vector<1x32xf32>
      %795 = arith.addf %793, %794 : vector<1x32xf32>
      %796 = arith.negf %795 : vector<1x32xf32>
      %797 = math.exp %796 : vector<1x32xf32>
      %cst_323 = arith.constant 1.000000e+00 : f32
      %798 = vector.broadcast %cst_323 : f32 to vector<1x32xf32>
      %799 = arith.addf %798, %797 : vector<1x32xf32>
      %800 = arith.divf %798, %799 : vector<1x32xf32>
      %801 = vector.extract_strided_slice %781 {offsets = [0, 64], sizes = [1, 32], strides = [1, 1]} : vector<1x96xf32> to vector<1x32xf32>
      %802 = vector.extract_strided_slice %784 {offsets = [0, 64], sizes = [1, 32], strides = [1, 1]} : vector<1x96xf32> to vector<1x32xf32>
      %803 = arith.mulf %792, %802 : vector<1x32xf32>
      %804 = arith.addf %801, %803 : vector<1x32xf32>
      %805 = math.tanh %804 : vector<1x32xf32>
      %cst_324 = arith.constant 1.000000e+00 : f32
      %806 = vector.broadcast %cst_324 : f32 to vector<1x32xf32>
      %807 = arith.subf %806, %800 : vector<1x32xf32>
      %808 = arith.mulf %807, %805 : vector<1x32xf32>
      %809 = arith.mulf %800, %782 : vector<1x32xf32>
      %810 = arith.addf %808, %809 : vector<1x32xf32>
      %c0_325 = arith.constant 0 : index
      %c0_326 = arith.constant 0 : index
      %811 = vector.load %arg26[%c0_325, %c0_326] : memref<1x32xf32, #tpu.memory_space<vmem>>, vector<1x32xf32>
      tpu.vector_store %arg26[%c0_325, %c0_326], %810 {strides = array<i32>} : memref<1x32xf32, #tpu.memory_space<vmem>>, vector<1x32xf32>,
      %c3_327 = arith.constant 3 : index
      %c0_328 = arith.constant 0 : index
      %812 = vector.load %arg24[%c3_327, %c0_328] : memref<8x32xf32, #tpu.memory_space<vmem>>, vector<1x32xf32>
      tpu.vector_store %arg24[%c3_327, %c0_328], %810 {strides = array<i32>} : memref<8x32xf32, #tpu.memory_space<vmem>>, vector<1x32xf32>,
    } else {
    }
    %c4_i32_78 = arith.constant 4 : i32
    %95 = arith.cmpi sgt, %0, %c4_i32_78 : i32
    %96 = arith.extui %95 : i1 to i32
    %c0_i32_79 = arith.constant 0 : i32
    %97 = arith.cmpi ne, %96, %c0_i32_79 : i32
    scf.if %97 {
      %c4_317 = arith.constant 4 : index
      %c0_318 = arith.constant 0 : index
      %781 = vector.load %arg22[%c4_317, %c0_318] : memref<8x96xf32, #tpu.memory_space<vmem>>, vector<1x96xf32>
      %c0_319 = arith.constant 0 : index
      %c0_320 = arith.constant 0 : index
      %782 = vector.load %arg26[%c0_319, %c0_320] : memref<1x32xf32, #tpu.memory_space<vmem>>, vector<1x32xf32>
      %cst_321 = arith.constant dense<0.000000e+00> : vector<1x96xf32>
      %783 = tpu.matmul %782, %79, %cst_321 {dimension_numbers = #tpu.dot_dimension_numbers<[1], [0], [0], [1], [0, 0, 1, 1], [], []>} : vector<1x32xf32>, vector<32x96xf32>, vector<1x96xf32> -> vector<1x96xf32>
      %784 = arith.addf %783, %80 : vector<1x96xf32>
      %785 = vector.extract_strided_slice %781 {offsets = [0, 0], sizes = [1, 32], strides = [1, 1]} : vector<1x96xf32> to vector<1x32xf32>
      %786 = vector.extract_strided_slice %784 {offsets = [0, 0], sizes = [1, 32], strides = [1, 1]} : vector<1x96xf32> to vector<1x32xf32>
      %787 = arith.addf %785, %786 : vector<1x32xf32>
      %788 = arith.negf %787 : vector<1x32xf32>
      %789 = math.exp %788 : vector<1x32xf32>
      %cst_322 = arith.constant 1.000000e+00 : f32
      %790 = vector.broadcast %cst_322 : f32 to vector<1x32xf32>
      %791 = arith.addf %790, %789 : vector<1x32xf32>
      %792 = arith.divf %790, %791 : vector<1x32xf32>
      %793 = vector.extract_strided_slice %781 {offsets = [0, 32], sizes = [1, 32], strides = [1, 1]} : vector<1x96xf32> to vector<1x32xf32>
      %794 = vector.extract_strided_slice %784 {offsets = [0, 32], sizes = [1, 32], strides = [1, 1]} : vector<1x96xf32> to vector<1x32xf32>
      %795 = arith.addf %793, %794 : vector<1x32xf32>
      %796 = arith.negf %795 : vector<1x32xf32>
      %797 = math.exp %796 : vector<1x32xf32>
      %cst_323 = arith.constant 1.000000e+00 : f32
      %798 = vector.broadcast %cst_323 : f32 to vector<1x32xf32>
      %799 = arith.addf %798, %797 : vector<1x32xf32>
      %800 = arith.divf %798, %799 : vector<1x32xf32>
      %801 = vector.extract_strided_slice %781 {offsets = [0, 64], sizes = [1, 32], strides = [1, 1]} : vector<1x96xf32> to vector<1x32xf32>
      %802 = vector.extract_strided_slice %784 {offsets = [0, 64], sizes = [1, 32], strides = [1, 1]} : vector<1x96xf32> to vector<1x32xf32>
      %803 = arith.mulf %792, %802 : vector<1x32xf32>
      %804 = arith.addf %801, %803 : vector<1x32xf32>
      %805 = math.tanh %804 : vector<1x32xf32>
      %cst_324 = arith.constant 1.000000e+00 : f32
      %806 = vector.broadcast %cst_324 : f32 to vector<1x32xf32>
      %807 = arith.subf %806, %800 : vector<1x32xf32>
      %808 = arith.mulf %807, %805 : vector<1x32xf32>
      %809 = arith.mulf %800, %782 : vector<1x32xf32>
      %810 = arith.addf %808, %809 : vector<1x32xf32>
      %c0_325 = arith.constant 0 : index
      %c0_326 = arith.constant 0 : index
      %811 = vector.load %arg26[%c0_325, %c0_326] : memref<1x32xf32, #tpu.memory_space<vmem>>, vector<1x32xf32>
      tpu.vector_store %arg26[%c0_325, %c0_326], %810 {strides = array<i32>} : memref<1x32xf32, #tpu.memory_space<vmem>>, vector<1x32xf32>,
      %c4_327 = arith.constant 4 : index
      %c0_328 = arith.constant 0 : index
      %812 = vector.load %arg24[%c4_327, %c0_328] : memref<8x32xf32, #tpu.memory_space<vmem>>, vector<1x32xf32>
      tpu.vector_store %arg24[%c4_327, %c0_328], %810 {strides = array<i32>} : memref<8x32xf32, #tpu.memory_space<vmem>>, vector<1x32xf32>,
    } else {
    }
    %c5_i32_80 = arith.constant 5 : i32
    %98 = arith.cmpi sgt, %0, %c5_i32_80 : i32
    %99 = arith.extui %98 : i1 to i32
    %c0_i32_81 = arith.constant 0 : i32
    %100 = arith.cmpi ne, %99, %c0_i32_81 : i32
    scf.if %100 {
      %c5_317 = arith.constant 5 : index
      %c0_318 = arith.constant 0 : index
      %781 = vector.load %arg22[%c5_317, %c0_318] : memref<8x96xf32, #tpu.memory_space<vmem>>, vector<1x96xf32>
      %c0_319 = arith.constant 0 : index
      %c0_320 = arith.constant 0 : index
      %782 = vector.load %arg26[%c0_319, %c0_320] : memref<1x32xf32, #tpu.memory_space<vmem>>, vector<1x32xf32>
      %cst_321 = arith.constant dense<0.000000e+00> : vector<1x96xf32>
      %783 = tpu.matmul %782, %79, %cst_321 {dimension_numbers = #tpu.dot_dimension_numbers<[1], [0], [0], [1], [0, 0, 1, 1], [], []>} : vector<1x32xf32>, vector<32x96xf32>, vector<1x96xf32> -> vector<1x96xf32>
      %784 = arith.addf %783, %80 : vector<1x96xf32>
      %785 = vector.extract_strided_slice %781 {offsets = [0, 0], sizes = [1, 32], strides = [1, 1]} : vector<1x96xf32> to vector<1x32xf32>
      %786 = vector.extract_strided_slice %784 {offsets = [0, 0], sizes = [1, 32], strides = [1, 1]} : vector<1x96xf32> to vector<1x32xf32>
      %787 = arith.addf %785, %786 : vector<1x32xf32>
      %788 = arith.negf %787 : vector<1x32xf32>
      %789 = math.exp %788 : vector<1x32xf32>
      %cst_322 = arith.constant 1.000000e+00 : f32
      %790 = vector.broadcast %cst_322 : f32 to vector<1x32xf32>
      %791 = arith.addf %790, %789 : vector<1x32xf32>
      %792 = arith.divf %790, %791 : vector<1x32xf32>
      %793 = vector.extract_strided_slice %781 {offsets = [0, 32], sizes = [1, 32], strides = [1, 1]} : vector<1x96xf32> to vector<1x32xf32>
      %794 = vector.extract_strided_slice %784 {offsets = [0, 32], sizes = [1, 32], strides = [1, 1]} : vector<1x96xf32> to vector<1x32xf32>
      %795 = arith.addf %793, %794 : vector<1x32xf32>
      %796 = arith.negf %795 : vector<1x32xf32>
      %797 = math.exp %796 : vector<1x32xf32>
      %cst_323 = arith.constant 1.000000e+00 : f32
      %798 = vector.broadcast %cst_323 : f32 to vector<1x32xf32>
      %799 = arith.addf %798, %797 : vector<1x32xf32>
      %800 = arith.divf %798, %799 : vector<1x32xf32>
      %801 = vector.extract_strided_slice %781 {offsets = [0, 64], sizes = [1, 32], strides = [1, 1]} : vector<1x96xf32> to vector<1x32xf32>
      %802 = vector.extract_strided_slice %784 {offsets = [0, 64], sizes = [1, 32], strides = [1, 1]} : vector<1x96xf32> to vector<1x32xf32>
      %803 = arith.mulf %792, %802 : vector<1x32xf32>
      %804 = arith.addf %801, %803 : vector<1x32xf32>
      %805 = math.tanh %804 : vector<1x32xf32>
      %cst_324 = arith.constant 1.000000e+00 : f32
      %806 = vector.broadcast %cst_324 : f32 to vector<1x32xf32>
      %807 = arith.subf %806, %800 : vector<1x32xf32>
      %808 = arith.mulf %807, %805 : vector<1x32xf32>
      %809 = arith.mulf %800, %782 : vector<1x32xf32>
      %810 = arith.addf %808, %809 : vector<1x32xf32>
      %c0_325 = arith.constant 0 : index
      %c0_326 = arith.constant 0 : index
      %811 = vector.load %arg26[%c0_325, %c0_326] : memref<1x32xf32, #tpu.memory_space<vmem>>, vector<1x32xf32>
      tpu.vector_store %arg26[%c0_325, %c0_326], %810 {strides = array<i32>} : memref<1x32xf32, #tpu.memory_space<vmem>>, vector<1x32xf32>,
      %c5_327 = arith.constant 5 : index
      %c0_328 = arith.constant 0 : index
      %812 = vector.load %arg24[%c5_327, %c0_328] : memref<8x32xf32, #tpu.memory_space<vmem>>, vector<1x32xf32>
      tpu.vector_store %arg24[%c5_327, %c0_328], %810 {strides = array<i32>} : memref<8x32xf32, #tpu.memory_space<vmem>>, vector<1x32xf32>,
    } else {
    }
    %c6_i32_82 = arith.constant 6 : i32
    %101 = arith.cmpi sgt, %0, %c6_i32_82 : i32
    %102 = arith.extui %101 : i1 to i32
    %c0_i32_83 = arith.constant 0 : i32
    %103 = arith.cmpi ne, %102, %c0_i32_83 : i32
    scf.if %103 {
      %c6_317 = arith.constant 6 : index
      %c0_318 = arith.constant 0 : index
      %781 = vector.load %arg22[%c6_317, %c0_318] : memref<8x96xf32, #tpu.memory_space<vmem>>, vector<1x96xf32>
      %c0_319 = arith.constant 0 : index
      %c0_320 = arith.constant 0 : index
      %782 = vector.load %arg26[%c0_319, %c0_320] : memref<1x32xf32, #tpu.memory_space<vmem>>, vector<1x32xf32>
      %cst_321 = arith.constant dense<0.000000e+00> : vector<1x96xf32>
      %783 = tpu.matmul %782, %79, %cst_321 {dimension_numbers = #tpu.dot_dimension_numbers<[1], [0], [0], [1], [0, 0, 1, 1], [], []>} : vector<1x32xf32>, vector<32x96xf32>, vector<1x96xf32> -> vector<1x96xf32>
      %784 = arith.addf %783, %80 : vector<1x96xf32>
      %785 = vector.extract_strided_slice %781 {offsets = [0, 0], sizes = [1, 32], strides = [1, 1]} : vector<1x96xf32> to vector<1x32xf32>
      %786 = vector.extract_strided_slice %784 {offsets = [0, 0], sizes = [1, 32], strides = [1, 1]} : vector<1x96xf32> to vector<1x32xf32>
      %787 = arith.addf %785, %786 : vector<1x32xf32>
      %788 = arith.negf %787 : vector<1x32xf32>
      %789 = math.exp %788 : vector<1x32xf32>
      %cst_322 = arith.constant 1.000000e+00 : f32
      %790 = vector.broadcast %cst_322 : f32 to vector<1x32xf32>
      %791 = arith.addf %790, %789 : vector<1x32xf32>
      %792 = arith.divf %790, %791 : vector<1x32xf32>
      %793 = vector.extract_strided_slice %781 {offsets = [0, 32], sizes = [1, 32], strides = [1, 1]} : vector<1x96xf32> to vector<1x32xf32>
      %794 = vector.extract_strided_slice %784 {offsets = [0, 32], sizes = [1, 32], strides = [1, 1]} : vector<1x96xf32> to vector<1x32xf32>
      %795 = arith.addf %793, %794 : vector<1x32xf32>
      %796 = arith.negf %795 : vector<1x32xf32>
      %797 = math.exp %796 : vector<1x32xf32>
      %cst_323 = arith.constant 1.000000e+00 : f32
      %798 = vector.broadcast %cst_323 : f32 to vector<1x32xf32>
      %799 = arith.addf %798, %797 : vector<1x32xf32>
      %800 = arith.divf %798, %799 : vector<1x32xf32>
      %801 = vector.extract_strided_slice %781 {offsets = [0, 64], sizes = [1, 32], strides = [1, 1]} : vector<1x96xf32> to vector<1x32xf32>
      %802 = vector.extract_strided_slice %784 {offsets = [0, 64], sizes = [1, 32], strides = [1, 1]} : vector<1x96xf32> to vector<1x32xf32>
      %803 = arith.mulf %792, %802 : vector<1x32xf32>
      %804 = arith.addf %801, %803 : vector<1x32xf32>
      %805 = math.tanh %804 : vector<1x32xf32>
      %cst_324 = arith.constant 1.000000e+00 : f32
      %806 = vector.broadcast %cst_324 : f32 to vector<1x32xf32>
      %807 = arith.subf %806, %800 : vector<1x32xf32>
      %808 = arith.mulf %807, %805 : vector<1x32xf32>
      %809 = arith.mulf %800, %782 : vector<1x32xf32>
      %810 = arith.addf %808, %809 : vector<1x32xf32>
      %c0_325 = arith.constant 0 : index
      %c0_326 = arith.constant 0 : index
      %811 = vector.load %arg26[%c0_325, %c0_326] : memref<1x32xf32, #tpu.memory_space<vmem>>, vector<1x32xf32>
      tpu.vector_store %arg26[%c0_325, %c0_326], %810 {strides = array<i32>} : memref<1x32xf32, #tpu.memory_space<vmem>>, vector<1x32xf32>,
      %c6_327 = arith.constant 6 : index
      %c0_328 = arith.constant 0 : index
      %812 = vector.load %arg24[%c6_327, %c0_328] : memref<8x32xf32, #tpu.memory_space<vmem>>, vector<1x32xf32>
      tpu.vector_store %arg24[%c6_327, %c0_328], %810 {strides = array<i32>} : memref<8x32xf32, #tpu.memory_space<vmem>>, vector<1x32xf32>,
    } else {
    }
    %c7_i32_84 = arith.constant 7 : i32
    %104 = arith.cmpi sgt, %0, %c7_i32_84 : i32
    %105 = arith.extui %104 : i1 to i32
    %c0_i32_85 = arith.constant 0 : i32
    %106 = arith.cmpi ne, %105, %c0_i32_85 : i32
    scf.if %106 {
      %c7_317 = arith.constant 7 : index
      %c0_318 = arith.constant 0 : index
      %781 = vector.load %arg22[%c7_317, %c0_318] : memref<8x96xf32, #tpu.memory_space<vmem>>, vector<1x96xf32>
      %c0_319 = arith.constant 0 : index
      %c0_320 = arith.constant 0 : index
      %782 = vector.load %arg26[%c0_319, %c0_320] : memref<1x32xf32, #tpu.memory_space<vmem>>, vector<1x32xf32>
      %cst_321 = arith.constant dense<0.000000e+00> : vector<1x96xf32>
      %783 = tpu.matmul %782, %79, %cst_321 {dimension_numbers = #tpu.dot_dimension_numbers<[1], [0], [0], [1], [0, 0, 1, 1], [], []>} : vector<1x32xf32>, vector<32x96xf32>, vector<1x96xf32> -> vector<1x96xf32>
      %784 = arith.addf %783, %80 : vector<1x96xf32>
      %785 = vector.extract_strided_slice %781 {offsets = [0, 0], sizes = [1, 32], strides = [1, 1]} : vector<1x96xf32> to vector<1x32xf32>
      %786 = vector.extract_strided_slice %784 {offsets = [0, 0], sizes = [1, 32], strides = [1, 1]} : vector<1x96xf32> to vector<1x32xf32>
      %787 = arith.addf %785, %786 : vector<1x32xf32>
      %788 = arith.negf %787 : vector<1x32xf32>
      %789 = math.exp %788 : vector<1x32xf32>
      %cst_322 = arith.constant 1.000000e+00 : f32
      %790 = vector.broadcast %cst_322 : f32 to vector<1x32xf32>
      %791 = arith.addf %790, %789 : vector<1x32xf32>
      %792 = arith.divf %790, %791 : vector<1x32xf32>
      %793 = vector.extract_strided_slice %781 {offsets = [0, 32], sizes = [1, 32], strides = [1, 1]} : vector<1x96xf32> to vector<1x32xf32>
      %794 = vector.extract_strided_slice %784 {offsets = [0, 32], sizes = [1, 32], strides = [1, 1]} : vector<1x96xf32> to vector<1x32xf32>
      %795 = arith.addf %793, %794 : vector<1x32xf32>
      %796 = arith.negf %795 : vector<1x32xf32>
      %797 = math.exp %796 : vector<1x32xf32>
      %cst_323 = arith.constant 1.000000e+00 : f32
      %798 = vector.broadcast %cst_323 : f32 to vector<1x32xf32>
      %799 = arith.addf %798, %797 : vector<1x32xf32>
      %800 = arith.divf %798, %799 : vector<1x32xf32>
      %801 = vector.extract_strided_slice %781 {offsets = [0, 64], sizes = [1, 32], strides = [1, 1]} : vector<1x96xf32> to vector<1x32xf32>
      %802 = vector.extract_strided_slice %784 {offsets = [0, 64], sizes = [1, 32], strides = [1, 1]} : vector<1x96xf32> to vector<1x32xf32>
      %803 = arith.mulf %792, %802 : vector<1x32xf32>
      %804 = arith.addf %801, %803 : vector<1x32xf32>
      %805 = math.tanh %804 : vector<1x32xf32>
      %cst_324 = arith.constant 1.000000e+00 : f32
      %806 = vector.broadcast %cst_324 : f32 to vector<1x32xf32>
      %807 = arith.subf %806, %800 : vector<1x32xf32>
      %808 = arith.mulf %807, %805 : vector<1x32xf32>
      %809 = arith.mulf %800, %782 : vector<1x32xf32>
      %810 = arith.addf %808, %809 : vector<1x32xf32>
      %c0_325 = arith.constant 0 : index
      %c0_326 = arith.constant 0 : index
      %811 = vector.load %arg26[%c0_325, %c0_326] : memref<1x32xf32, #tpu.memory_space<vmem>>, vector<1x32xf32>
      tpu.vector_store %arg26[%c0_325, %c0_326], %810 {strides = array<i32>} : memref<1x32xf32, #tpu.memory_space<vmem>>, vector<1x32xf32>,
      %c7_327 = arith.constant 7 : index
      %c0_328 = arith.constant 0 : index
      %812 = vector.load %arg24[%c7_327, %c0_328] : memref<8x32xf32, #tpu.memory_space<vmem>>, vector<1x32xf32>
      tpu.vector_store %arg24[%c7_327, %c0_328], %810 {strides = array<i32>} : memref<8x32xf32, #tpu.memory_space<vmem>>, vector<1x32xf32>,
    } else {
    }
    %c0_86 = arith.constant 0 : index
    %c0_87 = arith.constant 0 : index
    %107 = vector.load %arg24[%c0_86, %c0_87] : memref<8x32xf32, #tpu.memory_space<vmem>>, vector<8x32xf32>
    %c0_88 = arith.constant 0 : index
    %c0_89 = arith.constant 0 : index
    %108 = vector.load %arg25[%c0_88, %c0_89] : memref<8x32xf32, #tpu.memory_space<vmem>>, vector<8x32xf32>
    %109 = arith.addf %107, %108 : vector<8x32xf32>
    %110 = tpu.transpose %109, [1, 0] : vector<8x32xf32> -> vector<32x8xf32>
    %c0_90 = arith.constant 0 : index
    %c0_91 = arith.constant 0 : index
    %111 = vector.load %arg11[%c0_90, %c0_91] : memref<32x96xf32, #tpu.memory_space<vmem>>, vector<32x96xf32>
    %c0_92 = arith.constant 0 : index
    %c0_93 = arith.constant 0 : index
    %112 = vector.load %arg12[%c0_92, %c0_93] : memref<32x96xf32, #tpu.memory_space<vmem>>, vector<32x96xf32>
    %c0_94 = arith.constant 0 : index
    %c0_95 = arith.constant 0 : index
    %113 = vector.load %arg13[%c0_94, %c0_95] : memref<1x96xf32, #tpu.memory_space<vmem>>, vector<1x96xf32>
    %c0_96 = arith.constant 0 : index
    %c0_97 = arith.constant 0 : index
    %114 = vector.load %arg14[%c0_96, %c0_97] : memref<1x96xf32, #tpu.memory_space<vmem>>, vector<1x96xf32>
    %c0_98 = arith.constant 0 : index
    %c0_99 = arith.constant 0 : index
    %115 = vector.load %arg15[%c0_98, %c0_99] : memref<64x32xf32, #tpu.memory_space<vmem>>, vector<32x32xf32>
    %c32 = arith.constant 32 : index
    %c0_100 = arith.constant 0 : index
    %116 = vector.load %arg15[%c32, %c0_100] : memref<64x32xf32, #tpu.memory_space<vmem>>, vector<32x32xf32>
    %c0_101 = arith.constant 0 : index
    %c0_102 = arith.constant 0 : index
    %117 = vector.load %arg16[%c0_101, %c0_102] : memref<1x32xf32, #tpu.memory_space<vmem>>, vector<1x32xf32>
    %c0_103 = arith.constant 0 : index
    %c0_104 = arith.constant 0 : index
    %118 = vector.load %arg17[%c0_103, %c0_104] : memref<32x128xf32, #tpu.memory_space<vmem>>, vector<32x128xf32>
    %c0_105 = arith.constant 0 : index
    %c0_106 = arith.constant 0 : index
    %119 = vector.load %arg18[%c0_105, %c0_106] : memref<1x128xf32, #tpu.memory_space<vmem>>, vector<1x128xf32>
    %120 = tpu.iota {dimensions = array<i32: 1>} : vector<1x8xi32>
    %121 = vector.broadcast %0 : i32 to vector<1x8xi32>
    %122 = arith.cmpi slt, %120, %121 : vector<1x8xi32>
    %123 = tpu.iota {dimensions = array<i32: 1>} : vector<1x128xi32>
    %c1_i32_107 = arith.constant 1 : i32
    %c0_108 = arith.constant 0 : index
    %124 = memref.load %arg27[%c0_108] : memref<1xi32, #tpu.memory_space<smem>>
    memref.store %c1_i32_107, %arg27[%c0_108] : memref<1xi32, #tpu.memory_space<smem>>
    %cst_109 = arith.constant -1.000000e+30 : f32
    %c0_i32_110 = arith.constant 0 : i32
    %c0_111 = arith.constant 0 : index
    %125 = memref.load %arg27[%c0_111] : memref<1xi32, #tpu.memory_space<smem>>
    %126 = arith.index_cast %125 : i32 to index
    %c0_112 = arith.constant 0 : index
    %127 = vector.load %arg2[%126, %c0_112] : memref<128x32xf32, #tpu.memory_space<vmem>>, vector<1x32xf32>
    %cst_113 = arith.constant dense<0.000000e+00> : vector<1x96xf32>
    %128 = tpu.matmul %127, %111, %cst_113 {dimension_numbers = #tpu.dot_dimension_numbers<[1], [0], [0], [1], [0, 0, 1, 1], [], []>} : vector<1x32xf32>, vector<32x96xf32>, vector<1x96xf32> -> vector<1x96xf32>
    %129 = arith.addf %128, %113 : vector<1x96xf32>
    %c0_114 = arith.constant 0 : index
    %c0_115 = arith.constant 0 : index
    %130 = vector.load %arg26[%c0_114, %c0_115] : memref<1x32xf32, #tpu.memory_space<vmem>>, vector<1x32xf32>
    %cst_116 = arith.constant dense<0.000000e+00> : vector<1x96xf32>
    %131 = tpu.matmul %130, %112, %cst_116 {dimension_numbers = #tpu.dot_dimension_numbers<[1], [0], [0], [1], [0, 0, 1, 1], [], []>} : vector<1x32xf32>, vector<32x96xf32>, vector<1x96xf32> -> vector<1x96xf32>
    %132 = arith.addf %131, %114 : vector<1x96xf32>
    %133 = vector.extract_strided_slice %129 {offsets = [0, 0], sizes = [1, 32], strides = [1, 1]} : vector<1x96xf32> to vector<1x32xf32>
    %134 = vector.extract_strided_slice %132 {offsets = [0, 0], sizes = [1, 32], strides = [1, 1]} : vector<1x96xf32> to vector<1x32xf32>
    %135 = arith.addf %133, %134 : vector<1x32xf32>
    %136 = arith.negf %135 : vector<1x32xf32>
    %137 = math.exp %136 : vector<1x32xf32>
    %cst_117 = arith.constant 1.000000e+00 : f32
    %138 = vector.broadcast %cst_117 : f32 to vector<1x32xf32>
    %139 = arith.addf %138, %137 : vector<1x32xf32>
    %140 = arith.divf %138, %139 : vector<1x32xf32>
    %141 = vector.extract_strided_slice %129 {offsets = [0, 32], sizes = [1, 32], strides = [1, 1]} : vector<1x96xf32> to vector<1x32xf32>
    %142 = vector.extract_strided_slice %132 {offsets = [0, 32], sizes = [1, 32], strides = [1, 1]} : vector<1x96xf32> to vector<1x32xf32>
    %143 = arith.addf %141, %142 : vector<1x32xf32>
    %144 = arith.negf %143 : vector<1x32xf32>
    %145 = math.exp %144 : vector<1x32xf32>
    %cst_118 = arith.constant 1.000000e+00 : f32
    %146 = vector.broadcast %cst_118 : f32 to vector<1x32xf32>
    %147 = arith.addf %146, %145 : vector<1x32xf32>
    %148 = arith.divf %146, %147 : vector<1x32xf32>
    %149 = vector.extract_strided_slice %129 {offsets = [0, 64], sizes = [1, 32], strides = [1, 1]} : vector<1x96xf32> to vector<1x32xf32>
    %150 = vector.extract_strided_slice %132 {offsets = [0, 64], sizes = [1, 32], strides = [1, 1]} : vector<1x96xf32> to vector<1x32xf32>
    %151 = arith.mulf %140, %150 : vector<1x32xf32>
    %152 = arith.addf %149, %151 : vector<1x32xf32>
    %153 = math.tanh %152 : vector<1x32xf32>
    %cst_119 = arith.constant 1.000000e+00 : f32
    %154 = vector.broadcast %cst_119 : f32 to vector<1x32xf32>
    %155 = arith.subf %154, %148 : vector<1x32xf32>
    %156 = arith.mulf %155, %153 : vector<1x32xf32>
    %157 = arith.mulf %148, %130 : vector<1x32xf32>
    %158 = arith.addf %156, %157 : vector<1x32xf32>
    %c0_120 = arith.constant 0 : index
    %c0_121 = arith.constant 0 : index
    %159 = vector.load %arg26[%c0_120, %c0_121] : memref<1x32xf32, #tpu.memory_space<vmem>>, vector<1x32xf32>
    tpu.vector_store %arg26[%c0_120, %c0_121], %158 {strides = array<i32>} : memref<1x32xf32, #tpu.memory_space<vmem>>, vector<1x32xf32>,
    %cst_122 = arith.constant dense<0.000000e+00> : vector<1x8xf32>
    %160 = tpu.matmul %158, %110, %cst_122 {dimension_numbers = #tpu.dot_dimension_numbers<[1], [0], [0], [1], [0, 0, 1, 1], [], []>} : vector<1x32xf32>, vector<32x8xf32>, vector<1x8xf32> -> vector<1x8xf32>
    %161 = vector.broadcast %cst_109 : f32 to vector<1x8xf32>
    %162 = arith.select %122, %160, %161 : vector<1x8xi1>, vector<1x8xf32>
    %cst_123 = arith.constant dense<0xFF800000> : vector<1xf32>
    %163 = vector.multi_reduction <maximumf>, %162, %cst_123 [1] : vector<1x8xf32> to vector<1xf32>
    %cst_124 = arith.constant 0xFF800000 : f32
    %164 = vector.broadcast %cst_124 : f32 to vector<1xf32>
    %165 = arith.maximumf %164, %163 : vector<1xf32>
    %166 = vector.shape_cast %165 : vector<1xf32> to vector<1x1xf32>
    %167 = vector.broadcast %166 : vector<1x1xf32> to vector<1x8xf32>
    %168 = arith.subf %162, %167 : vector<1x8xf32>
    %169 = math.exp %168 : vector<1x8xf32>
    %cst_125 = arith.constant dense<0.000000e+00> : vector<1xf32>
    %170 = vector.multi_reduction <add>, %169, %cst_125 [1] : vector<1x8xf32> to vector<1xf32>
    %171 = vector.shape_cast %170 : vector<1xf32> to vector<1x1xf32>
    %172 = vector.broadcast %171 : vector<1x1xf32> to vector<1x8xf32>
    %173 = arith.divf %169, %172 : vector<1x8xf32>
    %cst_126 = arith.constant dense<0.000000e+00> : vector<1x32xf32>
    %174 = tpu.matmul %173, %109, %cst_126 {dimension_numbers = #tpu.dot_dimension_numbers<[1], [0], [0], [1], [0, 0, 1, 1], [], []>} : vector<1x8xf32>, vector<8x32xf32>, vector<1x32xf32> -> vector<1x32xf32>
    %cst_127 = arith.constant dense<0.000000e+00> : vector<1x32xf32>
    %175 = tpu.matmul %158, %115, %cst_127 {dimension_numbers = #tpu.dot_dimension_numbers<[1], [0], [0], [1], [0, 0, 1, 1], [], []>} : vector<1x32xf32>, vector<32x32xf32>, vector<1x32xf32> -> vector<1x32xf32>
    %cst_128 = arith.constant dense<0.000000e+00> : vector<1x32xf32>
    %176 = tpu.matmul %174, %116, %cst_128 {dimension_numbers = #tpu.dot_dimension_numbers<[1], [0], [0], [1], [0, 0, 1, 1], [], []>} : vector<1x32xf32>, vector<32x32xf32>, vector<1x32xf32> -> vector<1x32xf32>
    %177 = arith.addf %175, %176 : vector<1x32xf32>
    %178 = arith.addf %177, %117 : vector<1x32xf32>
    %179 = math.tanh %178 : vector<1x32xf32>
    %cst_129 = arith.constant dense<0.000000e+00> : vector<1x128xf32>
    %180 = tpu.matmul %179, %118, %cst_129 {dimension_numbers = #tpu.dot_dimension_numbers<[1], [0], [0], [1], [0, 0, 1, 1], [], []>} : vector<1x32xf32>, vector<32x128xf32>, vector<1x128xf32> -> vector<1x128xf32>
    %181 = arith.addf %180, %119 : vector<1x128xf32>
    %182 = vector.shape_cast %181 : vector<1x128xf32> to vector<1x1x128xf32>
    %cst_130 = arith.constant dense<0xFF800000> : vector<1xf32>
    %183 = vector.multi_reduction <maximumf>, %182, %cst_130 [1, 2] : vector<1x1x128xf32> to vector<1xf32>
    %184 = vector.shape_cast %183 : vector<1xf32> to vector<1x1x1xf32>
    %185 = vector.extract %184[0, 0, 0] : f32 from vector<1x1x1xf32>
    %186 = vector.broadcast %185 : f32 to vector<1x128xf32>
    %187 = arith.subf %181, %186 : vector<1x128xf32>
    %188 = math.exp %187 : vector<1x128xf32>
    %189 = vector.shape_cast %188 : vector<1x128xf32> to vector<1x1x128xf32>
    %cst_131 = arith.constant dense<0.000000e+00> : vector<1xf32>
    %190 = vector.multi_reduction <add>, %189, %cst_131 [1, 2] : vector<1x1x128xf32> to vector<1xf32>
    %191 = vector.shape_cast %190 : vector<1xf32> to vector<1x1x1xf32>
    %192 = vector.extract %191[0, 0, 0] : f32 from vector<1x1x1xf32>
    %cst_132 = arith.constant 1.000000e+00 : f32
    %193 = arith.divf %cst_132, %192 : f32
    %194 = vector.broadcast %185 : f32 to vector<1x128xf32>
    %195 = arith.cmpf oeq, %181, %194 : vector<1x128xf32>
    %c128_i32 = arith.constant 128 : i32
    %196 = vector.broadcast %c128_i32 : i32 to vector<1x128xi32>
    %197 = arith.select %195, %123, %196 : vector<1x128xi1>, vector<1x128xi32>
    %198 = vector.shape_cast %197 : vector<1x128xi32> to vector<1x1x128xi32>
    %cst_133 = arith.constant dense<2147483647> : vector<1xi32>
    %199 = vector.multi_reduction <minsi>, %198, %cst_133 [1, 2] : vector<1x1x128xi32> to vector<1xi32>
    %200 = vector.shape_cast %199 : vector<1xi32> to vector<1x1x1xi32>
    %201 = vector.extract %200[0, 0, 0] : i32 from vector<1x1x1xi32>
    %202 = arith.index_cast %c0_i32_110 : i32 to index
    %203 = memref.load %arg19[%202] : memref<8xi32, #tpu.memory_space<smem>>
    memref.store %201, %arg19[%202] : memref<8xi32, #tpu.memory_space<smem>>
    %204 = arith.index_cast %c0_i32_110 : i32 to index
    %205 = memref.load %arg20[%204] : memref<8xf32, #tpu.memory_space<smem>>
    memref.store %193, %arg20[%204] : memref<8xf32, #tpu.memory_space<smem>>
    %c0_134 = arith.constant 0 : index
    %206 = memref.load %arg27[%c0_134] : memref<1xi32, #tpu.memory_space<smem>>
    memref.store %201, %arg27[%c0_134] : memref<1xi32, #tpu.memory_space<smem>>
    %c1_i32_135 = arith.constant 1 : i32
    %c0_136 = arith.constant 0 : index
    %207 = memref.load %arg27[%c0_136] : memref<1xi32, #tpu.memory_space<smem>>
    %208 = arith.index_cast %207 : i32 to index
    %c0_137 = arith.constant 0 : index
    %209 = vector.load %arg2[%208, %c0_137] : memref<128x32xf32, #tpu.memory_space<vmem>>, vector<1x32xf32>
    %cst_138 = arith.constant dense<0.000000e+00> : vector<1x96xf32>
    %210 = tpu.matmul %209, %111, %cst_138 {dimension_numbers = #tpu.dot_dimension_numbers<[1], [0], [0], [1], [0, 0, 1, 1], [], []>} : vector<1x32xf32>, vector<32x96xf32>, vector<1x96xf32> -> vector<1x96xf32>
    %211 = arith.addf %210, %113 : vector<1x96xf32>
    %c0_139 = arith.constant 0 : index
    %c0_140 = arith.constant 0 : index
    %212 = vector.load %arg26[%c0_139, %c0_140] : memref<1x32xf32, #tpu.memory_space<vmem>>, vector<1x32xf32>
    %cst_141 = arith.constant dense<0.000000e+00> : vector<1x96xf32>
    %213 = tpu.matmul %212, %112, %cst_141 {dimension_numbers = #tpu.dot_dimension_numbers<[1], [0], [0], [1], [0, 0, 1, 1], [], []>} : vector<1x32xf32>, vector<32x96xf32>, vector<1x96xf32> -> vector<1x96xf32>
    %214 = arith.addf %213, %114 : vector<1x96xf32>
    %215 = vector.extract_strided_slice %211 {offsets = [0, 0], sizes = [1, 32], strides = [1, 1]} : vector<1x96xf32> to vector<1x32xf32>
    %216 = vector.extract_strided_slice %214 {offsets = [0, 0], sizes = [1, 32], strides = [1, 1]} : vector<1x96xf32> to vector<1x32xf32>
    %217 = arith.addf %215, %216 : vector<1x32xf32>
    %218 = arith.negf %217 : vector<1x32xf32>
    %219 = math.exp %218 : vector<1x32xf32>
    %cst_142 = arith.constant 1.000000e+00 : f32
    %220 = vector.broadcast %cst_142 : f32 to vector<1x32xf32>
    %221 = arith.addf %220, %219 : vector<1x32xf32>
    %222 = arith.divf %220, %221 : vector<1x32xf32>
    %223 = vector.extract_strided_slice %211 {offsets = [0, 32], sizes = [1, 32], strides = [1, 1]} : vector<1x96xf32> to vector<1x32xf32>
    %224 = vector.extract_strided_slice %214 {offsets = [0, 32], sizes = [1, 32], strides = [1, 1]} : vector<1x96xf32> to vector<1x32xf32>
    %225 = arith.addf %223, %224 : vector<1x32xf32>
    %226 = arith.negf %225 : vector<1x32xf32>
    %227 = math.exp %226 : vector<1x32xf32>
    %cst_143 = arith.constant 1.000000e+00 : f32
    %228 = vector.broadcast %cst_143 : f32 to vector<1x32xf32>
    %229 = arith.addf %228, %227 : vector<1x32xf32>
    %230 = arith.divf %228, %229 : vector<1x32xf32>
    %231 = vector.extract_strided_slice %211 {offsets = [0, 64], sizes = [1, 32], strides = [1, 1]} : vector<1x96xf32> to vector<1x32xf32>
    %232 = vector.extract_strided_slice %214 {offsets = [0, 64], sizes = [1, 32], strides = [1, 1]} : vector<1x96xf32> to vector<1x32xf32>
    %233 = arith.mulf %222, %232 : vector<1x32xf32>
    %234 = arith.addf %231, %233 : vector<1x32xf32>
    %235 = math.tanh %234 : vector<1x32xf32>
    %cst_144 = arith.constant 1.000000e+00 : f32
    %236 = vector.broadcast %cst_144 : f32 to vector<1x32xf32>
    %237 = arith.subf %236, %230 : vector<1x32xf32>
    %238 = arith.mulf %237, %235 : vector<1x32xf32>
    %239 = arith.mulf %230, %212 : vector<1x32xf32>
    %240 = arith.addf %238, %239 : vector<1x32xf32>
    %c0_145 = arith.constant 0 : index
    %c0_146 = arith.constant 0 : index
    %241 = vector.load %arg26[%c0_145, %c0_146] : memref<1x32xf32, #tpu.memory_space<vmem>>, vector<1x32xf32>
    tpu.vector_store %arg26[%c0_145, %c0_146], %240 {strides = array<i32>} : memref<1x32xf32, #tpu.memory_space<vmem>>, vector<1x32xf32>,
    %cst_147 = arith.constant dense<0.000000e+00> : vector<1x8xf32>
    %242 = tpu.matmul %240, %110, %cst_147 {dimension_numbers = #tpu.dot_dimension_numbers<[1], [0], [0], [1], [0, 0, 1, 1], [], []>} : vector<1x32xf32>, vector<32x8xf32>, vector<1x8xf32> -> vector<1x8xf32>
    %243 = vector.broadcast %cst_109 : f32 to vector<1x8xf32>
    %244 = arith.select %122, %242, %243 : vector<1x8xi1>, vector<1x8xf32>
    %cst_148 = arith.constant dense<0xFF800000> : vector<1xf32>
    %245 = vector.multi_reduction <maximumf>, %244, %cst_148 [1] : vector<1x8xf32> to vector<1xf32>
    %cst_149 = arith.constant 0xFF800000 : f32
    %246 = vector.broadcast %cst_149 : f32 to vector<1xf32>
    %247 = arith.maximumf %246, %245 : vector<1xf32>
    %248 = vector.shape_cast %247 : vector<1xf32> to vector<1x1xf32>
    %249 = vector.broadcast %248 : vector<1x1xf32> to vector<1x8xf32>
    %250 = arith.subf %244, %249 : vector<1x8xf32>
    %251 = math.exp %250 : vector<1x8xf32>
    %cst_150 = arith.constant dense<0.000000e+00> : vector<1xf32>
    %252 = vector.multi_reduction <add>, %251, %cst_150 [1] : vector<1x8xf32> to vector<1xf32>
    %253 = vector.shape_cast %252 : vector<1xf32> to vector<1x1xf32>
    %254 = vector.broadcast %253 : vector<1x1xf32> to vector<1x8xf32>
    %255 = arith.divf %251, %254 : vector<1x8xf32>
    %cst_151 = arith.constant dense<0.000000e+00> : vector<1x32xf32>
    %256 = tpu.matmul %255, %109, %cst_151 {dimension_numbers = #tpu.dot_dimension_numbers<[1], [0], [0], [1], [0, 0, 1, 1], [], []>} : vector<1x8xf32>, vector<8x32xf32>, vector<1x32xf32> -> vector<1x32xf32>
    %cst_152 = arith.constant dense<0.000000e+00> : vector<1x32xf32>
    %257 = tpu.matmul %240, %115, %cst_152 {dimension_numbers = #tpu.dot_dimension_numbers<[1], [0], [0], [1], [0, 0, 1, 1], [], []>} : vector<1x32xf32>, vector<32x32xf32>, vector<1x32xf32> -> vector<1x32xf32>
    %cst_153 = arith.constant dense<0.000000e+00> : vector<1x32xf32>
    %258 = tpu.matmul %256, %116, %cst_153 {dimension_numbers = #tpu.dot_dimension_numbers<[1], [0], [0], [1], [0, 0, 1, 1], [], []>} : vector<1x32xf32>, vector<32x32xf32>, vector<1x32xf32> -> vector<1x32xf32>
    %259 = arith.addf %257, %258 : vector<1x32xf32>
    %260 = arith.addf %259, %117 : vector<1x32xf32>
    %261 = math.tanh %260 : vector<1x32xf32>
    %cst_154 = arith.constant dense<0.000000e+00> : vector<1x128xf32>
    %262 = tpu.matmul %261, %118, %cst_154 {dimension_numbers = #tpu.dot_dimension_numbers<[1], [0], [0], [1], [0, 0, 1, 1], [], []>} : vector<1x32xf32>, vector<32x128xf32>, vector<1x128xf32> -> vector<1x128xf32>
    %263 = arith.addf %262, %119 : vector<1x128xf32>
    %264 = vector.shape_cast %263 : vector<1x128xf32> to vector<1x1x128xf32>
    %cst_155 = arith.constant dense<0xFF800000> : vector<1xf32>
    %265 = vector.multi_reduction <maximumf>, %264, %cst_155 [1, 2] : vector<1x1x128xf32> to vector<1xf32>
    %266 = vector.shape_cast %265 : vector<1xf32> to vector<1x1x1xf32>
    %267 = vector.extract %266[0, 0, 0] : f32 from vector<1x1x1xf32>
    %268 = vector.broadcast %267 : f32 to vector<1x128xf32>
    %269 = arith.subf %263, %268 : vector<1x128xf32>
    %270 = math.exp %269 : vector<1x128xf32>
    %271 = vector.shape_cast %270 : vector<1x128xf32> to vector<1x1x128xf32>
    %cst_156 = arith.constant dense<0.000000e+00> : vector<1xf32>
    %272 = vector.multi_reduction <add>, %271, %cst_156 [1, 2] : vector<1x1x128xf32> to vector<1xf32>
    %273 = vector.shape_cast %272 : vector<1xf32> to vector<1x1x1xf32>
    %274 = vector.extract %273[0, 0, 0] : f32 from vector<1x1x1xf32>
    %cst_157 = arith.constant 1.000000e+00 : f32
    %275 = arith.divf %cst_157, %274 : f32
    %276 = vector.broadcast %267 : f32 to vector<1x128xf32>
    %277 = arith.cmpf oeq, %263, %276 : vector<1x128xf32>
    %c128_i32_158 = arith.constant 128 : i32
    %278 = vector.broadcast %c128_i32_158 : i32 to vector<1x128xi32>
    %279 = arith.select %277, %123, %278 : vector<1x128xi1>, vector<1x128xi32>
    %280 = vector.shape_cast %279 : vector<1x128xi32> to vector<1x1x128xi32>
    %cst_159 = arith.constant dense<2147483647> : vector<1xi32>
    %281 = vector.multi_reduction <minsi>, %280, %cst_159 [1, 2] : vector<1x1x128xi32> to vector<1xi32>
    %282 = vector.shape_cast %281 : vector<1xi32> to vector<1x1x1xi32>
    %283 = vector.extract %282[0, 0, 0] : i32 from vector<1x1x1xi32>
    %284 = arith.index_cast %c1_i32_135 : i32 to index
    %285 = memref.load %arg19[%284] : memref<8xi32, #tpu.memory_space<smem>>
    memref.store %283, %arg19[%284] : memref<8xi32, #tpu.memory_space<smem>>
    %286 = arith.index_cast %c1_i32_135 : i32 to index
    %287 = memref.load %arg20[%286] : memref<8xf32, #tpu.memory_space<smem>>
    memref.store %275, %arg20[%286] : memref<8xf32, #tpu.memory_space<smem>>
    %c0_160 = arith.constant 0 : index
    %288 = memref.load %arg27[%c0_160] : memref<1xi32, #tpu.memory_space<smem>>
    memref.store %283, %arg27[%c0_160] : memref<1xi32, #tpu.memory_space<smem>>
    %c2_i32_161 = arith.constant 2 : i32
    %c0_162 = arith.constant 0 : index
    %289 = memref.load %arg27[%c0_162] : memref<1xi32, #tpu.memory_space<smem>>
    %290 = arith.index_cast %289 : i32 to index
    %c0_163 = arith.constant 0 : index
    %291 = vector.load %arg2[%290, %c0_163] : memref<128x32xf32, #tpu.memory_space<vmem>>, vector<1x32xf32>
    %cst_164 = arith.constant dense<0.000000e+00> : vector<1x96xf32>
    %292 = tpu.matmul %291, %111, %cst_164 {dimension_numbers = #tpu.dot_dimension_numbers<[1], [0], [0], [1], [0, 0, 1, 1], [], []>} : vector<1x32xf32>, vector<32x96xf32>, vector<1x96xf32> -> vector<1x96xf32>
    %293 = arith.addf %292, %113 : vector<1x96xf32>
    %c0_165 = arith.constant 0 : index
    %c0_166 = arith.constant 0 : index
    %294 = vector.load %arg26[%c0_165, %c0_166] : memref<1x32xf32, #tpu.memory_space<vmem>>, vector<1x32xf32>
    %cst_167 = arith.constant dense<0.000000e+00> : vector<1x96xf32>
    %295 = tpu.matmul %294, %112, %cst_167 {dimension_numbers = #tpu.dot_dimension_numbers<[1], [0], [0], [1], [0, 0, 1, 1], [], []>} : vector<1x32xf32>, vector<32x96xf32>, vector<1x96xf32> -> vector<1x96xf32>
    %296 = arith.addf %295, %114 : vector<1x96xf32>
    %297 = vector.extract_strided_slice %293 {offsets = [0, 0], sizes = [1, 32], strides = [1, 1]} : vector<1x96xf32> to vector<1x32xf32>
    %298 = vector.extract_strided_slice %296 {offsets = [0, 0], sizes = [1, 32], strides = [1, 1]} : vector<1x96xf32> to vector<1x32xf32>
    %299 = arith.addf %297, %298 : vector<1x32xf32>
    %300 = arith.negf %299 : vector<1x32xf32>
    %301 = math.exp %300 : vector<1x32xf32>
    %cst_168 = arith.constant 1.000000e+00 : f32
    %302 = vector.broadcast %cst_168 : f32 to vector<1x32xf32>
    %303 = arith.addf %302, %301 : vector<1x32xf32>
    %304 = arith.divf %302, %303 : vector<1x32xf32>
    %305 = vector.extract_strided_slice %293 {offsets = [0, 32], sizes = [1, 32], strides = [1, 1]} : vector<1x96xf32> to vector<1x32xf32>
    %306 = vector.extract_strided_slice %296 {offsets = [0, 32], sizes = [1, 32], strides = [1, 1]} : vector<1x96xf32> to vector<1x32xf32>
    %307 = arith.addf %305, %306 : vector<1x32xf32>
    %308 = arith.negf %307 : vector<1x32xf32>
    %309 = math.exp %308 : vector<1x32xf32>
    %cst_169 = arith.constant 1.000000e+00 : f32
    %310 = vector.broadcast %cst_169 : f32 to vector<1x32xf32>
    %311 = arith.addf %310, %309 : vector<1x32xf32>
    %312 = arith.divf %310, %311 : vector<1x32xf32>
    %313 = vector.extract_strided_slice %293 {offsets = [0, 64], sizes = [1, 32], strides = [1, 1]} : vector<1x96xf32> to vector<1x32xf32>
    %314 = vector.extract_strided_slice %296 {offsets = [0, 64], sizes = [1, 32], strides = [1, 1]} : vector<1x96xf32> to vector<1x32xf32>
    %315 = arith.mulf %304, %314 : vector<1x32xf32>
    %316 = arith.addf %313, %315 : vector<1x32xf32>
    %317 = math.tanh %316 : vector<1x32xf32>
    %cst_170 = arith.constant 1.000000e+00 : f32
    %318 = vector.broadcast %cst_170 : f32 to vector<1x32xf32>
    %319 = arith.subf %318, %312 : vector<1x32xf32>
    %320 = arith.mulf %319, %317 : vector<1x32xf32>
    %321 = arith.mulf %312, %294 : vector<1x32xf32>
    %322 = arith.addf %320, %321 : vector<1x32xf32>
    %c0_171 = arith.constant 0 : index
    %c0_172 = arith.constant 0 : index
    %323 = vector.load %arg26[%c0_171, %c0_172] : memref<1x32xf32, #tpu.memory_space<vmem>>, vector<1x32xf32>
    tpu.vector_store %arg26[%c0_171, %c0_172], %322 {strides = array<i32>} : memref<1x32xf32, #tpu.memory_space<vmem>>, vector<1x32xf32>,
    %cst_173 = arith.constant dense<0.000000e+00> : vector<1x8xf32>
    %324 = tpu.matmul %322, %110, %cst_173 {dimension_numbers = #tpu.dot_dimension_numbers<[1], [0], [0], [1], [0, 0, 1, 1], [], []>} : vector<1x32xf32>, vector<32x8xf32>, vector<1x8xf32> -> vector<1x8xf32>
    %325 = vector.broadcast %cst_109 : f32 to vector<1x8xf32>
    %326 = arith.select %122, %324, %325 : vector<1x8xi1>, vector<1x8xf32>
    %cst_174 = arith.constant dense<0xFF800000> : vector<1xf32>
    %327 = vector.multi_reduction <maximumf>, %326, %cst_174 [1] : vector<1x8xf32> to vector<1xf32>
    %cst_175 = arith.constant 0xFF800000 : f32
    %328 = vector.broadcast %cst_175 : f32 to vector<1xf32>
    %329 = arith.maximumf %328, %327 : vector<1xf32>
    %330 = vector.shape_cast %329 : vector<1xf32> to vector<1x1xf32>
    %331 = vector.broadcast %330 : vector<1x1xf32> to vector<1x8xf32>
    %332 = arith.subf %326, %331 : vector<1x8xf32>
    %333 = math.exp %332 : vector<1x8xf32>
    %cst_176 = arith.constant dense<0.000000e+00> : vector<1xf32>
    %334 = vector.multi_reduction <add>, %333, %cst_176 [1] : vector<1x8xf32> to vector<1xf32>
    %335 = vector.shape_cast %334 : vector<1xf32> to vector<1x1xf32>
    %336 = vector.broadcast %335 : vector<1x1xf32> to vector<1x8xf32>
    %337 = arith.divf %333, %336 : vector<1x8xf32>
    %cst_177 = arith.constant dense<0.000000e+00> : vector<1x32xf32>
    %338 = tpu.matmul %337, %109, %cst_177 {dimension_numbers = #tpu.dot_dimension_numbers<[1], [0], [0], [1], [0, 0, 1, 1], [], []>} : vector<1x8xf32>, vector<8x32xf32>, vector<1x32xf32> -> vector<1x32xf32>
    %cst_178 = arith.constant dense<0.000000e+00> : vector<1x32xf32>
    %339 = tpu.matmul %322, %115, %cst_178 {dimension_numbers = #tpu.dot_dimension_numbers<[1], [0], [0], [1], [0, 0, 1, 1], [], []>} : vector<1x32xf32>, vector<32x32xf32>, vector<1x32xf32> -> vector<1x32xf32>
    %cst_179 = arith.constant dense<0.000000e+00> : vector<1x32xf32>
    %340 = tpu.matmul %338, %116, %cst_179 {dimension_numbers = #tpu.dot_dimension_numbers<[1], [0], [0], [1], [0, 0, 1, 1], [], []>} : vector<1x32xf32>, vector<32x32xf32>, vector<1x32xf32> -> vector<1x32xf32>
    %341 = arith.addf %339, %340 : vector<1x32xf32>
    %342 = arith.addf %341, %117 : vector<1x32xf32>
    %343 = math.tanh %342 : vector<1x32xf32>
    %cst_180 = arith.constant dense<0.000000e+00> : vector<1x128xf32>
    %344 = tpu.matmul %343, %118, %cst_180 {dimension_numbers = #tpu.dot_dimension_numbers<[1], [0], [0], [1], [0, 0, 1, 1], [], []>} : vector<1x32xf32>, vector<32x128xf32>, vector<1x128xf32> -> vector<1x128xf32>
    %345 = arith.addf %344, %119 : vector<1x128xf32>
    %346 = vector.shape_cast %345 : vector<1x128xf32> to vector<1x1x128xf32>
    %cst_181 = arith.constant dense<0xFF800000> : vector<1xf32>
    %347 = vector.multi_reduction <maximumf>, %346, %cst_181 [1, 2] : vector<1x1x128xf32> to vector<1xf32>
    %348 = vector.shape_cast %347 : vector<1xf32> to vector<1x1x1xf32>
    %349 = vector.extract %348[0, 0, 0] : f32 from vector<1x1x1xf32>
    %350 = vector.broadcast %349 : f32 to vector<1x128xf32>
    %351 = arith.subf %345, %350 : vector<1x128xf32>
    %352 = math.exp %351 : vector<1x128xf32>
    %353 = vector.shape_cast %352 : vector<1x128xf32> to vector<1x1x128xf32>
    %cst_182 = arith.constant dense<0.000000e+00> : vector<1xf32>
    %354 = vector.multi_reduction <add>, %353, %cst_182 [1, 2] : vector<1x1x128xf32> to vector<1xf32>
    %355 = vector.shape_cast %354 : vector<1xf32> to vector<1x1x1xf32>
    %356 = vector.extract %355[0, 0, 0] : f32 from vector<1x1x1xf32>
    %cst_183 = arith.constant 1.000000e+00 : f32
    %357 = arith.divf %cst_183, %356 : f32
    %358 = vector.broadcast %349 : f32 to vector<1x128xf32>
    %359 = arith.cmpf oeq, %345, %358 : vector<1x128xf32>
    %c128_i32_184 = arith.constant 128 : i32
    %360 = vector.broadcast %c128_i32_184 : i32 to vector<1x128xi32>
    %361 = arith.select %359, %123, %360 : vector<1x128xi1>, vector<1x128xi32>
    %362 = vector.shape_cast %361 : vector<1x128xi32> to vector<1x1x128xi32>
    %cst_185 = arith.constant dense<2147483647> : vector<1xi32>
    %363 = vector.multi_reduction <minsi>, %362, %cst_185 [1, 2] : vector<1x1x128xi32> to vector<1xi32>
    %364 = vector.shape_cast %363 : vector<1xi32> to vector<1x1x1xi32>
    %365 = vector.extract %364[0, 0, 0] : i32 from vector<1x1x1xi32>
    %366 = arith.index_cast %c2_i32_161 : i32 to index
    %367 = memref.load %arg19[%366] : memref<8xi32, #tpu.memory_space<smem>>
    memref.store %365, %arg19[%366] : memref<8xi32, #tpu.memory_space<smem>>
    %368 = arith.index_cast %c2_i32_161 : i32 to index
    %369 = memref.load %arg20[%368] : memref<8xf32, #tpu.memory_space<smem>>
    memref.store %357, %arg20[%368] : memref<8xf32, #tpu.memory_space<smem>>
    %c0_186 = arith.constant 0 : index
    %370 = memref.load %arg27[%c0_186] : memref<1xi32, #tpu.memory_space<smem>>
    memref.store %365, %arg27[%c0_186] : memref<1xi32, #tpu.memory_space<smem>>
    %c3_i32_187 = arith.constant 3 : i32
    %c0_188 = arith.constant 0 : index
    %371 = memref.load %arg27[%c0_188] : memref<1xi32, #tpu.memory_space<smem>>
    %372 = arith.index_cast %371 : i32 to index
    %c0_189 = arith.constant 0 : index
    %373 = vector.load %arg2[%372, %c0_189] : memref<128x32xf32, #tpu.memory_space<vmem>>, vector<1x32xf32>
    %cst_190 = arith.constant dense<0.000000e+00> : vector<1x96xf32>
    %374 = tpu.matmul %373, %111, %cst_190 {dimension_numbers = #tpu.dot_dimension_numbers<[1], [0], [0], [1], [0, 0, 1, 1], [], []>} : vector<1x32xf32>, vector<32x96xf32>, vector<1x96xf32> -> vector<1x96xf32>
    %375 = arith.addf %374, %113 : vector<1x96xf32>
    %c0_191 = arith.constant 0 : index
    %c0_192 = arith.constant 0 : index
    %376 = vector.load %arg26[%c0_191, %c0_192] : memref<1x32xf32, #tpu.memory_space<vmem>>, vector<1x32xf32>
    %cst_193 = arith.constant dense<0.000000e+00> : vector<1x96xf32>
    %377 = tpu.matmul %376, %112, %cst_193 {dimension_numbers = #tpu.dot_dimension_numbers<[1], [0], [0], [1], [0, 0, 1, 1], [], []>} : vector<1x32xf32>, vector<32x96xf32>, vector<1x96xf32> -> vector<1x96xf32>
    %378 = arith.addf %377, %114 : vector<1x96xf32>
    %379 = vector.extract_strided_slice %375 {offsets = [0, 0], sizes = [1, 32], strides = [1, 1]} : vector<1x96xf32> to vector<1x32xf32>
    %380 = vector.extract_strided_slice %378 {offsets = [0, 0], sizes = [1, 32], strides = [1, 1]} : vector<1x96xf32> to vector<1x32xf32>
    %381 = arith.addf %379, %380 : vector<1x32xf32>
    %382 = arith.negf %381 : vector<1x32xf32>
    %383 = math.exp %382 : vector<1x32xf32>
    %cst_194 = arith.constant 1.000000e+00 : f32
    %384 = vector.broadcast %cst_194 : f32 to vector<1x32xf32>
    %385 = arith.addf %384, %383 : vector<1x32xf32>
    %386 = arith.divf %384, %385 : vector<1x32xf32>
    %387 = vector.extract_strided_slice %375 {offsets = [0, 32], sizes = [1, 32], strides = [1, 1]} : vector<1x96xf32> to vector<1x32xf32>
    %388 = vector.extract_strided_slice %378 {offsets = [0, 32], sizes = [1, 32], strides = [1, 1]} : vector<1x96xf32> to vector<1x32xf32>
    %389 = arith.addf %387, %388 : vector<1x32xf32>
    %390 = arith.negf %389 : vector<1x32xf32>
    %391 = math.exp %390 : vector<1x32xf32>
    %cst_195 = arith.constant 1.000000e+00 : f32
    %392 = vector.broadcast %cst_195 : f32 to vector<1x32xf32>
    %393 = arith.addf %392, %391 : vector<1x32xf32>
    %394 = arith.divf %392, %393 : vector<1x32xf32>
    %395 = vector.extract_strided_slice %375 {offsets = [0, 64], sizes = [1, 32], strides = [1, 1]} : vector<1x96xf32> to vector<1x32xf32>
    %396 = vector.extract_strided_slice %378 {offsets = [0, 64], sizes = [1, 32], strides = [1, 1]} : vector<1x96xf32> to vector<1x32xf32>
    %397 = arith.mulf %386, %396 : vector<1x32xf32>
    %398 = arith.addf %395, %397 : vector<1x32xf32>
    %399 = math.tanh %398 : vector<1x32xf32>
    %cst_196 = arith.constant 1.000000e+00 : f32
    %400 = vector.broadcast %cst_196 : f32 to vector<1x32xf32>
    %401 = arith.subf %400, %394 : vector<1x32xf32>
    %402 = arith.mulf %401, %399 : vector<1x32xf32>
    %403 = arith.mulf %394, %376 : vector<1x32xf32>
    %404 = arith.addf %402, %403 : vector<1x32xf32>
    %c0_197 = arith.constant 0 : index
    %c0_198 = arith.constant 0 : index
    %405 = vector.load %arg26[%c0_197, %c0_198] : memref<1x32xf32, #tpu.memory_space<vmem>>, vector<1x32xf32>
    tpu.vector_store %arg26[%c0_197, %c0_198], %404 {strides = array<i32>} : memref<1x32xf32, #tpu.memory_space<vmem>>, vector<1x32xf32>,
    %cst_199 = arith.constant dense<0.000000e+00> : vector<1x8xf32>
    %406 = tpu.matmul %404, %110, %cst_199 {dimension_numbers = #tpu.dot_dimension_numbers<[1], [0], [0], [1], [0, 0, 1, 1], [], []>} : vector<1x32xf32>, vector<32x8xf32>, vector<1x8xf32> -> vector<1x8xf32>
    %407 = vector.broadcast %cst_109 : f32 to vector<1x8xf32>
    %408 = arith.select %122, %406, %407 : vector<1x8xi1>, vector<1x8xf32>
    %cst_200 = arith.constant dense<0xFF800000> : vector<1xf32>
    %409 = vector.multi_reduction <maximumf>, %408, %cst_200 [1] : vector<1x8xf32> to vector<1xf32>
    %cst_201 = arith.constant 0xFF800000 : f32
    %410 = vector.broadcast %cst_201 : f32 to vector<1xf32>
    %411 = arith.maximumf %410, %409 : vector<1xf32>
    %412 = vector.shape_cast %411 : vector<1xf32> to vector<1x1xf32>
    %413 = vector.broadcast %412 : vector<1x1xf32> to vector<1x8xf32>
    %414 = arith.subf %408, %413 : vector<1x8xf32>
    %415 = math.exp %414 : vector<1x8xf32>
    %cst_202 = arith.constant dense<0.000000e+00> : vector<1xf32>
    %416 = vector.multi_reduction <add>, %415, %cst_202 [1] : vector<1x8xf32> to vector<1xf32>
    %417 = vector.shape_cast %416 : vector<1xf32> to vector<1x1xf32>
    %418 = vector.broadcast %417 : vector<1x1xf32> to vector<1x8xf32>
    %419 = arith.divf %415, %418 : vector<1x8xf32>
    %cst_203 = arith.constant dense<0.000000e+00> : vector<1x32xf32>
    %420 = tpu.matmul %419, %109, %cst_203 {dimension_numbers = #tpu.dot_dimension_numbers<[1], [0], [0], [1], [0, 0, 1, 1], [], []>} : vector<1x8xf32>, vector<8x32xf32>, vector<1x32xf32> -> vector<1x32xf32>
    %cst_204 = arith.constant dense<0.000000e+00> : vector<1x32xf32>
    %421 = tpu.matmul %404, %115, %cst_204 {dimension_numbers = #tpu.dot_dimension_numbers<[1], [0], [0], [1], [0, 0, 1, 1], [], []>} : vector<1x32xf32>, vector<32x32xf32>, vector<1x32xf32> -> vector<1x32xf32>
    %cst_205 = arith.constant dense<0.000000e+00> : vector<1x32xf32>
    %422 = tpu.matmul %420, %116, %cst_205 {dimension_numbers = #tpu.dot_dimension_numbers<[1], [0], [0], [1], [0, 0, 1, 1], [], []>} : vector<1x32xf32>, vector<32x32xf32>, vector<1x32xf32> -> vector<1x32xf32>
    %423 = arith.addf %421, %422 : vector<1x32xf32>
    %424 = arith.addf %423, %117 : vector<1x32xf32>
    %425 = math.tanh %424 : vector<1x32xf32>
    %cst_206 = arith.constant dense<0.000000e+00> : vector<1x128xf32>
    %426 = tpu.matmul %425, %118, %cst_206 {dimension_numbers = #tpu.dot_dimension_numbers<[1], [0], [0], [1], [0, 0, 1, 1], [], []>} : vector<1x32xf32>, vector<32x128xf32>, vector<1x128xf32> -> vector<1x128xf32>
    %427 = arith.addf %426, %119 : vector<1x128xf32>
    %428 = vector.shape_cast %427 : vector<1x128xf32> to vector<1x1x128xf32>
    %cst_207 = arith.constant dense<0xFF800000> : vector<1xf32>
    %429 = vector.multi_reduction <maximumf>, %428, %cst_207 [1, 2] : vector<1x1x128xf32> to vector<1xf32>
    %430 = vector.shape_cast %429 : vector<1xf32> to vector<1x1x1xf32>
    %431 = vector.extract %430[0, 0, 0] : f32 from vector<1x1x1xf32>
    %432 = vector.broadcast %431 : f32 to vector<1x128xf32>
    %433 = arith.subf %427, %432 : vector<1x128xf32>
    %434 = math.exp %433 : vector<1x128xf32>
    %435 = vector.shape_cast %434 : vector<1x128xf32> to vector<1x1x128xf32>
    %cst_208 = arith.constant dense<0.000000e+00> : vector<1xf32>
    %436 = vector.multi_reduction <add>, %435, %cst_208 [1, 2] : vector<1x1x128xf32> to vector<1xf32>
    %437 = vector.shape_cast %436 : vector<1xf32> to vector<1x1x1xf32>
    %438 = vector.extract %437[0, 0, 0] : f32 from vector<1x1x1xf32>
    %cst_209 = arith.constant 1.000000e+00 : f32
    %439 = arith.divf %cst_209, %438 : f32
    %440 = vector.broadcast %431 : f32 to vector<1x128xf32>
    %441 = arith.cmpf oeq, %427, %440 : vector<1x128xf32>
    %c128_i32_210 = arith.constant 128 : i32
    %442 = vector.broadcast %c128_i32_210 : i32 to vector<1x128xi32>
    %443 = arith.select %441, %123, %442 : vector<1x128xi1>, vector<1x128xi32>
    %444 = vector.shape_cast %443 : vector<1x128xi32> to vector<1x1x128xi32>
    %cst_211 = arith.constant dense<2147483647> : vector<1xi32>
    %445 = vector.multi_reduction <minsi>, %444, %cst_211 [1, 2] : vector<1x1x128xi32> to vector<1xi32>
    %446 = vector.shape_cast %445 : vector<1xi32> to vector<1x1x1xi32>
    %447 = vector.extract %446[0, 0, 0] : i32 from vector<1x1x1xi32>
    %448 = arith.index_cast %c3_i32_187 : i32 to index
    %449 = memref.load %arg19[%448] : memref<8xi32, #tpu.memory_space<smem>>
    memref.store %447, %arg19[%448] : memref<8xi32, #tpu.memory_space<smem>>
    %450 = arith.index_cast %c3_i32_187 : i32 to index
    %451 = memref.load %arg20[%450] : memref<8xf32, #tpu.memory_space<smem>>
    memref.store %439, %arg20[%450] : memref<8xf32, #tpu.memory_space<smem>>
    %c0_212 = arith.constant 0 : index
    %452 = memref.load %arg27[%c0_212] : memref<1xi32, #tpu.memory_space<smem>>
    memref.store %447, %arg27[%c0_212] : memref<1xi32, #tpu.memory_space<smem>>
    %c4_i32_213 = arith.constant 4 : i32
    %c0_214 = arith.constant 0 : index
    %453 = memref.load %arg27[%c0_214] : memref<1xi32, #tpu.memory_space<smem>>
    %454 = arith.index_cast %453 : i32 to index
    %c0_215 = arith.constant 0 : index
    %455 = vector.load %arg2[%454, %c0_215] : memref<128x32xf32, #tpu.memory_space<vmem>>, vector<1x32xf32>
    %cst_216 = arith.constant dense<0.000000e+00> : vector<1x96xf32>
    %456 = tpu.matmul %455, %111, %cst_216 {dimension_numbers = #tpu.dot_dimension_numbers<[1], [0], [0], [1], [0, 0, 1, 1], [], []>} : vector<1x32xf32>, vector<32x96xf32>, vector<1x96xf32> -> vector<1x96xf32>
    %457 = arith.addf %456, %113 : vector<1x96xf32>
    %c0_217 = arith.constant 0 : index
    %c0_218 = arith.constant 0 : index
    %458 = vector.load %arg26[%c0_217, %c0_218] : memref<1x32xf32, #tpu.memory_space<vmem>>, vector<1x32xf32>
    %cst_219 = arith.constant dense<0.000000e+00> : vector<1x96xf32>
    %459 = tpu.matmul %458, %112, %cst_219 {dimension_numbers = #tpu.dot_dimension_numbers<[1], [0], [0], [1], [0, 0, 1, 1], [], []>} : vector<1x32xf32>, vector<32x96xf32>, vector<1x96xf32> -> vector<1x96xf32>
    %460 = arith.addf %459, %114 : vector<1x96xf32>
    %461 = vector.extract_strided_slice %457 {offsets = [0, 0], sizes = [1, 32], strides = [1, 1]} : vector<1x96xf32> to vector<1x32xf32>
    %462 = vector.extract_strided_slice %460 {offsets = [0, 0], sizes = [1, 32], strides = [1, 1]} : vector<1x96xf32> to vector<1x32xf32>
    %463 = arith.addf %461, %462 : vector<1x32xf32>
    %464 = arith.negf %463 : vector<1x32xf32>
    %465 = math.exp %464 : vector<1x32xf32>
    %cst_220 = arith.constant 1.000000e+00 : f32
    %466 = vector.broadcast %cst_220 : f32 to vector<1x32xf32>
    %467 = arith.addf %466, %465 : vector<1x32xf32>
    %468 = arith.divf %466, %467 : vector<1x32xf32>
    %469 = vector.extract_strided_slice %457 {offsets = [0, 32], sizes = [1, 32], strides = [1, 1]} : vector<1x96xf32> to vector<1x32xf32>
    %470 = vector.extract_strided_slice %460 {offsets = [0, 32], sizes = [1, 32], strides = [1, 1]} : vector<1x96xf32> to vector<1x32xf32>
    %471 = arith.addf %469, %470 : vector<1x32xf32>
    %472 = arith.negf %471 : vector<1x32xf32>
    %473 = math.exp %472 : vector<1x32xf32>
    %cst_221 = arith.constant 1.000000e+00 : f32
    %474 = vector.broadcast %cst_221 : f32 to vector<1x32xf32>
    %475 = arith.addf %474, %473 : vector<1x32xf32>
    %476 = arith.divf %474, %475 : vector<1x32xf32>
    %477 = vector.extract_strided_slice %457 {offsets = [0, 64], sizes = [1, 32], strides = [1, 1]} : vector<1x96xf32> to vector<1x32xf32>
    %478 = vector.extract_strided_slice %460 {offsets = [0, 64], sizes = [1, 32], strides = [1, 1]} : vector<1x96xf32> to vector<1x32xf32>
    %479 = arith.mulf %468, %478 : vector<1x32xf32>
    %480 = arith.addf %477, %479 : vector<1x32xf32>
    %481 = math.tanh %480 : vector<1x32xf32>
    %cst_222 = arith.constant 1.000000e+00 : f32
    %482 = vector.broadcast %cst_222 : f32 to vector<1x32xf32>
    %483 = arith.subf %482, %476 : vector<1x32xf32>
    %484 = arith.mulf %483, %481 : vector<1x32xf32>
    %485 = arith.mulf %476, %458 : vector<1x32xf32>
    %486 = arith.addf %484, %485 : vector<1x32xf32>
    %c0_223 = arith.constant 0 : index
    %c0_224 = arith.constant 0 : index
    %487 = vector.load %arg26[%c0_223, %c0_224] : memref<1x32xf32, #tpu.memory_space<vmem>>, vector<1x32xf32>
    tpu.vector_store %arg26[%c0_223, %c0_224], %486 {strides = array<i32>} : memref<1x32xf32, #tpu.memory_space<vmem>>, vector<1x32xf32>,
    %cst_225 = arith.constant dense<0.000000e+00> : vector<1x8xf32>
    %488 = tpu.matmul %486, %110, %cst_225 {dimension_numbers = #tpu.dot_dimension_numbers<[1], [0], [0], [1], [0, 0, 1, 1], [], []>} : vector<1x32xf32>, vector<32x8xf32>, vector<1x8xf32> -> vector<1x8xf32>
    %489 = vector.broadcast %cst_109 : f32 to vector<1x8xf32>
    %490 = arith.select %122, %488, %489 : vector<1x8xi1>, vector<1x8xf32>
    %cst_226 = arith.constant dense<0xFF800000> : vector<1xf32>
    %491 = vector.multi_reduction <maximumf>, %490, %cst_226 [1] : vector<1x8xf32> to vector<1xf32>
    %cst_227 = arith.constant 0xFF800000 : f32
    %492 = vector.broadcast %cst_227 : f32 to vector<1xf32>
    %493 = arith.maximumf %492, %491 : vector<1xf32>
    %494 = vector.shape_cast %493 : vector<1xf32> to vector<1x1xf32>
    %495 = vector.broadcast %494 : vector<1x1xf32> to vector<1x8xf32>
    %496 = arith.subf %490, %495 : vector<1x8xf32>
    %497 = math.exp %496 : vector<1x8xf32>
    %cst_228 = arith.constant dense<0.000000e+00> : vector<1xf32>
    %498 = vector.multi_reduction <add>, %497, %cst_228 [1] : vector<1x8xf32> to vector<1xf32>
    %499 = vector.shape_cast %498 : vector<1xf32> to vector<1x1xf32>
    %500 = vector.broadcast %499 : vector<1x1xf32> to vector<1x8xf32>
    %501 = arith.divf %497, %500 : vector<1x8xf32>
    %cst_229 = arith.constant dense<0.000000e+00> : vector<1x32xf32>
    %502 = tpu.matmul %501, %109, %cst_229 {dimension_numbers = #tpu.dot_dimension_numbers<[1], [0], [0], [1], [0, 0, 1, 1], [], []>} : vector<1x8xf32>, vector<8x32xf32>, vector<1x32xf32> -> vector<1x32xf32>
    %cst_230 = arith.constant dense<0.000000e+00> : vector<1x32xf32>
    %503 = tpu.matmul %486, %115, %cst_230 {dimension_numbers = #tpu.dot_dimension_numbers<[1], [0], [0], [1], [0, 0, 1, 1], [], []>} : vector<1x32xf32>, vector<32x32xf32>, vector<1x32xf32> -> vector<1x32xf32>
    %cst_231 = arith.constant dense<0.000000e+00> : vector<1x32xf32>
    %504 = tpu.matmul %502, %116, %cst_231 {dimension_numbers = #tpu.dot_dimension_numbers<[1], [0], [0], [1], [0, 0, 1, 1], [], []>} : vector<1x32xf32>, vector<32x32xf32>, vector<1x32xf32> -> vector<1x32xf32>
    %505 = arith.addf %503, %504 : vector<1x32xf32>
    %506 = arith.addf %505, %117 : vector<1x32xf32>
    %507 = math.tanh %506 : vector<1x32xf32>
    %cst_232 = arith.constant dense<0.000000e+00> : vector<1x128xf32>
    %508 = tpu.matmul %507, %118, %cst_232 {dimension_numbers = #tpu.dot_dimension_numbers<[1], [0], [0], [1], [0, 0, 1, 1], [], []>} : vector<1x32xf32>, vector<32x128xf32>, vector<1x128xf32> -> vector<1x128xf32>
    %509 = arith.addf %508, %119 : vector<1x128xf32>
    %510 = vector.shape_cast %509 : vector<1x128xf32> to vector<1x1x128xf32>
    %cst_233 = arith.constant dense<0xFF800000> : vector<1xf32>
    %511 = vector.multi_reduction <maximumf>, %510, %cst_233 [1, 2] : vector<1x1x128xf32> to vector<1xf32>
    %512 = vector.shape_cast %511 : vector<1xf32> to vector<1x1x1xf32>
    %513 = vector.extract %512[0, 0, 0] : f32 from vector<1x1x1xf32>
    %514 = vector.broadcast %513 : f32 to vector<1x128xf32>
    %515 = arith.subf %509, %514 : vector<1x128xf32>
    %516 = math.exp %515 : vector<1x128xf32>
    %517 = vector.shape_cast %516 : vector<1x128xf32> to vector<1x1x128xf32>
    %cst_234 = arith.constant dense<0.000000e+00> : vector<1xf32>
    %518 = vector.multi_reduction <add>, %517, %cst_234 [1, 2] : vector<1x1x128xf32> to vector<1xf32>
    %519 = vector.shape_cast %518 : vector<1xf32> to vector<1x1x1xf32>
    %520 = vector.extract %519[0, 0, 0] : f32 from vector<1x1x1xf32>
    %cst_235 = arith.constant 1.000000e+00 : f32
    %521 = arith.divf %cst_235, %520 : f32
    %522 = vector.broadcast %513 : f32 to vector<1x128xf32>
    %523 = arith.cmpf oeq, %509, %522 : vector<1x128xf32>
    %c128_i32_236 = arith.constant 128 : i32
    %524 = vector.broadcast %c128_i32_236 : i32 to vector<1x128xi32>
    %525 = arith.select %523, %123, %524 : vector<1x128xi1>, vector<1x128xi32>
    %526 = vector.shape_cast %525 : vector<1x128xi32> to vector<1x1x128xi32>
    %cst_237 = arith.constant dense<2147483647> : vector<1xi32>
    %527 = vector.multi_reduction <minsi>, %526, %cst_237 [1, 2] : vector<1x1x128xi32> to vector<1xi32>
    %528 = vector.shape_cast %527 : vector<1xi32> to vector<1x1x1xi32>
    %529 = vector.extract %528[0, 0, 0] : i32 from vector<1x1x1xi32>
    %530 = arith.index_cast %c4_i32_213 : i32 to index
    %531 = memref.load %arg19[%530] : memref<8xi32, #tpu.memory_space<smem>>
    memref.store %529, %arg19[%530] : memref<8xi32, #tpu.memory_space<smem>>
    %532 = arith.index_cast %c4_i32_213 : i32 to index
    %533 = memref.load %arg20[%532] : memref<8xf32, #tpu.memory_space<smem>>
    memref.store %521, %arg20[%532] : memref<8xf32, #tpu.memory_space<smem>>
    %c0_238 = arith.constant 0 : index
    %534 = memref.load %arg27[%c0_238] : memref<1xi32, #tpu.memory_space<smem>>
    memref.store %529, %arg27[%c0_238] : memref<1xi32, #tpu.memory_space<smem>>
    %c5_i32_239 = arith.constant 5 : i32
    %c0_240 = arith.constant 0 : index
    %535 = memref.load %arg27[%c0_240] : memref<1xi32, #tpu.memory_space<smem>>
    %536 = arith.index_cast %535 : i32 to index
    %c0_241 = arith.constant 0 : index
    %537 = vector.load %arg2[%536, %c0_241] : memref<128x32xf32, #tpu.memory_space<vmem>>, vector<1x32xf32>
    %cst_242 = arith.constant dense<0.000000e+00> : vector<1x96xf32>
    %538 = tpu.matmul %537, %111, %cst_242 {dimension_numbers = #tpu.dot_dimension_numbers<[1], [0], [0], [1], [0, 0, 1, 1], [], []>} : vector<1x32xf32>, vector<32x96xf32>, vector<1x96xf32> -> vector<1x96xf32>
    %539 = arith.addf %538, %113 : vector<1x96xf32>
    %c0_243 = arith.constant 0 : index
    %c0_244 = arith.constant 0 : index
    %540 = vector.load %arg26[%c0_243, %c0_244] : memref<1x32xf32, #tpu.memory_space<vmem>>, vector<1x32xf32>
    %cst_245 = arith.constant dense<0.000000e+00> : vector<1x96xf32>
    %541 = tpu.matmul %540, %112, %cst_245 {dimension_numbers = #tpu.dot_dimension_numbers<[1], [0], [0], [1], [0, 0, 1, 1], [], []>} : vector<1x32xf32>, vector<32x96xf32>, vector<1x96xf32> -> vector<1x96xf32>
    %542 = arith.addf %541, %114 : vector<1x96xf32>
    %543 = vector.extract_strided_slice %539 {offsets = [0, 0], sizes = [1, 32], strides = [1, 1]} : vector<1x96xf32> to vector<1x32xf32>
    %544 = vector.extract_strided_slice %542 {offsets = [0, 0], sizes = [1, 32], strides = [1, 1]} : vector<1x96xf32> to vector<1x32xf32>
    %545 = arith.addf %543, %544 : vector<1x32xf32>
    %546 = arith.negf %545 : vector<1x32xf32>
    %547 = math.exp %546 : vector<1x32xf32>
    %cst_246 = arith.constant 1.000000e+00 : f32
    %548 = vector.broadcast %cst_246 : f32 to vector<1x32xf32>
    %549 = arith.addf %548, %547 : vector<1x32xf32>
    %550 = arith.divf %548, %549 : vector<1x32xf32>
    %551 = vector.extract_strided_slice %539 {offsets = [0, 32], sizes = [1, 32], strides = [1, 1]} : vector<1x96xf32> to vector<1x32xf32>
    %552 = vector.extract_strided_slice %542 {offsets = [0, 32], sizes = [1, 32], strides = [1, 1]} : vector<1x96xf32> to vector<1x32xf32>
    %553 = arith.addf %551, %552 : vector<1x32xf32>
    %554 = arith.negf %553 : vector<1x32xf32>
    %555 = math.exp %554 : vector<1x32xf32>
    %cst_247 = arith.constant 1.000000e+00 : f32
    %556 = vector.broadcast %cst_247 : f32 to vector<1x32xf32>
    %557 = arith.addf %556, %555 : vector<1x32xf32>
    %558 = arith.divf %556, %557 : vector<1x32xf32>
    %559 = vector.extract_strided_slice %539 {offsets = [0, 64], sizes = [1, 32], strides = [1, 1]} : vector<1x96xf32> to vector<1x32xf32>
    %560 = vector.extract_strided_slice %542 {offsets = [0, 64], sizes = [1, 32], strides = [1, 1]} : vector<1x96xf32> to vector<1x32xf32>
    %561 = arith.mulf %550, %560 : vector<1x32xf32>
    %562 = arith.addf %559, %561 : vector<1x32xf32>
    %563 = math.tanh %562 : vector<1x32xf32>
    %cst_248 = arith.constant 1.000000e+00 : f32
    %564 = vector.broadcast %cst_248 : f32 to vector<1x32xf32>
    %565 = arith.subf %564, %558 : vector<1x32xf32>
    %566 = arith.mulf %565, %563 : vector<1x32xf32>
    %567 = arith.mulf %558, %540 : vector<1x32xf32>
    %568 = arith.addf %566, %567 : vector<1x32xf32>
    %c0_249 = arith.constant 0 : index
    %c0_250 = arith.constant 0 : index
    %569 = vector.load %arg26[%c0_249, %c0_250] : memref<1x32xf32, #tpu.memory_space<vmem>>, vector<1x32xf32>
    tpu.vector_store %arg26[%c0_249, %c0_250], %568 {strides = array<i32>} : memref<1x32xf32, #tpu.memory_space<vmem>>, vector<1x32xf32>,
    %cst_251 = arith.constant dense<0.000000e+00> : vector<1x8xf32>
    %570 = tpu.matmul %568, %110, %cst_251 {dimension_numbers = #tpu.dot_dimension_numbers<[1], [0], [0], [1], [0, 0, 1, 1], [], []>} : vector<1x32xf32>, vector<32x8xf32>, vector<1x8xf32> -> vector<1x8xf32>
    %571 = vector.broadcast %cst_109 : f32 to vector<1x8xf32>
    %572 = arith.select %122, %570, %571 : vector<1x8xi1>, vector<1x8xf32>
    %cst_252 = arith.constant dense<0xFF800000> : vector<1xf32>
    %573 = vector.multi_reduction <maximumf>, %572, %cst_252 [1] : vector<1x8xf32> to vector<1xf32>
    %cst_253 = arith.constant 0xFF800000 : f32
    %574 = vector.broadcast %cst_253 : f32 to vector<1xf32>
    %575 = arith.maximumf %574, %573 : vector<1xf32>
    %576 = vector.shape_cast %575 : vector<1xf32> to vector<1x1xf32>
    %577 = vector.broadcast %576 : vector<1x1xf32> to vector<1x8xf32>
    %578 = arith.subf %572, %577 : vector<1x8xf32>
    %579 = math.exp %578 : vector<1x8xf32>
    %cst_254 = arith.constant dense<0.000000e+00> : vector<1xf32>
    %580 = vector.multi_reduction <add>, %579, %cst_254 [1] : vector<1x8xf32> to vector<1xf32>
    %581 = vector.shape_cast %580 : vector<1xf32> to vector<1x1xf32>
    %582 = vector.broadcast %581 : vector<1x1xf32> to vector<1x8xf32>
    %583 = arith.divf %579, %582 : vector<1x8xf32>
    %cst_255 = arith.constant dense<0.000000e+00> : vector<1x32xf32>
    %584 = tpu.matmul %583, %109, %cst_255 {dimension_numbers = #tpu.dot_dimension_numbers<[1], [0], [0], [1], [0, 0, 1, 1], [], []>} : vector<1x8xf32>, vector<8x32xf32>, vector<1x32xf32> -> vector<1x32xf32>
    %cst_256 = arith.constant dense<0.000000e+00> : vector<1x32xf32>
    %585 = tpu.matmul %568, %115, %cst_256 {dimension_numbers = #tpu.dot_dimension_numbers<[1], [0], [0], [1], [0, 0, 1, 1], [], []>} : vector<1x32xf32>, vector<32x32xf32>, vector<1x32xf32> -> vector<1x32xf32>
    %cst_257 = arith.constant dense<0.000000e+00> : vector<1x32xf32>
    %586 = tpu.matmul %584, %116, %cst_257 {dimension_numbers = #tpu.dot_dimension_numbers<[1], [0], [0], [1], [0, 0, 1, 1], [], []>} : vector<1x32xf32>, vector<32x32xf32>, vector<1x32xf32> -> vector<1x32xf32>
    %587 = arith.addf %585, %586 : vector<1x32xf32>
    %588 = arith.addf %587, %117 : vector<1x32xf32>
    %589 = math.tanh %588 : vector<1x32xf32>
    %cst_258 = arith.constant dense<0.000000e+00> : vector<1x128xf32>
    %590 = tpu.matmul %589, %118, %cst_258 {dimension_numbers = #tpu.dot_dimension_numbers<[1], [0], [0], [1], [0, 0, 1, 1], [], []>} : vector<1x32xf32>, vector<32x128xf32>, vector<1x128xf32> -> vector<1x128xf32>
    %591 = arith.addf %590, %119 : vector<1x128xf32>
    %592 = vector.shape_cast %591 : vector<1x128xf32> to vector<1x1x128xf32>
    %cst_259 = arith.constant dense<0xFF800000> : vector<1xf32>
    %593 = vector.multi_reduction <maximumf>, %592, %cst_259 [1, 2] : vector<1x1x128xf32> to vector<1xf32>
    %594 = vector.shape_cast %593 : vector<1xf32> to vector<1x1x1xf32>
    %595 = vector.extract %594[0, 0, 0] : f32 from vector<1x1x1xf32>
    %596 = vector.broadcast %595 : f32 to vector<1x128xf32>
    %597 = arith.subf %591, %596 : vector<1x128xf32>
    %598 = math.exp %597 : vector<1x128xf32>
    %599 = vector.shape_cast %598 : vector<1x128xf32> to vector<1x1x128xf32>
    %cst_260 = arith.constant dense<0.000000e+00> : vector<1xf32>
    %600 = vector.multi_reduction <add>, %599, %cst_260 [1, 2] : vector<1x1x128xf32> to vector<1xf32>
    %601 = vector.shape_cast %600 : vector<1xf32> to vector<1x1x1xf32>
    %602 = vector.extract %601[0, 0, 0] : f32 from vector<1x1x1xf32>
    %cst_261 = arith.constant 1.000000e+00 : f32
    %603 = arith.divf %cst_261, %602 : f32
    %604 = vector.broadcast %595 : f32 to vector<1x128xf32>
    %605 = arith.cmpf oeq, %591, %604 : vector<1x128xf32>
    %c128_i32_262 = arith.constant 128 : i32
    %606 = vector.broadcast %c128_i32_262 : i32 to vector<1x128xi32>
    %607 = arith.select %605, %123, %606 : vector<1x128xi1>, vector<1x128xi32>
    %608 = vector.shape_cast %607 : vector<1x128xi32> to vector<1x1x128xi32>
    %cst_263 = arith.constant dense<2147483647> : vector<1xi32>
    %609 = vector.multi_reduction <minsi>, %608, %cst_263 [1, 2] : vector<1x1x128xi32> to vector<1xi32>
    %610 = vector.shape_cast %609 : vector<1xi32> to vector<1x1x1xi32>
    %611 = vector.extract %610[0, 0, 0] : i32 from vector<1x1x1xi32>
    %612 = arith.index_cast %c5_i32_239 : i32 to index
    %613 = memref.load %arg19[%612] : memref<8xi32, #tpu.memory_space<smem>>
    memref.store %611, %arg19[%612] : memref<8xi32, #tpu.memory_space<smem>>
    %614 = arith.index_cast %c5_i32_239 : i32 to index
    %615 = memref.load %arg20[%614] : memref<8xf32, #tpu.memory_space<smem>>
    memref.store %603, %arg20[%614] : memref<8xf32, #tpu.memory_space<smem>>
    %c0_264 = arith.constant 0 : index
    %616 = memref.load %arg27[%c0_264] : memref<1xi32, #tpu.memory_space<smem>>
    memref.store %611, %arg27[%c0_264] : memref<1xi32, #tpu.memory_space<smem>>
    %c6_i32_265 = arith.constant 6 : i32
    %c0_266 = arith.constant 0 : index
    %617 = memref.load %arg27[%c0_266] : memref<1xi32, #tpu.memory_space<smem>>
    %618 = arith.index_cast %617 : i32 to index
    %c0_267 = arith.constant 0 : index
    %619 = vector.load %arg2[%618, %c0_267] : memref<128x32xf32, #tpu.memory_space<vmem>>, vector<1x32xf32>
    %cst_268 = arith.constant dense<0.000000e+00> : vector<1x96xf32>
    %620 = tpu.matmul %619, %111, %cst_268 {dimension_numbers = #tpu.dot_dimension_numbers<[1], [0], [0], [1], [0, 0, 1, 1], [], []>} : vector<1x32xf32>, vector<32x96xf32>, vector<1x96xf32> -> vector<1x96xf32>
    %621 = arith.addf %620, %113 : vector<1x96xf32>
    %c0_269 = arith.constant 0 : index
    %c0_270 = arith.constant 0 : index
    %622 = vector.load %arg26[%c0_269, %c0_270] : memref<1x32xf32, #tpu.memory_space<vmem>>, vector<1x32xf32>
    %cst_271 = arith.constant dense<0.000000e+00> : vector<1x96xf32>
    %623 = tpu.matmul %622, %112, %cst_271 {dimension_numbers = #tpu.dot_dimension_numbers<[1], [0], [0], [1], [0, 0, 1, 1], [], []>} : vector<1x32xf32>, vector<32x96xf32>, vector<1x96xf32> -> vector<1x96xf32>
    %624 = arith.addf %623, %114 : vector<1x96xf32>
    %625 = vector.extract_strided_slice %621 {offsets = [0, 0], sizes = [1, 32], strides = [1, 1]} : vector<1x96xf32> to vector<1x32xf32>
    %626 = vector.extract_strided_slice %624 {offsets = [0, 0], sizes = [1, 32], strides = [1, 1]} : vector<1x96xf32> to vector<1x32xf32>
    %627 = arith.addf %625, %626 : vector<1x32xf32>
    %628 = arith.negf %627 : vector<1x32xf32>
    %629 = math.exp %628 : vector<1x32xf32>
    %cst_272 = arith.constant 1.000000e+00 : f32
    %630 = vector.broadcast %cst_272 : f32 to vector<1x32xf32>
    %631 = arith.addf %630, %629 : vector<1x32xf32>
    %632 = arith.divf %630, %631 : vector<1x32xf32>
    %633 = vector.extract_strided_slice %621 {offsets = [0, 32], sizes = [1, 32], strides = [1, 1]} : vector<1x96xf32> to vector<1x32xf32>
    %634 = vector.extract_strided_slice %624 {offsets = [0, 32], sizes = [1, 32], strides = [1, 1]} : vector<1x96xf32> to vector<1x32xf32>
    %635 = arith.addf %633, %634 : vector<1x32xf32>
    %636 = arith.negf %635 : vector<1x32xf32>
    %637 = math.exp %636 : vector<1x32xf32>
    %cst_273 = arith.constant 1.000000e+00 : f32
    %638 = vector.broadcast %cst_273 : f32 to vector<1x32xf32>
    %639 = arith.addf %638, %637 : vector<1x32xf32>
    %640 = arith.divf %638, %639 : vector<1x32xf32>
    %641 = vector.extract_strided_slice %621 {offsets = [0, 64], sizes = [1, 32], strides = [1, 1]} : vector<1x96xf32> to vector<1x32xf32>
    %642 = vector.extract_strided_slice %624 {offsets = [0, 64], sizes = [1, 32], strides = [1, 1]} : vector<1x96xf32> to vector<1x32xf32>
    %643 = arith.mulf %632, %642 : vector<1x32xf32>
    %644 = arith.addf %641, %643 : vector<1x32xf32>
    %645 = math.tanh %644 : vector<1x32xf32>
    %cst_274 = arith.constant 1.000000e+00 : f32
    %646 = vector.broadcast %cst_274 : f32 to vector<1x32xf32>
    %647 = arith.subf %646, %640 : vector<1x32xf32>
    %648 = arith.mulf %647, %645 : vector<1x32xf32>
    %649 = arith.mulf %640, %622 : vector<1x32xf32>
    %650 = arith.addf %648, %649 : vector<1x32xf32>
    %c0_275 = arith.constant 0 : index
    %c0_276 = arith.constant 0 : index
    %651 = vector.load %arg26[%c0_275, %c0_276] : memref<1x32xf32, #tpu.memory_space<vmem>>, vector<1x32xf32>
    tpu.vector_store %arg26[%c0_275, %c0_276], %650 {strides = array<i32>} : memref<1x32xf32, #tpu.memory_space<vmem>>, vector<1x32xf32>,
    %cst_277 = arith.constant dense<0.000000e+00> : vector<1x8xf32>
    %652 = tpu.matmul %650, %110, %cst_277 {dimension_numbers = #tpu.dot_dimension_numbers<[1], [0], [0], [1], [0, 0, 1, 1], [], []>} : vector<1x32xf32>, vector<32x8xf32>, vector<1x8xf32> -> vector<1x8xf32>
    %653 = vector.broadcast %cst_109 : f32 to vector<1x8xf32>
    %654 = arith.select %122, %652, %653 : vector<1x8xi1>, vector<1x8xf32>
    %cst_278 = arith.constant dense<0xFF800000> : vector<1xf32>
    %655 = vector.multi_reduction <maximumf>, %654, %cst_278 [1] : vector<1x8xf32> to vector<1xf32>
    %cst_279 = arith.constant 0xFF800000 : f32
    %656 = vector.broadcast %cst_279 : f32 to vector<1xf32>
    %657 = arith.maximumf %656, %655 : vector<1xf32>
    %658 = vector.shape_cast %657 : vector<1xf32> to vector<1x1xf32>
    %659 = vector.broadcast %658 : vector<1x1xf32> to vector<1x8xf32>
    %660 = arith.subf %654, %659 : vector<1x8xf32>
    %661 = math.exp %660 : vector<1x8xf32>
    %cst_280 = arith.constant dense<0.000000e+00> : vector<1xf32>
    %662 = vector.multi_reduction <add>, %661, %cst_280 [1] : vector<1x8xf32> to vector<1xf32>
    %663 = vector.shape_cast %662 : vector<1xf32> to vector<1x1xf32>
    %664 = vector.broadcast %663 : vector<1x1xf32> to vector<1x8xf32>
    %665 = arith.divf %661, %664 : vector<1x8xf32>
    %cst_281 = arith.constant dense<0.000000e+00> : vector<1x32xf32>
    %666 = tpu.matmul %665, %109, %cst_281 {dimension_numbers = #tpu.dot_dimension_numbers<[1], [0], [0], [1], [0, 0, 1, 1], [], []>} : vector<1x8xf32>, vector<8x32xf32>, vector<1x32xf32> -> vector<1x32xf32>
    %cst_282 = arith.constant dense<0.000000e+00> : vector<1x32xf32>
    %667 = tpu.matmul %650, %115, %cst_282 {dimension_numbers = #tpu.dot_dimension_numbers<[1], [0], [0], [1], [0, 0, 1, 1], [], []>} : vector<1x32xf32>, vector<32x32xf32>, vector<1x32xf32> -> vector<1x32xf32>
    %cst_283 = arith.constant dense<0.000000e+00> : vector<1x32xf32>
    %668 = tpu.matmul %666, %116, %cst_283 {dimension_numbers = #tpu.dot_dimension_numbers<[1], [0], [0], [1], [0, 0, 1, 1], [], []>} : vector<1x32xf32>, vector<32x32xf32>, vector<1x32xf32> -> vector<1x32xf32>
    %669 = arith.addf %667, %668 : vector<1x32xf32>
    %670 = arith.addf %669, %117 : vector<1x32xf32>
    %671 = math.tanh %670 : vector<1x32xf32>
    %cst_284 = arith.constant dense<0.000000e+00> : vector<1x128xf32>
    %672 = tpu.matmul %671, %118, %cst_284 {dimension_numbers = #tpu.dot_dimension_numbers<[1], [0], [0], [1], [0, 0, 1, 1], [], []>} : vector<1x32xf32>, vector<32x128xf32>, vector<1x128xf32> -> vector<1x128xf32>
    %673 = arith.addf %672, %119 : vector<1x128xf32>
    %674 = vector.shape_cast %673 : vector<1x128xf32> to vector<1x1x128xf32>
    %cst_285 = arith.constant dense<0xFF800000> : vector<1xf32>
    %675 = vector.multi_reduction <maximumf>, %674, %cst_285 [1, 2] : vector<1x1x128xf32> to vector<1xf32>
    %676 = vector.shape_cast %675 : vector<1xf32> to vector<1x1x1xf32>
    %677 = vector.extract %676[0, 0, 0] : f32 from vector<1x1x1xf32>
    %678 = vector.broadcast %677 : f32 to vector<1x128xf32>
    %679 = arith.subf %673, %678 : vector<1x128xf32>
    %680 = math.exp %679 : vector<1x128xf32>
    %681 = vector.shape_cast %680 : vector<1x128xf32> to vector<1x1x128xf32>
    %cst_286 = arith.constant dense<0.000000e+00> : vector<1xf32>
    %682 = vector.multi_reduction <add>, %681, %cst_286 [1, 2] : vector<1x1x128xf32> to vector<1xf32>
    %683 = vector.shape_cast %682 : vector<1xf32> to vector<1x1x1xf32>
    %684 = vector.extract %683[0, 0, 0] : f32 from vector<1x1x1xf32>
    %cst_287 = arith.constant 1.000000e+00 : f32
    %685 = arith.divf %cst_287, %684 : f32
    %686 = vector.broadcast %677 : f32 to vector<1x128xf32>
    %687 = arith.cmpf oeq, %673, %686 : vector<1x128xf32>
    %c128_i32_288 = arith.constant 128 : i32
    %688 = vector.broadcast %c128_i32_288 : i32 to vector<1x128xi32>
    %689 = arith.select %687, %123, %688 : vector<1x128xi1>, vector<1x128xi32>
    %690 = vector.shape_cast %689 : vector<1x128xi32> to vector<1x1x128xi32>
    %cst_289 = arith.constant dense<2147483647> : vector<1xi32>
    %691 = vector.multi_reduction <minsi>, %690, %cst_289 [1, 2] : vector<1x1x128xi32> to vector<1xi32>
    %692 = vector.shape_cast %691 : vector<1xi32> to vector<1x1x1xi32>
    %693 = vector.extract %692[0, 0, 0] : i32 from vector<1x1x1xi32>
    %694 = arith.index_cast %c6_i32_265 : i32 to index
    %695 = memref.load %arg19[%694] : memref<8xi32, #tpu.memory_space<smem>>
    memref.store %693, %arg19[%694] : memref<8xi32, #tpu.memory_space<smem>>
    %696 = arith.index_cast %c6_i32_265 : i32 to index
    %697 = memref.load %arg20[%696] : memref<8xf32, #tpu.memory_space<smem>>
    memref.store %685, %arg20[%696] : memref<8xf32, #tpu.memory_space<smem>>
    %c0_290 = arith.constant 0 : index
    %698 = memref.load %arg27[%c0_290] : memref<1xi32, #tpu.memory_space<smem>>
    memref.store %693, %arg27[%c0_290] : memref<1xi32, #tpu.memory_space<smem>>
    %c7_i32_291 = arith.constant 7 : i32
    %c0_292 = arith.constant 0 : index
    %699 = memref.load %arg27[%c0_292] : memref<1xi32, #tpu.memory_space<smem>>
    %700 = arith.index_cast %699 : i32 to index
    %c0_293 = arith.constant 0 : index
    %701 = vector.load %arg2[%700, %c0_293] : memref<128x32xf32, #tpu.memory_space<vmem>>, vector<1x32xf32>
    %cst_294 = arith.constant dense<0.000000e+00> : vector<1x96xf32>
    %702 = tpu.matmul %701, %111, %cst_294 {dimension_numbers = #tpu.dot_dimension_numbers<[1], [0], [0], [1], [0, 0, 1, 1], [], []>} : vector<1x32xf32>, vector<32x96xf32>, vector<1x96xf32> -> vector<1x96xf32>
    %703 = arith.addf %702, %113 : vector<1x96xf32>
    %c0_295 = arith.constant 0 : index
    %c0_296 = arith.constant 0 : index
    %704 = vector.load %arg26[%c0_295, %c0_296] : memref<1x32xf32, #tpu.memory_space<vmem>>, vector<1x32xf32>
    %cst_297 = arith.constant dense<0.000000e+00> : vector<1x96xf32>
    %705 = tpu.matmul %704, %112, %cst_297 {dimension_numbers = #tpu.dot_dimension_numbers<[1], [0], [0], [1], [0, 0, 1, 1], [], []>} : vector<1x32xf32>, vector<32x96xf32>, vector<1x96xf32> -> vector<1x96xf32>
    %706 = arith.addf %705, %114 : vector<1x96xf32>
    %707 = vector.extract_strided_slice %703 {offsets = [0, 0], sizes = [1, 32], strides = [1, 1]} : vector<1x96xf32> to vector<1x32xf32>
    %708 = vector.extract_strided_slice %706 {offsets = [0, 0], sizes = [1, 32], strides = [1, 1]} : vector<1x96xf32> to vector<1x32xf32>
    %709 = arith.addf %707, %708 : vector<1x32xf32>
    %710 = arith.negf %709 : vector<1x32xf32>
    %711 = math.exp %710 : vector<1x32xf32>
    %cst_298 = arith.constant 1.000000e+00 : f32
    %712 = vector.broadcast %cst_298 : f32 to vector<1x32xf32>
    %713 = arith.addf %712, %711 : vector<1x32xf32>
    %714 = arith.divf %712, %713 : vector<1x32xf32>
    %715 = vector.extract_strided_slice %703 {offsets = [0, 32], sizes = [1, 32], strides = [1, 1]} : vector<1x96xf32> to vector<1x32xf32>
    %716 = vector.extract_strided_slice %706 {offsets = [0, 32], sizes = [1, 32], strides = [1, 1]} : vector<1x96xf32> to vector<1x32xf32>
    %717 = arith.addf %715, %716 : vector<1x32xf32>
    %718 = arith.negf %717 : vector<1x32xf32>
    %719 = math.exp %718 : vector<1x32xf32>
    %cst_299 = arith.constant 1.000000e+00 : f32
    %720 = vector.broadcast %cst_299 : f32 to vector<1x32xf32>
    %721 = arith.addf %720, %719 : vector<1x32xf32>
    %722 = arith.divf %720, %721 : vector<1x32xf32>
    %723 = vector.extract_strided_slice %703 {offsets = [0, 64], sizes = [1, 32], strides = [1, 1]} : vector<1x96xf32> to vector<1x32xf32>
    %724 = vector.extract_strided_slice %706 {offsets = [0, 64], sizes = [1, 32], strides = [1, 1]} : vector<1x96xf32> to vector<1x32xf32>
    %725 = arith.mulf %714, %724 : vector<1x32xf32>
    %726 = arith.addf %723, %725 : vector<1x32xf32>
    %727 = math.tanh %726 : vector<1x32xf32>
    %cst_300 = arith.constant 1.000000e+00 : f32
    %728 = vector.broadcast %cst_300 : f32 to vector<1x32xf32>
    %729 = arith.subf %728, %722 : vector<1x32xf32>
    %730 = arith.mulf %729, %727 : vector<1x32xf32>
    %731 = arith.mulf %722, %704 : vector<1x32xf32>
    %732 = arith.addf %730, %731 : vector<1x32xf32>
    %c0_301 = arith.constant 0 : index
    %c0_302 = arith.constant 0 : index
    %733 = vector.load %arg26[%c0_301, %c0_302] : memref<1x32xf32, #tpu.memory_space<vmem>>, vector<1x32xf32>
    tpu.vector_store %arg26[%c0_301, %c0_302], %732 {strides = array<i32>} : memref<1x32xf32, #tpu.memory_space<vmem>>, vector<1x32xf32>,
    %cst_303 = arith.constant dense<0.000000e+00> : vector<1x8xf32>
    %734 = tpu.matmul %732, %110, %cst_303 {dimension_numbers = #tpu.dot_dimension_numbers<[1], [0], [0], [1], [0, 0, 1, 1], [], []>} : vector<1x32xf32>, vector<32x8xf32>, vector<1x8xf32> -> vector<1x8xf32>
    %735 = vector.broadcast %cst_109 : f32 to vector<1x8xf32>
    %736 = arith.select %122, %734, %735 : vector<1x8xi1>, vector<1x8xf32>
    %cst_304 = arith.constant dense<0xFF800000> : vector<1xf32>
    %737 = vector.multi_reduction <maximumf>, %736, %cst_304 [1] : vector<1x8xf32> to vector<1xf32>
    %cst_305 = arith.constant 0xFF800000 : f32
    %738 = vector.broadcast %cst_305 : f32 to vector<1xf32>
    %739 = arith.maximumf %738, %737 : vector<1xf32>
    %740 = vector.shape_cast %739 : vector<1xf32> to vector<1x1xf32>
    %741 = vector.broadcast %740 : vector<1x1xf32> to vector<1x8xf32>
    %742 = arith.subf %736, %741 : vector<1x8xf32>
    %743 = math.exp %742 : vector<1x8xf32>
    %cst_306 = arith.constant dense<0.000000e+00> : vector<1xf32>
    %744 = vector.multi_reduction <add>, %743, %cst_306 [1] : vector<1x8xf32> to vector<1xf32>
    %745 = vector.shape_cast %744 : vector<1xf32> to vector<1x1xf32>
    %746 = vector.broadcast %745 : vector<1x1xf32> to vector<1x8xf32>
    %747 = arith.divf %743, %746 : vector<1x8xf32>
    %cst_307 = arith.constant dense<0.000000e+00> : vector<1x32xf32>
    %748 = tpu.matmul %747, %109, %cst_307 {dimension_numbers = #tpu.dot_dimension_numbers<[1], [0], [0], [1], [0, 0, 1, 1], [], []>} : vector<1x8xf32>, vector<8x32xf32>, vector<1x32xf32> -> vector<1x32xf32>
    %cst_308 = arith.constant dense<0.000000e+00> : vector<1x32xf32>
    %749 = tpu.matmul %732, %115, %cst_308 {dimension_numbers = #tpu.dot_dimension_numbers<[1], [0], [0], [1], [0, 0, 1, 1], [], []>} : vector<1x32xf32>, vector<32x32xf32>, vector<1x32xf32> -> vector<1x32xf32>
    %cst_309 = arith.constant dense<0.000000e+00> : vector<1x32xf32>
    %750 = tpu.matmul %748, %116, %cst_309 {dimension_numbers = #tpu.dot_dimension_numbers<[1], [0], [0], [1], [0, 0, 1, 1], [], []>} : vector<1x32xf32>, vector<32x32xf32>, vector<1x32xf32> -> vector<1x32xf32>
    %751 = arith.addf %749, %750 : vector<1x32xf32>
    %752 = arith.addf %751, %117 : vector<1x32xf32>
    %753 = math.tanh %752 : vector<1x32xf32>
    %cst_310 = arith.constant dense<0.000000e+00> : vector<1x128xf32>
    %754 = tpu.matmul %753, %118, %cst_310 {dimension_numbers = #tpu.dot_dimension_numbers<[1], [0], [0], [1], [0, 0, 1, 1], [], []>} : vector<1x32xf32>, vector<32x128xf32>, vector<1x128xf32> -> vector<1x128xf32>
    %755 = arith.addf %754, %119 : vector<1x128xf32>
    %756 = vector.shape_cast %755 : vector<1x128xf32> to vector<1x1x128xf32>
    %cst_311 = arith.constant dense<0xFF800000> : vector<1xf32>
    %757 = vector.multi_reduction <maximumf>, %756, %cst_311 [1, 2] : vector<1x1x128xf32> to vector<1xf32>
    %758 = vector.shape_cast %757 : vector<1xf32> to vector<1x1x1xf32>
    %759 = vector.extract %758[0, 0, 0] : f32 from vector<1x1x1xf32>
    %760 = vector.broadcast %759 : f32 to vector<1x128xf32>
    %761 = arith.subf %755, %760 : vector<1x128xf32>
    %762 = math.exp %761 : vector<1x128xf32>
    %763 = vector.shape_cast %762 : vector<1x128xf32> to vector<1x1x128xf32>
    %cst_312 = arith.constant dense<0.000000e+00> : vector<1xf32>
    %764 = vector.multi_reduction <add>, %763, %cst_312 [1, 2] : vector<1x1x128xf32> to vector<1xf32>
    %765 = vector.shape_cast %764 : vector<1xf32> to vector<1x1x1xf32>
    %766 = vector.extract %765[0, 0, 0] : f32 from vector<1x1x1xf32>
    %cst_313 = arith.constant 1.000000e+00 : f32
    %767 = arith.divf %cst_313, %766 : f32
    %768 = vector.broadcast %759 : f32 to vector<1x128xf32>
    %769 = arith.cmpf oeq, %755, %768 : vector<1x128xf32>
    %c128_i32_314 = arith.constant 128 : i32
    %770 = vector.broadcast %c128_i32_314 : i32 to vector<1x128xi32>
    %771 = arith.select %769, %123, %770 : vector<1x128xi1>, vector<1x128xi32>
    %772 = vector.shape_cast %771 : vector<1x128xi32> to vector<1x1x128xi32>
    %cst_315 = arith.constant dense<2147483647> : vector<1xi32>
    %773 = vector.multi_reduction <minsi>, %772, %cst_315 [1, 2] : vector<1x1x128xi32> to vector<1xi32>
    %774 = vector.shape_cast %773 : vector<1xi32> to vector<1x1x1xi32>
    %775 = vector.extract %774[0, 0, 0] : i32 from vector<1x1x1xi32>
    %776 = arith.index_cast %c7_i32_291 : i32 to index
    %777 = memref.load %arg19[%776] : memref<8xi32, #tpu.memory_space<smem>>
    memref.store %775, %arg19[%776] : memref<8xi32, #tpu.memory_space<smem>>
    %778 = arith.index_cast %c7_i32_291 : i32 to index
    %779 = memref.load %arg20[%778] : memref<8xf32, #tpu.memory_space<smem>>
    memref.store %767, %arg20[%778] : memref<8xf32, #tpu.memory_space<smem>>
    %c0_316 = arith.constant 0 : index
    %780 = memref.load %arg27[%c0_316] : memref<1xi32, #tpu.memory_space<smem>>
    memref.store %775, %arg27[%c0_316] : memref<1xi32, #tpu.memory_space<smem>>
    %c8_i32 = arith.constant 8 : i32
    return
  }
}

</mosaic_0001>

<llo_original>
// kernel: _run_greedy_search.1
$region0: #{_run_greedy_search.1}
  #allocation0 [shape = 'u32[]', space=smem, size = 0x4, offset = 0x4, fixed_abs, tag = 'smem constant byte address 0x4 - core index']
  #allocation1 [shape = 'u32[144,128]{1,0:T(1,128)}', space=vmem, size = 0x12000, scoped, tag = 'internal scratch']
  #allocation2 [shape = 'f32[8,32]{1,0:T(8,128)}', space=vmem, size = 0x1000, scoped, tag = 'scratch operand']
  #allocation3 [shape = 'f32[8,96]{1,0:T(8,128)}', space=vmem, size = 0x1000, scoped, tag = 'scratch operand']
  #allocation4 [shape = 'f32[8,96]{1,0:T(8,128)}', space=vmem, size = 0x1000, scoped, tag = 'scratch operand']
  #allocation5 [shape = 'f32[8,32]{1,0:T(8,128)}', space=vmem, size = 0x1000, scoped, tag = 'scratch operand']
  #allocation6 [shape = 'f32[8,32]{1,0:T(8,128)}', space=vmem, size = 0x1000, scoped, tag = 'scratch operand']
  #allocation7 [shape = 'f32[1,32]{1,0:T(1,128)}', space=vmem, size = 0x200, scoped, tag = 'scratch operand']
  #allocation8 [shape = 's32[1]{0:T(128)}', space=smem, size = 0x200, scoped, tag = 'scratch operand']
  #allocation9 [shape = 's32[1]{0:T(128)S(6)}', space=smem, size = 0x200, scoped, tag = 'scoped memory for _run_greedy_search.1']
  %s0 = inlined_call_operand.vmem [shape: s32[8], index: 0, kind: input, shape index: {}]
  %s1 = inlined_call_operand.<no memory space> [shape: s32[1], index: 1, kind: input, shape index: {}]
  %s2 = inlined_call_operand.vmem [shape: f32[128,32], index: 2, kind: input, shape index: {}]
  %s3 = inlined_call_operand.vmem [shape: f32[32,96], index: 3, kind: input, shape index: {}]
  %s4 = inlined_call_operand.vmem [shape: f32[32,96], index: 4, kind: input, shape index: {}]
  %s5 = inlined_call_operand.vmem [shape: f32[1,96], index: 5, kind: input, shape index: {}]
  %s6 = inlined_call_operand.vmem [shape: f32[1,96], index: 6, kind: input, shape index: {}]
  %s7 = inlined_call_operand.vmem [shape: f32[32,96], index: 7, kind: input, shape index: {}]
  %s8 = inlined_call_operand.vmem [shape: f32[32,96], index: 8, kind: input, shape index: {}]
  %s9 = inlined_call_operand.vmem [shape: f32[1,96], index: 9, kind: input, shape index: {}]
  %s10 = inlined_call_operand.vmem [shape: f32[1,96], index: 10, kind: input, shape index: {}]
  %s11 = inlined_call_operand.vmem [shape: f32[32,96], index: 11, kind: input, shape index: {}]
  %s12 = inlined_call_operand.vmem [shape: f32[32,96], index: 12, kind: input, shape index: {}]
  %s13 = inlined_call_operand.vmem [shape: f32[1,96], index: 13, kind: input, shape index: {}]
  %s14 = inlined_call_operand.vmem [shape: f32[1,96], index: 14, kind: input, shape index: {}]
  %s15 = inlined_call_operand.vmem [shape: f32[64,32], index: 15, kind: input, shape index: {}]
  %s16 = inlined_call_operand.hbm [shape: f32[1,32], index: 16, kind: input, shape index: {}]
  %s17 = inlined_call_operand.vmem [shape: f32[32,128], index: 17, kind: input, shape index: {}]
  %s18 = inlined_call_operand.vmem [shape: f32[1,128], index: 18, kind: input, shape index: {}]
  %s19 = inlined_call_operand.hbm [shape: s32[8], index: 19, kind: output, shape index: {0}]
  %s20 = inlined_call_operand.hbm [shape: f32[8], index: 20, kind: output, shape index: {1}]
  %21 = xla_tuple %s19, %s20
  %s22 = sld [smem:[#allocation0]]
  $region166: #{_run_greedy_search.1} parent=0
    _
  %s24 = ssub.s32 1, %s22
  %s25 = scalar_select 0, %s24, %s22
  %26 = sst [smem:[#allocation9]] %s1
  $region1: #{_run_greedy_search.1} parent=0
    #allocation10 [shape = 'u8[512]{0}', space=smem, size = 0x200, scoped, tag = 'input window, operand 0, single buffered']
    #allocation11 [shape = 's32[1]{0}', space=sflag, size = 0x4, scoped, tag = 'scoped memory for _run_greedy_search.1']
    #allocation12 [shape = 's32[1]{0}', space=sflag, size = 0x4, scoped, tag = 'scoped memory for _run_greedy_search.1']
    #allocation13 [shape = 's32[1]{0}', space=sflag, size = 0x4, scoped, tag = 'scoped memory for _run_greedy_search.1']
    #allocation14 [shape = 'u8[512]{0}', space=vmem, size = 0x400, scoped, tag = 'input window, operand 16, single buffered']
    #allocation15 [shape = 'u8[512]{0}', space=smem, size = 0x200, scoped, tag = 'output window, operand 0, single buffered']
    #allocation16 [shape = 'u8[512]{0}', space=smem, size = 0x200, scoped, tag = 'output window, operand 1, single buffered']
    #allocation17 [shape = 's32[1]{0}', space=sflag, size = 0x4, scoped, tag = 'scoped memory for _run_greedy_search.1']
    %27 = vsyncpa [#allocation13], 0
    %28 = vsyncpa [#allocation11], 0
    %29 = vsyncpa [#allocation12], 0
    %30 = vsyncpa [#allocation17], 0
    // Predicated region
    $region2: #{_run_greedy_search.1} parent=1 // pred_check
      _
    $region3: #{_run_greedy_search.1} parent=1 // pred_check_branch
      %32 = sbr.rel (0) target = $region5
    $region4: #{_run_greedy_search.1} parent=1 // pred_region
      %s34 = ssub.s32 16, 16
      %35 = vsyncadd [#allocation13], %s34
      %s37 = sshll.u32 %s0, 4
      %s38 = int_to_ptr.vmem [resolvable:$true] %s37
      %40 = dma.vmem_to_smem %s38, 16, [#allocation10], [#allocation13]
    $region5: #{_run_greedy_search.1} parent=1 // pred_fallthru
      _
    // Predicated region
    $region6: #{_run_greedy_search.1} parent=1 // pred_check
      _
    $region7: #{_run_greedy_search.1} parent=1 // pred_check_branch
      %42 = sbr.rel (0) target = $region9
    $region8: #{_run_greedy_search.1} parent=1 // pred_region
      _
    $region9: #{_run_greedy_search.1} parent=1 // pred_fallthru
      _
    // Predicated region
    $region10: #{_run_greedy_search.1} parent=1 // pred_check
      _
    $region11: #{_run_greedy_search.1} parent=1 // pred_check_branch
      %44 = sbr.rel (0) target = $region13
    $region12: #{_run_greedy_search.1} parent=1 // pred_region
      _
    $region13: #{_run_greedy_search.1} parent=1 // pred_fallthru
      _
    // Predicated region
    $region14: #{_run_greedy_search.1} parent=1 // pred_check
      _
    $region15: #{_run_greedy_search.1} parent=1 // pred_check_branch
      %46 = sbr.rel (0) target = $region17
    $region16: #{_run_greedy_search.1} parent=1 // pred_region
      _
    $region17: #{_run_greedy_search.1} parent=1 // pred_fallthru
      _
    // Predicated region
    $region18: #{_run_greedy_search.1} parent=1 // pred_check
      _
    $region19: #{_run_greedy_search.1} parent=1 // pred_check_branch
      %48 = sbr.rel (0) target = $region21
    $region20: #{_run_greedy_search.1} parent=1 // pred_region
      _
    $region21: #{_run_greedy_search.1} parent=1 // pred_fallthru
      _
    // Predicated region
    $region22: #{_run_greedy_search.1} parent=1 // pred_check
      _
    $region23: #{_run_greedy_search.1} parent=1 // pred_check_branch
      %50 = sbr.rel (0) target = $region25
    $region24: #{_run_greedy_search.1} parent=1 // pred_region
      _
    $region25: #{_run_greedy_search.1} parent=1 // pred_fallthru
      _
    // Predicated region
    $region26: #{_run_greedy_search.1} parent=1 // pred_check
      _
    $region27: #{_run_greedy_search.1} parent=1 // pred_check_branch
      %52 = sbr.rel (0) target = $region29
    $region28: #{_run_greedy_search.1} parent=1 // pred_region
      _
    $region29: #{_run_greedy_search.1} parent=1 // pred_fallthru
      _
    // Predicated region
    $region30: #{_run_greedy_search.1} parent=1 // pred_check
      _
    $region31: #{_run_greedy_search.1} parent=1 // pred_check_branch
      %54 = sbr.rel (0) target = $region33
    $region32: #{_run_greedy_search.1} parent=1 // pred_region
      _
    $region33: #{_run_greedy_search.1} parent=1 // pred_fallthru
      _
    // Predicated region
    $region34: #{_run_greedy_search.1} parent=1 // pred_check
      _
    $region35: #{_run_greedy_search.1} parent=1 // pred_check_branch
      %56 = sbr.rel (0) target = $region37
    $region36: #{_run_greedy_search.1} parent=1 // pred_region
      _
    $region37: #{_run_greedy_search.1} parent=1 // pred_fallthru
      _
    // Predicated region
    $region38: #{_run_greedy_search.1} parent=1 // pred_check
      _
    $region39: #{_run_greedy_search.1} parent=1 // pred_check_branch
      %58 = sbr.rel (0) target = $region41
    $region40: #{_run_greedy_search.1} parent=1 // pred_region
      _
    $region41: #{_run_greedy_search.1} parent=1 // pred_fallthru
      _
    // Predicated region
    $region42: #{_run_greedy_search.1} parent=1 // pred_check
      _
    $region43: #{_run_greedy_search.1} parent=1 // pred_check_branch
      %60 = sbr.rel (0) target = $region45
    $region44: #{_run_greedy_search.1} parent=1 // pred_region
      _
    $region45: #{_run_greedy_search.1} parent=1 // pred_fallthru
      _
    // Predicated region
    $region46: #{_run_greedy_search.1} parent=1 // pred_check
      _
    $region47: #{_run_greedy_search.1} parent=1 // pred_check_branch
      %62 = sbr.rel (0) target = $region49
    $region48: #{_run_greedy_search.1} parent=1 // pred_region
      _
    $region49: #{_run_greedy_search.1} parent=1 // pred_fallthru
      _
    // Predicated region
    $region50: #{_run_greedy_search.1} parent=1 // pred_check
      _
    $region51: #{_run_greedy_search.1} parent=1 // pred_check_branch
      %64 = sbr.rel (0) target = $region53
    $region52: #{_run_greedy_search.1} parent=1 // pred_region
      _
    $region53: #{_run_greedy_search.1} parent=1 // pred_fallthru
      _
    // Predicated region
    $region54: #{_run_greedy_search.1} parent=1 // pred_check
      _
    $region55: #{_run_greedy_search.1} parent=1 // pred_check_branch
      %66 = sbr.rel (0) target = $region57
    $region56: #{_run_greedy_search.1} parent=1 // pred_region
      _
    $region57: #{_run_greedy_search.1} parent=1 // pred_fallthru
      _
    // Predicated region
    $region58: #{_run_greedy_search.1} parent=1 // pred_check
      _
    $region59: #{_run_greedy_search.1} parent=1 // pred_check_branch
      %68 = sbr.rel (0) target = $region61
    $region60: #{_run_greedy_search.1} parent=1 // pred_region
      _
    $region61: #{_run_greedy_search.1} parent=1 // pred_fallthru
      _
    // Predicated region
    $region62: #{_run_greedy_search.1} parent=1 // pred_check
      _
    $region63: #{_run_greedy_search.1} parent=1 // pred_check_branch
      %70 = sbr.rel (0) target = $region65
    $region64: #{_run_greedy_search.1} parent=1 // pred_region
      _
    $region65: #{_run_greedy_search.1} parent=1 // pred_fallthru
      _
    // Predicated region
    $region66: #{_run_greedy_search.1} parent=1 // pred_check
      _
    $region67: #{_run_greedy_search.1} parent=1 // pred_check_branch
      %72 = sbr.rel (0) target = $region69
    $region68: #{_run_greedy_search.1} parent=1 // pred_region
      %s74 = ssub.s32 16, 16
      %75 = vsyncadd [#allocation11], %s74
      %s77 = sshll.u32 [#allocation14], 4
      %s78 = int_to_ptr.vmem [resolvable:$true] %s77
      %80 = dma.hbm_to_vmem [thread:$0]  %s16, 16, %s78, [#allocation11]
    $region69: #{_run_greedy_search.1} parent=1 // pred_fallthru
      _
    // Predicated region
    $region70: #{_run_greedy_search.1} parent=1 // pred_check
      _
    $region71: #{_run_greedy_search.1} parent=1 // pred_check_branch
      %82 = sbr.rel (0) target = $region73
    $region72: #{_run_greedy_search.1} parent=1 // pred_region
      _
    $region73: #{_run_greedy_search.1} parent=1 // pred_fallthru
      _
    // Predicated region
    $region74: #{_run_greedy_search.1} parent=1 // pred_check
      _
    $region75: #{_run_greedy_search.1} parent=1 // pred_check_branch
      %84 = sbr.rel (0) target = $region77
    $region76: #{_run_greedy_search.1} parent=1 // pred_region
      _
    $region77: #{_run_greedy_search.1} parent=1 // pred_fallthru
      _
    // Predicated region
    $region78: #{_run_greedy_search.1} parent=1 // pred_check
      _
    $region79: #{_run_greedy_search.1} parent=1 // pred_check_branch
      %86 = sbr.rel (0) target = $region81
    $region80: #{_run_greedy_search.1} parent=1 // pred_region
      %87 = dma.done [#allocation13], 16
    $region81: #{_run_greedy_search.1} parent=1 // pred_fallthru
      _
    // Predicated region
    $region82: #{_run_greedy_search.1} parent=1 // pred_check
      _
    $region83: #{_run_greedy_search.1} parent=1 // pred_check_branch
      %89 = sbr.rel (0) target = $region85
    $region84: #{_run_greedy_search.1} parent=1 // pred_region
      %90 = dma.done [#allocation11], 16
    $region85: #{_run_greedy_search.1} parent=1 // pred_fallthru
      _
    %91 = sfence
    %s92 = sld [smem:[#allocation9]]
    %s93 = sld [smem:[#allocation10]]
    %s94 = scalar_lea.vmem %s2, %s93
    %v95 = vld [vmem:[%s94] sm:$0x1]
    %vm96 = vcmask 253952
    %97 = vst.msk [vmem:[#allocation2] sm:$0x1] %vm96, %v95
    %s98 = sld [smem:[#allocation10 + $0x1]]
    %s99 = scalar_lea.vmem %s2, %s98
    %v100 = vld [vmem:[%s99] sm:$0x1]
    %101 = vst.msk [vmem:[#allocation2 + $0x1] sm:$0x1] %vm96, %v100
    %s102 = sld [smem:[#allocation10 + $0x2]]
    %s103 = scalar_lea.vmem %s2, %s102
    %v104 = vld [vmem:[%s103] sm:$0x1]
    %105 = vst.msk [vmem:[#allocation2 + $0x2] sm:$0x1] %vm96, %v104
    %s106 = sld [smem:[#allocation10 + $0x3]]
    %s107 = scalar_lea.vmem %s2, %s106
    %v108 = vld [vmem:[%s107] sm:$0x1]
    %109 = vst.msk [vmem:[#allocation2 + $0x3] sm:$0x1] %vm96, %v108
    %s110 = sld [smem:[#allocation10 + $0x4]]
    %s111 = scalar_lea.vmem %s2, %s110
    %v112 = vld [vmem:[%s111] sm:$0x1]
    %113 = vst.msk [vmem:[#allocation2 + $0x4] sm:$0x1] %vm96, %v112
    %s114 = sld [smem:[#allocation10 + $0x5]]
    %s115 = scalar_lea.vmem %s2, %s114
    %v116 = vld [vmem:[%s115] sm:$0x1]
    %117 = vst.msk [vmem:[#allocation2 + $0x5] sm:$0x1] %vm96, %v116
    %s118 = sld [smem:[#allocation10 + $0x6]]
    %s119 = scalar_lea.vmem %s2, %s118
    %v120 = vld [vmem:[%s119] sm:$0x1]
    %121 = vst.msk [vmem:[#allocation2 + $0x6] sm:$0x1] %vm96, %v120
    %s122 = sld [smem:[#allocation10 + $0x7]]
    %s123 = scalar_lea.vmem %s2, %s122
    %v124 = vld [vmem:[%s123] sm:$0x1]
    %125 = vst.msk [vmem:[#allocation2 + $0x7] sm:$0x1] %vm96, %v124
    %v126 = vld [vmem:[#allocation2] sm:$0xff]
    %v127 = vld [vmem:[%s3] sm:$0xff]
    %v128 = vld [vmem:[%s3 + $0x8] sm:$0xff]
    %v129 = vld [vmem:[%s3 + $0x10] sm:$0xff]
    %v130 = vld [vmem:[%s3 + $0x18] sm:$0xff]
    %v131 = vld [vmem:[%s5] sm:$0x1]
    %v133 = vlaneseq
    %v134 = vshrl.u32 %v133, 7
    %v135 = vsub.s32 0, %v134
    %v136 = vrot.slane %v131, %v135
    %vm138 = vcmask 261120
    %v140 = vsel %vm138, %v126, 0
    %142 = vmatprep.subr.mxu0 0.0
    %143 = vmatpush1.msra.mxu0 %v127
    %144 = vmatprep.subr.mxu0 0.0
    %145 = vmatpush1.msra.mxu0 %v128
    %146 = vmatprep.subr.mxu0 0.0
    %147 = vmatpush1.msra.mxu0 %v129
    %148 = vmatprep.subr.mxu0 0.0
    %149 = vmatpush1.msra.mxu0 %v130
    %150 = vmatprep.subr.mxu0 0.0
    %151 = vmatpush1.msra.mxu0 0.0
    %152 = vmatprep.subr.mxu0 0.0
    %153 = vmatpush1.msra.mxu0 0.0
    %154 = vmatprep.subr.mxu0 0.0
    %155 = vmatpush1.msra.mxu0 0.0
    %156 = vmatprep.subr.mxu0 0.0
    %157 = vmatpush1.msra.mxu0 0.0
    %158 = vmatprep.subr.mxu0 0.0
    %159 = vmatpush1.msra.mxu0 0.0
    %160 = vmatprep.subr.mxu0 0.0
    %161 = vmatpush1.msra.mxu0 0.0
    %162 = vmatprep.subr.mxu0 0.0
    %163 = vmatpush1.msra.mxu0 0.0
    %164 = vmatprep.subr.mxu0 0.0
    %165 = vmatpush1.msra.mxu0 0.0
    %166 = vmatprep.subr.mxu0 0.0
    %167 = vmatpush1.msra.mxu0 0.0
    %168 = vmatprep.subr.mxu0 0.0
    %169 = vmatpush1.msra.mxu0 0.0
    %170 = vmatprep.subr.mxu0 0.0
    %171 = vmatpush1.msra.mxu0 0.0
    %172 = vmatprep.subr.mxu0 0.0
    %173 = vmatpush1.msra.mxu0 0.0
    %174 = vmatprep.subr.mxu0 0.0
    %175 = vmatpush1.msra.mxu0 0.0
    %176 = vmatprep.subr.mxu0 0.0
    %177 = vmatpush1.msra.mxu0 0.0
    %178 = vmatprep.subr.mxu0 0.0
    %179 = vmatpush1.msra.mxu0 0.0
    %180 = vmatprep.subr.mxu0 0.0
    %181 = vmatpush1.msra.mxu0 0.0
    %182 = vmatprep.subr.mxu0 0.0
    %183 = vmatpush1.msra.mxu0 0.0
    %184 = vmatprep.subr.mxu0 0.0
    %185 = vmatpush1.msra.mxu0 0.0
    %186 = vmatprep.subr.mxu0 0.0
    %187 = vmatpush1.msra.mxu0 0.0
    %188 = vmatprep.subr.mxu0 0.0
    %189 = vmatpush1.msra.mxu0 0.0
    %190 = vmatprep.subr.mxu0 0.0
    %191 = vmatpush1.msra.mxu0 0.0
    %192 = vmatprep.subr.mxu0 0.0
    %193 = vmatpush1.msra.mxu0 0.0
    %194 = vmatprep.subr.mxu0 0.0
    %195 = vmatpush1.msra.mxu0 0.0
    %196 = vmatprep.subr.mxu0 0.0
    %197 = vmatpush1.msra.mxu0 0.0
    %198 = vmatprep.subr.mxu0 0.0
    %199 = vmatpush1.msra.mxu0 0.0
    %200 = vmatprep.subr.mxu0 0.0
    %201 = vmatpush1.msra.mxu0 0.0
    %202 = vmatprep.subr.mxu0 0.0
    %203 = vmatpush1.msra.mxu0 0.0
    %204 = vmatprep.subr.mxu0 0.0
    %205 = vmatpush1.msra.mxu0 0.0
    %206 = vmatprep.mubr.f32.mxu0 0.0
    %207 = vmatmul.mubr.f32.gmra.mrb[0].mxu0 %v140
    %v208 = vpop.f32.mrb[0].mxu0
    %v209 = vadd.f32 %v136, %v208
    %v210 = vpop.f32.mrb[0].mxu0
    %211 = vdwg.mxu0
    %vm212 = vcmask 785408
    %213 = vst.msk [vmem:[#allocation3] sm:$0xff] %vm212, %v209
    %v214 = vld [vmem:[#allocation2] sm:$0xff]
    %v215 = vld [vmem:[%s7] sm:$0xff]
    %v216 = vld [vmem:[%s7 + $0x8] sm:$0xff]
    %v217 = vld [vmem:[%s7 + $0x10] sm:$0xff]
    %v218 = vld [vmem:[%s7 + $0x18] sm:$0xff]
    %v219 = vld [vmem:[%s9] sm:$0x1]
    %v221 = vlaneseq
    %v222 = vshrl.u32 %v221, 7
    %v223 = vsub.s32 0, %v222
    %v224 = vrot.slane %v219, %v223
    %v227 = vsel %vm138, %v214, 0
    %229 = vmatprep.subr.mxu0 0.0
    %230 = vmatpush1.msra.mxu0 %v215
    %231 = vmatprep.subr.mxu0 0.0
    %232 = vmatpush1.msra.mxu0 %v216
    %233 = vmatprep.subr.mxu0 0.0
    %234 = vmatpush1.msra.mxu0 %v217
    %235 = vmatprep.subr.mxu0 0.0
    %236 = vmatpush1.msra.mxu0 %v218
    %237 = vmatprep.subr.mxu0 0.0
    %238 = vmatpush1.msra.mxu0 0.0
    %239 = vmatprep.subr.mxu0 0.0
    %240 = vmatpush1.msra.mxu0 0.0
    %241 = vmatprep.subr.mxu0 0.0
    %242 = vmatpush1.msra.mxu0 0.0
    %243 = vmatprep.subr.mxu0 0.0
    %244 = vmatpush1.msra.mxu0 0.0
    %245 = vmatprep.subr.mxu0 0.0
    %246 = vmatpush1.msra.mxu0 0.0
    %247 = vmatprep.subr.mxu0 0.0
    %248 = vmatpush1.msra.mxu0 0.0
    %249 = vmatprep.subr.mxu0 0.0
    %250 = vmatpush1.msra.mxu0 0.0
    %251 = vmatprep.subr.mxu0 0.0
    %252 = vmatpush1.msra.mxu0 0.0
    %253 = vmatprep.subr.mxu0 0.0
    %254 = vmatpush1.msra.mxu0 0.0
    %255 = vmatprep.subr.mxu0 0.0
    %256 = vmatpush1.msra.mxu0 0.0
    %257 = vmatprep.subr.mxu0 0.0
    %258 = vmatpush1.msra.mxu0 0.0
    %259 = vmatprep.subr.mxu0 0.0
    %260 = vmatpush1.msra.mxu0 0.0
    %261 = vmatprep.subr.mxu0 0.0
    %262 = vmatpush1.msra.mxu0 0.0
    %263 = vmatprep.subr.mxu0 0.0
    %264 = vmatpush1.msra.mxu0 0.0
    %265 = vmatprep.subr.mxu0 0.0
    %266 = vmatpush1.msra.mxu0 0.0
    %267 = vmatprep.subr.mxu0 0.0
    %268 = vmatpush1.msra.mxu0 0.0
    %269 = vmatprep.subr.mxu0 0.0
    %270 = vmatpush1.msra.mxu0 0.0
    %271 = vmatprep.subr.mxu0 0.0
    %272 = vmatpush1.msra.mxu0 0.0
    %273 = vmatprep.subr.mxu0 0.0
    %274 = vmatpush1.msra.mxu0 0.0
    %275 = vmatprep.subr.mxu0 0.0
    %276 = vmatpush1.msra.mxu0 0.0
    %277 = vmatprep.subr.mxu0 0.0
    %278 = vmatpush1.msra.mxu0 0.0
    %279 = vmatprep.subr.mxu0 0.0
    %280 = vmatpush1.msra.mxu0 0.0
    %281 = vmatprep.subr.mxu0 0.0
    %282 = vmatpush1.msra.mxu0 0.0
    %283 = vmatprep.subr.mxu0 0.0
    %284 = vmatpush1.msra.mxu0 0.0
    %285 = vmatprep.subr.mxu0 0.0
    %286 = vmatpush1.msra.mxu0 0.0
    %287 = vmatprep.subr.mxu0 0.0
    %288 = vmatpush1.msra.mxu0 0.0
    %289 = vmatprep.subr.mxu0 0.0
    %290 = vmatpush1.msra.mxu0 0.0
    %291 = vmatprep.subr.mxu0 0.0
    %292 = vmatpush1.msra.mxu0 0.0
    %293 = vmatprep.mubr.f32.mxu0 0.0
    %294 = vmatmul.mubr.f32.gmra.mrb[0].mxu0 %v227
    %v295 = vpop.f32.mrb[0].mxu0
    %v296 = vadd.f32 %v224, %v295
    %v297 = vpop.f32.mrb[0].mxu0
    %298 = vdwg.mxu0
    %299 = vst.msk [vmem:[#allocation4] sm:$0xff] %vm212, %v296
    %300 = vst.msk [vmem:[#allocation5] sm:$0xff] %vm138, 0.0
    %301 = vst.msk [vmem:[#allocation6] sm:$0xff] %vm138, 0.0
    %v302 = vld [vmem:[%s8] sm:$0xff]
    %v303 = vld [vmem:[%s8 + $0x8] sm:$0xff]
    %v304 = vld [vmem:[%s8 + $0x10] sm:$0xff]
    %v305 = vld [vmem:[%s8 + $0x18] sm:$0xff]
    %v306 = vld [vmem:[%s10] sm:$0x1]
    %307 = vst.msk [vmem:[#allocation7] sm:$0x1] %vm96, 0.0
    %p308 = scmp.gt.s32.totalorder %s92, 0
    // Predicated region
    $region86: #{_run_greedy_search.1} parent=1 // pred_check
      %p309 = pneg %p308
    $region87: #{_run_greedy_search.1} parent=1 // pred_check_branch
      %311 = sbr.rel (%p309) target = $region89
    $region88: #{_run_greedy_search.1} parent=1 // pred_region
      %s312 = ssub.s32 %s92, 1
      %s313 = scalar_lea.vmem [#allocation4], %s312
      %v314 = vld [vmem:[%s313] sm:$0x1]
      %v315 = vld [vmem:[#allocation7] sm:$0x1]
      %v317 = vsel %vm138, %v315, 0
      %319 = vmatprep.subr.mxu0 0.0
      %320 = vmatpush1.msra.mxu0 %v302
      %321 = vmatprep.subr.mxu0 0.0
      %322 = vmatpush1.msra.mxu0 %v303
      %323 = vmatprep.subr.mxu0 0.0
      %324 = vmatpush1.msra.mxu0 %v304
      %325 = vmatprep.subr.mxu0 0.0
      %326 = vmatpush1.msra.mxu0 %v305
      %327 = vmatprep.subr.mxu0 0.0
      %328 = vmatpush1.msra.mxu0 0.0
      %329 = vmatprep.subr.mxu0 0.0
      %330 = vmatpush1.msra.mxu0 0.0
      %331 = vmatprep.subr.mxu0 0.0
      %332 = vmatpush1.msra.mxu0 0.0
      %333 = vmatprep.subr.mxu0 0.0
      %334 = vmatpush1.msra.mxu0 0.0
      %335 = vmatprep.subr.mxu0 0.0
      %336 = vmatpush1.msra.mxu0 0.0
      %337 = vmatprep.subr.mxu0 0.0
      %338 = vmatpush1.msra.mxu0 0.0
      %339 = vmatprep.subr.mxu0 0.0
      %340 = vmatpush1.msra.mxu0 0.0
      %341 = vmatprep.subr.mxu0 0.0
      %342 = vmatpush1.msra.mxu0 0.0
      %343 = vmatprep.subr.mxu0 0.0
      %344 = vmatpush1.msra.mxu0 0.0
      %345 = vmatprep.subr.mxu0 0.0
      %346 = vmatpush1.msra.mxu0 0.0
      %347 = vmatprep.subr.mxu0 0.0
      %348 = vmatpush1.msra.mxu0 0.0
      %349 = vmatprep.subr.mxu0 0.0
      %350 = vmatpush1.msra.mxu0 0.0
      %351 = vmatprep.subr.mxu0 0.0
      %352 = vmatpush1.msra.mxu0 0.0
      %353 = vmatprep.subr.mxu0 0.0
      %354 = vmatpush1.msra.mxu0 0.0
      %355 = vmatprep.subr.mxu0 0.0
      %356 = vmatpush1.msra.mxu0 0.0
      %357 = vmatprep.subr.mxu0 0.0
      %358 = vmatpush1.msra.mxu0 0.0
      %359 = vmatprep.subr.mxu0 0.0
      %360 = vmatpush1.msra.mxu0 0.0
      %361 = vmatprep.subr.mxu0 0.0
      %362 = vmatpush1.msra.mxu0 0.0
      %363 = vmatprep.subr.mxu0 0.0
      %364 = vmatpush1.msra.mxu0 0.0
      %365 = vmatprep.subr.mxu0 0.0
      %366 = vmatpush1.msra.mxu0 0.0
      %367 = vmatprep.subr.mxu0 0.0
      %368 = vmatpush1.msra.mxu0 0.0
      %369 = vmatprep.subr.mxu0 0.0
      %370 = vmatpush1.msra.mxu0 0.0
      %371 = vmatprep.subr.mxu0 0.0
      %372 = vmatpush1.msra.mxu0 0.0
      %373 = vmatprep.subr.mxu0 0.0
      %374 = vmatpush1.msra.mxu0 0.0
      %375 = vmatprep.subr.mxu0 0.0
      %376 = vmatpush1.msra.mxu0 0.0
      %377 = vmatprep.subr.mxu0 0.0
      %378 = vmatpush1.msra.mxu0 0.0
      %379 = vmatprep.subr.mxu0 0.0
      %380 = vmatpush1.msra.mxu0 0.0
      %381 = vmatprep.subr.mxu0 0.0
      %382 = vmatpush1.msra.mxu0 0.0
      %383 = vmatprep.mubr.f32.mxu0 0.0
      %384 = vmatmul.mubr.f32.gmra.mrb[0].mxu0 %v317
      %v385 = vpop.f32.mrb[0].mxu0
      %v386 = vadd.f32 %v306, %v385
      %v387 = vpop.f32.mrb[0].mxu0
      %388 = vdwg.mxu0
      %v389 = vadd.f32 %v314, %v386
      %v390 = vxor.u32 %v389, 2147483648
      %v391 = vmul.f32 %v390, 1.442695
      %v392 = vpow.pop %v391
      %v393 = vadd.f32 %v392, 1.0
      %v394 = vrcp.pop %v393
      %v395 = vmul.f32 1.0, %v394
      %397 = vrot.lane.b32.xlu0 %v386, 64
      %v398 = vpop.permute.xlu0 %397
      %v400 = vmul.f32 %v395, %v398
      %402 = vrot.lane.b32.xlu0 %v400, 64
      %v403 = vpop.permute.xlu0 %402
      %v405 = vadd.f32 %v314, %v403
      %v406 = vtanh.pop %v405
      %v407 = vsub.f32 1.0, %v395
      %409 = vrot.lane.b32.xlu0 %v406, 96
      %v410 = vpop.permute.xlu0 %409
      %v412 = vmul.f32 %v407, %v410
      %v413 = vlaneseq
      %v414 = vshrl.u32 %v413, 7
      %v415 = vsub.s32 0, %v414
      %v416 = vrot.slane %v315, %v415
      %417 = vrot.lane.b32.xlu0 %v416, 32
      %v418 = vpop.permute.xlu0 %417
      %v420 = vmul.f32 %v395, %v418
      %v421 = vadd.f32 %v412, %v420
      %423 = vrot.lane.b32.xlu0 %v421, 96
      %v424 = vpop.permute.xlu0 %423
      %426 = vst.msk [vmem:[#allocation7] sm:$0x1] %vm96, %v424
      %s427 = scalar_lea.vmem [#allocation6], %s312
      %428 = vst.msk [vmem:[%s427] sm:$0x1] %vm96, %v424
    $region89: #{_run_greedy_search.1} parent=1 // pred_fallthru
      _
    %p429 = scmp.gt.s32.totalorder %s92, 1
    // Predicated region
    $region90: #{_run_greedy_search.1} parent=1 // pred_check
      %p430 = pneg %p429
    $region91: #{_run_greedy_search.1} parent=1 // pred_check_branch
      %432 = sbr.rel (%p430) target = $region93
    $region92: #{_run_greedy_search.1} parent=1 // pred_region
      %s433 = ssub.s32 %s92, 2
      %s434 = scalar_lea.vmem [#allocation4], %s433
      %v435 = vld [vmem:[%s434] sm:$0x1]
      %v436 = vld [vmem:[#allocation7] sm:$0x1]
      %v438 = vsel %vm138, %v436, 0
      %440 = vmatprep.subr.mxu0 0.0
      %441 = vmatpush1.msra.mxu0 %v302
      %442 = vmatprep.subr.mxu0 0.0
      %443 = vmatpush1.msra.mxu0 %v303
      %444 = vmatprep.subr.mxu0 0.0
      %445 = vmatpush1.msra.mxu0 %v304
      %446 = vmatprep.subr.mxu0 0.0
      %447 = vmatpush1.msra.mxu0 %v305
      %448 = vmatprep.subr.mxu0 0.0
      %449 = vmatpush1.msra.mxu0 0.0
      %450 = vmatprep.subr.mxu0 0.0
      %451 = vmatpush1.msra.mxu0 0.0
      %452 = vmatprep.subr.mxu0 0.0
      %453 = vmatpush1.msra.mxu0 0.0
      %454 = vmatprep.subr.mxu0 0.0
      %455 = vmatpush1.msra.mxu0 0.0
      %456 = vmatprep.subr.mxu0 0.0
      %457 = vmatpush1.msra.mxu0 0.0
      %458 = vmatprep.subr.mxu0 0.0
      %459 = vmatpush1.msra.mxu0 0.0
      %460 = vmatprep.subr.mxu0 0.0
      %461 = vmatpush1.msra.mxu0 0.0
      %462 = vmatprep.subr.mxu0 0.0
      %463 = vmatpush1.msra.mxu0 0.0
      %464 = vmatprep.subr.mxu0 0.0
      %465 = vmatpush1.msra.mxu0 0.0
      %466 = vmatprep.subr.mxu0 0.0
      %467 = vmatpush1.msra.mxu0 0.0
      %468 = vmatprep.subr.mxu0 0.0
      %469 = vmatpush1.msra.mxu0 0.0
      %470 = vmatprep.subr.mxu0 0.0
      %471 = vmatpush1.msra.mxu0 0.0
      %472 = vmatprep.subr.mxu0 0.0
      %473 = vmatpush1.msra.mxu0 0.0
      %474 = vmatprep.subr.mxu0 0.0
      %475 = vmatpush1.msra.mxu0 0.0
      %476 = vmatprep.subr.mxu0 0.0
      %477 = vmatpush1.msra.mxu0 0.0
      %478 = vmatprep.subr.mxu0 0.0
      %479 = vmatpush1.msra.mxu0 0.0
      %480 = vmatprep.subr.mxu0 0.0
      %481 = vmatpush1.msra.mxu0 0.0
      %482 = vmatprep.subr.mxu0 0.0
      %483 = vmatpush1.msra.mxu0 0.0
      %484 = vmatprep.subr.mxu0 0.0
      %485 = vmatpush1.msra.mxu0 0.0
      %486 = vmatprep.subr.mxu0 0.0
      %487 = vmatpush1.msra.mxu0 0.0
      %488 = vmatprep.subr.mxu0 0.0
      %489 = vmatpush1.msra.mxu0 0.0
      %490 = vmatprep.subr.mxu0 0.0
      %491 = vmatpush1.msra.mxu0 0.0
      %492 = vmatprep.subr.mxu0 0.0
      %493 = vmatpush1.msra.mxu0 0.0
      %494 = vmatprep.subr.mxu0 0.0
      %495 = vmatpush1.msra.mxu0 0.0
      %496 = vmatprep.subr.mxu0 0.0
      %497 = vmatpush1.msra.mxu0 0.0
      %498 = vmatprep.subr.mxu0 0.0
      %499 = vmatpush1.msra.mxu0 0.0
      %500 = vmatprep.subr.mxu0 0.0
      %501 = vmatpush1.msra.mxu0 0.0
      %502 = vmatprep.subr.mxu0 0.0
      %503 = vmatpush1.msra.mxu0 0.0
      %504 = vmatprep.mubr.f32.mxu0 0.0
      %505 = vmatmul.mubr.f32.gmra.mrb[0].mxu0 %v438
      %v506 = vpop.f32.mrb[0].mxu0
      %v507 = vadd.f32 %v306, %v506
      %v508 = vpop.f32.mrb[0].mxu0
      %509 = vdwg.mxu0
      %v510 = vadd.f32 %v435, %v507
      %v511 = vxor.u32 %v510, 2147483648
      %v512 = vmul.f32 %v511, 1.442695
      %v513 = vpow.pop %v512
      %v514 = vadd.f32 %v513, 1.0
      %v515 = vrcp.pop %v514
      %v516 = vmul.f32 1.0, %v515
      %518 = vrot.lane.b32.xlu0 %v507, 64
      %v519 = vpop.permute.xlu0 %518
      %v521 = vmul.f32 %v516, %v519
      %523 = vrot.lane.b32.xlu0 %v521, 64
      %v524 = vpop.permute.xlu0 %523
      %v526 = vadd.f32 %v435, %v524
      %v527 = vtanh.pop %v526
      %v528 = vsub.f32 1.0, %v516
      %530 = vrot.lane.b32.xlu0 %v527, 96
      %v531 = vpop.permute.xlu0 %530
      %v533 = vmul.f32 %v528, %v531
      %v534 = vlaneseq
      %v535 = vshrl.u32 %v534, 7
      %v536 = vsub.s32 0, %v535
      %v537 = vrot.slane %v436, %v536
      %538 = vrot.lane.b32.xlu0 %v537, 32
      %v539 = vpop.permute.xlu0 %538
      %v541 = vmul.f32 %v516, %v539
      %v542 = vadd.f32 %v533, %v541
      %544 = vrot.lane.b32.xlu0 %v542, 96
      %v545 = vpop.permute.xlu0 %544
      %547 = vst.msk [vmem:[#allocation7] sm:$0x1] %vm96, %v545
      %s548 = scalar_lea.vmem [#allocation6], %s433
      %549 = vst.msk [vmem:[%s548] sm:$0x1] %vm96, %v545
    $region93: #{_run_greedy_search.1} parent=1 // pred_fallthru
      _
    %p550 = scmp.gt.s32.totalorder %s92, 2
    // Predicated region
    $region94: #{_run_greedy_search.1} parent=1 // pred_check
      %p551 = pneg %p550
    $region95: #{_run_greedy_search.1} parent=1 // pred_check_branch
      %553 = sbr.rel (%p551) target = $region97
    $region96: #{_run_greedy_search.1} parent=1 // pred_region
      %s554 = ssub.s32 %s92, 3
      %s555 = scalar_lea.vmem [#allocation4], %s554
      %v556 = vld [vmem:[%s555] sm:$0x1]
      %v557 = vld [vmem:[#allocation7] sm:$0x1]
      %v559 = vsel %vm138, %v557, 0
      %561 = vmatprep.subr.mxu0 0.0
      %562 = vmatpush1.msra.mxu0 %v302
      %563 = vmatprep.subr.mxu0 0.0
      %564 = vmatpush1.msra.mxu0 %v303
      %565 = vmatprep.subr.mxu0 0.0
      %566 = vmatpush1.msra.mxu0 %v304
      %567 = vmatprep.subr.mxu0 0.0
      %568 = vmatpush1.msra.mxu0 %v305
      %569 = vmatprep.subr.mxu0 0.0
      %570 = vmatpush1.msra.mxu0 0.0
      %571 = vmatprep.subr.mxu0 0.0
      %572 = vmatpush1.msra.mxu0 0.0
      %573 = vmatprep.subr.mxu0 0.0
      %574 = vmatpush1.msra.mxu0 0.0
      %575 = vmatprep.subr.mxu0 0.0
      %576 = vmatpush1.msra.mxu0 0.0
      %577 = vmatprep.subr.mxu0 0.0
      %578 = vmatpush1.msra.mxu0 0.0
      %579 = vmatprep.subr.mxu0 0.0
      %580 = vmatpush1.msra.mxu0 0.0
      %581 = vmatprep.subr.mxu0 0.0
      %582 = vmatpush1.msra.mxu0 0.0
      %583 = vmatprep.subr.mxu0 0.0
      %584 = vmatpush1.msra.mxu0 0.0
      %585 = vmatprep.subr.mxu0 0.0
      %586 = vmatpush1.msra.mxu0 0.0
      %587 = vmatprep.subr.mxu0 0.0
      %588 = vmatpush1.msra.mxu0 0.0
      %589 = vmatprep.subr.mxu0 0.0
      %590 = vmatpush1.msra.mxu0 0.0
      %591 = vmatprep.subr.mxu0 0.0
      %592 = vmatpush1.msra.mxu0 0.0
      %593 = vmatprep.subr.mxu0 0.0
      %594 = vmatpush1.msra.mxu0 0.0
      %595 = vmatprep.subr.mxu0 0.0
      %596 = vmatpush1.msra.mxu0 0.0
      %597 = vmatprep.subr.mxu0 0.0
      %598 = vmatpush1.msra.mxu0 0.0
      %599 = vmatprep.subr.mxu0 0.0
      %600 = vmatpush1.msra.mxu0 0.0
      %601 = vmatprep.subr.mxu0 0.0
      %602 = vmatpush1.msra.mxu0 0.0
      %603 = vmatprep.subr.mxu0 0.0
      %604 = vmatpush1.msra.mxu0 0.0
      %605 = vmatprep.subr.mxu0 0.0
      %606 = vmatpush1.msra.mxu0 0.0
      %607 = vmatprep.subr.mxu0 0.0
      %608 = vmatpush1.msra.mxu0 0.0
      %609 = vmatprep.subr.mxu0 0.0
      %610 = vmatpush1.msra.mxu0 0.0
      %611 = vmatprep.subr.mxu0 0.0
      %612 = vmatpush1.msra.mxu0 0.0
      %613 = vmatprep.subr.mxu0 0.0
      %614 = vmatpush1.msra.mxu0 0.0
      %615 = vmatprep.subr.mxu0 0.0
      %616 = vmatpush1.msra.mxu0 0.0
      %617 = vmatprep.subr.mxu0 0.0
      %618 = vmatpush1.msra.mxu0 0.0
      %619 = vmatprep.subr.mxu0 0.0
      %620 = vmatpush1.msra.mxu0 0.0
      %621 = vmatprep.subr.mxu0 0.0
      %622 = vmatpush1.msra.mxu0 0.0
      %623 = vmatprep.subr.mxu0 0.0
      %624 = vmatpush1.msra.mxu0 0.0
      %625 = vmatprep.mubr.f32.mxu0 0.0
      %626 = vmatmul.mubr.f32.gmra.mrb[0].mxu0 %v559
      %v627 = vpop.f32.mrb[0].mxu0
      %v628 = vadd.f32 %v306, %v627
      %v629 = vpop.f32.mrb[0].mxu0
      %630 = vdwg.mxu0
      %v631 = vadd.f32 %v556, %v628
      %v632 = vxor.u32 %v631, 2147483648
      %v633 = vmul.f32 %v632, 1.442695
      %v634 = vpow.pop %v633
      %v635 = vadd.f32 %v634, 1.0
      %v636 = vrcp.pop %v635
      %v637 = vmul.f32 1.0, %v636
      %639 = vrot.lane.b32.xlu0 %v628, 64
      %v640 = vpop.permute.xlu0 %639
      %v642 = vmul.f32 %v637, %v640
      %644 = vrot.lane.b32.xlu0 %v642, 64
      %v645 = vpop.permute.xlu0 %644
      %v647 = vadd.f32 %v556, %v645
      %v648 = vtanh.pop %v647
      %v649 = vsub.f32 1.0, %v637
      %651 = vrot.lane.b32.xlu0 %v648, 96
      %v652 = vpop.permute.xlu0 %651
      %v654 = vmul.f32 %v649, %v652
      %v655 = vlaneseq
      %v656 = vshrl.u32 %v655, 7
      %v657 = vsub.s32 0, %v656
      %v658 = vrot.slane %v557, %v657
      %659 = vrot.lane.b32.xlu0 %v658, 32
      %v660 = vpop.permute.xlu0 %659
      %v662 = vmul.f32 %v637, %v660
      %v663 = vadd.f32 %v654, %v662
      %665 = vrot.lane.b32.xlu0 %v663, 96
      %v666 = vpop.permute.xlu0 %665
      %668 = vst.msk [vmem:[#allocation7] sm:$0x1] %vm96, %v666
      %s669 = scalar_lea.vmem [#allocation6], %s554
      %670 = vst.msk [vmem:[%s669] sm:$0x1] %vm96, %v666
    $region97: #{_run_greedy_search.1} parent=1 // pred_fallthru
      _
    %p671 = scmp.gt.s32.totalorder %s92, 3
    // Predicated region
    $region98: #{_run_greedy_search.1} parent=1 // pred_check
      %p672 = pneg %p671
    $region99: #{_run_greedy_search.1} parent=1 // pred_check_branch
      %674 = sbr.rel (%p672) target = $region101
    $region100: #{_run_greedy_search.1} parent=1 // pred_region
      %s675 = ssub.s32 %s92, 4
      %s676 = scalar_lea.vmem [#allocation4], %s675
      %v677 = vld [vmem:[%s676] sm:$0x1]
      %v678 = vld [vmem:[#allocation7] sm:$0x1]
      %v680 = vsel %vm138, %v678, 0
      %682 = vmatprep.subr.mxu0 0.0
      %683 = vmatpush1.msra.mxu0 %v302
      %684 = vmatprep.subr.mxu0 0.0
      %685 = vmatpush1.msra.mxu0 %v303
      %686 = vmatprep.subr.mxu0 0.0
      %687 = vmatpush1.msra.mxu0 %v304
      %688 = vmatprep.subr.mxu0 0.0
      %689 = vmatpush1.msra.mxu0 %v305
      %690 = vmatprep.subr.mxu0 0.0
      %691 = vmatpush1.msra.mxu0 0.0
      %692 = vmatprep.subr.mxu0 0.0
      %693 = vmatpush1.msra.mxu0 0.0
      %694 = vmatprep.subr.mxu0 0.0
      %695 = vmatpush1.msra.mxu0 0.0
      %696 = vmatprep.subr.mxu0 0.0
      %697 = vmatpush1.msra.mxu0 0.0
      %698 = vmatprep.subr.mxu0 0.0
      %699 = vmatpush1.msra.mxu0 0.0
      %700 = vmatprep.subr.mxu0 0.0
      %701 = vmatpush1.msra.mxu0 0.0
      %702 = vmatprep.subr.mxu0 0.0
      %703 = vmatpush1.msra.mxu0 0.0
      %704 = vmatprep.subr.mxu0 0.0
      %705 = vmatpush1.msra.mxu0 0.0
      %706 = vmatprep.subr.mxu0 0.0
      %707 = vmatpush1.msra.mxu0 0.0
      %708 = vmatprep.subr.mxu0 0.0
      %709 = vmatpush1.msra.mxu0 0.0
      %710 = vmatprep.subr.mxu0 0.0
      %711 = vmatpush1.msra.mxu0 0.0
      %712 = vmatprep.subr.mxu0 0.0
      %713 = vmatpush1.msra.mxu0 0.0
      %714 = vmatprep.subr.mxu0 0.0
      %715 = vmatpush1.msra.mxu0 0.0
      %716 = vmatprep.subr.mxu0 0.0
      %717 = vmatpush1.msra.mxu0 0.0
      %718 = vmatprep.subr.mxu0 0.0
      %719 = vmatpush1.msra.mxu0 0.0
      %720 = vmatprep.subr.mxu0 0.0
      %721 = vmatpush1.msra.mxu0 0.0
      %722 = vmatprep.subr.mxu0 0.0
      %723 = vmatpush1.msra.mxu0 0.0
      %724 = vmatprep.subr.mxu0 0.0
      %725 = vmatpush1.msra.mxu0 0.0
      %726 = vmatprep.subr.mxu0 0.0
      %727 = vmatpush1.msra.mxu0 0.0
      %728 = vmatprep.subr.mxu0 0.0
      %729 = vmatpush1.msra.mxu0 0.0
      %730 = vmatprep.subr.mxu0 0.0
      %731 = vmatpush1.msra.mxu0 0.0
      %732 = vmatprep.subr.mxu0 0.0
      %733 = vmatpush1.msra.mxu0 0.0
      %734 = vmatprep.subr.mxu0 0.0
      %735 = vmatpush1.msra.mxu0 0.0
      %736 = vmatprep.subr.mxu0 0.0
      %737 = vmatpush1.msra.mxu0 0.0
      %738 = vmatprep.subr.mxu0 0.0
      %739 = vmatpush1.msra.mxu0 0.0
      %740 = vmatprep.subr.mxu0 0.0
      %741 = vmatpush1.msra.mxu0 0.0
      %742 = vmatprep.subr.mxu0 0.0
      %743 = vmatpush1.msra.mxu0 0.0
      %744 = vmatprep.subr.mxu0 0.0
      %745 = vmatpush1.msra.mxu0 0.0
      %746 = vmatprep.mubr.f32.mxu0 0.0
      %747 = vmatmul.mubr.f32.gmra.mrb[0].mxu0 %v680
      %v748 = vpop.f32.mrb[0].mxu0
      %v749 = vadd.f32 %v306, %v748
      %v750 = vpop.f32.mrb[0].mxu0
      %751 = vdwg.mxu0
      %v752 = vadd.f32 %v677, %v749
      %v753 = vxor.u32 %v752, 2147483648
      %v754 = vmul.f32 %v753, 1.442695
      %v755 = vpow.pop %v754
      %v756 = vadd.f32 %v755, 1.0
      %v757 = vrcp.pop %v756
      %v758 = vmul.f32 1.0, %v757
      %760 = vrot.lane.b32.xlu0 %v749, 64
      %v761 = vpop.permute.xlu0 %760
      %v763 = vmul.f32 %v758, %v761
      %765 = vrot.lane.b32.xlu0 %v763, 64
      %v766 = vpop.permute.xlu0 %765
      %v768 = vadd.f32 %v677, %v766
      %v769 = vtanh.pop %v768
      %v770 = vsub.f32 1.0, %v758
      %772 = vrot.lane.b32.xlu0 %v769, 96
      %v773 = vpop.permute.xlu0 %772
      %v775 = vmul.f32 %v770, %v773
      %v776 = vlaneseq
      %v777 = vshrl.u32 %v776, 7
      %v778 = vsub.s32 0, %v777
      %v779 = vrot.slane %v678, %v778
      %780 = vrot.lane.b32.xlu0 %v779, 32
      %v781 = vpop.permute.xlu0 %780
      %v783 = vmul.f32 %v758, %v781
      %v784 = vadd.f32 %v775, %v783
      %786 = vrot.lane.b32.xlu0 %v784, 96
      %v787 = vpop.permute.xlu0 %786
      %789 = vst.msk [vmem:[#allocation7] sm:$0x1] %vm96, %v787
      %s790 = scalar_lea.vmem [#allocation6], %s675
      %791 = vst.msk [vmem:[%s790] sm:$0x1] %vm96, %v787
    $region101: #{_run_greedy_search.1} parent=1 // pred_fallthru
      _
    %p792 = scmp.gt.s32.totalorder %s92, 4
    // Predicated region
    $region102: #{_run_greedy_search.1} parent=1 // pred_check
      %p793 = pneg %p792
    $region103: #{_run_greedy_search.1} parent=1 // pred_check_branch
      %795 = sbr.rel (%p793) target = $region105
    $region104: #{_run_greedy_search.1} parent=1 // pred_region
      %s796 = ssub.s32 %s92, 5
      %s797 = scalar_lea.vmem [#allocation4], %s796
      %v798 = vld [vmem:[%s797] sm:$0x1]
      %v799 = vld [vmem:[#allocation7] sm:$0x1]
      %v801 = vsel %vm138, %v799, 0
      %803 = vmatprep.subr.mxu0 0.0
      %804 = vmatpush1.msra.mxu0 %v302
      %805 = vmatprep.subr.mxu0 0.0
      %806 = vmatpush1.msra.mxu0 %v303
      %807 = vmatprep.subr.mxu0 0.0
      %808 = vmatpush1.msra.mxu0 %v304
      %809 = vmatprep.subr.mxu0 0.0
      %810 = vmatpush1.msra.mxu0 %v305
      %811 = vmatprep.subr.mxu0 0.0
      %812 = vmatpush1.msra.mxu0 0.0
      %813 = vmatprep.subr.mxu0 0.0
      %814 = vmatpush1.msra.mxu0 0.0
      %815 = vmatprep.subr.mxu0 0.0
      %816 = vmatpush1.msra.mxu0 0.0
      %817 = vmatprep.subr.mxu0 0.0
      %818 = vmatpush1.msra.mxu0 0.0
      %819 = vmatprep.subr.mxu0 0.0
      %820 = vmatpush1.msra.mxu0 0.0
      %821 = vmatprep.subr.mxu0 0.0
      %822 = vmatpush1.msra.mxu0 0.0
      %823 = vmatprep.subr.mxu0 0.0
      %824 = vmatpush1.msra.mxu0 0.0
      %825 = vmatprep.subr.mxu0 0.0
      %826 = vmatpush1.msra.mxu0 0.0
      %827 = vmatprep.subr.mxu0 0.0
      %828 = vmatpush1.msra.mxu0 0.0
      %829 = vmatprep.subr.mxu0 0.0
      %830 = vmatpush1.msra.mxu0 0.0
      %831 = vmatprep.subr.mxu0 0.0
      %832 = vmatpush1.msra.mxu0 0.0
      %833 = vmatprep.subr.mxu0 0.0
      %834 = vmatpush1.msra.mxu0 0.0
      %835 = vmatprep.subr.mxu0 0.0
      %836 = vmatpush1.msra.mxu0 0.0
      %837 = vmatprep.subr.mxu0 0.0
      %838 = vmatpush1.msra.mxu0 0.0
      %839 = vmatprep.subr.mxu0 0.0
      %840 = vmatpush1.msra.mxu0 0.0
      %841 = vmatprep.subr.mxu0 0.0
      %842 = vmatpush1.msra.mxu0 0.0
      %843 = vmatprep.subr.mxu0 0.0
      %844 = vmatpush1.msra.mxu0 0.0
      %845 = vmatprep.subr.mxu0 0.0
      %846 = vmatpush1.msra.mxu0 0.0
      %847 = vmatprep.subr.mxu0 0.0
      %848 = vmatpush1.msra.mxu0 0.0
      %849 = vmatprep.subr.mxu0 0.0
      %850 = vmatpush1.msra.mxu0 0.0
      %851 = vmatprep.subr.mxu0 0.0
      %852 = vmatpush1.msra.mxu0 0.0
      %853 = vmatprep.subr.mxu0 0.0
      %854 = vmatpush1.msra.mxu0 0.0
      %855 = vmatprep.subr.mxu0 0.0
      %856 = vmatpush1.msra.mxu0 0.0
      %857 = vmatprep.subr.mxu0 0.0
      %858 = vmatpush1.msra.mxu0 0.0
      %859 = vmatprep.subr.mxu0 0.0
      %860 = vmatpush1.msra.mxu0 0.0
      %861 = vmatprep.subr.mxu0 0.0
      %862 = vmatpush1.msra.mxu0 0.0
      %863 = vmatprep.subr.mxu0 0.0
      %864 = vmatpush1.msra.mxu0 0.0
      %865 = vmatprep.subr.mxu0 0.0
      %866 = vmatpush1.msra.mxu0 0.0
      %867 = vmatprep.mubr.f32.mxu0 0.0
      %868 = vmatmul.mubr.f32.gmra.mrb[0].mxu0 %v801
      %v869 = vpop.f32.mrb[0].mxu0
      %v870 = vadd.f32 %v306, %v869
      %v871 = vpop.f32.mrb[0].mxu0
      %872 = vdwg.mxu0
      %v873 = vadd.f32 %v798, %v870
      %v874 = vxor.u32 %v873, 2147483648
      %v875 = vmul.f32 %v874, 1.442695
      %v876 = vpow.pop %v875
      %v877 = vadd.f32 %v876, 1.0
      %v878 = vrcp.pop %v877
      %v879 = vmul.f32 1.0, %v878
      %881 = vrot.lane.b32.xlu0 %v870, 64
      %v882 = vpop.permute.xlu0 %881
      %v884 = vmul.f32 %v879, %v882
      %886 = vrot.lane.b32.xlu0 %v884, 64
      %v887 = vpop.permute.xlu0 %886
      %v889 = vadd.f32 %v798, %v887
      %v890 = vtanh.pop %v889
      %v891 = vsub.f32 1.0, %v879
      %893 = vrot.lane.b32.xlu0 %v890, 96
      %v894 = vpop.permute.xlu0 %893
      %v896 = vmul.f32 %v891, %v894
      %v897 = vlaneseq
      %v898 = vshrl.u32 %v897, 7
      %v899 = vsub.s32 0, %v898
      %v900 = vrot.slane %v799, %v899
      %901 = vrot.lane.b32.xlu0 %v900, 32
      %v902 = vpop.permute.xlu0 %901
      %v904 = vmul.f32 %v879, %v902
      %v905 = vadd.f32 %v896, %v904
      %907 = vrot.lane.b32.xlu0 %v905, 96
      %v908 = vpop.permute.xlu0 %907
      %910 = vst.msk [vmem:[#allocation7] sm:$0x1] %vm96, %v908
      %s911 = scalar_lea.vmem [#allocation6], %s796
      %912 = vst.msk [vmem:[%s911] sm:$0x1] %vm96, %v908
    $region105: #{_run_greedy_search.1} parent=1 // pred_fallthru
      _
    %p913 = scmp.gt.s32.totalorder %s92, 5
    // Predicated region
    $region106: #{_run_greedy_search.1} parent=1 // pred_check
      %p914 = pneg %p913
    $region107: #{_run_greedy_search.1} parent=1 // pred_check_branch
      %916 = sbr.rel (%p914) target = $region109
    $region108: #{_run_greedy_search.1} parent=1 // pred_region
      %s917 = ssub.s32 %s92, 6
      %s918 = scalar_lea.vmem [#allocation4], %s917
      %v919 = vld [vmem:[%s918] sm:$0x1]
      %v920 = vld [vmem:[#allocation7] sm:$0x1]
      %v922 = vsel %vm138, %v920, 0
      %924 = vmatprep.subr.mxu0 0.0
      %925 = vmatpush1.msra.mxu0 %v302
      %926 = vmatprep.subr.mxu0 0.0
      %927 = vmatpush1.msra.mxu0 %v303
      %928 = vmatprep.subr.mxu0 0.0
      %929 = vmatpush1.msra.mxu0 %v304
      %930 = vmatprep.subr.mxu0 0.0
      %931 = vmatpush1.msra.mxu0 %v305
      %932 = vmatprep.subr.mxu0 0.0
      %933 = vmatpush1.msra.mxu0 0.0
      %934 = vmatprep.subr.mxu0 0.0
      %935 = vmatpush1.msra.mxu0 0.0
      %936 = vmatprep.subr.mxu0 0.0
      %937 = vmatpush1.msra.mxu0 0.0
      %938 = vmatprep.subr.mxu0 0.0
      %939 = vmatpush1.msra.mxu0 0.0
      %940 = vmatprep.subr.mxu0 0.0
      %941 = vmatpush1.msra.mxu0 0.0
      %942 = vmatprep.subr.mxu0 0.0
      %943 = vmatpush1.msra.mxu0 0.0
      %944 = vmatprep.subr.mxu0 0.0
      %945 = vmatpush1.msra.mxu0 0.0
      %946 = vmatprep.subr.mxu0 0.0
      %947 = vmatpush1.msra.mxu0 0.0
      %948 = vmatprep.subr.mxu0 0.0
      %949 = vmatpush1.msra.mxu0 0.0
      %950 = vmatprep.subr.mxu0 0.0
      %951 = vmatpush1.msra.mxu0 0.0
      %952 = vmatprep.subr.mxu0 0.0
      %953 = vmatpush1.msra.mxu0 0.0
      %954 = vmatprep.subr.mxu0 0.0
      %955 = vmatpush1.msra.mxu0 0.0
      %956 = vmatprep.subr.mxu0 0.0
      %957 = vmatpush1.msra.mxu0 0.0
      %958 = vmatprep.subr.mxu0 0.0
      %959 = vmatpush1.msra.mxu0 0.0
      %960 = vmatprep.subr.mxu0 0.0
      %961 = vmatpush1.msra.mxu0 0.0
      %962 = vmatprep.subr.mxu0 0.0
      %963 = vmatpush1.msra.mxu0 0.0
      %964 = vmatprep.subr.mxu0 0.0
      %965 = vmatpush1.msra.mxu0 0.0
      %966 = vmatprep.subr.mxu0 0.0
      %967 = vmatpush1.msra.mxu0 0.0
      %968 = vmatprep.subr.mxu0 0.0
      %969 = vmatpush1.msra.mxu0 0.0
      %970 = vmatprep.subr.mxu0 0.0
      %971 = vmatpush1.msra.mxu0 0.0
      %972 = vmatprep.subr.mxu0 0.0
      %973 = vmatpush1.msra.mxu0 0.0
      %974 = vmatprep.subr.mxu0 0.0
      %975 = vmatpush1.msra.mxu0 0.0
      %976 = vmatprep.subr.mxu0 0.0
      %977 = vmatpush1.msra.mxu0 0.0
      %978 = vmatprep.subr.mxu0 0.0
      %979 = vmatpush1.msra.mxu0 0.0
      %980 = vmatprep.subr.mxu0 0.0
      %981 = vmatpush1.msra.mxu0 0.0
      %982 = vmatprep.subr.mxu0 0.0
      %983 = vmatpush1.msra.mxu0 0.0
      %984 = vmatprep.subr.mxu0 0.0
      %985 = vmatpush1.msra.mxu0 0.0
      %986 = vmatprep.subr.mxu0 0.0
      %987 = vmatpush1.msra.mxu0 0.0
      %988 = vmatprep.mubr.f32.mxu0 0.0
      %989 = vmatmul.mubr.f32.gmra.mrb[0].mxu0 %v922
      %v990 = vpop.f32.mrb[0].mxu0
      %v991 = vadd.f32 %v306, %v990
      %v992 = vpop.f32.mrb[0].mxu0
      %993 = vdwg.mxu0
      %v994 = vadd.f32 %v919, %v991
      %v995 = vxor.u32 %v994, 2147483648
      %v996 = vmul.f32 %v995, 1.442695
      %v997 = vpow.pop %v996
      %v998 = vadd.f32 %v997, 1.0
      %v999 = vrcp.pop %v998
      %v1000 = vmul.f32 1.0, %v999
      %1002 = vrot.lane.b32.xlu0 %v991, 64
      %v1003 = vpop.permute.xlu0 %1002
      %v1005 = vmul.f32 %v1000, %v1003
      %1007 = vrot.lane.b32.xlu0 %v1005, 64
      %v1008 = vpop.permute.xlu0 %1007
      %v1010 = vadd.f32 %v919, %v1008
      %v1011 = vtanh.pop %v1010
      %v1012 = vsub.f32 1.0, %v1000
      %1014 = vrot.lane.b32.xlu0 %v1011, 96
      %v1015 = vpop.permute.xlu0 %1014
      %v1017 = vmul.f32 %v1012, %v1015
      %v1018 = vlaneseq
      %v1019 = vshrl.u32 %v1018, 7
      %v1020 = vsub.s32 0, %v1019
      %v1021 = vrot.slane %v920, %v1020
      %1022 = vrot.lane.b32.xlu0 %v1021, 32
      %v1023 = vpop.permute.xlu0 %1022
      %v1025 = vmul.f32 %v1000, %v1023
      %v1026 = vadd.f32 %v1017, %v1025
      %1028 = vrot.lane.b32.xlu0 %v1026, 96
      %v1029 = vpop.permute.xlu0 %1028
      %1031 = vst.msk [vmem:[#allocation7] sm:$0x1] %vm96, %v1029
      %s1032 = scalar_lea.vmem [#allocation6], %s917
      %1033 = vst.msk [vmem:[%s1032] sm:$0x1] %vm96, %v1029
    $region109: #{_run_greedy_search.1} parent=1 // pred_fallthru
      _
    %p1034 = scmp.gt.s32.totalorder %s92, 6
    // Predicated region
    $region110: #{_run_greedy_search.1} parent=1 // pred_check
      %p1035 = pneg %p1034
    $region111: #{_run_greedy_search.1} parent=1 // pred_check_branch
      %1037 = sbr.rel (%p1035) target = $region113
    $region112: #{_run_greedy_search.1} parent=1 // pred_region
      %s1038 = ssub.s32 %s92, 7
      %s1039 = scalar_lea.vmem [#allocation4], %s1038
      %v1040 = vld [vmem:[%s1039] sm:$0x1]
      %v1041 = vld [vmem:[#allocation7] sm:$0x1]
      %v1043 = vsel %vm138, %v1041, 0
      %1045 = vmatprep.subr.mxu0 0.0
      %1046 = vmatpush1.msra.mxu0 %v302
      %1047 = vmatprep.subr.mxu0 0.0
      %1048 = vmatpush1.msra.mxu0 %v303
      %1049 = vmatprep.subr.mxu0 0.0
      %1050 = vmatpush1.msra.mxu0 %v304
      %1051 = vmatprep.subr.mxu0 0.0
      %1052 = vmatpush1.msra.mxu0 %v305
      %1053 = vmatprep.subr.mxu0 0.0
      %1054 = vmatpush1.msra.mxu0 0.0
      %1055 = vmatprep.subr.mxu0 0.0
      %1056 = vmatpush1.msra.mxu0 0.0
      %1057 = vmatprep.subr.mxu0 0.0
      %1058 = vmatpush1.msra.mxu0 0.0
      %1059 = vmatprep.subr.mxu0 0.0
      %1060 = vmatpush1.msra.mxu0 0.0
      %1061 = vmatprep.subr.mxu0 0.0
      %1062 = vmatpush1.msra.mxu0 0.0
      %1063 = vmatprep.subr.mxu0 0.0
      %1064 = vmatpush1.msra.mxu0 0.0
      %1065 = vmatprep.subr.mxu0 0.0
      %1066 = vmatpush1.msra.mxu0 0.0
      %1067 = vmatprep.subr.mxu0 0.0
      %1068 = vmatpush1.msra.mxu0 0.0
      %1069 = vmatprep.subr.mxu0 0.0
      %1070 = vmatpush1.msra.mxu0 0.0
      %1071 = vmatprep.subr.mxu0 0.0
      %1072 = vmatpush1.msra.mxu0 0.0
      %1073 = vmatprep.subr.mxu0 0.0
      %1074 = vmatpush1.msra.mxu0 0.0
      %1075 = vmatprep.subr.mxu0 0.0
      %1076 = vmatpush1.msra.mxu0 0.0
      %1077 = vmatprep.subr.mxu0 0.0
      %1078 = vmatpush1.msra.mxu0 0.0
      %1079 = vmatprep.subr.mxu0 0.0
      %1080 = vmatpush1.msra.mxu0 0.0
      %1081 = vmatprep.subr.mxu0 0.0
      %1082 = vmatpush1.msra.mxu0 0.0
      %1083 = vmatprep.subr.mxu0 0.0
      %1084 = vmatpush1.msra.mxu0 0.0
      %1085 = vmatprep.subr.mxu0 0.0
      %1086 = vmatpush1.msra.mxu0 0.0
      %1087 = vmatprep.subr.mxu0 0.0
      %1088 = vmatpush1.msra.mxu0 0.0
      %1089 = vmatprep.subr.mxu0 0.0
      %1090 = vmatpush1.msra.mxu0 0.0
      %1091 = vmatprep.subr.mxu0 0.0
      %1092 = vmatpush1.msra.mxu0 0.0
      %1093 = vmatprep.subr.mxu0 0.0
      %1094 = vmatpush1.msra.mxu0 0.0
      %1095 = vmatprep.subr.mxu0 0.0
      %1096 = vmatpush1.msra.mxu0 0.0
      %1097 = vmatprep.subr.mxu0 0.0
      %1098 = vmatpush1.msra.mxu0 0.0
      %1099 = vmatprep.subr.mxu0 0.0
      %1100 = vmatpush1.msra.mxu0 0.0
      %1101 = vmatprep.subr.mxu0 0.0
      %1102 = vmatpush1.msra.mxu0 0.0
      %1103 = vmatprep.subr.mxu0 0.0
      %1104 = vmatpush1.msra.mxu0 0.0
      %1105 = vmatprep.subr.mxu0 0.0
      %1106 = vmatpush1.msra.mxu0 0.0
      %1107 = vmatprep.subr.mxu0 0.0
      %1108 = vmatpush1.msra.mxu0 0.0
      %1109 = vmatprep.mubr.f32.mxu0 0.0
      %1110 = vmatmul.mubr.f32.gmra.mrb[0].mxu0 %v1043
      %v1111 = vpop.f32.mrb[0].mxu0
      %v1112 = vadd.f32 %v306, %v1111
      %v1113 = vpop.f32.mrb[0].mxu0
      %1114 = vdwg.mxu0
      %v1115 = vadd.f32 %v1040, %v1112
      %v1116 = vxor.u32 %v1115, 2147483648
      %v1117 = vmul.f32 %v1116, 1.442695
      %v1118 = vpow.pop %v1117
      %v1119 = vadd.f32 %v1118, 1.0
      %v1120 = vrcp.pop %v1119
      %v1121 = vmul.f32 1.0, %v1120
      %1123 = vrot.lane.b32.xlu0 %v1112, 64
      %v1124 = vpop.permute.xlu0 %1123
      %v1126 = vmul.f32 %v1121, %v1124
      %1128 = vrot.lane.b32.xlu0 %v1126, 64
      %v1129 = vpop.permute.xlu0 %1128
      %v1131 = vadd.f32 %v1040, %v1129
      %v1132 = vtanh.pop %v1131
      %v1133 = vsub.f32 1.0, %v1121
      %1135 = vrot.lane.b32.xlu0 %v1132, 96
      %v1136 = vpop.permute.xlu0 %1135
      %v1138 = vmul.f32 %v1133, %v1136
      %v1139 = vlaneseq
      %v1140 = vshrl.u32 %v1139, 7
      %v1141 = vsub.s32 0, %v1140
      %v1142 = vrot.slane %v1041, %v1141
      %1143 = vrot.lane.b32.xlu0 %v1142, 32
      %v1144 = vpop.permute.xlu0 %1143
      %v1146 = vmul.f32 %v1121, %v1144
      %v1147 = vadd.f32 %v1138, %v1146
      %1149 = vrot.lane.b32.xlu0 %v1147, 96
      %v1150 = vpop.permute.xlu0 %1149
      %1152 = vst.msk [vmem:[#allocation7] sm:$0x1] %vm96, %v1150
      %s1153 = scalar_lea.vmem [#allocation6], %s1038
      %1154 = vst.msk [vmem:[%s1153] sm:$0x1] %vm96, %v1150
    $region113: #{_run_greedy_search.1} parent=1 // pred_fallthru
      _
    %p1155 = scmp.gt.s32.totalorder %s92, 7
    // Predicated region
    $region114: #{_run_greedy_search.1} parent=1 // pred_check
      %p1156 = pneg %p1155
    $region115: #{_run_greedy_search.1} parent=1 // pred_check_branch
      %1158 = sbr.rel (%p1156) target = $region117
    $region116: #{_run_greedy_search.1} parent=1 // pred_region
      %s1159 = ssub.s32 %s92, 8
      %s1160 = scalar_lea.vmem [#allocation4], %s1159
      %v1161 = vld [vmem:[%s1160] sm:$0x1]
      %v1162 = vld [vmem:[#allocation7] sm:$0x1]
      %v1164 = vsel %vm138, %v1162, 0
      %1166 = vmatprep.subr.mxu0 0.0
      %1167 = vmatpush1.msra.mxu0 %v302
      %1168 = vmatprep.subr.mxu0 0.0
      %1169 = vmatpush1.msra.mxu0 %v303
      %1170 = vmatprep.subr.mxu0 0.0
      %1171 = vmatpush1.msra.mxu0 %v304
      %1172 = vmatprep.subr.mxu0 0.0
      %1173 = vmatpush1.msra.mxu0 %v305
      %1174 = vmatprep.subr.mxu0 0.0
      %1175 = vmatpush1.msra.mxu0 0.0
      %1176 = vmatprep.subr.mxu0 0.0
      %1177 = vmatpush1.msra.mxu0 0.0
      %1178 = vmatprep.subr.mxu0 0.0
      %1179 = vmatpush1.msra.mxu0 0.0
      %1180 = vmatprep.subr.mxu0 0.0
      %1181 = vmatpush1.msra.mxu0 0.0
      %1182 = vmatprep.subr.mxu0 0.0
      %1183 = vmatpush1.msra.mxu0 0.0
      %1184 = vmatprep.subr.mxu0 0.0
      %1185 = vmatpush1.msra.mxu0 0.0
      %1186 = vmatprep.subr.mxu0 0.0
      %1187 = vmatpush1.msra.mxu0 0.0
      %1188 = vmatprep.subr.mxu0 0.0
      %1189 = vmatpush1.msra.mxu0 0.0
      %1190 = vmatprep.subr.mxu0 0.0
      %1191 = vmatpush1.msra.mxu0 0.0
      %1192 = vmatprep.subr.mxu0 0.0
      %1193 = vmatpush1.msra.mxu0 0.0
      %1194 = vmatprep.subr.mxu0 0.0
      %1195 = vmatpush1.msra.mxu0 0.0
      %1196 = vmatprep.subr.mxu0 0.0
      %1197 = vmatpush1.msra.mxu0 0.0
      %1198 = vmatprep.subr.mxu0 0.0
      %1199 = vmatpush1.msra.mxu0 0.0
      %1200 = vmatprep.subr.mxu0 0.0
      %1201 = vmatpush1.msra.mxu0 0.0
      %1202 = vmatprep.subr.mxu0 0.0
      %1203 = vmatpush1.msra.mxu0 0.0
      %1204 = vmatprep.subr.mxu0 0.0
      %1205 = vmatpush1.msra.mxu0 0.0
      %1206 = vmatprep.subr.mxu0 0.0
      %1207 = vmatpush1.msra.mxu0 0.0
      %1208 = vmatprep.subr.mxu0 0.0
      %1209 = vmatpush1.msra.mxu0 0.0
      %1210 = vmatprep.subr.mxu0 0.0
      %1211 = vmatpush1.msra.mxu0 0.0
      %1212 = vmatprep.subr.mxu0 0.0
      %1213 = vmatpush1.msra.mxu0 0.0
      %1214 = vmatprep.subr.mxu0 0.0
      %1215 = vmatpush1.msra.mxu0 0.0
      %1216 = vmatprep.subr.mxu0 0.0
      %1217 = vmatpush1.msra.mxu0 0.0
      %1218 = vmatprep.subr.mxu0 0.0
      %1219 = vmatpush1.msra.mxu0 0.0
      %1220 = vmatprep.subr.mxu0 0.0
      %1221 = vmatpush1.msra.mxu0 0.0
      %1222 = vmatprep.subr.mxu0 0.0
      %1223 = vmatpush1.msra.mxu0 0.0
      %1224 = vmatprep.subr.mxu0 0.0
      %1225 = vmatpush1.msra.mxu0 0.0
      %1226 = vmatprep.subr.mxu0 0.0
      %1227 = vmatpush1.msra.mxu0 0.0
      %1228 = vmatprep.subr.mxu0 0.0
      %1229 = vmatpush1.msra.mxu0 0.0
      %1230 = vmatprep.mubr.f32.mxu0 0.0
      %1231 = vmatmul.mubr.f32.gmra.mrb[0].mxu0 %v1164
      %v1232 = vpop.f32.mrb[0].mxu0
      %v1233 = vadd.f32 %v306, %v1232
      %v1234 = vpop.f32.mrb[0].mxu0
      %1235 = vdwg.mxu0
      %v1236 = vadd.f32 %v1161, %v1233
      %v1237 = vxor.u32 %v1236, 2147483648
      %v1238 = vmul.f32 %v1237, 1.442695
      %v1239 = vpow.pop %v1238
      %v1240 = vadd.f32 %v1239, 1.0
      %v1241 = vrcp.pop %v1240
      %v1242 = vmul.f32 1.0, %v1241
      %1244 = vrot.lane.b32.xlu0 %v1233, 64
      %v1245 = vpop.permute.xlu0 %1244
      %v1247 = vmul.f32 %v1242, %v1245
      %1249 = vrot.lane.b32.xlu0 %v1247, 64
      %v1250 = vpop.permute.xlu0 %1249
      %v1252 = vadd.f32 %v1161, %v1250
      %v1253 = vtanh.pop %v1252
      %v1254 = vsub.f32 1.0, %v1242
      %1256 = vrot.lane.b32.xlu0 %v1253, 96
      %v1257 = vpop.permute.xlu0 %1256
      %v1259 = vmul.f32 %v1254, %v1257
      %v1260 = vlaneseq
      %v1261 = vshrl.u32 %v1260, 7
      %v1262 = vsub.s32 0, %v1261
      %v1263 = vrot.slane %v1162, %v1262
      %1264 = vrot.lane.b32.xlu0 %v1263, 32
      %v1265 = vpop.permute.xlu0 %1264
      %v1267 = vmul.f32 %v1242, %v1265
      %v1268 = vadd.f32 %v1259, %v1267
      %1270 = vrot.lane.b32.xlu0 %v1268, 96
      %v1271 = vpop.permute.xlu0 %1270
      %1273 = vst.msk [vmem:[#allocation7] sm:$0x1] %vm96, %v1271
      %s1274 = scalar_lea.vmem [#allocation6], %s1159
      %1275 = vst.msk [vmem:[%s1274] sm:$0x1] %vm96, %v1271
    $region117: #{_run_greedy_search.1} parent=1 // pred_fallthru
      _
    %v1276 = vld [vmem:[%s4] sm:$0xff]
    %v1277 = vld [vmem:[%s4 + $0x8] sm:$0xff]
    %v1278 = vld [vmem:[%s4 + $0x10] sm:$0xff]
    %v1279 = vld [vmem:[%s4 + $0x18] sm:$0xff]
    %v1280 = vld [vmem:[%s6] sm:$0x1]
    %1281 = vst.msk [vmem:[#allocation7] sm:$0x1] %vm96, 0.0
    // Predicated region
    $region118: #{_run_greedy_search.1} parent=1 // pred_check
      %p1282 = pneg %p308
    $region119: #{_run_greedy_search.1} parent=1 // pred_check_branch
      %1284 = sbr.rel (%p1282) target = $region121
    $region120: #{_run_greedy_search.1} parent=1 // pred_region
      %v1285 = vld [vmem:[#allocation3] sm:$0x1]
      %v1286 = vld [vmem:[#allocation7] sm:$0x1]
      %v1288 = vsel %vm138, %v1286, 0
      %1290 = vmatprep.subr.mxu0 0.0
      %1291 = vmatpush1.msra.mxu0 %v1276
      %1292 = vmatprep.subr.mxu0 0.0
      %1293 = vmatpush1.msra.mxu0 %v1277
      %1294 = vmatprep.subr.mxu0 0.0
      %1295 = vmatpush1.msra.mxu0 %v1278
      %1296 = vmatprep.subr.mxu0 0.0
      %1297 = vmatpush1.msra.mxu0 %v1279
      %1298 = vmatprep.subr.mxu0 0.0
      %1299 = vmatpush1.msra.mxu0 0.0
      %1300 = vmatprep.subr.mxu0 0.0
      %1301 = vmatpush1.msra.mxu0 0.0
      %1302 = vmatprep.subr.mxu0 0.0
      %1303 = vmatpush1.msra.mxu0 0.0
      %1304 = vmatprep.subr.mxu0 0.0
      %1305 = vmatpush1.msra.mxu0 0.0
      %1306 = vmatprep.subr.mxu0 0.0
      %1307 = vmatpush1.msra.mxu0 0.0
      %1308 = vmatprep.subr.mxu0 0.0
      %1309 = vmatpush1.msra.mxu0 0.0
      %1310 = vmatprep.subr.mxu0 0.0
      %1311 = vmatpush1.msra.mxu0 0.0
      %1312 = vmatprep.subr.mxu0 0.0
      %1313 = vmatpush1.msra.mxu0 0.0
      %1314 = vmatprep.subr.mxu0 0.0
      %1315 = vmatpush1.msra.mxu0 0.0
      %1316 = vmatprep.subr.mxu0 0.0
      %1317 = vmatpush1.msra.mxu0 0.0
      %1318 = vmatprep.subr.mxu0 0.0
      %1319 = vmatpush1.msra.mxu0 0.0
      %1320 = vmatprep.subr.mxu0 0.0
      %1321 = vmatpush1.msra.mxu0 0.0
      %1322 = vmatprep.subr.mxu0 0.0
      %1323 = vmatpush1.msra.mxu0 0.0
      %1324 = vmatprep.subr.mxu0 0.0
      %1325 = vmatpush1.msra.mxu0 0.0
      %1326 = vmatprep.subr.mxu0 0.0
      %1327 = vmatpush1.msra.mxu0 0.0
      %1328 = vmatprep.subr.mxu0 0.0
      %1329 = vmatpush1.msra.mxu0 0.0
      %1330 = vmatprep.subr.mxu0 0.0
      %1331 = vmatpush1.msra.mxu0 0.0
      %1332 = vmatprep.subr.mxu0 0.0
      %1333 = vmatpush1.msra.mxu0 0.0
      %1334 = vmatprep.subr.mxu0 0.0
      %1335 = vmatpush1.msra.mxu0 0.0
      %1336 = vmatprep.subr.mxu0 0.0
      %1337 = vmatpush1.msra.mxu0 0.0
      %1338 = vmatprep.subr.mxu0 0.0
      %1339 = vmatpush1.msra.mxu0 0.0
      %1340 = vmatprep.subr.mxu0 0.0
      %1341 = vmatpush1.msra.mxu0 0.0
      %1342 = vmatprep.subr.mxu0 0.0
      %1343 = vmatpush1.msra.mxu0 0.0
      %1344 = vmatprep.subr.mxu0 0.0
      %1345 = vmatpush1.msra.mxu0 0.0
      %1346 = vmatprep.subr.mxu0 0.0
      %1347 = vmatpush1.msra.mxu0 0.0
      %1348 = vmatprep.subr.mxu0 0.0
      %1349 = vmatpush1.msra.mxu0 0.0
      %1350 = vmatprep.subr.mxu0 0.0
      %1351 = vmatpush1.msra.mxu0 0.0
      %1352 = vmatprep.subr.mxu0 0.0
      %1353 = vmatpush1.msra.mxu0 0.0
      %1354 = vmatprep.mubr.f32.mxu0 0.0
      %1355 = vmatmul.mubr.f32.gmra.mrb[0].mxu0 %v1288
      %v1356 = vpop.f32.mrb[0].mxu0
      %v1357 = vadd.f32 %v1280, %v1356
      %v1358 = vpop.f32.mrb[0].mxu0
      %1359 = vdwg.mxu0
      %v1360 = vadd.f32 %v1285, %v1357
      %v1361 = vxor.u32 %v1360, 2147483648
      %v1362 = vmul.f32 %v1361, 1.442695
      %v1363 = vpow.pop %v1362
      %v1364 = vadd.f32 %v1363, 1.0
      %v1365 = vrcp.pop %v1364
      %v1366 = vmul.f32 1.0, %v1365
      %1368 = vrot.lane.b32.xlu0 %v1357, 64
      %v1369 = vpop.permute.xlu0 %1368
      %v1371 = vmul.f32 %v1366, %v1369
      %1373 = vrot.lane.b32.xlu0 %v1371, 64
      %v1374 = vpop.permute.xlu0 %1373
      %v1376 = vadd.f32 %v1285, %v1374
      %v1377 = vtanh.pop %v1376
      %v1378 = vsub.f32 1.0, %v1366
      %1380 = vrot.lane.b32.xlu0 %v1377, 96
      %v1381 = vpop.permute.xlu0 %1380
      %v1383 = vmul.f32 %v1378, %v1381
      %v1384 = vlaneseq
      %v1385 = vshrl.u32 %v1384, 7
      %v1386 = vsub.s32 0, %v1385
      %v1387 = vrot.slane %v1286, %v1386
      %1388 = vrot.lane.b32.xlu0 %v1387, 32
      %v1389 = vpop.permute.xlu0 %1388
      %v1391 = vmul.f32 %v1366, %v1389
      %v1392 = vadd.f32 %v1383, %v1391
      %1394 = vrot.lane.b32.xlu0 %v1392, 96
      %v1395 = vpop.permute.xlu0 %1394
      %1397 = vst.msk [vmem:[#allocation7] sm:$0x1] %vm96, %v1395
      %1398 = vst.msk [vmem:[#allocation5] sm:$0x1] %vm96, %v1395
    $region121: #{_run_greedy_search.1} parent=1 // pred_fallthru
      _
    // Predicated region
    $region122: #{_run_greedy_search.1} parent=1 // pred_check
      %p1399 = pneg %p429
    $region123: #{_run_greedy_search.1} parent=1 // pred_check_branch
      %1401 = sbr.rel (%p1399) target = $region125
    $region124: #{_run_greedy_search.1} parent=1 // pred_region
      %v1402 = vld [vmem:[#allocation3 + $0x1] sm:$0x1]
      %v1403 = vld [vmem:[#allocation7] sm:$0x1]
      %v1405 = vsel %vm138, %v1403, 0
      %1407 = vmatprep.subr.mxu0 0.0
      %1408 = vmatpush1.msra.mxu0 %v1276
      %1409 = vmatprep.subr.mxu0 0.0
      %1410 = vmatpush1.msra.mxu0 %v1277
      %1411 = vmatprep.subr.mxu0 0.0
      %1412 = vmatpush1.msra.mxu0 %v1278
      %1413 = vmatprep.subr.mxu0 0.0
      %1414 = vmatpush1.msra.mxu0 %v1279
      %1415 = vmatprep.subr.mxu0 0.0
      %1416 = vmatpush1.msra.mxu0 0.0
      %1417 = vmatprep.subr.mxu0 0.0
      %1418 = vmatpush1.msra.mxu0 0.0
      %1419 = vmatprep.subr.mxu0 0.0
      %1420 = vmatpush1.msra.mxu0 0.0
      %1421 = vmatprep.subr.mxu0 0.0
      %1422 = vmatpush1.msra.mxu0 0.0
      %1423 = vmatprep.subr.mxu0 0.0
      %1424 = vmatpush1.msra.mxu0 0.0
      %1425 = vmatprep.subr.mxu0 0.0
      %1426 = vmatpush1.msra.mxu0 0.0
      %1427 = vmatprep.subr.mxu0 0.0
      %1428 = vmatpush1.msra.mxu0 0.0
      %1429 = vmatprep.subr.mxu0 0.0
      %1430 = vmatpush1.msra.mxu0 0.0
      %1431 = vmatprep.subr.mxu0 0.0
      %1432 = vmatpush1.msra.mxu0 0.0
      %1433 = vmatprep.subr.mxu0 0.0
      %1434 = vmatpush1.msra.mxu0 0.0
      %1435 = vmatprep.subr.mxu0 0.0
      %1436 = vmatpush1.msra.mxu0 0.0
      %1437 = vmatprep.subr.mxu0 0.0
      %1438 = vmatpush1.msra.mxu0 0.0
      %1439 = vmatprep.subr.mxu0 0.0
      %1440 = vmatpush1.msra.mxu0 0.0
      %1441 = vmatprep.subr.mxu0 0.0
      %1442 = vmatpush1.msra.mxu0 0.0
      %1443 = vmatprep.subr.mxu0 0.0
      %1444 = vmatpush1.msra.mxu0 0.0
      %1445 = vmatprep.subr.mxu0 0.0
      %1446 = vmatpush1.msra.mxu0 0.0
      %1447 = vmatprep.subr.mxu0 0.0
      %1448 = vmatpush1.msra.mxu0 0.0
      %1449 = vmatprep.subr.mxu0 0.0
      %1450 = vmatpush1.msra.mxu0 0.0
      %1451 = vmatprep.subr.mxu0 0.0
      %1452 = vmatpush1.msra.mxu0 0.0
      %1453 = vmatprep.subr.mxu0 0.0
      %1454 = vmatpush1.msra.mxu0 0.0
      %1455 = vmatprep.subr.mxu0 0.0
      %1456 = vmatpush1.msra.mxu0 0.0
      %1457 = vmatprep.subr.mxu0 0.0
      %1458 = vmatpush1.msra.mxu0 0.0
      %1459 = vmatprep.subr.mxu0 0.0
      %1460 = vmatpush1.msra.mxu0 0.0
      %1461 = vmatprep.subr.mxu0 0.0
      %1462 = vmatpush1.msra.mxu0 0.0
      %1463 = vmatprep.subr.mxu0 0.0
      %1464 = vmatpush1.msra.mxu0 0.0
      %1465 = vmatprep.subr.mxu0 0.0
      %1466 = vmatpush1.msra.mxu0 0.0
      %1467 = vmatprep.subr.mxu0 0.0
      %1468 = vmatpush1.msra.mxu0 0.0
      %1469 = vmatprep.subr.mxu0 0.0
      %1470 = vmatpush1.msra.mxu0 0.0
      %1471 = vmatprep.mubr.f32.mxu0 0.0
      %1472 = vmatmul.mubr.f32.gmra.mrb[0].mxu0 %v1405
      %v1473 = vpop.f32.mrb[0].mxu0
      %v1474 = vadd.f32 %v1280, %v1473
      %v1475 = vpop.f32.mrb[0].mxu0
      %1476 = vdwg.mxu0
      %v1477 = vadd.f32 %v1402, %v1474
      %v1478 = vxor.u32 %v1477, 2147483648
      %v1479 = vmul.f32 %v1478, 1.442695
      %v1480 = vpow.pop %v1479
      %v1481 = vadd.f32 %v1480, 1.0
      %v1482 = vrcp.pop %v1481
      %v1483 = vmul.f32 1.0, %v1482
      %1485 = vrot.lane.b32.xlu0 %v1474, 64
      %v1486 = vpop.permute.xlu0 %1485
      %v1488 = vmul.f32 %v1483, %v1486
      %1490 = vrot.lane.b32.xlu0 %v1488, 64
      %v1491 = vpop.permute.xlu0 %1490
      %v1493 = vadd.f32 %v1402, %v1491
      %v1494 = vtanh.pop %v1493
      %v1495 = vsub.f32 1.0, %v1483
      %1497 = vrot.lane.b32.xlu0 %v1494, 96
      %v1498 = vpop.permute.xlu0 %1497
      %v1500 = vmul.f32 %v1495, %v1498
      %v1501 = vlaneseq
      %v1502 = vshrl.u32 %v1501, 7
      %v1503 = vsub.s32 0, %v1502
      %v1504 = vrot.slane %v1403, %v1503
      %1505 = vrot.lane.b32.xlu0 %v1504, 32
      %v1506 = vpop.permute.xlu0 %1505
      %v1508 = vmul.f32 %v1483, %v1506
      %v1509 = vadd.f32 %v1500, %v1508
      %1511 = vrot.lane.b32.xlu0 %v1509, 96
      %v1512 = vpop.permute.xlu0 %1511
      %1514 = vst.msk [vmem:[#allocation7] sm:$0x1] %vm96, %v1512
      %1515 = vst.msk [vmem:[#allocation5 + $0x1] sm:$0x1] %vm96, %v1512
    $region125: #{_run_greedy_search.1} parent=1 // pred_fallthru
      _
    // Predicated region
    $region126: #{_run_greedy_search.1} parent=1 // pred_check
      %p1516 = pneg %p550
    $region127: #{_run_greedy_search.1} parent=1 // pred_check_branch
      %1518 = sbr.rel (%p1516) target = $region129
    $region128: #{_run_greedy_search.1} parent=1 // pred_region
      %v1519 = vld [vmem:[#allocation3 + $0x2] sm:$0x1]
      %v1520 = vld [vmem:[#allocation7] sm:$0x1]
      %v1522 = vsel %vm138, %v1520, 0
      %1524 = vmatprep.subr.mxu0 0.0
      %1525 = vmatpush1.msra.mxu0 %v1276
      %1526 = vmatprep.subr.mxu0 0.0
      %1527 = vmatpush1.msra.mxu0 %v1277
      %1528 = vmatprep.subr.mxu0 0.0
      %1529 = vmatpush1.msra.mxu0 %v1278
      %1530 = vmatprep.subr.mxu0 0.0
      %1531 = vmatpush1.msra.mxu0 %v1279
      %1532 = vmatprep.subr.mxu0 0.0
      %1533 = vmatpush1.msra.mxu0 0.0
      %1534 = vmatprep.subr.mxu0 0.0
      %1535 = vmatpush1.msra.mxu0 0.0
      %1536 = vmatprep.subr.mxu0 0.0
      %1537 = vmatpush1.msra.mxu0 0.0
      %1538 = vmatprep.subr.mxu0 0.0
      %1539 = vmatpush1.msra.mxu0 0.0
      %1540 = vmatprep.subr.mxu0 0.0
      %1541 = vmatpush1.msra.mxu0 0.0
      %1542 = vmatprep.subr.mxu0 0.0
      %1543 = vmatpush1.msra.mxu0 0.0
      %1544 = vmatprep.subr.mxu0 0.0
      %1545 = vmatpush1.msra.mxu0 0.0
      %1546 = vmatprep.subr.mxu0 0.0
      %1547 = vmatpush1.msra.mxu0 0.0
      %1548 = vmatprep.subr.mxu0 0.0
      %1549 = vmatpush1.msra.mxu0 0.0
      %1550 = vmatprep.subr.mxu0 0.0
      %1551 = vmatpush1.msra.mxu0 0.0
      %1552 = vmatprep.subr.mxu0 0.0
      %1553 = vmatpush1.msra.mxu0 0.0
      %1554 = vmatprep.subr.mxu0 0.0
      %1555 = vmatpush1.msra.mxu0 0.0
      %1556 = vmatprep.subr.mxu0 0.0
      %1557 = vmatpush1.msra.mxu0 0.0
      %1558 = vmatprep.subr.mxu0 0.0
      %1559 = vmatpush1.msra.mxu0 0.0
      %1560 = vmatprep.subr.mxu0 0.0
      %1561 = vmatpush1.msra.mxu0 0.0
      %1562 = vmatprep.subr.mxu0 0.0
      %1563 = vmatpush1.msra.mxu0 0.0
      %1564 = vmatprep.subr.mxu0 0.0
      %1565 = vmatpush1.msra.mxu0 0.0
      %1566 = vmatprep.subr.mxu0 0.0
      %1567 = vmatpush1.msra.mxu0 0.0
      %1568 = vmatprep.subr.mxu0 0.0
      %1569 = vmatpush1.msra.mxu0 0.0
      %1570 = vmatprep.subr.mxu0 0.0
      %1571 = vmatpush1.msra.mxu0 0.0
      %1572 = vmatprep.subr.mxu0 0.0
      %1573 = vmatpush1.msra.mxu0 0.0
      %1574 = vmatprep.subr.mxu0 0.0
      %1575 = vmatpush1.msra.mxu0 0.0
      %1576 = vmatprep.subr.mxu0 0.0
      %1577 = vmatpush1.msra.mxu0 0.0
      %1578 = vmatprep.subr.mxu0 0.0
      %1579 = vmatpush1.msra.mxu0 0.0
      %1580 = vmatprep.subr.mxu0 0.0
      %1581 = vmatpush1.msra.mxu0 0.0
      %1582 = vmatprep.subr.mxu0 0.0
      %1583 = vmatpush1.msra.mxu0 0.0
      %1584 = vmatprep.subr.mxu0 0.0
      %1585 = vmatpush1.msra.mxu0 0.0
      %1586 = vmatprep.subr.mxu0 0.0
      %1587 = vmatpush1.msra.mxu0 0.0
      %1588 = vmatprep.mubr.f32.mxu0 0.0
      %1589 = vmatmul.mubr.f32.gmra.mrb[0].mxu0 %v1522
      %v1590 = vpop.f32.mrb[0].mxu0
      %v1591 = vadd.f32 %v1280, %v1590
      %v1592 = vpop.f32.mrb[0].mxu0
      %1593 = vdwg.mxu0
      %v1594 = vadd.f32 %v1519, %v1591
      %v1595 = vxor.u32 %v1594, 2147483648
      %v1596 = vmul.f32 %v1595, 1.442695
      %v1597 = vpow.pop %v1596
      %v1598 = vadd.f32 %v1597, 1.0
      %v1599 = vrcp.pop %v1598
      %v1600 = vmul.f32 1.0, %v1599
      %1602 = vrot.lane.b32.xlu0 %v1591, 64
      %v1603 = vpop.permute.xlu0 %1602
      %v1605 = vmul.f32 %v1600, %v1603
      %1607 = vrot.lane.b32.xlu0 %v1605, 64
      %v1608 = vpop.permute.xlu0 %1607
      %v1610 = vadd.f32 %v1519, %v1608
      %v1611 = vtanh.pop %v1610
      %v1612 = vsub.f32 1.0, %v1600
      %1614 = vrot.lane.b32.xlu0 %v1611, 96
      %v1615 = vpop.permute.xlu0 %1614
      %v1617 = vmul.f32 %v1612, %v1615
      %v1618 = vlaneseq
      %v1619 = vshrl.u32 %v1618, 7
      %v1620 = vsub.s32 0, %v1619
      %v1621 = vrot.slane %v1520, %v1620
      %1622 = vrot.lane.b32.xlu0 %v1621, 32
      %v1623 = vpop.permute.xlu0 %1622
      %v1625 = vmul.f32 %v1600, %v1623
      %v1626 = vadd.f32 %v1617, %v1625
      %1628 = vrot.lane.b32.xlu0 %v1626, 96
      %v1629 = vpop.permute.xlu0 %1628
      %1631 = vst.msk [vmem:[#allocation7] sm:$0x1] %vm96, %v1629
      %1632 = vst.msk [vmem:[#allocation5 + $0x2] sm:$0x1] %vm96, %v1629
    $region129: #{_run_greedy_search.1} parent=1 // pred_fallthru
      _
    // Predicated region
    $region130: #{_run_greedy_search.1} parent=1 // pred_check
      %p1633 = pneg %p671
    $region131: #{_run_greedy_search.1} parent=1 // pred_check_branch
      %1635 = sbr.rel (%p1633) target = $region133
    $region132: #{_run_greedy_search.1} parent=1 // pred_region
      %v1636 = vld [vmem:[#allocation3 + $0x3] sm:$0x1]
      %v1637 = vld [vmem:[#allocation7] sm:$0x1]
      %v1639 = vsel %vm138, %v1637, 0
      %1641 = vmatprep.subr.mxu0 0.0
      %1642 = vmatpush1.msra.mxu0 %v1276
      %1643 = vmatprep.subr.mxu0 0.0
      %1644 = vmatpush1.msra.mxu0 %v1277
      %1645 = vmatprep.subr.mxu0 0.0
      %1646 = vmatpush1.msra.mxu0 %v1278
      %1647 = vmatprep.subr.mxu0 0.0
      %1648 = vmatpush1.msra.mxu0 %v1279
      %1649 = vmatprep.subr.mxu0 0.0
      %1650 = vmatpush1.msra.mxu0 0.0
      %1651 = vmatprep.subr.mxu0 0.0
      %1652 = vmatpush1.msra.mxu0 0.0
      %1653 = vmatprep.subr.mxu0 0.0
      %1654 = vmatpush1.msra.mxu0 0.0
      %1655 = vmatprep.subr.mxu0 0.0
      %1656 = vmatpush1.msra.mxu0 0.0
      %1657 = vmatprep.subr.mxu0 0.0
      %1658 = vmatpush1.msra.mxu0 0.0
      %1659 = vmatprep.subr.mxu0 0.0
      %1660 = vmatpush1.msra.mxu0 0.0
      %1661 = vmatprep.subr.mxu0 0.0
      %1662 = vmatpush1.msra.mxu0 0.0
      %1663 = vmatprep.subr.mxu0 0.0
      %1664 = vmatpush1.msra.mxu0 0.0
      %1665 = vmatprep.subr.mxu0 0.0
      %1666 = vmatpush1.msra.mxu0 0.0
      %1667 = vmatprep.subr.mxu0 0.0
      %1668 = vmatpush1.msra.mxu0 0.0
      %1669 = vmatprep.subr.mxu0 0.0
      %1670 = vmatpush1.msra.mxu0 0.0
      %1671 = vmatprep.subr.mxu0 0.0
      %1672 = vmatpush1.msra.mxu0 0.0
      %1673 = vmatprep.subr.mxu0 0.0
      %1674 = vmatpush1.msra.mxu0 0.0
      %1675 = vmatprep.subr.mxu0 0.0
      %1676 = vmatpush1.msra.mxu0 0.0
      %1677 = vmatprep.subr.mxu0 0.0
      %1678 = vmatpush1.msra.mxu0 0.0
      %1679 = vmatprep.subr.mxu0 0.0
      %1680 = vmatpush1.msra.mxu0 0.0
      %1681 = vmatprep.subr.mxu0 0.0
      %1682 = vmatpush1.msra.mxu0 0.0
      %1683 = vmatprep.subr.mxu0 0.0
      %1684 = vmatpush1.msra.mxu0 0.0
      %1685 = vmatprep.subr.mxu0 0.0
      %1686 = vmatpush1.msra.mxu0 0.0
      %1687 = vmatprep.subr.mxu0 0.0
      %1688 = vmatpush1.msra.mxu0 0.0
      %1689 = vmatprep.subr.mxu0 0.0
      %1690 = vmatpush1.msra.mxu0 0.0
      %1691 = vmatprep.subr.mxu0 0.0
      %1692 = vmatpush1.msra.mxu0 0.0
      %1693 = vmatprep.subr.mxu0 0.0
      %1694 = vmatpush1.msra.mxu0 0.0
      %1695 = vmatprep.subr.mxu0 0.0
      %1696 = vmatpush1.msra.mxu0 0.0
      %1697 = vmatprep.subr.mxu0 0.0
      %1698 = vmatpush1.msra.mxu0 0.0
      %1699 = vmatprep.subr.mxu0 0.0
      %1700 = vmatpush1.msra.mxu0 0.0
      %1701 = vmatprep.subr.mxu0 0.0
      %1702 = vmatpush1.msra.mxu0 0.0
      %1703 = vmatprep.subr.mxu0 0.0
      %1704 = vmatpush1.msra.mxu0 0.0
      %1705 = vmatprep.mubr.f32.mxu0 0.0
      %1706 = vmatmul.mubr.f32.gmra.mrb[0].mxu0 %v1639
      %v1707 = vpop.f32.mrb[0].mxu0
      %v1708 = vadd.f32 %v1280, %v1707
      %v1709 = vpop.f32.mrb[0].mxu0
      %1710 = vdwg.mxu0
      %v1711 = vadd.f32 %v1636, %v1708
      %v1712 = vxor.u32 %v1711, 2147483648
      %v1713 = vmul.f32 %v1712, 1.442695
      %v1714 = vpow.pop %v1713
      %v1715 = vadd.f32 %v1714, 1.0
      %v1716 = vrcp.pop %v1715
      %v1717 = vmul.f32 1.0, %v1716
      %1719 = vrot.lane.b32.xlu0 %v1708, 64
      %v1720 = vpop.permute.xlu0 %1719
      %v1722 = vmul.f32 %v1717, %v1720
      %1724 = vrot.lane.b32.xlu0 %v1722, 64
      %v1725 = vpop.permute.xlu0 %1724
      %v1727 = vadd.f32 %v1636, %v1725
      %v1728 = vtanh.pop %v1727
      %v1729 = vsub.f32 1.0, %v1717
      %1731 = vrot.lane.b32.xlu0 %v1728, 96
      %v1732 = vpop.permute.xlu0 %1731
      %v1734 = vmul.f32 %v1729, %v1732
      %v1735 = vlaneseq
      %v1736 = vshrl.u32 %v1735, 7
      %v1737 = vsub.s32 0, %v1736
      %v1738 = vrot.slane %v1637, %v1737
      %1739 = vrot.lane.b32.xlu0 %v1738, 32
      %v1740 = vpop.permute.xlu0 %1739
      %v1742 = vmul.f32 %v1717, %v1740
      %v1743 = vadd.f32 %v1734, %v1742
      %1745 = vrot.lane.b32.xlu0 %v1743, 96
      %v1746 = vpop.permute.xlu0 %1745
      %1748 = vst.msk [vmem:[#allocation7] sm:$0x1] %vm96, %v1746
      %1749 = vst.msk [vmem:[#allocation5 + $0x3] sm:$0x1] %vm96, %v1746
    $region133: #{_run_greedy_search.1} parent=1 // pred_fallthru
      _
    // Predicated region
    $region134: #{_run_greedy_search.1} parent=1 // pred_check
      %p1750 = pneg %p792
    $region135: #{_run_greedy_search.1} parent=1 // pred_check_branch
      %1752 = sbr.rel (%p1750) target = $region137
    $region136: #{_run_greedy_search.1} parent=1 // pred_region
      %v1753 = vld [vmem:[#allocation3 + $0x4] sm:$0x1]
      %v1754 = vld [vmem:[#allocation7] sm:$0x1]
      %v1756 = vsel %vm138, %v1754, 0
      %1758 = vmatprep.subr.mxu0 0.0
      %1759 = vmatpush1.msra.mxu0 %v1276
      %1760 = vmatprep.subr.mxu0 0.0
      %1761 = vmatpush1.msra.mxu0 %v1277
      %1762 = vmatprep.subr.mxu0 0.0
      %1763 = vmatpush1.msra.mxu0 %v1278
      %1764 = vmatprep.subr.mxu0 0.0
      %1765 = vmatpush1.msra.mxu0 %v1279
      %1766 = vmatprep.subr.mxu0 0.0
      %1767 = vmatpush1.msra.mxu0 0.0
      %1768 = vmatprep.subr.mxu0 0.0
      %1769 = vmatpush1.msra.mxu0 0.0
      %1770 = vmatprep.subr.mxu0 0.0
      %1771 = vmatpush1.msra.mxu0 0.0
      %1772 = vmatprep.subr.mxu0 0.0
      %1773 = vmatpush1.msra.mxu0 0.0
      %1774 = vmatprep.subr.mxu0 0.0
      %1775 = vmatpush1.msra.mxu0 0.0
      %1776 = vmatprep.subr.mxu0 0.0
      %1777 = vmatpush1.msra.mxu0 0.0
      %1778 = vmatprep.subr.mxu0 0.0
      %1779 = vmatpush1.msra.mxu0 0.0
      %1780 = vmatprep.subr.mxu0 0.0
      %1781 = vmatpush1.msra.mxu0 0.0
      %1782 = vmatprep.subr.mxu0 0.0
      %1783 = vmatpush1.msra.mxu0 0.0
      %1784 = vmatprep.subr.mxu0 0.0
      %1785 = vmatpush1.msra.mxu0 0.0
      %1786 = vmatprep.subr.mxu0 0.0
      %1787 = vmatpush1.msra.mxu0 0.0
      %1788 = vmatprep.subr.mxu0 0.0
      %1789 = vmatpush1.msra.mxu0 0.0
      %1790 = vmatprep.subr.mxu0 0.0
      %1791 = vmatpush1.msra.mxu0 0.0
      %1792 = vmatprep.subr.mxu0 0.0
      %1793 = vmatpush1.msra.mxu0 0.0
      %1794 = vmatprep.subr.mxu0 0.0
      %1795 = vmatpush1.msra.mxu0 0.0
      %1796 = vmatprep.subr.mxu0 0.0
      %1797 = vmatpush1.msra.mxu0 0.0
      %1798 = vmatprep.subr.mxu0 0.0
      %1799 = vmatpush1.msra.mxu0 0.0
      %1800 = vmatprep.subr.mxu0 0.0
      %1801 = vmatpush1.msra.mxu0 0.0
      %1802 = vmatprep.subr.mxu0 0.0
      %1803 = vmatpush1.msra.mxu0 0.0
      %1804 = vmatprep.subr.mxu0 0.0
      %1805 = vmatpush1.msra.mxu0 0.0
      %1806 = vmatprep.subr.mxu0 0.0
      %1807 = vmatpush1.msra.mxu0 0.0
      %1808 = vmatprep.subr.mxu0 0.0
      %1809 = vmatpush1.msra.mxu0 0.0
      %1810 = vmatprep.subr.mxu0 0.0
      %1811 = vmatpush1.msra.mxu0 0.0
      %1812 = vmatprep.subr.mxu0 0.0
      %1813 = vmatpush1.msra.mxu0 0.0
      %1814 = vmatprep.subr.mxu0 0.0
      %1815 = vmatpush1.msra.mxu0 0.0
      %1816 = vmatprep.subr.mxu0 0.0
      %1817 = vmatpush1.msra.mxu0 0.0
      %1818 = vmatprep.subr.mxu0 0.0
      %1819 = vmatpush1.msra.mxu0 0.0
      %1820 = vmatprep.subr.mxu0 0.0
      %1821 = vmatpush1.msra.mxu0 0.0
      %1822 = vmatprep.mubr.f32.mxu0 0.0
      %1823 = vmatmul.mubr.f32.gmra.mrb[0].mxu0 %v1756
      %v1824 = vpop.f32.mrb[0].mxu0
      %v1825 = vadd.f32 %v1280, %v1824
      %v1826 = vpop.f32.mrb[0].mxu0
      %1827 = vdwg.mxu0
      %v1828 = vadd.f32 %v1753, %v1825
      %v1829 = vxor.u32 %v1828, 2147483648
      %v1830 = vmul.f32 %v1829, 1.442695
      %v1831 = vpow.pop %v1830
      %v1832 = vadd.f32 %v1831, 1.0
      %v1833 = vrcp.pop %v1832
      %v1834 = vmul.f32 1.0, %v1833
      %1836 = vrot.lane.b32.xlu0 %v1825, 64
      %v1837 = vpop.permute.xlu0 %1836
      %v1839 = vmul.f32 %v1834, %v1837
      %1841 = vrot.lane.b32.xlu0 %v1839, 64
      %v1842 = vpop.permute.xlu0 %1841
      %v1844 = vadd.f32 %v1753, %v1842
      %v1845 = vtanh.pop %v1844
      %v1846 = vsub.f32 1.0, %v1834
      %1848 = vrot.lane.b32.xlu0 %v1845, 96
      %v1849 = vpop.permute.xlu0 %1848
      %v1851 = vmul.f32 %v1846, %v1849
      %v1852 = vlaneseq
      %v1853 = vshrl.u32 %v1852, 7
      %v1854 = vsub.s32 0, %v1853
      %v1855 = vrot.slane %v1754, %v1854
      %1856 = vrot.lane.b32.xlu0 %v1855, 32
      %v1857 = vpop.permute.xlu0 %1856
      %v1859 = vmul.f32 %v1834, %v1857
      %v1860 = vadd.f32 %v1851, %v1859
      %1862 = vrot.lane.b32.xlu0 %v1860, 96
      %v1863 = vpop.permute.xlu0 %1862
      %1865 = vst.msk [vmem:[#allocation7] sm:$0x1] %vm96, %v1863
      %1866 = vst.msk [vmem:[#allocation5 + $0x4] sm:$0x1] %vm96, %v1863
    $region137: #{_run_greedy_search.1} parent=1 // pred_fallthru
      _
    // Predicated region
    $region138: #{_run_greedy_search.1} parent=1 // pred_check
      %p1867 = pneg %p913
    $region139: #{_run_greedy_search.1} parent=1 // pred_check_branch
      %1869 = sbr.rel (%p1867) target = $region141
    $region140: #{_run_greedy_search.1} parent=1 // pred_region
      %v1870 = vld [vmem:[#allocation3 + $0x5] sm:$0x1]
      %v1871 = vld [vmem:[#allocation7] sm:$0x1]
      %v1873 = vsel %vm138, %v1871, 0
      %1875 = vmatprep.subr.mxu0 0.0
      %1876 = vmatpush1.msra.mxu0 %v1276
      %1877 = vmatprep.subr.mxu0 0.0
      %1878 = vmatpush1.msra.mxu0 %v1277
      %1879 = vmatprep.subr.mxu0 0.0
      %1880 = vmatpush1.msra.mxu0 %v1278
      %1881 = vmatprep.subr.mxu0 0.0
      %1882 = vmatpush1.msra.mxu0 %v1279
      %1883 = vmatprep.subr.mxu0 0.0
      %1884 = vmatpush1.msra.mxu0 0.0
      %1885 = vmatprep.subr.mxu0 0.0
      %1886 = vmatpush1.msra.mxu0 0.0
      %1887 = vmatprep.subr.mxu0 0.0
      %1888 = vmatpush1.msra.mxu0 0.0
      %1889 = vmatprep.subr.mxu0 0.0
      %1890 = vmatpush1.msra.mxu0 0.0
      %1891 = vmatprep.subr.mxu0 0.0
      %1892 = vmatpush1.msra.mxu0 0.0
      %1893 = vmatprep.subr.mxu0 0.0
      %1894 = vmatpush1.msra.mxu0 0.0
      %1895 = vmatprep.subr.mxu0 0.0
      %1896 = vmatpush1.msra.mxu0 0.0
      %1897 = vmatprep.subr.mxu0 0.0
      %1898 = vmatpush1.msra.mxu0 0.0
      %1899 = vmatprep.subr.mxu0 0.0
      %1900 = vmatpush1.msra.mxu0 0.0
      %1901 = vmatprep.subr.mxu0 0.0
      %1902 = vmatpush1.msra.mxu0 0.0
      %1903 = vmatprep.subr.mxu0 0.0
      %1904 = vmatpush1.msra.mxu0 0.0
      %1905 = vmatprep.subr.mxu0 0.0
      %1906 = vmatpush1.msra.mxu0 0.0
      %1907 = vmatprep.subr.mxu0 0.0
      %1908 = vmatpush1.msra.mxu0 0.0
      %1909 = vmatprep.subr.mxu0 0.0
      %1910 = vmatpush1.msra.mxu0 0.0
      %1911 = vmatprep.subr.mxu0 0.0
      %1912 = vmatpush1.msra.mxu0 0.0
      %1913 = vmatprep.subr.mxu0 0.0
      %1914 = vmatpush1.msra.mxu0 0.0
      %1915 = vmatprep.subr.mxu0 0.0
      %1916 = vmatpush1.msra.mxu0 0.0
      %1917 = vmatprep.subr.mxu0 0.0
      %1918 = vmatpush1.msra.mxu0 0.0
      %1919 = vmatprep.subr.mxu0 0.0
      %1920 = vmatpush1.msra.mxu0 0.0
      %1921 = vmatprep.subr.mxu0 0.0
      %1922 = vmatpush1.msra.mxu0 0.0
      %1923 = vmatprep.subr.mxu0 0.0
      %1924 = vmatpush1.msra.mxu0 0.0
      %1925 = vmatprep.subr.mxu0 0.0
      %1926 = vmatpush1.msra.mxu0 0.0
      %1927 = vmatprep.subr.mxu0 0.0
      %1928 = vmatpush1.msra.mxu0 0.0
      %1929 = vmatprep.subr.mxu0 0.0
      %1930 = vmatpush1.msra.mxu0 0.0
      %1931 = vmatprep.subr.mxu0 0.0
      %1932 = vmatpush1.msra.mxu0 0.0
      %1933 = vmatprep.subr.mxu0 0.0
      %1934 = vmatpush1.msra.mxu0 0.0
      %1935 = vmatprep.subr.mxu0 0.0
      %1936 = vmatpush1.msra.mxu0 0.0
      %1937 = vmatprep.subr.mxu0 0.0
      %1938 = vmatpush1.msra.mxu0 0.0
      %1939 = vmatprep.mubr.f32.mxu0 0.0
      %1940 = vmatmul.mubr.f32.gmra.mrb[0].mxu0 %v1873
      %v1941 = vpop.f32.mrb[0].mxu0
      %v1942 = vadd.f32 %v1280, %v1941
      %v1943 = vpop.f32.mrb[0].mxu0
      %1944 = vdwg.mxu0
      %v1945 = vadd.f32 %v1870, %v1942
      %v1946 = vxor.u32 %v1945, 2147483648
      %v1947 = vmul.f32 %v1946, 1.442695
      %v1948 = vpow.pop %v1947
      %v1949 = vadd.f32 %v1948, 1.0
      %v1950 = vrcp.pop %v1949
      %v1951 = vmul.f32 1.0, %v1950
      %1953 = vrot.lane.b32.xlu0 %v1942, 64
      %v1954 = vpop.permute.xlu0 %1953
      %v1956 = vmul.f32 %v1951, %v1954
      %1958 = vrot.lane.b32.xlu0 %v1956, 64
      %v1959 = vpop.permute.xlu0 %1958
      %v1961 = vadd.f32 %v1870, %v1959
      %v1962 = vtanh.pop %v1961
      %v1963 = vsub.f32 1.0, %v1951
      %1965 = vrot.lane.b32.xlu0 %v1962, 96
      %v1966 = vpop.permute.xlu0 %1965
      %v1968 = vmul.f32 %v1963, %v1966
      %v1969 = vlaneseq
      %v1970 = vshrl.u32 %v1969, 7
      %v1971 = vsub.s32 0, %v1970
      %v1972 = vrot.slane %v1871, %v1971
      %1973 = vrot.lane.b32.xlu0 %v1972, 32
      %v1974 = vpop.permute.xlu0 %1973
      %v1976 = vmul.f32 %v1951, %v1974
      %v1977 = vadd.f32 %v1968, %v1976
      %1979 = vrot.lane.b32.xlu0 %v1977, 96
      %v1980 = vpop.permute.xlu0 %1979
      %1982 = vst.msk [vmem:[#allocation7] sm:$0x1] %vm96, %v1980
      %1983 = vst.msk [vmem:[#allocation5 + $0x5] sm:$0x1] %vm96, %v1980
    $region141: #{_run_greedy_search.1} parent=1 // pred_fallthru
      _
    // Predicated region
    $region142: #{_run_greedy_search.1} parent=1 // pred_check
      %p1984 = pneg %p1034
    $region143: #{_run_greedy_search.1} parent=1 // pred_check_branch
      %1986 = sbr.rel (%p1984) target = $region145
    $region144: #{_run_greedy_search.1} parent=1 // pred_region
      %v1987 = vld [vmem:[#allocation3 + $0x6] sm:$0x1]
      %v1988 = vld [vmem:[#allocation7] sm:$0x1]
      %v1990 = vsel %vm138, %v1988, 0
      %1992 = vmatprep.subr.mxu0 0.0
      %1993 = vmatpush1.msra.mxu0 %v1276
      %1994 = vmatprep.subr.mxu0 0.0
      %1995 = vmatpush1.msra.mxu0 %v1277
      %1996 = vmatprep.subr.mxu0 0.0
      %1997 = vmatpush1.msra.mxu0 %v1278
      %1998 = vmatprep.subr.mxu0 0.0
      %1999 = vmatpush1.msra.mxu0 %v1279
      %2000 = vmatprep.subr.mxu0 0.0
      %2001 = vmatpush1.msra.mxu0 0.0
      %2002 = vmatprep.subr.mxu0 0.0
      %2003 = vmatpush1.msra.mxu0 0.0
      %2004 = vmatprep.subr.mxu0 0.0
      %2005 = vmatpush1.msra.mxu0 0.0
      %2006 = vmatprep.subr.mxu0 0.0
      %2007 = vmatpush1.msra.mxu0 0.0
      %2008 = vmatprep.subr.mxu0 0.0
      %2009 = vmatpush1.msra.mxu0 0.0
      %2010 = vmatprep.subr.mxu0 0.0
      %2011 = vmatpush1.msra.mxu0 0.0
      %2012 = vmatprep.subr.mxu0 0.0
      %2013 = vmatpush1.msra.mxu0 0.0
      %2014 = vmatprep.subr.mxu0 0.0
      %2015 = vmatpush1.msra.mxu0 0.0
      %2016 = vmatprep.subr.mxu0 0.0
      %2017 = vmatpush1.msra.mxu0 0.0
      %2018 = vmatprep.subr.mxu0 0.0
      %2019 = vmatpush1.msra.mxu0 0.0
      %2020 = vmatprep.subr.mxu0 0.0
      %2021 = vmatpush1.msra.mxu0 0.0
      %2022 = vmatprep.subr.mxu0 0.0
      %2023 = vmatpush1.msra.mxu0 0.0
      %2024 = vmatprep.subr.mxu0 0.0
      %2025 = vmatpush1.msra.mxu0 0.0
      %2026 = vmatprep.subr.mxu0 0.0
      %2027 = vmatpush1.msra.mxu0 0.0
      %2028 = vmatprep.subr.mxu0 0.0
      %2029 = vmatpush1.msra.mxu0 0.0
      %2030 = vmatprep.subr.mxu0 0.0
      %2031 = vmatpush1.msra.mxu0 0.0
      %2032 = vmatprep.subr.mxu0 0.0
      %2033 = vmatpush1.msra.mxu0 0.0
      %2034 = vmatprep.subr.mxu0 0.0
      %2035 = vmatpush1.msra.mxu0 0.0
      %2036 = vmatprep.subr.mxu0 0.0
      %2037 = vmatpush1.msra.mxu0 0.0
      %2038 = vmatprep.subr.mxu0 0.0
      %2039 = vmatpush1.msra.mxu0 0.0
      %2040 = vmatprep.subr.mxu0 0.0
      %2041 = vmatpush1.msra.mxu0 0.0
      %2042 = vmatprep.subr.mxu0 0.0
      %2043 = vmatpush1.msra.mxu0 0.0
      %2044 = vmatprep.subr.mxu0 0.0
      %2045 = vmatpush1.msra.mxu0 0.0
      %2046 = vmatprep.subr.mxu0 0.0
      %2047 = vmatpush1.msra.mxu0 0.0
      %2048 = vmatprep.subr.mxu0 0.0
      %2049 = vmatpush1.msra.mxu0 0.0
      %2050 = vmatprep.subr.mxu0 0.0
      %2051 = vmatpush1.msra.mxu0 0.0
      %2052 = vmatprep.subr.mxu0 0.0
      %2053 = vmatpush1.msra.mxu0 0.0
      %2054 = vmatprep.subr.mxu0 0.0
      %2055 = vmatpush1.msra.mxu0 0.0
      %2056 = vmatprep.mubr.f32.mxu0 0.0
      %2057 = vmatmul.mubr.f32.gmra.mrb[0].mxu0 %v1990
      %v2058 = vpop.f32.mrb[0].mxu0
      %v2059 = vadd.f32 %v1280, %v2058
      %v2060 = vpop.f32.mrb[0].mxu0
      %2061 = vdwg.mxu0
      %v2062 = vadd.f32 %v1987, %v2059
      %v2063 = vxor.u32 %v2062, 2147483648
      %v2064 = vmul.f32 %v2063, 1.442695
      %v2065 = vpow.pop %v2064
      %v2066 = vadd.f32 %v2065, 1.0
      %v2067 = vrcp.pop %v2066
      %v2068 = vmul.f32 1.0, %v2067
      %2070 = vrot.lane.b32.xlu0 %v2059, 64
      %v2071 = vpop.permute.xlu0 %2070
      %v2073 = vmul.f32 %v2068, %v2071
      %2075 = vrot.lane.b32.xlu0 %v2073, 64
      %v2076 = vpop.permute.xlu0 %2075
      %v2078 = vadd.f32 %v1987, %v2076
      %v2079 = vtanh.pop %v2078
      %v2080 = vsub.f32 1.0, %v2068
      %2082 = vrot.lane.b32.xlu0 %v2079, 96
      %v2083 = vpop.permute.xlu0 %2082
      %v2085 = vmul.f32 %v2080, %v2083
      %v2086 = vlaneseq
      %v2087 = vshrl.u32 %v2086, 7
      %v2088 = vsub.s32 0, %v2087
      %v2089 = vrot.slane %v1988, %v2088
      %2090 = vrot.lane.b32.xlu0 %v2089, 32
      %v2091 = vpop.permute.xlu0 %2090
      %v2093 = vmul.f32 %v2068, %v2091
      %v2094 = vadd.f32 %v2085, %v2093
      %2096 = vrot.lane.b32.xlu0 %v2094, 96
      %v2097 = vpop.permute.xlu0 %2096
      %2099 = vst.msk [vmem:[#allocation7] sm:$0x1] %vm96, %v2097
      %2100 = vst.msk [vmem:[#allocation5 + $0x6] sm:$0x1] %vm96, %v2097
    $region145: #{_run_greedy_search.1} parent=1 // pred_fallthru
      _
    // Predicated region
    $region146: #{_run_greedy_search.1} parent=1 // pred_check
      %p2101 = pneg %p1155
    $region147: #{_run_greedy_search.1} parent=1 // pred_check_branch
      %2103 = sbr.rel (%p2101) target = $region149
    $region148: #{_run_greedy_search.1} parent=1 // pred_region
      %v2104 = vld [vmem:[#allocation3 + $0x7] sm:$0x1]
      %v2105 = vld [vmem:[#allocation7] sm:$0x1]
      %v2107 = vsel %vm138, %v2105, 0
      %2109 = vmatprep.subr.mxu0 0.0
      %2110 = vmatpush1.msra.mxu0 %v1276
      %2111 = vmatprep.subr.mxu0 0.0
      %2112 = vmatpush1.msra.mxu0 %v1277
      %2113 = vmatprep.subr.mxu0 0.0
      %2114 = vmatpush1.msra.mxu0 %v1278
      %2115 = vmatprep.subr.mxu0 0.0
      %2116 = vmatpush1.msra.mxu0 %v1279
      %2117 = vmatprep.subr.mxu0 0.0
      %2118 = vmatpush1.msra.mxu0 0.0
      %2119 = vmatprep.subr.mxu0 0.0
      %2120 = vmatpush1.msra.mxu0 0.0
      %2121 = vmatprep.subr.mxu0 0.0
      %2122 = vmatpush1.msra.mxu0 0.0
      %2123 = vmatprep.subr.mxu0 0.0
      %2124 = vmatpush1.msra.mxu0 0.0
      %2125 = vmatprep.subr.mxu0 0.0
      %2126 = vmatpush1.msra.mxu0 0.0
      %2127 = vmatprep.subr.mxu0 0.0
      %2128 = vmatpush1.msra.mxu0 0.0
      %2129 = vmatprep.subr.mxu0 0.0
      %2130 = vmatpush1.msra.mxu0 0.0
      %2131 = vmatprep.subr.mxu0 0.0
      %2132 = vmatpush1.msra.mxu0 0.0
      %2133 = vmatprep.subr.mxu0 0.0
      %2134 = vmatpush1.msra.mxu0 0.0
      %2135 = vmatprep.subr.mxu0 0.0
      %2136 = vmatpush1.msra.mxu0 0.0
      %2137 = vmatprep.subr.mxu0 0.0
      %2138 = vmatpush1.msra.mxu0 0.0
      %2139 = vmatprep.subr.mxu0 0.0
      %2140 = vmatpush1.msra.mxu0 0.0
      %2141 = vmatprep.subr.mxu0 0.0
      %2142 = vmatpush1.msra.mxu0 0.0
      %2143 = vmatprep.subr.mxu0 0.0
      %2144 = vmatpush1.msra.mxu0 0.0
      %2145 = vmatprep.subr.mxu0 0.0
      %2146 = vmatpush1.msra.mxu0 0.0
      %2147 = vmatprep.subr.mxu0 0.0
      %2148 = vmatpush1.msra.mxu0 0.0
      %2149 = vmatprep.subr.mxu0 0.0
      %2150 = vmatpush1.msra.mxu0 0.0
      %2151 = vmatprep.subr.mxu0 0.0
      %2152 = vmatpush1.msra.mxu0 0.0
      %2153 = vmatprep.subr.mxu0 0.0
      %2154 = vmatpush1.msra.mxu0 0.0
      %2155 = vmatprep.subr.mxu0 0.0
      %2156 = vmatpush1.msra.mxu0 0.0
      %2157 = vmatprep.subr.mxu0 0.0
      %2158 = vmatpush1.msra.mxu0 0.0
      %2159 = vmatprep.subr.mxu0 0.0
      %2160 = vmatpush1.msra.mxu0 0.0
      %2161 = vmatprep.subr.mxu0 0.0
      %2162 = vmatpush1.msra.mxu0 0.0
      %2163 = vmatprep.subr.mxu0 0.0
      %2164 = vmatpush1.msra.mxu0 0.0
      %2165 = vmatprep.subr.mxu0 0.0
      %2166 = vmatpush1.msra.mxu0 0.0
      %2167 = vmatprep.subr.mxu0 0.0
      %2168 = vmatpush1.msra.mxu0 0.0
      %2169 = vmatprep.subr.mxu0 0.0
      %2170 = vmatpush1.msra.mxu0 0.0
      %2171 = vmatprep.subr.mxu0 0.0
      %2172 = vmatpush1.msra.mxu0 0.0
      %2173 = vmatprep.mubr.f32.mxu0 0.0
      %2174 = vmatmul.mubr.f32.gmra.mrb[0].mxu0 %v2107
      %v2175 = vpop.f32.mrb[0].mxu0
      %v2176 = vadd.f32 %v1280, %v2175
      %v2177 = vpop.f32.mrb[0].mxu0
      %2178 = vdwg.mxu0
      %v2179 = vadd.f32 %v2104, %v2176
      %v2180 = vxor.u32 %v2179, 2147483648
      %v2181 = vmul.f32 %v2180, 1.442695
      %v2182 = vpow.pop %v2181
      %v2183 = vadd.f32 %v2182, 1.0
      %v2184 = vrcp.pop %v2183
      %v2185 = vmul.f32 1.0, %v2184
      %2187 = vrot.lane.b32.xlu0 %v2176, 64
      %v2188 = vpop.permute.xlu0 %2187
      %v2190 = vmul.f32 %v2185, %v2188
      %2192 = vrot.lane.b32.xlu0 %v2190, 64
      %v2193 = vpop.permute.xlu0 %2192
      %v2195 = vadd.f32 %v2104, %v2193
      %v2196 = vtanh.pop %v2195
      %v2197 = vsub.f32 1.0, %v2185
      %2199 = vrot.lane.b32.xlu0 %v2196, 96
      %v2200 = vpop.permute.xlu0 %2199
      %v2202 = vmul.f32 %v2197, %v2200
      %v2203 = vlaneseq
      %v2204 = vshrl.u32 %v2203, 7
      %v2205 = vsub.s32 0, %v2204
      %v2206 = vrot.slane %v2105, %v2205
      %2207 = vrot.lane.b32.xlu0 %v2206, 32
      %v2208 = vpop.permute.xlu0 %2207
      %v2210 = vmul.f32 %v2185, %v2208
      %v2211 = vadd.f32 %v2202, %v2210
      %2213 = vrot.lane.b32.xlu0 %v2211, 96
      %v2214 = vpop.permute.xlu0 %2213
      %2216 = vst.msk [vmem:[#allocation7] sm:$0x1] %vm96, %v2214
      %2217 = vst.msk [vmem:[#allocation5 + $0x7] sm:$0x1] %vm96, %v2214
    $region149: #{_run_greedy_search.1} parent=1 // pred_fallthru
      _
    %v2218 = vld [vmem:[#allocation5] sm:$0xff]
    %v2219 = vld [vmem:[#allocation6] sm:$0xff]
    %v2220 = vadd.f32 %v2218, %v2219
    %v2221 = vld [vmem:[%s11] sm:$0xff]
    %v2222 = vld [vmem:[%s11 + $0x8] sm:$0xff]
    %v2223 = vld [vmem:[%s11 + $0x10] sm:$0xff]
    %v2224 = vld [vmem:[%s11 + $0x18] sm:$0xff]
    %v2225 = vld [vmem:[%s12] sm:$0xff]
    %v2226 = vld [vmem:[%s12 + $0x8] sm:$0xff]
    %v2227 = vld [vmem:[%s12 + $0x10] sm:$0xff]
    %v2228 = vld [vmem:[%s12 + $0x18] sm:$0xff]
    %v2229 = vld [vmem:[%s13] sm:$0x1]
    %v2230 = vld [vmem:[%s14] sm:$0x1]
    %v2231 = vld [vmem:[%s15] sm:$0xff]
    %v2232 = vld [vmem:[%s15 + $0x8] sm:$0xff]
    %v2233 = vld [vmem:[%s15 + $0x10] sm:$0xff]
    %v2234 = vld [vmem:[%s15 + $0x18] sm:$0xff]
    %v2235 = vld [vmem:[%s15 + $0x20] sm:$0xff]
    %v2236 = vld [vmem:[%s15 + $0x28] sm:$0xff]
    %v2237 = vld [vmem:[%s15 + $0x30] sm:$0xff]
    %v2238 = vld [vmem:[%s15 + $0x38] sm:$0xff]
    %v2239 = vld [vmem:[#allocation14] sm:$0x1]
    %v2240 = vld [vmem:[%s17] sm:$0xff]
    %v2241 = vld [vmem:[%s17 + $0x8] sm:$0xff]
    %v2242 = vld [vmem:[%s17 + $0x10] sm:$0xff]
    %v2243 = vld [vmem:[%s17 + $0x18] sm:$0xff]
    %v2244 = vld [vmem:[%s18] sm:$0x1]
    %v2245 = vlaneseq
    %v2246 = vand.u32 %v2245, 127
    %v2247 = vstv %s92
    %vm2248 = vcmp.lt.s32.totalorder %v2246, %v2247
    %s2249 = scalar_lea.smem [#allocation8], 0
    %2250 = sst [smem:[%s2249]] 1
    %s2251 = sld [smem:[#allocation8]]
    %s2252 = scalar_lea.vmem %s2, %s2251
    %v2253 = vld [vmem:[%s2252] sm:$0x1]
    %v2255 = vsel %vm138, %v2253, 0
    %2257 = vmatprep.subr.mxu0 0.0
    %2258 = vmatpush1.msra.mxu0 %v2221
    %2259 = vmatprep.subr.mxu0 0.0
    %2260 = vmatpush1.msra.mxu0 %v2222
    %2261 = vmatprep.subr.mxu0 0.0
    %2262 = vmatpush1.msra.mxu0 %v2223
    %2263 = vmatprep.subr.mxu0 0.0
    %2264 = vmatpush1.msra.mxu0 %v2224
    %2265 = vmatprep.subr.mxu0 0.0
    %2266 = vmatpush1.msra.mxu0 0.0
    %2267 = vmatprep.subr.mxu0 0.0
    %2268 = vmatpush1.msra.mxu0 0.0
    %2269 = vmatprep.subr.mxu0 0.0
    %2270 = vmatpush1.msra.mxu0 0.0
    %2271 = vmatprep.subr.mxu0 0.0
    %2272 = vmatpush1.msra.mxu0 0.0
    %2273 = vmatprep.subr.mxu0 0.0
    %2274 = vmatpush1.msra.mxu0 0.0
    %2275 = vmatprep.subr.mxu0 0.0
    %2276 = vmatpush1.msra.mxu0 0.0
    %2277 = vmatprep.subr.mxu0 0.0
    %2278 = vmatpush1.msra.mxu0 0.0
    %2279 = vmatprep.subr.mxu0 0.0
    %2280 = vmatpush1.msra.mxu0 0.0
    %2281 = vmatprep.subr.mxu0 0.0
    %2282 = vmatpush1.msra.mxu0 0.0
    %2283 = vmatprep.subr.mxu0 0.0
    %2284 = vmatpush1.msra.mxu0 0.0
    %2285 = vmatprep.subr.mxu0 0.0
    %2286 = vmatpush1.msra.mxu0 0.0
    %2287 = vmatprep.subr.mxu0 0.0
    %2288 = vmatpush1.msra.mxu0 0.0
    %2289 = vmatprep.subr.mxu0 0.0
    %2290 = vmatpush1.msra.mxu0 0.0
    %2291 = vmatprep.subr.mxu0 0.0
    %2292 = vmatpush1.msra.mxu0 0.0
    %2293 = vmatprep.subr.mxu0 0.0
    %2294 = vmatpush1.msra.mxu0 0.0
    %2295 = vmatprep.subr.mxu0 0.0
    %2296 = vmatpush1.msra.mxu0 0.0
    %2297 = vmatprep.subr.mxu0 0.0
    %2298 = vmatpush1.msra.mxu0 0.0
    %2299 = vmatprep.subr.mxu0 0.0
    %2300 = vmatpush1.msra.mxu0 0.0
    %2301 = vmatprep.subr.mxu0 0.0
    %2302 = vmatpush1.msra.mxu0 0.0
    %2303 = vmatprep.subr.mxu0 0.0
    %2304 = vmatpush1.msra.mxu0 0.0
    %2305 = vmatprep.subr.mxu0 0.0
    %2306 = vmatpush1.msra.mxu0 0.0
    %2307 = vmatprep.subr.mxu0 0.0
    %2308 = vmatpush1.msra.mxu0 0.0
    %2309 = vmatprep.subr.mxu0 0.0
    %2310 = vmatpush1.msra.mxu0 0.0
    %2311 = vmatprep.subr.mxu0 0.0
    %2312 = vmatpush1.msra.mxu0 0.0
    %2313 = vmatprep.subr.mxu0 0.0
    %2314 = vmatpush1.msra.mxu0 0.0
    %2315 = vmatprep.subr.mxu0 0.0
    %2316 = vmatpush1.msra.mxu0 0.0
    %2317 = vmatprep.subr.mxu0 0.0
    %2318 = vmatpush1.msra.mxu0 0.0
    %2319 = vmatprep.subr.mxu0 0.0
    %2320 = vmatpush1.msra.mxu0 0.0
    %2321 = vmatprep.mubr.f32.mxu0 0.0
    %2322 = vmatmul.mubr.f32.gmra.mrb[0].mxu0 %v2255
    %v2323 = vpop.f32.mrb[0].mxu0
    %v2324 = vadd.f32 %v2229, %v2323
    %v2325 = vpop.f32.mrb[0].mxu0
    %2326 = vdwg.mxu0
    %v2327 = vld [vmem:[#allocation7] sm:$0x1]
    %v2329 = vsel %vm138, %v2327, 0
    %2331 = vmatprep.subr.mxu0 0.0
    %2332 = vmatpush1.msra.mxu0 %v2225
    %2333 = vmatprep.subr.mxu0 0.0
    %2334 = vmatpush1.msra.mxu0 %v2226
    %2335 = vmatprep.subr.mxu0 0.0
    %2336 = vmatpush1.msra.mxu0 %v2227
    %2337 = vmatprep.subr.mxu0 0.0
    %2338 = vmatpush1.msra.mxu0 %v2228
    %2339 = vmatprep.subr.mxu0 0.0
    %2340 = vmatpush1.msra.mxu0 0.0
    %2341 = vmatprep.subr.mxu0 0.0
    %2342 = vmatpush1.msra.mxu0 0.0
    %2343 = vmatprep.subr.mxu0 0.0
    %2344 = vmatpush1.msra.mxu0 0.0
    %2345 = vmatprep.subr.mxu0 0.0
    %2346 = vmatpush1.msra.mxu0 0.0
    %2347 = vmatprep.subr.mxu0 0.0
    %2348 = vmatpush1.msra.mxu0 0.0
    %2349 = vmatprep.subr.mxu0 0.0
    %2350 = vmatpush1.msra.mxu0 0.0
    %2351 = vmatprep.subr.mxu0 0.0
    %2352 = vmatpush1.msra.mxu0 0.0
    %2353 = vmatprep.subr.mxu0 0.0
    %2354 = vmatpush1.msra.mxu0 0.0
    %2355 = vmatprep.subr.mxu0 0.0
    %2356 = vmatpush1.msra.mxu0 0.0
    %2357 = vmatprep.subr.mxu0 0.0
    %2358 = vmatpush1.msra.mxu0 0.0
    %2359 = vmatprep.subr.mxu0 0.0
    %2360 = vmatpush1.msra.mxu0 0.0
    %2361 = vmatprep.subr.mxu0 0.0
    %2362 = vmatpush1.msra.mxu0 0.0
    %2363 = vmatprep.subr.mxu0 0.0
    %2364 = vmatpush1.msra.mxu0 0.0
    %2365 = vmatprep.subr.mxu0 0.0
    %2366 = vmatpush1.msra.mxu0 0.0
    %2367 = vmatprep.subr.mxu0 0.0
    %2368 = vmatpush1.msra.mxu0 0.0
    %2369 = vmatprep.subr.mxu0 0.0
    %2370 = vmatpush1.msra.mxu0 0.0
    %2371 = vmatprep.subr.mxu0 0.0
    %2372 = vmatpush1.msra.mxu0 0.0
    %2373 = vmatprep.subr.mxu0 0.0
    %2374 = vmatpush1.msra.mxu0 0.0
    %2375 = vmatprep.subr.mxu0 0.0
    %2376 = vmatpush1.msra.mxu0 0.0
    %2377 = vmatprep.subr.mxu0 0.0
    %2378 = vmatpush1.msra.mxu0 0.0
    %2379 = vmatprep.subr.mxu0 0.0
    %2380 = vmatpush1.msra.mxu0 0.0
    %2381 = vmatprep.subr.mxu0 0.0
    %2382 = vmatpush1.msra.mxu0 0.0
    %2383 = vmatprep.subr.mxu0 0.0
    %2384 = vmatpush1.msra.mxu0 0.0
    %2385 = vmatprep.subr.mxu0 0.0
    %2386 = vmatpush1.msra.mxu0 0.0
    %2387 = vmatprep.subr.mxu0 0.0
    %2388 = vmatpush1.msra.mxu0 0.0
    %2389 = vmatprep.subr.mxu0 0.0
    %2390 = vmatpush1.msra.mxu0 0.0
    %2391 = vmatprep.subr.mxu0 0.0
    %2392 = vmatpush1.msra.mxu0 0.0
    %2393 = vmatprep.subr.mxu0 0.0
    %2394 = vmatpush1.msra.mxu0 0.0
    %2395 = vmatprep.mubr.f32.mxu0 0.0
    %2396 = vmatmul.mubr.f32.gmra.mrb[0].mxu0 %v2329
    %v2397 = vpop.f32.mrb[0].mxu0
    %v2398 = vadd.f32 %v2230, %v2397
    %v2399 = vpop.f32.mrb[0].mxu0
    %2400 = vdwg.mxu0
    %v2401 = vadd.f32 %v2324, %v2398
    %v2402 = vxor.u32 %v2401, 2147483648
    %v2403 = vmul.f32 %v2402, 1.442695
    %v2404 = vpow.pop %v2403
    %v2405 = vadd.f32 %v2404, 1.0
    %v2406 = vrcp.pop %v2405
    %v2407 = vmul.f32 1.0, %v2406
    %2409 = vrot.lane.b32.xlu0 %v2398, 64
    %v2410 = vpop.permute.xlu0 %2409
    %v2412 = vmul.f32 %v2407, %v2410
    %2414 = vrot.lane.b32.xlu0 %v2412, 64
    %v2415 = vpop.permute.xlu0 %2414
    %v2417 = vadd.f32 %v2324, %v2415
    %v2418 = vtanh.pop %v2417
    %v2419 = vsub.f32 1.0, %v2407
    %2421 = vrot.lane.b32.xlu0 %v2418, 96
    %v2422 = vpop.permute.xlu0 %2421
    %v2424 = vmul.f32 %v2419, %v2422
    %v2425 = vlaneseq
    %v2426 = vshrl.u32 %v2425, 7
    %v2427 = vsub.s32 0, %v2426
    %v2428 = vrot.slane %v2327, %v2427
    %2429 = vrot.lane.b32.xlu0 %v2428, 32
    %v2430 = vpop.permute.xlu0 %2429
    %v2432 = vmul.f32 %v2407, %v2430
    %v2433 = vadd.f32 %v2424, %v2432
    %2435 = vrot.lane.b32.xlu0 %v2433, 96
    %v2436 = vpop.permute.xlu0 %2435
    %2438 = vst.msk [vmem:[#allocation7] sm:$0x1] %vm96, %v2436
    %v2439 = vsel %vm138, %v2436, 0
    %v2442 = vsel %vm138, %v2220, 0
    %2444 = vmatprep.subr.mxu0 0.0
    %2445 = vmatpush1.xpose.msra.mxu0 %v2442
    %2446 = vmatprep.subr.mxu0 0.0
    %2447 = vmatpush1.xpose.msra.mxu0 0.0
    %2448 = vmatprep.subr.mxu0 0.0
    %2449 = vmatpush1.xpose.msra.mxu0 0.0
    %2450 = vmatprep.subr.mxu0 0.0
    %2451 = vmatpush1.xpose.msra.mxu0 0.0
    %2452 = vmatprep.subr.mxu0 0.0
    %2453 = vmatpush1.xpose.msra.mxu0 0.0
    %2454 = vmatprep.subr.mxu0 0.0
    %2455 = vmatpush1.xpose.msra.mxu0 0.0
    %2456 = vmatprep.subr.mxu0 0.0
    %2457 = vmatpush1.xpose.msra.mxu0 0.0
    %2458 = vmatprep.subr.mxu0 0.0
    %2459 = vmatpush1.xpose.msra.mxu0 0.0
    %2460 = vmatprep.subr.mxu0 0.0
    %2461 = vmatpush1.xpose.msra.mxu0 0.0
    %2462 = vmatprep.subr.mxu0 0.0
    %2463 = vmatpush1.xpose.msra.mxu0 0.0
    %2464 = vmatprep.subr.mxu0 0.0
    %2465 = vmatpush1.xpose.msra.mxu0 0.0
    %2466 = vmatprep.subr.mxu0 0.0
    %2467 = vmatpush1.xpose.msra.mxu0 0.0
    %2468 = vmatprep.subr.mxu0 0.0
    %2469 = vmatpush1.xpose.msra.mxu0 0.0
    %2470 = vmatprep.subr.mxu0 0.0
    %2471 = vmatpush1.xpose.msra.mxu0 0.0
    %2472 = vmatprep.subr.mxu0 0.0
    %2473 = vmatpush1.xpose.msra.mxu0 0.0
    %2474 = vmatprep.subr.mxu0 0.0
    %2475 = vmatpush1.xpose.msra.mxu0 0.0
    %2476 = vmatprep.subr.mxu0 0.0
    %2477 = vmatpush1.xpose.msra.mxu0 0.0
    %2478 = vmatprep.subr.mxu0 0.0
    %2479 = vmatpush1.xpose.msra.mxu0 0.0
    %2480 = vmatprep.subr.mxu0 0.0
    %2481 = vmatpush1.xpose.msra.mxu0 0.0
    %2482 = vmatprep.subr.mxu0 0.0
    %2483 = vmatpush1.xpose.msra.mxu0 0.0
    %2484 = vmatprep.subr.mxu0 0.0
    %2485 = vmatpush1.xpose.msra.mxu0 0.0
    %2486 = vmatprep.subr.mxu0 0.0
    %2487 = vmatpush1.xpose.msra.mxu0 0.0
    %2488 = vmatprep.subr.mxu0 0.0
    %2489 = vmatpush1.xpose.msra.mxu0 0.0
    %2490 = vmatprep.subr.mxu0 0.0
    %2491 = vmatpush1.xpose.msra.mxu0 0.0
    %2492 = vmatprep.subr.mxu0 0.0
    %2493 = vmatpush1.xpose.msra.mxu0 0.0
    %2494 = vmatprep.subr.mxu0 0.0
    %2495 = vmatpush1.xpose.msra.mxu0 0.0
    %2496 = vmatprep.subr.mxu0 0.0
    %2497 = vmatpush1.xpose.msra.mxu0 0.0
    %2498 = vmatprep.subr.mxu0 0.0
    %2499 = vmatpush1.xpose.msra.mxu0 0.0
    %2500 = vmatprep.subr.mxu0 0.0
    %2501 = vmatpush1.xpose.msra.mxu0 0.0
    %2502 = vmatprep.subr.mxu0 0.0
    %2503 = vmatpush1.xpose.msra.mxu0 0.0
    %2504 = vmatprep.subr.mxu0 0.0
    %2505 = vmatpush1.xpose.msra.mxu0 0.0
    %2506 = vmatprep.subr.mxu0 0.0
    %2507 = vmatpush1.xpose.msra.mxu0 0.0
    %2508 = vmatprep.mubr.f32.mxu0 0.0
    %2509 = vmatmul.mubr.f32.gmra.mrb[0].mxu0 %v2439
    %v2510 = vpop.f32.mrb[0].mxu0
    %v2511 = vadd.f32 0.0, %v2510
    %v2512 = vpop.f32.mrb[0].mxu0
    %2513 = vdwg.mxu0
    %v2514 = vsel %vm2248, %v2511, -1e+30
    %vm2515 = vcmask 57344
    %v2516 = vsel %vm2515, %v2514, -inf
    %2517 = vmax.xlane.f32.xlu0 %v2516
    %v2518 = vpop.xlane.xlu0 %2517
    %v2519 = vsub.f32 %v2514, %v2518
    %v2520 = vmul.f32 %v2519, 1.442695
    %v2521 = vpow.pop %v2520
    %v2522 = vsel %vm2515, %v2521, 0.0
    %2523 = vadd.xlane.f32.xlu0 %v2522
    %v2524 = vpop.xlane.xlu0 %2523
    %v2525 = vrcp.pop %v2524
    %v2526 = vmul.f32 %v2521, %v2525
    %vm2527 = vcmask 64512
    %v2529 = vsel %vm2527, %v2526, 0
    %2531 = vmatprep.subr.mxu0 0.0
    %2532 = vmatpush1.msra.mxu0 %v2220
    %2533 = vmatprep.subr.mxu0 0.0
    %2534 = vmatpush1.msra.mxu0 0.0
    %2535 = vmatprep.subr.mxu0 0.0
    %2536 = vmatpush1.msra.mxu0 0.0
    %2537 = vmatprep.subr.mxu0 0.0
    %2538 = vmatpush1.msra.mxu0 0.0
    %2539 = vmatprep.subr.mxu0 0.0
    %2540 = vmatpush1.msra.mxu0 0.0
    %2541 = vmatprep.subr.mxu0 0.0
    %2542 = vmatpush1.msra.mxu0 0.0
    %2543 = vmatprep.subr.mxu0 0.0
    %2544 = vmatpush1.msra.mxu0 0.0
    %2545 = vmatprep.subr.mxu0 0.0
    %2546 = vmatpush1.msra.mxu0 0.0
    %2547 = vmatprep.subr.mxu0 0.0
    %2548 = vmatpush1.msra.mxu0 0.0
    %2549 = vmatprep.subr.mxu0 0.0
    %2550 = vmatpush1.msra.mxu0 0.0
    %2551 = vmatprep.subr.mxu0 0.0
    %2552 = vmatpush1.msra.mxu0 0.0
    %2553 = vmatprep.subr.mxu0 0.0
    %2554 = vmatpush1.msra.mxu0 0.0
    %2555 = vmatprep.subr.mxu0 0.0
    %2556 = vmatpush1.msra.mxu0 0.0
    %2557 = vmatprep.subr.mxu0 0.0
    %2558 = vmatpush1.msra.mxu0 0.0
    %2559 = vmatprep.subr.mxu0 0.0
    %2560 = vmatpush1.msra.mxu0 0.0
    %2561 = vmatprep.subr.mxu0 0.0
    %2562 = vmatpush1.msra.mxu0 0.0
    %2563 = vmatprep.subr.mxu0 0.0
    %2564 = vmatpush1.msra.mxu0 0.0
    %2565 = vmatprep.subr.mxu0 0.0
    %2566 = vmatpush1.msra.mxu0 0.0
    %2567 = vmatprep.subr.mxu0 0.0
    %2568 = vmatpush1.msra.mxu0 0.0
    %2569 = vmatprep.subr.mxu0 0.0
    %2570 = vmatpush1.msra.mxu0 0.0
    %2571 = vmatprep.subr.mxu0 0.0
    %2572 = vmatpush1.msra.mxu0 0.0
    %2573 = vmatprep.subr.mxu0 0.0
    %2574 = vmatpush1.msra.mxu0 0.0
    %2575 = vmatprep.subr.mxu0 0.0
    %2576 = vmatpush1.msra.mxu0 0.0
    %2577 = vmatprep.subr.mxu0 0.0
    %2578 = vmatpush1.msra.mxu0 0.0
    %2579 = vmatprep.subr.mxu0 0.0
    %2580 = vmatpush1.msra.mxu0 0.0
    %2581 = vmatprep.subr.mxu0 0.0
    %2582 = vmatpush1.msra.mxu0 0.0
    %2583 = vmatprep.subr.mxu0 0.0
    %2584 = vmatpush1.msra.mxu0 0.0
    %2585 = vmatprep.subr.mxu0 0.0
    %2586 = vmatpush1.msra.mxu0 0.0
    %2587 = vmatprep.subr.mxu0 0.0
    %2588 = vmatpush1.msra.mxu0 0.0
    %2589 = vmatprep.subr.mxu0 0.0
    %2590 = vmatpush1.msra.mxu0 0.0
    %2591 = vmatprep.subr.mxu0 0.0
    %2592 = vmatpush1.msra.mxu0 0.0
    %2593 = vmatprep.subr.mxu0 0.0
    %2594 = vmatpush1.msra.mxu0 0.0
    %2595 = vmatprep.mubr.f32.mxu0 0.0
    %2596 = vmatmul.mubr.f32.gmra.mrb[0].mxu0 %v2529
    %v2597 = vpop.f32.mrb[0].mxu0
    %v2598 = vadd.f32 0.0, %v2597
    %v2599 = vpop.f32.mrb[0].mxu0
    %2600 = vdwg.mxu0
    %v2602 = vsel %vm138, %v2598, 0
    %2604 = vmatprep.subr.mxu0 0.0
    %2605 = vmatpush1.msra.mxu0 %v2235
    %2606 = vmatprep.subr.mxu0 0.0
    %2607 = vmatpush1.msra.mxu0 %v2236
    %2608 = vmatprep.subr.mxu0 0.0
    %2609 = vmatpush1.msra.mxu0 %v2237
    %2610 = vmatprep.subr.mxu0 0.0
    %2611 = vmatpush1.msra.mxu0 %v2238
    %2612 = vmatprep.subr.mxu0 0.0
    %2613 = vmatpush1.msra.mxu0 0.0
    %2614 = vmatprep.subr.mxu0 0.0
    %2615 = vmatpush1.msra.mxu0 0.0
    %2616 = vmatprep.subr.mxu0 0.0
    %2617 = vmatpush1.msra.mxu0 0.0
    %2618 = vmatprep.subr.mxu0 0.0
    %2619 = vmatpush1.msra.mxu0 0.0
    %2620 = vmatprep.subr.mxu0 0.0
    %2621 = vmatpush1.msra.mxu0 0.0
    %2622 = vmatprep.subr.mxu0 0.0
    %2623 = vmatpush1.msra.mxu0 0.0
    %2624 = vmatprep.subr.mxu0 0.0
    %2625 = vmatpush1.msra.mxu0 0.0
    %2626 = vmatprep.subr.mxu0 0.0
    %2627 = vmatpush1.msra.mxu0 0.0
    %2628 = vmatprep.subr.mxu0 0.0
    %2629 = vmatpush1.msra.mxu0 0.0
    %2630 = vmatprep.subr.mxu0 0.0
    %2631 = vmatpush1.msra.mxu0 0.0
    %2632 = vmatprep.subr.mxu0 0.0
    %2633 = vmatpush1.msra.mxu0 0.0
    %2634 = vmatprep.subr.mxu0 0.0
    %2635 = vmatpush1.msra.mxu0 0.0
    %2636 = vmatprep.subr.mxu0 0.0
    %2637 = vmatpush1.msra.mxu0 0.0
    %2638 = vmatprep.subr.mxu0 0.0
    %2639 = vmatpush1.msra.mxu0 0.0
    %2640 = vmatprep.subr.mxu0 0.0
    %2641 = vmatpush1.msra.mxu0 0.0
    %2642 = vmatprep.subr.mxu0 0.0
    %2643 = vmatpush1.msra.mxu0 0.0
    %2644 = vmatprep.subr.mxu0 0.0
    %2645 = vmatpush1.msra.mxu0 0.0
    %2646 = vmatprep.subr.mxu0 0.0
    %2647 = vmatpush1.msra.mxu0 0.0
    %2648 = vmatprep.subr.mxu0 0.0
    %2649 = vmatpush1.msra.mxu0 0.0
    %2650 = vmatprep.subr.mxu0 0.0
    %2651 = vmatpush1.msra.mxu0 0.0
    %2652 = vmatprep.subr.mxu0 0.0
    %2653 = vmatpush1.msra.mxu0 0.0
    %2654 = vmatprep.subr.mxu0 0.0
    %2655 = vmatpush1.msra.mxu0 0.0
    %2656 = vmatprep.subr.mxu0 0.0
    %2657 = vmatpush1.msra.mxu0 0.0
    %2658 = vmatprep.subr.mxu0 0.0
    %2659 = vmatpush1.msra.mxu0 0.0
    %2660 = vmatprep.subr.mxu0 0.0
    %2661 = vmatpush1.msra.mxu0 0.0
    %2662 = vmatprep.subr.mxu0 0.0
    %2663 = vmatpush1.msra.mxu0 0.0
    %2664 = vmatprep.subr.mxu0 0.0
    %2665 = vmatpush1.msra.mxu0 0.0
    %2666 = vmatprep.subr.mxu0 0.0
    %2667 = vmatpush1.msra.mxu0 0.0
    %2668 = vmatprep.mubr.f32.mxu0 0.0
    %2669 = vmatmul.mubr.f32.gmra.mrb[0].mxu0 %v2602
    %v2670 = vpop.f32.mrb[0].mxu0
    %v2671 = vadd.f32 0.0, %v2670
    %v2672 = vpop.f32.mrb[0].mxu0
    %2673 = vdwg.mxu0
    %2674 = vmatprep.subr.mxu0 0.0
    %2675 = vmatpush1.msra.mxu0 %v2231
    %2676 = vmatprep.subr.mxu0 0.0
    %2677 = vmatpush1.msra.mxu0 %v2232
    %2678 = vmatprep.subr.mxu0 0.0
    %2679 = vmatpush1.msra.mxu0 %v2233
    %2680 = vmatprep.subr.mxu0 0.0
    %2681 = vmatpush1.msra.mxu0 %v2234
    %2682 = vmatprep.subr.mxu0 0.0
    %2683 = vmatpush1.msra.mxu0 0.0
    %2684 = vmatprep.subr.mxu0 0.0
    %2685 = vmatpush1.msra.mxu0 0.0
    %2686 = vmatprep.subr.mxu0 0.0
    %2687 = vmatpush1.msra.mxu0 0.0
    %2688 = vmatprep.subr.mxu0 0.0
    %2689 = vmatpush1.msra.mxu0 0.0
    %2690 = vmatprep.subr.mxu0 0.0
    %2691 = vmatpush1.msra.mxu0 0.0
    %2692 = vmatprep.subr.mxu0 0.0
    %2693 = vmatpush1.msra.mxu0 0.0
    %2694 = vmatprep.subr.mxu0 0.0
    %2695 = vmatpush1.msra.mxu0 0.0
    %2696 = vmatprep.subr.mxu0 0.0
    %2697 = vmatpush1.msra.mxu0 0.0
    %2698 = vmatprep.subr.mxu0 0.0
    %2699 = vmatpush1.msra.mxu0 0.0
    %2700 = vmatprep.subr.mxu0 0.0
    %2701 = vmatpush1.msra.mxu0 0.0
    %2702 = vmatprep.subr.mxu0 0.0
    %2703 = vmatpush1.msra.mxu0 0.0
    %2704 = vmatprep.subr.mxu0 0.0
    %2705 = vmatpush1.msra.mxu0 0.0
    %2706 = vmatprep.subr.mxu0 0.0
    %2707 = vmatpush1.msra.mxu0 0.0
    %2708 = vmatprep.subr.mxu0 0.0
    %2709 = vmatpush1.msra.mxu0 0.0
    %2710 = vmatprep.subr.mxu0 0.0
    %2711 = vmatpush1.msra.mxu0 0.0
    %2712 = vmatprep.subr.mxu0 0.0
    %2713 = vmatpush1.msra.mxu0 0.0
    %2714 = vmatprep.subr.mxu0 0.0
    %2715 = vmatpush1.msra.mxu0 0.0
    %2716 = vmatprep.subr.mxu0 0.0
    %2717 = vmatpush1.msra.mxu0 0.0
    %2718 = vmatprep.subr.mxu0 0.0
    %2719 = vmatpush1.msra.mxu0 0.0
    %2720 = vmatprep.subr.mxu0 0.0
    %2721 = vmatpush1.msra.mxu0 0.0
    %2722 = vmatprep.subr.mxu0 0.0
    %2723 = vmatpush1.msra.mxu0 0.0
    %2724 = vmatprep.subr.mxu0 0.0
    %2725 = vmatpush1.msra.mxu0 0.0
    %2726 = vmatprep.subr.mxu0 0.0
    %2727 = vmatpush1.msra.mxu0 0.0
    %2728 = vmatprep.subr.mxu0 0.0
    %2729 = vmatpush1.msra.mxu0 0.0
    %2730 = vmatprep.subr.mxu0 0.0
    %2731 = vmatpush1.msra.mxu0 0.0
    %2732 = vmatprep.subr.mxu0 0.0
    %2733 = vmatpush1.msra.mxu0 0.0
    %2734 = vmatprep.subr.mxu0 0.0
    %2735 = vmatpush1.msra.mxu0 0.0
    %2736 = vmatprep.subr.mxu0 0.0
    %2737 = vmatpush1.msra.mxu0 0.0
    %2738 = vmatprep.mubr.f32.mxu0 0.0
    %2739 = vmatmul.mubr.f32.gmra.mrb[0].mxu0 %v2439
    %v2740 = vpop.f32.mrb[0].mxu0
    %v2741 = vadd.f32 %v2671, %v2740
    %v2742 = vpop.f32.mrb[0].mxu0
    %2743 = vdwg.mxu0
    %v2744 = vadd.f32 %v2741, %v2239
    %v2745 = vtanh.pop %v2744
    %v2747 = vsel %vm138, %v2745, 0
    %2749 = vmatprep.subr.mxu0 0.0
    %2750 = vmatpush1.msra.mxu0 %v2240
    %2751 = vmatprep.subr.mxu0 0.0
    %2752 = vmatpush1.msra.mxu0 %v2241
    %2753 = vmatprep.subr.mxu0 0.0
    %2754 = vmatpush1.msra.mxu0 %v2242
    %2755 = vmatprep.subr.mxu0 0.0
    %2756 = vmatpush1.msra.mxu0 %v2243
    %2757 = vmatprep.subr.mxu0 0.0
    %2758 = vmatpush1.msra.mxu0 0.0
    %2759 = vmatprep.subr.mxu0 0.0
    %2760 = vmatpush1.msra.mxu0 0.0
    %2761 = vmatprep.subr.mxu0 0.0
    %2762 = vmatpush1.msra.mxu0 0.0
    %2763 = vmatprep.subr.mxu0 0.0
    %2764 = vmatpush1.msra.mxu0 0.0
    %2765 = vmatprep.subr.mxu0 0.0
    %2766 = vmatpush1.msra.mxu0 0.0
    %2767 = vmatprep.subr.mxu0 0.0
    %2768 = vmatpush1.msra.mxu0 0.0
    %2769 = vmatprep.subr.mxu0 0.0
    %2770 = vmatpush1.msra.mxu0 0.0
    %2771 = vmatprep.subr.mxu0 0.0
    %2772 = vmatpush1.msra.mxu0 0.0
    %2773 = vmatprep.subr.mxu0 0.0
    %2774 = vmatpush1.msra.mxu0 0.0
    %2775 = vmatprep.subr.mxu0 0.0
    %2776 = vmatpush1.msra.mxu0 0.0
    %2777 = vmatprep.subr.mxu0 0.0
    %2778 = vmatpush1.msra.mxu0 0.0
    %2779 = vmatprep.subr.mxu0 0.0
    %2780 = vmatpush1.msra.mxu0 0.0
    %2781 = vmatprep.subr.mxu0 0.0
    %2782 = vmatpush1.msra.mxu0 0.0
    %2783 = vmatprep.subr.mxu0 0.0
    %2784 = vmatpush1.msra.mxu0 0.0
    %2785 = vmatprep.subr.mxu0 0.0
    %2786 = vmatpush1.msra.mxu0 0.0
    %2787 = vmatprep.subr.mxu0 0.0
    %2788 = vmatpush1.msra.mxu0 0.0
    %2789 = vmatprep.subr.mxu0 0.0
    %2790 = vmatpush1.msra.mxu0 0.0
    %2791 = vmatprep.subr.mxu0 0.0
    %2792 = vmatpush1.msra.mxu0 0.0
    %2793 = vmatprep.subr.mxu0 0.0
    %2794 = vmatpush1.msra.mxu0 0.0
    %2795 = vmatprep.subr.mxu0 0.0
    %2796 = vmatpush1.msra.mxu0 0.0
    %2797 = vmatprep.subr.mxu0 0.0
    %2798 = vmatpush1.msra.mxu0 0.0
    %2799 = vmatprep.subr.mxu0 0.0
    %2800 = vmatpush1.msra.mxu0 0.0
    %2801 = vmatprep.subr.mxu0 0.0
    %2802 = vmatpush1.msra.mxu0 0.0
    %2803 = vmatprep.subr.mxu0 0.0
    %2804 = vmatpush1.msra.mxu0 0.0
    %2805 = vmatprep.subr.mxu0 0.0
    %2806 = vmatpush1.msra.mxu0 0.0
    %2807 = vmatprep.subr.mxu0 0.0
    %2808 = vmatpush1.msra.mxu0 0.0
    %2809 = vmatprep.subr.mxu0 0.0
    %2810 = vmatpush1.msra.mxu0 0.0
    %2811 = vmatprep.subr.mxu0 0.0
    %2812 = vmatpush1.msra.mxu0 0.0
    %2813 = vmatprep.mubr.f32.mxu0 0.0
    %2814 = vmatmul.mubr.f32.gmra.mrb[0].mxu0 %v2747
    %v2815 = vpop.f32.mrb[0].mxu0
    %v2816 = vadd.f32 %v2244, %v2815
    %v2817 = vpop.f32.mrb[0].mxu0
    %2818 = vdwg.mxu0
    %vm2819 = vcmask 1040384
    %v2820 = vsel %vm2819, %v2816, -inf
    %2821 = vmax.xlane.f32.xlu0 %v2820
    %v2822 = vpop.xlane.xlu0 %2821
    %v2823 = vrot.slane %v2822, 4
    %v2824 = vmax.f32 %v2822, %v2823
    %v2825 = vrot.slane %v2824, 2
    %v2826 = vmax.f32 %v2824, %v2825
    %v2827 = vrot.slane %v2826, 1
    %v2828 = vmax.f32 %v2826, %v2827
    %s2829 = vtos %v2828
    %v2830 = vstv %s2829
    %v2831 = vsub.f32 %v2816, %v2830
    %v2832 = vmul.f32 %v2831, 1.442695
    %v2833 = vpow.pop %v2832
    %v2834 = vsel %vm2819, %v2833, 0.0
    %2835 = vadd.xlane.f32.xlu0 %v2834
    %v2836 = vpop.xlane.xlu0 %2835
    %v2837 = vrot.slane %v2836, 4
    %v2838 = vadd.f32 %v2836, %v2837
    %v2839 = vrot.slane %v2838, 2
    %v2840 = vadd.f32 %v2838, %v2839
    %v2841 = vrot.slane %v2840, 1
    %v2842 = vadd.f32 %v2840, %v2841
    %s2843 = vtos %v2842
    %v2844 = vstv %s2843
    %v2845 = vrcp.pop %v2844
    %s2846 = vtos %v2845
    %vm2847 = vcmp.eq.f32.partialorder %v2816, %v2830
    %v2848 = vsel %vm2847, %v2246, 128
    %v2849 = vsel %vm2819, %v2848, 2147483647
    %v2850 = vand.u32 %v2849, 65535
    %v2851 = vshra.s32 %v2849, 16
    %v2852 = vcvt.s32.f32 %v2850
    %v2853 = vcvt.s32.f32 %v2851
    %2854 = vmin.xlane.f32.xlu0 %v2853
    %v2855 = vpop.xlane.xlu0 %2854
    %vm2856 = vcmp.eq.f32.partialorder %v2853, %v2855
    %v2857 = vsel %vm2856, %v2852, inf
    %2858 = vmin.xlane.f32.xlu0 %v2857
    %v2859 = vpop.xlane.xlu0 %2858
    %v2860 = vcvt.f32.s32 %v2859
    %v2861 = vcvt.f32.s32 %v2855
    %v2862 = vshll.u32 %v2861, 16
    %v2863 = vadd.s32 %v2862, %v2860
    %v2864 = vrot.slane %v2863, 4
    %vm2865 = vcmp.lt.s32.totalorder %v2863, %v2864
    %v2866 = vsel %vm2865, %v2863, %v2864
    %v2867 = vrot.slane %v2866, 2
    %vm2868 = vcmp.lt.s32.totalorder %v2866, %v2867
    %v2869 = vsel %vm2868, %v2866, %v2867
    %v2870 = vrot.slane %v2869, 1
    %vm2871 = vcmp.lt.s32.totalorder %v2869, %v2870
    %v2872 = vsel %vm2871, %v2869, %v2870
    %s2873 = vtos %v2872
    %s2874 = scalar_lea.smem [#allocation15], 0
    %2875 = sst [smem:[%s2874]] %s2873
    %s2876 = scalar_lea.smem [#allocation16], 0
    %2877 = sst [smem:[%s2876]] %s2846
    %2878 = sst [smem:[%s2249]] %s2873
    %s2879 = sld [smem:[#allocation8]]
    %s2880 = scalar_lea.vmem %s2, %s2879
    %v2881 = vld [vmem:[%s2880] sm:$0x1]
    %v2883 = vsel %vm138, %v2881, 0
    %2885 = vmatprep.subr.mxu0 0.0
    %2886 = vmatpush1.msra.mxu0 %v2221
    %2887 = vmatprep.subr.mxu0 0.0
    %2888 = vmatpush1.msra.mxu0 %v2222
    %2889 = vmatprep.subr.mxu0 0.0
    %2890 = vmatpush1.msra.mxu0 %v2223
    %2891 = vmatprep.subr.mxu0 0.0
    %2892 = vmatpush1.msra.mxu0 %v2224
    %2893 = vmatprep.subr.mxu0 0.0
    %2894 = vmatpush1.msra.mxu0 0.0
    %2895 = vmatprep.subr.mxu0 0.0
    %2896 = vmatpush1.msra.mxu0 0.0
    %2897 = vmatprep.subr.mxu0 0.0
    %2898 = vmatpush1.msra.mxu0 0.0
    %2899 = vmatprep.subr.mxu0 0.0
    %2900 = vmatpush1.msra.mxu0 0.0
    %2901 = vmatprep.subr.mxu0 0.0
    %2902 = vmatpush1.msra.mxu0 0.0
    %2903 = vmatprep.subr.mxu0 0.0
    %2904 = vmatpush1.msra.mxu0 0.0
    %2905 = vmatprep.subr.mxu0 0.0
    %2906 = vmatpush1.msra.mxu0 0.0
    %2907 = vmatprep.subr.mxu0 0.0
    %2908 = vmatpush1.msra.mxu0 0.0
    %2909 = vmatprep.subr.mxu0 0.0
    %2910 = vmatpush1.msra.mxu0 0.0
    %2911 = vmatprep.subr.mxu0 0.0
    %2912 = vmatpush1.msra.mxu0 0.0
    %2913 = vmatprep.subr.mxu0 0.0
    %2914 = vmatpush1.msra.mxu0 0.0
    %2915 = vmatprep.subr.mxu0 0.0
    %2916 = vmatpush1.msra.mxu0 0.0
    %2917 = vmatprep.subr.mxu0 0.0
    %2918 = vmatpush1.msra.mxu0 0.0
    %2919 = vmatprep.subr.mxu0 0.0
    %2920 = vmatpush1.msra.mxu0 0.0
    %2921 = vmatprep.subr.mxu0 0.0
    %2922 = vmatpush1.msra.mxu0 0.0
    %2923 = vmatprep.subr.mxu0 0.0
    %2924 = vmatpush1.msra.mxu0 0.0
    %2925 = vmatprep.subr.mxu0 0.0
    %2926 = vmatpush1.msra.mxu0 0.0
    %2927 = vmatprep.subr.mxu0 0.0
    %2928 = vmatpush1.msra.mxu0 0.0
    %2929 = vmatprep.subr.mxu0 0.0
    %2930 = vmatpush1.msra.mxu0 0.0
    %2931 = vmatprep.subr.mxu0 0.0
    %2932 = vmatpush1.msra.mxu0 0.0
    %2933 = vmatprep.subr.mxu0 0.0
    %2934 = vmatpush1.msra.mxu0 0.0
    %2935 = vmatprep.subr.mxu0 0.0
    %2936 = vmatpush1.msra.mxu0 0.0
    %2937 = vmatprep.subr.mxu0 0.0
    %2938 = vmatpush1.msra.mxu0 0.0
    %2939 = vmatprep.subr.mxu0 0.0
    %2940 = vmatpush1.msra.mxu0 0.0
    %2941 = vmatprep.subr.mxu0 0.0
    %2942 = vmatpush1.msra.mxu0 0.0
    %2943 = vmatprep.subr.mxu0 0.0
    %2944 = vmatpush1.msra.mxu0 0.0
    %2945 = vmatprep.subr.mxu0 0.0
    %2946 = vmatpush1.msra.mxu0 0.0
    %2947 = vmatprep.subr.mxu0 0.0
    %2948 = vmatpush1.msra.mxu0 0.0
    %2949 = vmatprep.mubr.f32.mxu0 0.0
    %2950 = vmatmul.mubr.f32.gmra.mrb[0].mxu0 %v2883
    %v2951 = vpop.f32.mrb[0].mxu0
    %v2952 = vadd.f32 %v2229, %v2951
    %v2953 = vpop.f32.mrb[0].mxu0
    %2954 = vdwg.mxu0
    %v2955 = vld [vmem:[#allocation7] sm:$0x1]
    %v2957 = vsel %vm138, %v2955, 0
    %2959 = vmatprep.subr.mxu0 0.0
    %2960 = vmatpush1.msra.mxu0 %v2225
    %2961 = vmatprep.subr.mxu0 0.0
    %2962 = vmatpush1.msra.mxu0 %v2226
    %2963 = vmatprep.subr.mxu0 0.0
    %2964 = vmatpush1.msra.mxu0 %v2227
    %2965 = vmatprep.subr.mxu0 0.0
    %2966 = vmatpush1.msra.mxu0 %v2228
    %2967 = vmatprep.subr.mxu0 0.0
    %2968 = vmatpush1.msra.mxu0 0.0
    %2969 = vmatprep.subr.mxu0 0.0
    %2970 = vmatpush1.msra.mxu0 0.0
    %2971 = vmatprep.subr.mxu0 0.0
    %2972 = vmatpush1.msra.mxu0 0.0
    %2973 = vmatprep.subr.mxu0 0.0
    %2974 = vmatpush1.msra.mxu0 0.0
    %2975 = vmatprep.subr.mxu0 0.0
    %2976 = vmatpush1.msra.mxu0 0.0
    %2977 = vmatprep.subr.mxu0 0.0
    %2978 = vmatpush1.msra.mxu0 0.0
    %2979 = vmatprep.subr.mxu0 0.0
    %2980 = vmatpush1.msra.mxu0 0.0
    %2981 = vmatprep.subr.mxu0 0.0
    %2982 = vmatpush1.msra.mxu0 0.0
    %2983 = vmatprep.subr.mxu0 0.0
    %2984 = vmatpush1.msra.mxu0 0.0
    %2985 = vmatprep.subr.mxu0 0.0
    %2986 = vmatpush1.msra.mxu0 0.0
    %2987 = vmatprep.subr.mxu0 0.0
    %2988 = vmatpush1.msra.mxu0 0.0
    %2989 = vmatprep.subr.mxu0 0.0
    %2990 = vmatpush1.msra.mxu0 0.0
    %2991 = vmatprep.subr.mxu0 0.0
    %2992 = vmatpush1.msra.mxu0 0.0
    %2993 = vmatprep.subr.mxu0 0.0
    %2994 = vmatpush1.msra.mxu0 0.0
    %2995 = vmatprep.subr.mxu0 0.0
    %2996 = vmatpush1.msra.mxu0 0.0
    %2997 = vmatprep.subr.mxu0 0.0
    %2998 = vmatpush1.msra.mxu0 0.0
    %2999 = vmatprep.subr.mxu0 0.0
    %3000 = vmatpush1.msra.mxu0 0.0
    %3001 = vmatprep.subr.mxu0 0.0
    %3002 = vmatpush1.msra.mxu0 0.0
    %3003 = vmatprep.subr.mxu0 0.0
    %3004 = vmatpush1.msra.mxu0 0.0
    %3005 = vmatprep.subr.mxu0 0.0
    %3006 = vmatpush1.msra.mxu0 0.0
    %3007 = vmatprep.subr.mxu0 0.0
    %3008 = vmatpush1.msra.mxu0 0.0
    %3009 = vmatprep.subr.mxu0 0.0
    %3010 = vmatpush1.msra.mxu0 0.0
    %3011 = vmatprep.subr.mxu0 0.0
    %3012 = vmatpush1.msra.mxu0 0.0
    %3013 = vmatprep.subr.mxu0 0.0
    %3014 = vmatpush1.msra.mxu0 0.0
    %3015 = vmatprep.subr.mxu0 0.0
    %3016 = vmatpush1.msra.mxu0 0.0
    %3017 = vmatprep.subr.mxu0 0.0
    %3018 = vmatpush1.msra.mxu0 0.0
    %3019 = vmatprep.subr.mxu0 0.0
    %3020 = vmatpush1.msra.mxu0 0.0
    %3021 = vmatprep.subr.mxu0 0.0
    %3022 = vmatpush1.msra.mxu0 0.0
    %3023 = vmatprep.mubr.f32.mxu0 0.0
    %3024 = vmatmul.mubr.f32.gmra.mrb[0].mxu0 %v2957
    %v3025 = vpop.f32.mrb[0].mxu0
    %v3026 = vadd.f32 %v2230, %v3025
    %v3027 = vpop.f32.mrb[0].mxu0
    %3028 = vdwg.mxu0
    %v3029 = vadd.f32 %v2952, %v3026
    %v3030 = vxor.u32 %v3029, 2147483648
    %v3031 = vmul.f32 %v3030, 1.442695
    %v3032 = vpow.pop %v3031
    %v3033 = vadd.f32 %v3032, 1.0
    %v3034 = vrcp.pop %v3033
    %v3035 = vmul.f32 1.0, %v3034
    %3037 = vrot.lane.b32.xlu0 %v3026, 64
    %v3038 = vpop.permute.xlu0 %3037
    %v3040 = vmul.f32 %v3035, %v3038
    %3042 = vrot.lane.b32.xlu0 %v3040, 64
    %v3043 = vpop.permute.xlu0 %3042
    %v3045 = vadd.f32 %v2952, %v3043
    %v3046 = vtanh.pop %v3045
    %v3047 = vsub.f32 1.0, %v3035
    %3049 = vrot.lane.b32.xlu0 %v3046, 96
    %v3050 = vpop.permute.xlu0 %3049
    %v3052 = vmul.f32 %v3047, %v3050
    %v3053 = vlaneseq
    %v3054 = vshrl.u32 %v3053, 7
    %v3055 = vsub.s32 0, %v3054
    %v3056 = vrot.slane %v2955, %v3055
    %3057 = vrot.lane.b32.xlu0 %v3056, 32
    %v3058 = vpop.permute.xlu0 %3057
    %v3060 = vmul.f32 %v3035, %v3058
    %v3061 = vadd.f32 %v3052, %v3060
    %3063 = vrot.lane.b32.xlu0 %v3061, 96
    %v3064 = vpop.permute.xlu0 %3063
    %3066 = vst.msk [vmem:[#allocation7] sm:$0x1] %vm96, %v3064
    %v3067 = vsel %vm138, %v3064, 0
    %3069 = vmatprep.subr.mxu0 0.0
    %3070 = vmatpush1.xpose.msra.mxu0 %v2442
    %3071 = vmatprep.subr.mxu0 0.0
    %3072 = vmatpush1.xpose.msra.mxu0 0.0
    %3073 = vmatprep.subr.mxu0 0.0
    %3074 = vmatpush1.xpose.msra.mxu0 0.0
    %3075 = vmatprep.subr.mxu0 0.0
    %3076 = vmatpush1.xpose.msra.mxu0 0.0
    %3077 = vmatprep.subr.mxu0 0.0
    %3078 = vmatpush1.xpose.msra.mxu0 0.0
    %3079 = vmatprep.subr.mxu0 0.0
    %3080 = vmatpush1.xpose.msra.mxu0 0.0
    %3081 = vmatprep.subr.mxu0 0.0
    %3082 = vmatpush1.xpose.msra.mxu0 0.0
    %3083 = vmatprep.subr.mxu0 0.0
    %3084 = vmatpush1.xpose.msra.mxu0 0.0
    %3085 = vmatprep.subr.mxu0 0.0
    %3086 = vmatpush1.xpose.msra.mxu0 0.0
    %3087 = vmatprep.subr.mxu0 0.0
    %3088 = vmatpush1.xpose.msra.mxu0 0.0
    %3089 = vmatprep.subr.mxu0 0.0
    %3090 = vmatpush1.xpose.msra.mxu0 0.0
    %3091 = vmatprep.subr.mxu0 0.0
    %3092 = vmatpush1.xpose.msra.mxu0 0.0
    %3093 = vmatprep.subr.mxu0 0.0
    %3094 = vmatpush1.xpose.msra.mxu0 0.0
    %3095 = vmatprep.subr.mxu0 0.0
    %3096 = vmatpush1.xpose.msra.mxu0 0.0
    %3097 = vmatprep.subr.mxu0 0.0
    %3098 = vmatpush1.xpose.msra.mxu0 0.0
    %3099 = vmatprep.subr.mxu0 0.0
    %3100 = vmatpush1.xpose.msra.mxu0 0.0
    %3101 = vmatprep.subr.mxu0 0.0
    %3102 = vmatpush1.xpose.msra.mxu0 0.0
    %3103 = vmatprep.subr.mxu0 0.0
    %3104 = vmatpush1.xpose.msra.mxu0 0.0
    %3105 = vmatprep.subr.mxu0 0.0
    %3106 = vmatpush1.xpose.msra.mxu0 0.0
    %3107 = vmatprep.subr.mxu0 0.0
    %3108 = vmatpush1.xpose.msra.mxu0 0.0
    %3109 = vmatprep.subr.mxu0 0.0
    %3110 = vmatpush1.xpose.msra.mxu0 0.0
    %3111 = vmatprep.subr.mxu0 0.0
    %3112 = vmatpush1.xpose.msra.mxu0 0.0
    %3113 = vmatprep.subr.mxu0 0.0
    %3114 = vmatpush1.xpose.msra.mxu0 0.0
    %3115 = vmatprep.subr.mxu0 0.0
    %3116 = vmatpush1.xpose.msra.mxu0 0.0
    %3117 = vmatprep.subr.mxu0 0.0
    %3118 = vmatpush1.xpose.msra.mxu0 0.0
    %3119 = vmatprep.subr.mxu0 0.0
    %3120 = vmatpush1.xpose.msra.mxu0 0.0
    %3121 = vmatprep.subr.mxu0 0.0
    %3122 = vmatpush1.xpose.msra.mxu0 0.0
    %3123 = vmatprep.subr.mxu0 0.0
    %3124 = vmatpush1.xpose.msra.mxu0 0.0
    %3125 = vmatprep.subr.mxu0 0.0
    %3126 = vmatpush1.xpose.msra.mxu0 0.0
    %3127 = vmatprep.subr.mxu0 0.0
    %3128 = vmatpush1.xpose.msra.mxu0 0.0
    %3129 = vmatprep.subr.mxu0 0.0
    %3130 = vmatpush1.xpose.msra.mxu0 0.0
    %3131 = vmatprep.subr.mxu0 0.0
    %3132 = vmatpush1.xpose.msra.mxu0 0.0
    %3133 = vmatprep.mubr.f32.mxu0 0.0
    %3134 = vmatmul.mubr.f32.gmra.mrb[0].mxu0 %v3067
    %v3135 = vpop.f32.mrb[0].mxu0
    %v3136 = vadd.f32 0.0, %v3135
    %v3137 = vpop.f32.mrb[0].mxu0
    %3138 = vdwg.mxu0
    %v3139 = vsel %vm2248, %v3136, -1e+30
    %v3140 = vsel %vm2515, %v3139, -inf
    %3141 = vmax.xlane.f32.xlu0 %v3140
    %v3142 = vpop.xlane.xlu0 %3141
    %v3143 = vsub.f32 %v3139, %v3142
    %v3144 = vmul.f32 %v3143, 1.442695
    %v3145 = vpow.pop %v3144
    %v3146 = vsel %vm2515, %v3145, 0.0
    %3147 = vadd.xlane.f32.xlu0 %v3146
    %v3148 = vpop.xlane.xlu0 %3147
    %v3149 = vrcp.pop %v3148
    %v3150 = vmul.f32 %v3145, %v3149
    %v3152 = vsel %vm2527, %v3150, 0
    %3154 = vmatprep.subr.mxu0 0.0
    %3155 = vmatpush1.msra.mxu0 %v2220
    %3156 = vmatprep.subr.mxu0 0.0
    %3157 = vmatpush1.msra.mxu0 0.0
    %3158 = vmatprep.subr.mxu0 0.0
    %3159 = vmatpush1.msra.mxu0 0.0
    %3160 = vmatprep.subr.mxu0 0.0
    %3161 = vmatpush1.msra.mxu0 0.0
    %3162 = vmatprep.subr.mxu0 0.0
    %3163 = vmatpush1.msra.mxu0 0.0
    %3164 = vmatprep.subr.mxu0 0.0
    %3165 = vmatpush1.msra.mxu0 0.0
    %3166 = vmatprep.subr.mxu0 0.0
    %3167 = vmatpush1.msra.mxu0 0.0
    %3168 = vmatprep.subr.mxu0 0.0
    %3169 = vmatpush1.msra.mxu0 0.0
    %3170 = vmatprep.subr.mxu0 0.0
    %3171 = vmatpush1.msra.mxu0 0.0
    %3172 = vmatprep.subr.mxu0 0.0
    %3173 = vmatpush1.msra.mxu0 0.0
    %3174 = vmatprep.subr.mxu0 0.0
    %3175 = vmatpush1.msra.mxu0 0.0
    %3176 = vmatprep.subr.mxu0 0.0
    %3177 = vmatpush1.msra.mxu0 0.0
    %3178 = vmatprep.subr.mxu0 0.0
    %3179 = vmatpush1.msra.mxu0 0.0
    %3180 = vmatprep.subr.mxu0 0.0
    %3181 = vmatpush1.msra.mxu0 0.0
    %3182 = vmatprep.subr.mxu0 0.0
    %3183 = vmatpush1.msra.mxu0 0.0
    %3184 = vmatprep.subr.mxu0 0.0
    %3185 = vmatpush1.msra.mxu0 0.0
    %3186 = vmatprep.subr.mxu0 0.0
    %3187 = vmatpush1.msra.mxu0 0.0
    %3188 = vmatprep.subr.mxu0 0.0
    %3189 = vmatpush1.msra.mxu0 0.0
    %3190 = vmatprep.subr.mxu0 0.0
    %3191 = vmatpush1.msra.mxu0 0.0
    %3192 = vmatprep.subr.mxu0 0.0
    %3193 = vmatpush1.msra.mxu0 0.0
    %3194 = vmatprep.subr.mxu0 0.0
    %3195 = vmatpush1.msra.mxu0 0.0
    %3196 = vmatprep.subr.mxu0 0.0
    %3197 = vmatpush1.msra.mxu0 0.0
    %3198 = vmatprep.subr.mxu0 0.0
    %3199 = vmatpush1.msra.mxu0 0.0
    %3200 = vmatprep.subr.mxu0 0.0
    %3201 = vmatpush1.msra.mxu0 0.0
    %3202 = vmatprep.subr.mxu0 0.0
    %3203 = vmatpush1.msra.mxu0 0.0
    %3204 = vmatprep.subr.mxu0 0.0
    %3205 = vmatpush1.msra.mxu0 0.0
    %3206 = vmatprep.subr.mxu0 0.0
    %3207 = vmatpush1.msra.mxu0 0.0
    %3208 = vmatprep.subr.mxu0 0.0
    %3209 = vmatpush1.msra.mxu0 0.0
    %3210 = vmatprep.subr.mxu0 0.0
    %3211 = vmatpush1.msra.mxu0 0.0
    %3212 = vmatprep.subr.mxu0 0.0
    %3213 = vmatpush1.msra.mxu0 0.0
    %3214 = vmatprep.subr.mxu0 0.0
    %3215 = vmatpush1.msra.mxu0 0.0
    %3216 = vmatprep.subr.mxu0 0.0
    %3217 = vmatpush1.msra.mxu0 0.0
    %3218 = vmatprep.mubr.f32.mxu0 0.0
    %3219 = vmatmul.mubr.f32.gmra.mrb[0].mxu0 %v3152
    %v3220 = vpop.f32.mrb[0].mxu0
    %v3221 = vadd.f32 0.0, %v3220
    %v3222 = vpop.f32.mrb[0].mxu0
    %3223 = vdwg.mxu0
    %v3225 = vsel %vm138, %v3221, 0
    %3227 = vmatprep.subr.mxu0 0.0
    %3228 = vmatpush1.msra.mxu0 %v2235
    %3229 = vmatprep.subr.mxu0 0.0
    %3230 = vmatpush1.msra.mxu0 %v2236
    %3231 = vmatprep.subr.mxu0 0.0
    %3232 = vmatpush1.msra.mxu0 %v2237
    %3233 = vmatprep.subr.mxu0 0.0
    %3234 = vmatpush1.msra.mxu0 %v2238
    %3235 = vmatprep.subr.mxu0 0.0
    %3236 = vmatpush1.msra.mxu0 0.0
    %3237 = vmatprep.subr.mxu0 0.0
    %3238 = vmatpush1.msra.mxu0 0.0
    %3239 = vmatprep.subr.mxu0 0.0
    %3240 = vmatpush1.msra.mxu0 0.0
    %3241 = vmatprep.subr.mxu0 0.0
    %3242 = vmatpush1.msra.mxu0 0.0
    %3243 = vmatprep.subr.mxu0 0.0
    %3244 = vmatpush1.msra.mxu0 0.0
    %3245 = vmatprep.subr.mxu0 0.0
    %3246 = vmatpush1.msra.mxu0 0.0
    %3247 = vmatprep.subr.mxu0 0.0
    %3248 = vmatpush1.msra.mxu0 0.0
    %3249 = vmatprep.subr.mxu0 0.0
    %3250 = vmatpush1.msra.mxu0 0.0
    %3251 = vmatprep.subr.mxu0 0.0
    %3252 = vmatpush1.msra.mxu0 0.0
    %3253 = vmatprep.subr.mxu0 0.0
    %3254 = vmatpush1.msra.mxu0 0.0
    %3255 = vmatprep.subr.mxu0 0.0
    %3256 = vmatpush1.msra.mxu0 0.0
    %3257 = vmatprep.subr.mxu0 0.0
    %3258 = vmatpush1.msra.mxu0 0.0
    %3259 = vmatprep.subr.mxu0 0.0
    %3260 = vmatpush1.msra.mxu0 0.0
    %3261 = vmatprep.subr.mxu0 0.0
    %3262 = vmatpush1.msra.mxu0 0.0
    %3263 = vmatprep.subr.mxu0 0.0
    %3264 = vmatpush1.msra.mxu0 0.0
    %3265 = vmatprep.subr.mxu0 0.0
    %3266 = vmatpush1.msra.mxu0 0.0
    %3267 = vmatprep.subr.mxu0 0.0
    %3268 = vmatpush1.msra.mxu0 0.0
    %3269 = vmatprep.subr.mxu0 0.0
    %3270 = vmatpush1.msra.mxu0 0.0
    %3271 = vmatprep.subr.mxu0 0.0
    %3272 = vmatpush1.msra.mxu0 0.0
    %3273 = vmatprep.subr.mxu0 0.0
    %3274 = vmatpush1.msra.mxu0 0.0
    %3275 = vmatprep.subr.mxu0 0.0
    %3276 = vmatpush1.msra.mxu0 0.0
    %3277 = vmatprep.subr.mxu0 0.0
    %3278 = vmatpush1.msra.mxu0 0.0
    %3279 = vmatprep.subr.mxu0 0.0
    %3280 = vmatpush1.msra.mxu0 0.0
    %3281 = vmatprep.subr.mxu0 0.0
    %3282 = vmatpush1.msra.mxu0 0.0
    %3283 = vmatprep.subr.mxu0 0.0
    %3284 = vmatpush1.msra.mxu0 0.0
    %3285 = vmatprep.subr.mxu0 0.0
    %3286 = vmatpush1.msra.mxu0 0.0
    %3287 = vmatprep.subr.mxu0 0.0
    %3288 = vmatpush1.msra.mxu0 0.0
    %3289 = vmatprep.subr.mxu0 0.0
    %3290 = vmatpush1.msra.mxu0 0.0
    %3291 = vmatprep.mubr.f32.mxu0 0.0
    %3292 = vmatmul.mubr.f32.gmra.mrb[0].mxu0 %v3225
    %v3293 = vpop.f32.mrb[0].mxu0
    %v3294 = vadd.f32 0.0, %v3293
    %v3295 = vpop.f32.mrb[0].mxu0
    %3296 = vdwg.mxu0
    %3297 = vmatprep.subr.mxu0 0.0
    %3298 = vmatpush1.msra.mxu0 %v2231
    %3299 = vmatprep.subr.mxu0 0.0
    %3300 = vmatpush1.msra.mxu0 %v2232
    %3301 = vmatprep.subr.mxu0 0.0
    %3302 = vmatpush1.msra.mxu0 %v2233
    %3303 = vmatprep.subr.mxu0 0.0
    %3304 = vmatpush1.msra.mxu0 %v2234
    %3305 = vmatprep.subr.mxu0 0.0
    %3306 = vmatpush1.msra.mxu0 0.0
    %3307 = vmatprep.subr.mxu0 0.0
    %3308 = vmatpush1.msra.mxu0 0.0
    %3309 = vmatprep.subr.mxu0 0.0
    %3310 = vmatpush1.msra.mxu0 0.0
    %3311 = vmatprep.subr.mxu0 0.0
    %3312 = vmatpush1.msra.mxu0 0.0
    %3313 = vmatprep.subr.mxu0 0.0
    %3314 = vmatpush1.msra.mxu0 0.0
    %3315 = vmatprep.subr.mxu0 0.0
    %3316 = vmatpush1.msra.mxu0 0.0
    %3317 = vmatprep.subr.mxu0 0.0
    %3318 = vmatpush1.msra.mxu0 0.0
    %3319 = vmatprep.subr.mxu0 0.0
    %3320 = vmatpush1.msra.mxu0 0.0
    %3321 = vmatprep.subr.mxu0 0.0
    %3322 = vmatpush1.msra.mxu0 0.0
    %3323 = vmatprep.subr.mxu0 0.0
    %3324 = vmatpush1.msra.mxu0 0.0
    %3325 = vmatprep.subr.mxu0 0.0
    %3326 = vmatpush1.msra.mxu0 0.0
    %3327 = vmatprep.subr.mxu0 0.0
    %3328 = vmatpush1.msra.mxu0 0.0
    %3329 = vmatprep.subr.mxu0 0.0
    %3330 = vmatpush1.msra.mxu0 0.0
    %3331 = vmatprep.subr.mxu0 0.0
    %3332 = vmatpush1.msra.mxu0 0.0
    %3333 = vmatprep.subr.mxu0 0.0
    %3334 = vmatpush1.msra.mxu0 0.0
    %3335 = vmatprep.subr.mxu0 0.0
    %3336 = vmatpush1.msra.mxu0 0.0
    %3337 = vmatprep.subr.mxu0 0.0
    %3338 = vmatpush1.msra.mxu0 0.0
    %3339 = vmatprep.subr.mxu0 0.0
    %3340 = vmatpush1.msra.mxu0 0.0
    %3341 = vmatprep.subr.mxu0 0.0
    %3342 = vmatpush1.msra.mxu0 0.0
    %3343 = vmatprep.subr.mxu0 0.0
    %3344 = vmatpush1.msra.mxu0 0.0
    %3345 = vmatprep.subr.mxu0 0.0
    %3346 = vmatpush1.msra.mxu0 0.0
    %3347 = vmatprep.subr.mxu0 0.0
    %3348 = vmatpush1.msra.mxu0 0.0
    %3349 = vmatprep.subr.mxu0 0.0
    %3350 = vmatpush1.msra.mxu0 0.0
    %3351 = vmatprep.subr.mxu0 0.0
    %3352 = vmatpush1.msra.mxu0 0.0
    %3353 = vmatprep.subr.mxu0 0.0
    %3354 = vmatpush1.msra.mxu0 0.0
    %3355 = vmatprep.subr.mxu0 0.0
    %3356 = vmatpush1.msra.mxu0 0.0
    %3357 = vmatprep.subr.mxu0 0.0
    %3358 = vmatpush1.msra.mxu0 0.0
    %3359 = vmatprep.subr.mxu0 0.0
    %3360 = vmatpush1.msra.mxu0 0.0
    %3361 = vmatprep.mubr.f32.mxu0 0.0
    %3362 = vmatmul.mubr.f32.gmra.mrb[0].mxu0 %v3067
    %v3363 = vpop.f32.mrb[0].mxu0
    %v3364 = vadd.f32 %v3294, %v3363
    %v3365 = vpop.f32.mrb[0].mxu0
    %3366 = vdwg.mxu0
    %v3367 = vadd.f32 %v3364, %v2239
    %v3368 = vtanh.pop %v3367
    %v3370 = vsel %vm138, %v3368, 0
    %3372 = vmatprep.subr.mxu0 0.0
    %3373 = vmatpush1.msra.mxu0 %v2240
    %3374 = vmatprep.subr.mxu0 0.0
    %3375 = vmatpush1.msra.mxu0 %v2241
    %3376 = vmatprep.subr.mxu0 0.0
    %3377 = vmatpush1.msra.mxu0 %v2242
    %3378 = vmatprep.subr.mxu0 0.0
    %3379 = vmatpush1.msra.mxu0 %v2243
    %3380 = vmatprep.subr.mxu0 0.0
    %3381 = vmatpush1.msra.mxu0 0.0
    %3382 = vmatprep.subr.mxu0 0.0
    %3383 = vmatpush1.msra.mxu0 0.0
    %3384 = vmatprep.subr.mxu0 0.0
    %3385 = vmatpush1.msra.mxu0 0.0
    %3386 = vmatprep.subr.mxu0 0.0
    %3387 = vmatpush1.msra.mxu0 0.0
    %3388 = vmatprep.subr.mxu0 0.0
    %3389 = vmatpush1.msra.mxu0 0.0
    %3390 = vmatprep.subr.mxu0 0.0
    %3391 = vmatpush1.msra.mxu0 0.0
    %3392 = vmatprep.subr.mxu0 0.0
    %3393 = vmatpush1.msra.mxu0 0.0
    %3394 = vmatprep.subr.mxu0 0.0
    %3395 = vmatpush1.msra.mxu0 0.0
    %3396 = vmatprep.subr.mxu0 0.0
    %3397 = vmatpush1.msra.mxu0 0.0
    %3398 = vmatprep.subr.mxu0 0.0
    %3399 = vmatpush1.msra.mxu0 0.0
    %3400 = vmatprep.subr.mxu0 0.0
    %3401 = vmatpush1.msra.mxu0 0.0
    %3402 = vmatprep.subr.mxu0 0.0
    %3403 = vmatpush1.msra.mxu0 0.0
    %3404 = vmatprep.subr.mxu0 0.0
    %3405 = vmatpush1.msra.mxu0 0.0
    %3406 = vmatprep.subr.mxu0 0.0
    %3407 = vmatpush1.msra.mxu0 0.0
    %3408 = vmatprep.subr.mxu0 0.0
    %3409 = vmatpush1.msra.mxu0 0.0
    %3410 = vmatprep.subr.mxu0 0.0
    %3411 = vmatpush1.msra.mxu0 0.0
    %3412 = vmatprep.subr.mxu0 0.0
    %3413 = vmatpush1.msra.mxu0 0.0
    %3414 = vmatprep.subr.mxu0 0.0
    %3415 = vmatpush1.msra.mxu0 0.0
    %3416 = vmatprep.subr.mxu0 0.0
    %3417 = vmatpush1.msra.mxu0 0.0
    %3418 = vmatprep.subr.mxu0 0.0
    %3419 = vmatpush1.msra.mxu0 0.0
    %3420 = vmatprep.subr.mxu0 0.0
    %3421 = vmatpush1.msra.mxu0 0.0
    %3422 = vmatprep.subr.mxu0 0.0
    %3423 = vmatpush1.msra.mxu0 0.0
    %3424 = vmatprep.subr.mxu0 0.0
    %3425 = vmatpush1.msra.mxu0 0.0
    %3426 = vmatprep.subr.mxu0 0.0
    %3427 = vmatpush1.msra.mxu0 0.0
    %3428 = vmatprep.subr.mxu0 0.0
    %3429 = vmatpush1.msra.mxu0 0.0
    %3430 = vmatprep.subr.mxu0 0.0
    %3431 = vmatpush1.msra.mxu0 0.0
    %3432 = vmatprep.subr.mxu0 0.0
    %3433 = vmatpush1.msra.mxu0 0.0
    %3434 = vmatprep.subr.mxu0 0.0
    %3435 = vmatpush1.msra.mxu0 0.0
    %3436 = vmatprep.mubr.f32.mxu0 0.0
    %3437 = vmatmul.mubr.f32.gmra.mrb[0].mxu0 %v3370
    %v3438 = vpop.f32.mrb[0].mxu0
    %v3439 = vadd.f32 %v2244, %v3438
    %v3440 = vpop.f32.mrb[0].mxu0
    %3441 = vdwg.mxu0
    %v3442 = vsel %vm2819, %v3439, -inf
    %3443 = vmax.xlane.f32.xlu0 %v3442
    %v3444 = vpop.xlane.xlu0 %3443
    %v3445 = vrot.slane %v3444, 4
    %v3446 = vmax.f32 %v3444, %v3445
    %v3447 = vrot.slane %v3446, 2
    %v3448 = vmax.f32 %v3446, %v3447
    %v3449 = vrot.slane %v3448, 1
    %v3450 = vmax.f32 %v3448, %v3449
    %s3451 = vtos %v3450
    %v3452 = vstv %s3451
    %v3453 = vsub.f32 %v3439, %v3452
    %v3454 = vmul.f32 %v3453, 1.442695
    %v3455 = vpow.pop %v3454
    %v3456 = vsel %vm2819, %v3455, 0.0
    %3457 = vadd.xlane.f32.xlu0 %v3456
    %v3458 = vpop.xlane.xlu0 %3457
    %v3459 = vrot.slane %v3458, 4
    %v3460 = vadd.f32 %v3458, %v3459
    %v3461 = vrot.slane %v3460, 2
    %v3462 = vadd.f32 %v3460, %v3461
    %v3463 = vrot.slane %v3462, 1
    %v3464 = vadd.f32 %v3462, %v3463
    %s3465 = vtos %v3464
    %v3466 = vstv %s3465
    %v3467 = vrcp.pop %v3466
    %s3468 = vtos %v3467
    %vm3469 = vcmp.eq.f32.partialorder %v3439, %v3452
    %v3470 = vsel %vm3469, %v2246, 128
    %v3471 = vsel %vm2819, %v3470, 2147483647
    %v3472 = vand.u32 %v3471, 65535
    %v3473 = vshra.s32 %v3471, 16
    %v3474 = vcvt.s32.f32 %v3472
    %v3475 = vcvt.s32.f32 %v3473
    %3476 = vmin.xlane.f32.xlu0 %v3475
    %v3477 = vpop.xlane.xlu0 %3476
    %vm3478 = vcmp.eq.f32.partialorder %v3475, %v3477
    %v3479 = vsel %vm3478, %v3474, inf
    %3480 = vmin.xlane.f32.xlu0 %v3479
    %v3481 = vpop.xlane.xlu0 %3480
    %v3482 = vcvt.f32.s32 %v3481
    %v3483 = vcvt.f32.s32 %v3477
    %v3484 = vshll.u32 %v3483, 16
    %v3485 = vadd.s32 %v3484, %v3482
    %v3486 = vrot.slane %v3485, 4
    %vm3487 = vcmp.lt.s32.totalorder %v3485, %v3486
    %v3488 = vsel %vm3487, %v3485, %v3486
    %v3489 = vrot.slane %v3488, 2
    %vm3490 = vcmp.lt.s32.totalorder %v3488, %v3489
    %v3491 = vsel %vm3490, %v3488, %v3489
    %v3492 = vrot.slane %v3491, 1
    %vm3493 = vcmp.lt.s32.totalorder %v3491, %v3492
    %v3494 = vsel %vm3493, %v3491, %v3492
    %s3495 = vtos %v3494
    %s3496 = scalar_lea.smem [#allocation15], 1
    %3497 = sst [smem:[%s3496]] %s3495
    %s3498 = scalar_lea.smem [#allocation16], 1
    %3499 = sst [smem:[%s3498]] %s3468
    %3500 = sst [smem:[%s2249]] %s3495
    %s3501 = sld [smem:[#allocation8]]
    %s3502 = scalar_lea.vmem %s2, %s3501
    %v3503 = vld [vmem:[%s3502] sm:$0x1]
    %v3505 = vsel %vm138, %v3503, 0
    %3507 = vmatprep.subr.mxu0 0.0
    %3508 = vmatpush1.msra.mxu0 %v2221
    %3509 = vmatprep.subr.mxu0 0.0
    %3510 = vmatpush1.msra.mxu0 %v2222
    %3511 = vmatprep.subr.mxu0 0.0
    %3512 = vmatpush1.msra.mxu0 %v2223
    %3513 = vmatprep.subr.mxu0 0.0
    %3514 = vmatpush1.msra.mxu0 %v2224
    %3515 = vmatprep.subr.mxu0 0.0
    %3516 = vmatpush1.msra.mxu0 0.0
    %3517 = vmatprep.subr.mxu0 0.0
    %3518 = vmatpush1.msra.mxu0 0.0
    %3519 = vmatprep.subr.mxu0 0.0
    %3520 = vmatpush1.msra.mxu0 0.0
    %3521 = vmatprep.subr.mxu0 0.0
    %3522 = vmatpush1.msra.mxu0 0.0
    %3523 = vmatprep.subr.mxu0 0.0
    %3524 = vmatpush1.msra.mxu0 0.0
    %3525 = vmatprep.subr.mxu0 0.0
    %3526 = vmatpush1.msra.mxu0 0.0
    %3527 = vmatprep.subr.mxu0 0.0
    %3528 = vmatpush1.msra.mxu0 0.0
    %3529 = vmatprep.subr.mxu0 0.0
    %3530 = vmatpush1.msra.mxu0 0.0
    %3531 = vmatprep.subr.mxu0 0.0
    %3532 = vmatpush1.msra.mxu0 0.0
    %3533 = vmatprep.subr.mxu0 0.0
    %3534 = vmatpush1.msra.mxu0 0.0
    %3535 = vmatprep.subr.mxu0 0.0
    %3536 = vmatpush1.msra.mxu0 0.0
    %3537 = vmatprep.subr.mxu0 0.0
    %3538 = vmatpush1.msra.mxu0 0.0
    %3539 = vmatprep.subr.mxu0 0.0
    %3540 = vmatpush1.msra.mxu0 0.0
    %3541 = vmatprep.subr.mxu0 0.0
    %3542 = vmatpush1.msra.mxu0 0.0
    %3543 = vmatprep.subr.mxu0 0.0
    %3544 = vmatpush1.msra.mxu0 0.0
    %3545 = vmatprep.subr.mxu0 0.0
    %3546 = vmatpush1.msra.mxu0 0.0
    %3547 = vmatprep.subr.mxu0 0.0
    %3548 = vmatpush1.msra.mxu0 0.0
    %3549 = vmatprep.subr.mxu0 0.0
    %3550 = vmatpush1.msra.mxu0 0.0
    %3551 = vmatprep.subr.mxu0 0.0
    %3552 = vmatpush1.msra.mxu0 0.0
    %3553 = vmatprep.subr.mxu0 0.0
    %3554 = vmatpush1.msra.mxu0 0.0
    %3555 = vmatprep.subr.mxu0 0.0
    %3556 = vmatpush1.msra.mxu0 0.0
    %3557 = vmatprep.subr.mxu0 0.0
    %3558 = vmatpush1.msra.mxu0 0.0
    %3559 = vmatprep.subr.mxu0 0.0
    %3560 = vmatpush1.msra.mxu0 0.0
    %3561 = vmatprep.subr.mxu0 0.0
    %3562 = vmatpush1.msra.mxu0 0.0
    %3563 = vmatprep.subr.mxu0 0.0
    %3564 = vmatpush1.msra.mxu0 0.0
    %3565 = vmatprep.subr.mxu0 0.0
    %3566 = vmatpush1.msra.mxu0 0.0
    %3567 = vmatprep.subr.mxu0 0.0
    %3568 = vmatpush1.msra.mxu0 0.0
    %3569 = vmatprep.subr.mxu0 0.0
    %3570 = vmatpush1.msra.mxu0 0.0
    %3571 = vmatprep.mubr.f32.mxu0 0.0
    %3572 = vmatmul.mubr.f32.gmra.mrb[0].mxu0 %v3505
    %v3573 = vpop.f32.mrb[0].mxu0
    %v3574 = vadd.f32 %v2229, %v3573
    %v3575 = vpop.f32.mrb[0].mxu0
    %3576 = vdwg.mxu0
    %v3577 = vld [vmem:[#allocation7] sm:$0x1]
    %v3579 = vsel %vm138, %v3577, 0
    %3581 = vmatprep.subr.mxu0 0.0
    %3582 = vmatpush1.msra.mxu0 %v2225
    %3583 = vmatprep.subr.mxu0 0.0
    %3584 = vmatpush1.msra.mxu0 %v2226
    %3585 = vmatprep.subr.mxu0 0.0
    %3586 = vmatpush1.msra.mxu0 %v2227
    %3587 = vmatprep.subr.mxu0 0.0
    %3588 = vmatpush1.msra.mxu0 %v2228
    %3589 = vmatprep.subr.mxu0 0.0
    %3590 = vmatpush1.msra.mxu0 0.0
    %3591 = vmatprep.subr.mxu0 0.0
    %3592 = vmatpush1.msra.mxu0 0.0
    %3593 = vmatprep.subr.mxu0 0.0
    %3594 = vmatpush1.msra.mxu0 0.0
    %3595 = vmatprep.subr.mxu0 0.0
    %3596 = vmatpush1.msra.mxu0 0.0
    %3597 = vmatprep.subr.mxu0 0.0
    %3598 = vmatpush1.msra.mxu0 0.0
    %3599 = vmatprep.subr.mxu0 0.0
    %3600 = vmatpush1.msra.mxu0 0.0
    %3601 = vmatprep.subr.mxu0 0.0
    %3602 = vmatpush1.msra.mxu0 0.0
    %3603 = vmatprep.subr.mxu0 0.0
    %3604 = vmatpush1.msra.mxu0 0.0
    %3605 = vmatprep.subr.mxu0 0.0
    %3606 = vmatpush1.msra.mxu0 0.0
    %3607 = vmatprep.subr.mxu0 0.0
    %3608 = vmatpush1.msra.mxu0 0.0
    %3609 = vmatprep.subr.mxu0 0.0
    %3610 = vmatpush1.msra.mxu0 0.0
    %3611 = vmatprep.subr.mxu0 0.0
    %3612 = vmatpush1.msra.mxu0 0.0
    %3613 = vmatprep.subr.mxu0 0.0
    %3614 = vmatpush1.msra.mxu0 0.0
    %3615 = vmatprep.subr.mxu0 0.0
    %3616 = vmatpush1.msra.mxu0 0.0
    %3617 = vmatprep.subr.mxu0 0.0
    %3618 = vmatpush1.msra.mxu0 0.0
    %3619 = vmatprep.subr.mxu0 0.0
    %3620 = vmatpush1.msra.mxu0 0.0
    %3621 = vmatprep.subr.mxu0 0.0
    %3622 = vmatpush1.msra.mxu0 0.0
    %3623 = vmatprep.subr.mxu0 0.0
    %3624 = vmatpush1.msra.mxu0 0.0
    %3625 = vmatprep.subr.mxu0 0.0
    %3626 = vmatpush1.msra.mxu0 0.0
    %3627 = vmatprep.subr.mxu0 0.0
    %3628 = vmatpush1.msra.mxu0 0.0
    %3629 = vmatprep.subr.mxu0 0.0
    %3630 = vmatpush1.msra.mxu0 0.0
    %3631 = vmatprep.subr.mxu0 0.0
    %3632 = vmatpush1.msra.mxu0 0.0
    %3633 = vmatprep.subr.mxu0 0.0
    %3634 = vmatpush1.msra.mxu0 0.0
    %3635 = vmatprep.subr.mxu0 0.0
    %3636 = vmatpush1.msra.mxu0 0.0
    %3637 = vmatprep.subr.mxu0 0.0
    %3638 = vmatpush1.msra.mxu0 0.0
    %3639 = vmatprep.subr.mxu0 0.0
    %3640 = vmatpush1.msra.mxu0 0.0
    %3641 = vmatprep.subr.mxu0 0.0
    %3642 = vmatpush1.msra.mxu0 0.0
    %3643 = vmatprep.subr.mxu0 0.0
    %3644 = vmatpush1.msra.mxu0 0.0
    %3645 = vmatprep.mubr.f32.mxu0 0.0
    %3646 = vmatmul.mubr.f32.gmra.mrb[0].mxu0 %v3579
    %v3647 = vpop.f32.mrb[0].mxu0
    %v3648 = vadd.f32 %v2230, %v3647
    %v3649 = vpop.f32.mrb[0].mxu0
    %3650 = vdwg.mxu0
    %v3651 = vadd.f32 %v3574, %v3648
    %v3652 = vxor.u32 %v3651, 2147483648
    %v3653 = vmul.f32 %v3652, 1.442695
    %v3654 = vpow.pop %v3653
    %v3655 = vadd.f32 %v3654, 1.0
    %v3656 = vrcp.pop %v3655
    %v3657 = vmul.f32 1.0, %v3656
    %3659 = vrot.lane.b32.xlu0 %v3648, 64
    %v3660 = vpop.permute.xlu0 %3659
    %v3662 = vmul.f32 %v3657, %v3660
    %3664 = vrot.lane.b32.xlu0 %v3662, 64
    %v3665 = vpop.permute.xlu0 %3664
    %v3667 = vadd.f32 %v3574, %v3665
    %v3668 = vtanh.pop %v3667
    %v3669 = vsub.f32 1.0, %v3657
    %3671 = vrot.lane.b32.xlu0 %v3668, 96
    %v3672 = vpop.permute.xlu0 %3671
    %v3674 = vmul.f32 %v3669, %v3672
    %v3675 = vlaneseq
    %v3676 = vshrl.u32 %v3675, 7
    %v3677 = vsub.s32 0, %v3676
    %v3678 = vrot.slane %v3577, %v3677
    %3679 = vrot.lane.b32.xlu0 %v3678, 32
    %v3680 = vpop.permute.xlu0 %3679
    %v3682 = vmul.f32 %v3657, %v3680
    %v3683 = vadd.f32 %v3674, %v3682
    %3685 = vrot.lane.b32.xlu0 %v3683, 96
    %v3686 = vpop.permute.xlu0 %3685
    %3688 = vst.msk [vmem:[#allocation7] sm:$0x1] %vm96, %v3686
    %v3689 = vsel %vm138, %v3686, 0
    %3691 = vmatprep.subr.mxu0 0.0
    %3692 = vmatpush1.xpose.msra.mxu0 %v2442
    %3693 = vmatprep.subr.mxu0 0.0
    %3694 = vmatpush1.xpose.msra.mxu0 0.0
    %3695 = vmatprep.subr.mxu0 0.0
    %3696 = vmatpush1.xpose.msra.mxu0 0.0
    %3697 = vmatprep.subr.mxu0 0.0
    %3698 = vmatpush1.xpose.msra.mxu0 0.0
    %3699 = vmatprep.subr.mxu0 0.0
    %3700 = vmatpush1.xpose.msra.mxu0 0.0
    %3701 = vmatprep.subr.mxu0 0.0
    %3702 = vmatpush1.xpose.msra.mxu0 0.0
    %3703 = vmatprep.subr.mxu0 0.0
    %3704 = vmatpush1.xpose.msra.mxu0 0.0
    %3705 = vmatprep.subr.mxu0 0.0
    %3706 = vmatpush1.xpose.msra.mxu0 0.0
    %3707 = vmatprep.subr.mxu0 0.0
    %3708 = vmatpush1.xpose.msra.mxu0 0.0
    %3709 = vmatprep.subr.mxu0 0.0
    %3710 = vmatpush1.xpose.msra.mxu0 0.0
    %3711 = vmatprep.subr.mxu0 0.0
    %3712 = vmatpush1.xpose.msra.mxu0 0.0
    %3713 = vmatprep.subr.mxu0 0.0
    %3714 = vmatpush1.xpose.msra.mxu0 0.0
    %3715 = vmatprep.subr.mxu0 0.0
    %3716 = vmatpush1.xpose.msra.mxu0 0.0
    %3717 = vmatprep.subr.mxu0 0.0
    %3718 = vmatpush1.xpose.msra.mxu0 0.0
    %3719 = vmatprep.subr.mxu0 0.0
    %3720 = vmatpush1.xpose.msra.mxu0 0.0
    %3721 = vmatprep.subr.mxu0 0.0
    %3722 = vmatpush1.xpose.msra.mxu0 0.0
    %3723 = vmatprep.subr.mxu0 0.0
    %3724 = vmatpush1.xpose.msra.mxu0 0.0
    %3725 = vmatprep.subr.mxu0 0.0
    %3726 = vmatpush1.xpose.msra.mxu0 0.0
    %3727 = vmatprep.subr.mxu0 0.0
    %3728 = vmatpush1.xpose.msra.mxu0 0.0
    %3729 = vmatprep.subr.mxu0 0.0
    %3730 = vmatpush1.xpose.msra.mxu0 0.0
    %3731 = vmatprep.subr.mxu0 0.0
    %3732 = vmatpush1.xpose.msra.mxu0 0.0
    %3733 = vmatprep.subr.mxu0 0.0
    %3734 = vmatpush1.xpose.msra.mxu0 0.0
    %3735 = vmatprep.subr.mxu0 0.0
    %3736 = vmatpush1.xpose.msra.mxu0 0.0
    %3737 = vmatprep.subr.mxu0 0.0
    %3738 = vmatpush1.xpose.msra.mxu0 0.0
    %3739 = vmatprep.subr.mxu0 0.0
    %3740 = vmatpush1.xpose.msra.mxu0 0.0
    %3741 = vmatprep.subr.mxu0 0.0
    %3742 = vmatpush1.xpose.msra.mxu0 0.0
    %3743 = vmatprep.subr.mxu0 0.0
    %3744 = vmatpush1.xpose.msra.mxu0 0.0
    %3745 = vmatprep.subr.mxu0 0.0
    %3746 = vmatpush1.xpose.msra.mxu0 0.0
    %3747 = vmatprep.subr.mxu0 0.0
    %3748 = vmatpush1.xpose.msra.mxu0 0.0
    %3749 = vmatprep.subr.mxu0 0.0
    %3750 = vmatpush1.xpose.msra.mxu0 0.0
    %3751 = vmatprep.subr.mxu0 0.0
    %3752 = vmatpush1.xpose.msra.mxu0 0.0
    %3753 = vmatprep.subr.mxu0 0.0
    %3754 = vmatpush1.xpose.msra.mxu0 0.0
    %3755 = vmatprep.mubr.f32.mxu0 0.0
    %3756 = vmatmul.mubr.f32.gmra.mrb[0].mxu0 %v3689
    %v3757 = vpop.f32.mrb[0].mxu0
    %v3758 = vadd.f32 0.0, %v3757
    %v3759 = vpop.f32.mrb[0].mxu0
    %3760 = vdwg.mxu0
    %v3761 = vsel %vm2248, %v3758, -1e+30
    %v3762 = vsel %vm2515, %v3761, -inf
    %3763 = vmax.xlane.f32.xlu0 %v3762
    %v3764 = vpop.xlane.xlu0 %3763
    %v3765 = vsub.f32 %v3761, %v3764
    %v3766 = vmul.f32 %v3765, 1.442695
    %v3767 = vpow.pop %v3766
    %v3768 = vsel %vm2515, %v3767, 0.0
    %3769 = vadd.xlane.f32.xlu0 %v3768
    %v3770 = vpop.xlane.xlu0 %3769
    %v3771 = vrcp.pop %v3770
    %v3772 = vmul.f32 %v3767, %v3771
    %v3774 = vsel %vm2527, %v3772, 0
    %3776 = vmatprep.subr.mxu0 0.0
    %3777 = vmatpush1.msra.mxu0 %v2220
    %3778 = vmatprep.subr.mxu0 0.0
    %3779 = vmatpush1.msra.mxu0 0.0
    %3780 = vmatprep.subr.mxu0 0.0
    %3781 = vmatpush1.msra.mxu0 0.0
    %3782 = vmatprep.subr.mxu0 0.0
    %3783 = vmatpush1.msra.mxu0 0.0
    %3784 = vmatprep.subr.mxu0 0.0
    %3785 = vmatpush1.msra.mxu0 0.0
    %3786 = vmatprep.subr.mxu0 0.0
    %3787 = vmatpush1.msra.mxu0 0.0
    %3788 = vmatprep.subr.mxu0 0.0
    %3789 = vmatpush1.msra.mxu0 0.0
    %3790 = vmatprep.subr.mxu0 0.0
    %3791 = vmatpush1.msra.mxu0 0.0
    %3792 = vmatprep.subr.mxu0 0.0
    %3793 = vmatpush1.msra.mxu0 0.0
    %3794 = vmatprep.subr.mxu0 0.0
    %3795 = vmatpush1.msra.mxu0 0.0
    %3796 = vmatprep.subr.mxu0 0.0
    %3797 = vmatpush1.msra.mxu0 0.0
    %3798 = vmatprep.subr.mxu0 0.0
    %3799 = vmatpush1.msra.mxu0 0.0
    %3800 = vmatprep.subr.mxu0 0.0
    %3801 = vmatpush1.msra.mxu0 0.0
    %3802 = vmatprep.subr.mxu0 0.0
    %3803 = vmatpush1.msra.mxu0 0.0
    %3804 = vmatprep.subr.mxu0 0.0
    %3805 = vmatpush1.msra.mxu0 0.0
    %3806 = vmatprep.subr.mxu0 0.0
    %3807 = vmatpush1.msra.mxu0 0.0
    %3808 = vmatprep.subr.mxu0 0.0
    %3809 = vmatpush1.msra.mxu0 0.0
    %3810 = vmatprep.subr.mxu0 0.0
    %3811 = vmatpush1.msra.mxu0 0.0
    %3812 = vmatprep.subr.mxu0 0.0
    %3813 = vmatpush1.msra.mxu0 0.0
    %3814 = vmatprep.subr.mxu0 0.0
    %3815 = vmatpush1.msra.mxu0 0.0
    %3816 = vmatprep.subr.mxu0 0.0
    %3817 = vmatpush1.msra.mxu0 0.0
    %3818 = vmatprep.subr.mxu0 0.0
    %3819 = vmatpush1.msra.mxu0 0.0
    %3820 = vmatprep.subr.mxu0 0.0
    %3821 = vmatpush1.msra.mxu0 0.0
    %3822 = vmatprep.subr.mxu0 0.0
    %3823 = vmatpush1.msra.mxu0 0.0
    %3824 = vmatprep.subr.mxu0 0.0
    %3825 = vmatpush1.msra.mxu0 0.0
    %3826 = vmatprep.subr.mxu0 0.0
    %3827 = vmatpush1.msra.mxu0 0.0
    %3828 = vmatprep.subr.mxu0 0.0
    %3829 = vmatpush1.msra.mxu0 0.0
    %3830 = vmatprep.subr.mxu0 0.0
    %3831 = vmatpush1.msra.mxu0 0.0
    %3832 = vmatprep.subr.mxu0 0.0
    %3833 = vmatpush1.msra.mxu0 0.0
    %3834 = vmatprep.subr.mxu0 0.0
    %3835 = vmatpush1.msra.mxu0 0.0
    %3836 = vmatprep.subr.mxu0 0.0
    %3837 = vmatpush1.msra.mxu0 0.0
    %3838 = vmatprep.subr.mxu0 0.0
    %3839 = vmatpush1.msra.mxu0 0.0
    %3840 = vmatprep.mubr.f32.mxu0 0.0
    %3841 = vmatmul.mubr.f32.gmra.mrb[0].mxu0 %v3774
    %v3842 = vpop.f32.mrb[0].mxu0
    %v3843 = vadd.f32 0.0, %v3842
    %v3844 = vpop.f32.mrb[0].mxu0
    %3845 = vdwg.mxu0
    %v3847 = vsel %vm138, %v3843, 0
    %3849 = vmatprep.subr.mxu0 0.0
    %3850 = vmatpush1.msra.mxu0 %v2235
    %3851 = vmatprep.subr.mxu0 0.0
    %3852 = vmatpush1.msra.mxu0 %v2236
    %3853 = vmatprep.subr.mxu0 0.0
    %3854 = vmatpush1.msra.mxu0 %v2237
    %3855 = vmatprep.subr.mxu0 0.0
    %3856 = vmatpush1.msra.mxu0 %v2238
    %3857 = vmatprep.subr.mxu0 0.0
    %3858 = vmatpush1.msra.mxu0 0.0
    %3859 = vmatprep.subr.mxu0 0.0
    %3860 = vmatpush1.msra.mxu0 0.0
    %3861 = vmatprep.subr.mxu0 0.0
    %3862 = vmatpush1.msra.mxu0 0.0
    %3863 = vmatprep.subr.mxu0 0.0
    %3864 = vmatpush1.msra.mxu0 0.0
    %3865 = vmatprep.subr.mxu0 0.0
    %3866 = vmatpush1.msra.mxu0 0.0
    %3867 = vmatprep.subr.mxu0 0.0
    %3868 = vmatpush1.msra.mxu0 0.0
    %3869 = vmatprep.subr.mxu0 0.0
    %3870 = vmatpush1.msra.mxu0 0.0
    %3871 = vmatprep.subr.mxu0 0.0
    %3872 = vmatpush1.msra.mxu0 0.0
    %3873 = vmatprep.subr.mxu0 0.0
    %3874 = vmatpush1.msra.mxu0 0.0
    %3875 = vmatprep.subr.mxu0 0.0
    %3876 = vmatpush1.msra.mxu0 0.0
    %3877 = vmatprep.subr.mxu0 0.0
    %3878 = vmatpush1.msra.mxu0 0.0
    %3879 = vmatprep.subr.mxu0 0.0
    %3880 = vmatpush1.msra.mxu0 0.0
    %3881 = vmatprep.subr.mxu0 0.0
    %3882 = vmatpush1.msra.mxu0 0.0
    %3883 = vmatprep.subr.mxu0 0.0
    %3884 = vmatpush1.msra.mxu0 0.0
    %3885 = vmatprep.subr.mxu0 0.0
    %3886 = vmatpush1.msra.mxu0 0.0
    %3887 = vmatprep.subr.mxu0 0.0
    %3888 = vmatpush1.msra.mxu0 0.0
    %3889 = vmatprep.subr.mxu0 0.0
    %3890 = vmatpush1.msra.mxu0 0.0
    %3891 = vmatprep.subr.mxu0 0.0
    %3892 = vmatpush1.msra.mxu0 0.0
    %3893 = vmatprep.subr.mxu0 0.0
    %3894 = vmatpush1.msra.mxu0 0.0
    %3895 = vmatprep.subr.mxu0 0.0
    %3896 = vmatpush1.msra.mxu0 0.0
    %3897 = vmatprep.subr.mxu0 0.0
    %3898 = vmatpush1.msra.mxu0 0.0
    %3899 = vmatprep.subr.mxu0 0.0
    %3900 = vmatpush1.msra.mxu0 0.0
    %3901 = vmatprep.subr.mxu0 0.0
    %3902 = vmatpush1.msra.mxu0 0.0
    %3903 = vmatprep.subr.mxu0 0.0
    %3904 = vmatpush1.msra.mxu0 0.0
    %3905 = vmatprep.subr.mxu0 0.0
    %3906 = vmatpush1.msra.mxu0 0.0
    %3907 = vmatprep.subr.mxu0 0.0
    %3908 = vmatpush1.msra.mxu0 0.0
    %3909 = vmatprep.subr.mxu0 0.0
    %3910 = vmatpush1.msra.mxu0 0.0
    %3911 = vmatprep.subr.mxu0 0.0
    %3912 = vmatpush1.msra.mxu0 0.0
    %3913 = vmatprep.mubr.f32.mxu0 0.0
    %3914 = vmatmul.mubr.f32.gmra.mrb[0].mxu0 %v3847
    %v3915 = vpop.f32.mrb[0].mxu0
    %v3916 = vadd.f32 0.0, %v3915
    %v3917 = vpop.f32.mrb[0].mxu0
    %3918 = vdwg.mxu0
    %3919 = vmatprep.subr.mxu0 0.0
    %3920 = vmatpush1.msra.mxu0 %v2231
    %3921 = vmatprep.subr.mxu0 0.0
    %3922 = vmatpush1.msra.mxu0 %v2232
    %3923 = vmatprep.subr.mxu0 0.0
    %3924 = vmatpush1.msra.mxu0 %v2233
    %3925 = vmatprep.subr.mxu0 0.0
    %3926 = vmatpush1.msra.mxu0 %v2234
    %3927 = vmatprep.subr.mxu0 0.0
    %3928 = vmatpush1.msra.mxu0 0.0
    %3929 = vmatprep.subr.mxu0 0.0
    %3930 = vmatpush1.msra.mxu0 0.0
    %3931 = vmatprep.subr.mxu0 0.0
    %3932 = vmatpush1.msra.mxu0 0.0
    %3933 = vmatprep.subr.mxu0 0.0
    %3934 = vmatpush1.msra.mxu0 0.0
    %3935 = vmatprep.subr.mxu0 0.0
    %3936 = vmatpush1.msra.mxu0 0.0
    %3937 = vmatprep.subr.mxu0 0.0
    %3938 = vmatpush1.msra.mxu0 0.0
    %3939 = vmatprep.subr.mxu0 0.0
    %3940 = vmatpush1.msra.mxu0 0.0
    %3941 = vmatprep.subr.mxu0 0.0
    %3942 = vmatpush1.msra.mxu0 0.0
    %3943 = vmatprep.subr.mxu0 0.0
    %3944 = vmatpush1.msra.mxu0 0.0
    %3945 = vmatprep.subr.mxu0 0.0
    %3946 = vmatpush1.msra.mxu0 0.0
    %3947 = vmatprep.subr.mxu0 0.0
    %3948 = vmatpush1.msra.mxu0 0.0
    %3949 = vmatprep.subr.mxu0 0.0
    %3950 = vmatpush1.msra.mxu0 0.0
    %3951 = vmatprep.subr.mxu0 0.0
    %3952 = vmatpush1.msra.mxu0 0.0
    %3953 = vmatprep.subr.mxu0 0.0
    %3954 = vmatpush1.msra.mxu0 0.0
    %3955 = vmatprep.subr.mxu0 0.0
    %3956 = vmatpush1.msra.mxu0 0.0
    %3957 = vmatprep.subr.mxu0 0.0
    %3958 = vmatpush1.msra.mxu0 0.0
    %3959 = vmatprep.subr.mxu0 0.0
    %3960 = vmatpush1.msra.mxu0 0.0
    %3961 = vmatprep.subr.mxu0 0.0
    %3962 = vmatpush1.msra.mxu0 0.0
    %3963 = vmatprep.subr.mxu0 0.0
    %3964 = vmatpush1.msra.mxu0 0.0
    %3965 = vmatprep.subr.mxu0 0.0
    %3966 = vmatpush1.msra.mxu0 0.0
    %3967 = vmatprep.subr.mxu0 0.0
    %3968 = vmatpush1.msra.mxu0 0.0
    %3969 = vmatprep.subr.mxu0 0.0
    %3970 = vmatpush1.msra.mxu0 0.0
    %3971 = vmatprep.subr.mxu0 0.0
    %3972 = vmatpush1.msra.mxu0 0.0
    %3973 = vmatprep.subr.mxu0 0.0
    %3974 = vmatpush1.msra.mxu0 0.0
    %3975 = vmatprep.subr.mxu0 0.0
    %3976 = vmatpush1.msra.mxu0 0.0
    %3977 = vmatprep.subr.mxu0 0.0
    %3978 = vmatpush1.msra.mxu0 0.0
    %3979 = vmatprep.subr.mxu0 0.0
    %3980 = vmatpush1.msra.mxu0 0.0
    %3981 = vmatprep.subr.mxu0 0.0
    %3982 = vmatpush1.msra.mxu0 0.0
    %3983 = vmatprep.mubr.f32.mxu0 0.0
    %3984 = vmatmul.mubr.f32.gmra.mrb[0].mxu0 %v3689
    %v3985 = vpop.f32.mrb[0].mxu0
    %v3986 = vadd.f32 %v3916, %v3985
    %v3987 = vpop.f32.mrb[0].mxu0
    %3988 = vdwg.mxu0
    %v3989 = vadd.f32 %v3986, %v2239
    %v3990 = vtanh.pop %v3989
    %v3992 = vsel %vm138, %v3990, 0
    %3994 = vmatprep.subr.mxu0 0.0
    %3995 = vmatpush1.msra.mxu0 %v2240
    %3996 = vmatprep.subr.mxu0 0.0
    %3997 = vmatpush1.msra.mxu0 %v2241
    %3998 = vmatprep.subr.mxu0 0.0
    %3999 = vmatpush1.msra.mxu0 %v2242
    %4000 = vmatprep.subr.mxu0 0.0
    %4001 = vmatpush1.msra.mxu0 %v2243
    %4002 = vmatprep.subr.mxu0 0.0
    %4003 = vmatpush1.msra.mxu0 0.0
    %4004 = vmatprep.subr.mxu0 0.0
    %4005 = vmatpush1.msra.mxu0 0.0
    %4006 = vmatprep.subr.mxu0 0.0
    %4007 = vmatpush1.msra.mxu0 0.0
    %4008 = vmatprep.subr.mxu0 0.0
    %4009 = vmatpush1.msra.mxu0 0.0
    %4010 = vmatprep.subr.mxu0 0.0
    %4011 = vmatpush1.msra.mxu0 0.0
    %4012 = vmatprep.subr.mxu0 0.0
    %4013 = vmatpush1.msra.mxu0 0.0
    %4014 = vmatprep.subr.mxu0 0.0
    %4015 = vmatpush1.msra.mxu0 0.0
    %4016 = vmatprep.subr.mxu0 0.0
    %4017 = vmatpush1.msra.mxu0 0.0
    %4018 = vmatprep.subr.mxu0 0.0
    %4019 = vmatpush1.msra.mxu0 0.0
    %4020 = vmatprep.subr.mxu0 0.0
    %4021 = vmatpush1.msra.mxu0 0.0
    %4022 = vmatprep.subr.mxu0 0.0
    %4023 = vmatpush1.msra.mxu0 0.0
    %4024 = vmatprep.subr.mxu0 0.0
    %4025 = vmatpush1.msra.mxu0 0.0
    %4026 = vmatprep.subr.mxu0 0.0
    %4027 = vmatpush1.msra.mxu0 0.0
    %4028 = vmatprep.subr.mxu0 0.0
    %4029 = vmatpush1.msra.mxu0 0.0
    %4030 = vmatprep.subr.mxu0 0.0
    %4031 = vmatpush1.msra.mxu0 0.0
    %4032 = vmatprep.subr.mxu0 0.0
    %4033 = vmatpush1.msra.mxu0 0.0
    %4034 = vmatprep.subr.mxu0 0.0
    %4035 = vmatpush1.msra.mxu0 0.0
    %4036 = vmatprep.subr.mxu0 0.0
    %4037 = vmatpush1.msra.mxu0 0.0
    %4038 = vmatprep.subr.mxu0 0.0
    %4039 = vmatpush1.msra.mxu0 0.0
    %4040 = vmatprep.subr.mxu0 0.0
    %4041 = vmatpush1.msra.mxu0 0.0
    %4042 = vmatprep.subr.mxu0 0.0
    %4043 = vmatpush1.msra.mxu0 0.0
    %4044 = vmatprep.subr.mxu0 0.0
    %4045 = vmatpush1.msra.mxu0 0.0
    %4046 = vmatprep.subr.mxu0 0.0
    %4047 = vmatpush1.msra.mxu0 0.0
    %4048 = vmatprep.subr.mxu0 0.0
    %4049 = vmatpush1.msra.mxu0 0.0
    %4050 = vmatprep.subr.mxu0 0.0
    %4051 = vmatpush1.msra.mxu0 0.0
    %4052 = vmatprep.subr.mxu0 0.0
    %4053 = vmatpush1.msra.mxu0 0.0
    %4054 = vmatprep.subr.mxu0 0.0
    %4055 = vmatpush1.msra.mxu0 0.0
    %4056 = vmatprep.subr.mxu0 0.0
    %4057 = vmatpush1.msra.mxu0 0.0
    %4058 = vmatprep.mubr.f32.mxu0 0.0
    %4059 = vmatmul.mubr.f32.gmra.mrb[0].mxu0 %v3992
    %v4060 = vpop.f32.mrb[0].mxu0
    %v4061 = vadd.f32 %v2244, %v4060
    %v4062 = vpop.f32.mrb[0].mxu0
    %4063 = vdwg.mxu0
    %v4064 = vsel %vm2819, %v4061, -inf
    %4065 = vmax.xlane.f32.xlu0 %v4064
    %v4066 = vpop.xlane.xlu0 %4065
    %v4067 = vrot.slane %v4066, 4
    %v4068 = vmax.f32 %v4066, %v4067
    %v4069 = vrot.slane %v4068, 2
    %v4070 = vmax.f32 %v4068, %v4069
    %v4071 = vrot.slane %v4070, 1
    %v4072 = vmax.f32 %v4070, %v4071
    %s4073 = vtos %v4072
    %v4074 = vstv %s4073
    %v4075 = vsub.f32 %v4061, %v4074
    %v4076 = vmul.f32 %v4075, 1.442695
    %v4077 = vpow.pop %v4076
    %v4078 = vsel %vm2819, %v4077, 0.0
    %4079 = vadd.xlane.f32.xlu0 %v4078
    %v4080 = vpop.xlane.xlu0 %4079
    %v4081 = vrot.slane %v4080, 4
    %v4082 = vadd.f32 %v4080, %v4081
    %v4083 = vrot.slane %v4082, 2
    %v4084 = vadd.f32 %v4082, %v4083
    %v4085 = vrot.slane %v4084, 1
    %v4086 = vadd.f32 %v4084, %v4085
    %s4087 = vtos %v4086
    %v4088 = vstv %s4087
    %v4089 = vrcp.pop %v4088
    %s4090 = vtos %v4089
    %vm4091 = vcmp.eq.f32.partialorder %v4061, %v4074
    %v4092 = vsel %vm4091, %v2246, 128
    %v4093 = vsel %vm2819, %v4092, 2147483647
    %v4094 = vand.u32 %v4093, 65535
    %v4095 = vshra.s32 %v4093, 16
    %v4096 = vcvt.s32.f32 %v4094
    %v4097 = vcvt.s32.f32 %v4095
    %4098 = vmin.xlane.f32.xlu0 %v4097
    %v4099 = vpop.xlane.xlu0 %4098
    %vm4100 = vcmp.eq.f32.partialorder %v4097, %v4099
    %v4101 = vsel %vm4100, %v4096, inf
    %4102 = vmin.xlane.f32.xlu0 %v4101
    %v4103 = vpop.xlane.xlu0 %4102
    %v4104 = vcvt.f32.s32 %v4103
    %v4105 = vcvt.f32.s32 %v4099
    %v4106 = vshll.u32 %v4105, 16
    %v4107 = vadd.s32 %v4106, %v4104
    %v4108 = vrot.slane %v4107, 4
    %vm4109 = vcmp.lt.s32.totalorder %v4107, %v4108
    %v4110 = vsel %vm4109, %v4107, %v4108
    %v4111 = vrot.slane %v4110, 2
    %vm4112 = vcmp.lt.s32.totalorder %v4110, %v4111
    %v4113 = vsel %vm4112, %v4110, %v4111
    %v4114 = vrot.slane %v4113, 1
    %vm4115 = vcmp.lt.s32.totalorder %v4113, %v4114
    %v4116 = vsel %vm4115, %v4113, %v4114
    %s4117 = vtos %v4116
    %s4118 = scalar_lea.smem [#allocation15], 2
    %4119 = sst [smem:[%s4118]] %s4117
    %s4120 = scalar_lea.smem [#allocation16], 2
    %4121 = sst [smem:[%s4120]] %s4090
    %4122 = sst [smem:[%s2249]] %s4117
    %s4123 = sld [smem:[#allocation8]]
    %s4124 = scalar_lea.vmem %s2, %s4123
    %v4125 = vld [vmem:[%s4124] sm:$0x1]
    %v4127 = vsel %vm138, %v4125, 0
    %4129 = vmatprep.subr.mxu0 0.0
    %4130 = vmatpush1.msra.mxu0 %v2221
    %4131 = vmatprep.subr.mxu0 0.0
    %4132 = vmatpush1.msra.mxu0 %v2222
    %4133 = vmatprep.subr.mxu0 0.0
    %4134 = vmatpush1.msra.mxu0 %v2223
    %4135 = vmatprep.subr.mxu0 0.0
    %4136 = vmatpush1.msra.mxu0 %v2224
    %4137 = vmatprep.subr.mxu0 0.0
    %4138 = vmatpush1.msra.mxu0 0.0
    %4139 = vmatprep.subr.mxu0 0.0
    %4140 = vmatpush1.msra.mxu0 0.0
    %4141 = vmatprep.subr.mxu0 0.0
    %4142 = vmatpush1.msra.mxu0 0.0
    %4143 = vmatprep.subr.mxu0 0.0
    %4144 = vmatpush1.msra.mxu0 0.0
    %4145 = vmatprep.subr.mxu0 0.0
    %4146 = vmatpush1.msra.mxu0 0.0
    %4147 = vmatprep.subr.mxu0 0.0
    %4148 = vmatpush1.msra.mxu0 0.0
    %4149 = vmatprep.subr.mxu0 0.0
    %4150 = vmatpush1.msra.mxu0 0.0
    %4151 = vmatprep.subr.mxu0 0.0
    %4152 = vmatpush1.msra.mxu0 0.0
    %4153 = vmatprep.subr.mxu0 0.0
    %4154 = vmatpush1.msra.mxu0 0.0
    %4155 = vmatprep.subr.mxu0 0.0
    %4156 = vmatpush1.msra.mxu0 0.0
    %4157 = vmatprep.subr.mxu0 0.0
    %4158 = vmatpush1.msra.mxu0 0.0
    %4159 = vmatprep.subr.mxu0 0.0
    %4160 = vmatpush1.msra.mxu0 0.0
    %4161 = vmatprep.subr.mxu0 0.0
    %4162 = vmatpush1.msra.mxu0 0.0
    %4163 = vmatprep.subr.mxu0 0.0
    %4164 = vmatpush1.msra.mxu0 0.0
    %4165 = vmatprep.subr.mxu0 0.0
    %4166 = vmatpush1.msra.mxu0 0.0
    %4167 = vmatprep.subr.mxu0 0.0
    %4168 = vmatpush1.msra.mxu0 0.0
    %4169 = vmatprep.subr.mxu0 0.0
    %4170 = vmatpush1.msra.mxu0 0.0
    %4171 = vmatprep.subr.mxu0 0.0
    %4172 = vmatpush1.msra.mxu0 0.0
    %4173 = vmatprep.subr.mxu0 0.0
    %4174 = vmatpush1.msra.mxu0 0.0
    %4175 = vmatprep.subr.mxu0 0.0
    %4176 = vmatpush1.msra.mxu0 0.0
    %4177 = vmatprep.subr.mxu0 0.0
    %4178 = vmatpush1.msra.mxu0 0.0
    %4179 = vmatprep.subr.mxu0 0.0
    %4180 = vmatpush1.msra.mxu0 0.0
    %4181 = vmatprep.subr.mxu0 0.0
    %4182 = vmatpush1.msra.mxu0 0.0
    %4183 = vmatprep.subr.mxu0 0.0
    %4184 = vmatpush1.msra.mxu0 0.0
    %4185 = vmatprep.subr.mxu0 0.0
    %4186 = vmatpush1.msra.mxu0 0.0
    %4187 = vmatprep.subr.mxu0 0.0
    %4188 = vmatpush1.msra.mxu0 0.0
    %4189 = vmatprep.subr.mxu0 0.0
    %4190 = vmatpush1.msra.mxu0 0.0
    %4191 = vmatprep.subr.mxu0 0.0
    %4192 = vmatpush1.msra.mxu0 0.0
    %4193 = vmatprep.mubr.f32.mxu0 0.0
    %4194 = vmatmul.mubr.f32.gmra.mrb[0].mxu0 %v4127
    %v4195 = vpop.f32.mrb[0].mxu0
    %v4196 = vadd.f32 %v2229, %v4195
    %v4197 = vpop.f32.mrb[0].mxu0
    %4198 = vdwg.mxu0
    %v4199 = vld [vmem:[#allocation7] sm:$0x1]
    %v4201 = vsel %vm138, %v4199, 0
    %4203 = vmatprep.subr.mxu0 0.0
    %4204 = vmatpush1.msra.mxu0 %v2225
    %4205 = vmatprep.subr.mxu0 0.0
    %4206 = vmatpush1.msra.mxu0 %v2226
    %4207 = vmatprep.subr.mxu0 0.0
    %4208 = vmatpush1.msra.mxu0 %v2227
    %4209 = vmatprep.subr.mxu0 0.0
    %4210 = vmatpush1.msra.mxu0 %v2228
    %4211 = vmatprep.subr.mxu0 0.0
    %4212 = vmatpush1.msra.mxu0 0.0
    %4213 = vmatprep.subr.mxu0 0.0
    %4214 = vmatpush1.msra.mxu0 0.0
    %4215 = vmatprep.subr.mxu0 0.0
    %4216 = vmatpush1.msra.mxu0 0.0
    %4217 = vmatprep.subr.mxu0 0.0
    %4218 = vmatpush1.msra.mxu0 0.0
    %4219 = vmatprep.subr.mxu0 0.0
    %4220 = vmatpush1.msra.mxu0 0.0
    %4221 = vmatprep.subr.mxu0 0.0
    %4222 = vmatpush1.msra.mxu0 0.0
    %4223 = vmatprep.subr.mxu0 0.0
    %4224 = vmatpush1.msra.mxu0 0.0
    %4225 = vmatprep.subr.mxu0 0.0
    %4226 = vmatpush1.msra.mxu0 0.0
    %4227 = vmatprep.subr.mxu0 0.0
    %4228 = vmatpush1.msra.mxu0 0.0
    %4229 = vmatprep.subr.mxu0 0.0
    %4230 = vmatpush1.msra.mxu0 0.0
    %4231 = vmatprep.subr.mxu0 0.0
    %4232 = vmatpush1.msra.mxu0 0.0
    %4233 = vmatprep.subr.mxu0 0.0
    %4234 = vmatpush1.msra.mxu0 0.0
    %4235 = vmatprep.subr.mxu0 0.0
    %4236 = vmatpush1.msra.mxu0 0.0
    %4237 = vmatprep.subr.mxu0 0.0
    %4238 = vmatpush1.msra.mxu0 0.0
    %4239 = vmatprep.subr.mxu0 0.0
    %4240 = vmatpush1.msra.mxu0 0.0
    %4241 = vmatprep.subr.mxu0 0.0
    %4242 = vmatpush1.msra.mxu0 0.0
    %4243 = vmatprep.subr.mxu0 0.0
    %4244 = vmatpush1.msra.mxu0 0.0
    %4245 = vmatprep.subr.mxu0 0.0
    %4246 = vmatpush1.msra.mxu0 0.0
    %4247 = vmatprep.subr.mxu0 0.0
    %4248 = vmatpush1.msra.mxu0 0.0
    %4249 = vmatprep.subr.mxu0 0.0
    %4250 = vmatpush1.msra.mxu0 0.0
    %4251 = vmatprep.subr.mxu0 0.0
    %4252 = vmatpush1.msra.mxu0 0.0
    %4253 = vmatprep.subr.mxu0 0.0
    %4254 = vmatpush1.msra.mxu0 0.0
    %4255 = vmatprep.subr.mxu0 0.0
    %4256 = vmatpush1.msra.mxu0 0.0
    %4257 = vmatprep.subr.mxu0 0.0
    %4258 = vmatpush1.msra.mxu0 0.0
    %4259 = vmatprep.subr.mxu0 0.0
    %4260 = vmatpush1.msra.mxu0 0.0
    %4261 = vmatprep.subr.mxu0 0.0
    %4262 = vmatpush1.msra.mxu0 0.0
    %4263 = vmatprep.subr.mxu0 0.0
    %4264 = vmatpush1.msra.mxu0 0.0
    %4265 = vmatprep.subr.mxu0 0.0
    %4266 = vmatpush1.msra.mxu0 0.0
    %4267 = vmatprep.mubr.f32.mxu0 0.0
    %4268 = vmatmul.mubr.f32.gmra.mrb[0].mxu0 %v4201
    %v4269 = vpop.f32.mrb[0].mxu0
    %v4270 = vadd.f32 %v2230, %v4269
    %v4271 = vpop.f32.mrb[0].mxu0
    %4272 = vdwg.mxu0
    %v4273 = vadd.f32 %v4196, %v4270
    %v4274 = vxor.u32 %v4273, 2147483648
    %v4275 = vmul.f32 %v4274, 1.442695
    %v4276 = vpow.pop %v4275
    %v4277 = vadd.f32 %v4276, 1.0
    %v4278 = vrcp.pop %v4277
    %v4279 = vmul.f32 1.0, %v4278
    %4281 = vrot.lane.b32.xlu0 %v4270, 64
    %v4282 = vpop.permute.xlu0 %4281
    %v4284 = vmul.f32 %v4279, %v4282
    %4286 = vrot.lane.b32.xlu0 %v4284, 64
    %v4287 = vpop.permute.xlu0 %4286
    %v4289 = vadd.f32 %v4196, %v4287
    %v4290 = vtanh.pop %v4289
    %v4291 = vsub.f32 1.0, %v4279
    %4293 = vrot.lane.b32.xlu0 %v4290, 96
    %v4294 = vpop.permute.xlu0 %4293
    %v4296 = vmul.f32 %v4291, %v4294
    %v4297 = vlaneseq
    %v4298 = vshrl.u32 %v4297, 7
    %v4299 = vsub.s32 0, %v4298
    %v4300 = vrot.slane %v4199, %v4299
    %4301 = vrot.lane.b32.xlu0 %v4300, 32
    %v4302 = vpop.permute.xlu0 %4301
    %v4304 = vmul.f32 %v4279, %v4302
    %v4305 = vadd.f32 %v4296, %v4304
    %4307 = vrot.lane.b32.xlu0 %v4305, 96
    %v4308 = vpop.permute.xlu0 %4307
    %4310 = vst.msk [vmem:[#allocation7] sm:$0x1] %vm96, %v4308
    %v4311 = vsel %vm138, %v4308, 0
    %4313 = vmatprep.subr.mxu0 0.0
    %4314 = vmatpush1.xpose.msra.mxu0 %v2442
    %4315 = vmatprep.subr.mxu0 0.0
    %4316 = vmatpush1.xpose.msra.mxu0 0.0
    %4317 = vmatprep.subr.mxu0 0.0
    %4318 = vmatpush1.xpose.msra.mxu0 0.0
    %4319 = vmatprep.subr.mxu0 0.0
    %4320 = vmatpush1.xpose.msra.mxu0 0.0
    %4321 = vmatprep.subr.mxu0 0.0
    %4322 = vmatpush1.xpose.msra.mxu0 0.0
    %4323 = vmatprep.subr.mxu0 0.0
    %4324 = vmatpush1.xpose.msra.mxu0 0.0
    %4325 = vmatprep.subr.mxu0 0.0
    %4326 = vmatpush1.xpose.msra.mxu0 0.0
    %4327 = vmatprep.subr.mxu0 0.0
    %4328 = vmatpush1.xpose.msra.mxu0 0.0
    %4329 = vmatprep.subr.mxu0 0.0
    %4330 = vmatpush1.xpose.msra.mxu0 0.0
    %4331 = vmatprep.subr.mxu0 0.0
    %4332 = vmatpush1.xpose.msra.mxu0 0.0
    %4333 = vmatprep.subr.mxu0 0.0
    %4334 = vmatpush1.xpose.msra.mxu0 0.0
    %4335 = vmatprep.subr.mxu0 0.0
    %4336 = vmatpush1.xpose.msra.mxu0 0.0
    %4337 = vmatprep.subr.mxu0 0.0
    %4338 = vmatpush1.xpose.msra.mxu0 0.0
    %4339 = vmatprep.subr.mxu0 0.0
    %4340 = vmatpush1.xpose.msra.mxu0 0.0
    %4341 = vmatprep.subr.mxu0 0.0
    %4342 = vmatpush1.xpose.msra.mxu0 0.0
    %4343 = vmatprep.subr.mxu0 0.0
    %4344 = vmatpush1.xpose.msra.mxu0 0.0
    %4345 = vmatprep.subr.mxu0 0.0
    %4346 = vmatpush1.xpose.msra.mxu0 0.0
    %4347 = vmatprep.subr.mxu0 0.0
    %4348 = vmatpush1.xpose.msra.mxu0 0.0
    %4349 = vmatprep.subr.mxu0 0.0
    %4350 = vmatpush1.xpose.msra.mxu0 0.0
    %4351 = vmatprep.subr.mxu0 0.0
    %4352 = vmatpush1.xpose.msra.mxu0 0.0
    %4353 = vmatprep.subr.mxu0 0.0
    %4354 = vmatpush1.xpose.msra.mxu0 0.0
    %4355 = vmatprep.subr.mxu0 0.0
    %4356 = vmatpush1.xpose.msra.mxu0 0.0
    %4357 = vmatprep.subr.mxu0 0.0
    %4358 = vmatpush1.xpose.msra.mxu0 0.0
    %4359 = vmatprep.subr.mxu0 0.0
    %4360 = vmatpush1.xpose.msra.mxu0 0.0
    %4361 = vmatprep.subr.mxu0 0.0
    %4362 = vmatpush1.xpose.msra.mxu0 0.0
    %4363 = vmatprep.subr.mxu0 0.0
    %4364 = vmatpush1.xpose.msra.mxu0 0.0
    %4365 = vmatprep.subr.mxu0 0.0
    %4366 = vmatpush1.xpose.msra.mxu0 0.0
    %4367 = vmatprep.subr.mxu0 0.0
    %4368 = vmatpush1.xpose.msra.mxu0 0.0
    %4369 = vmatprep.subr.mxu0 0.0
    %4370 = vmatpush1.xpose.msra.mxu0 0.0
    %4371 = vmatprep.subr.mxu0 0.0
    %4372 = vmatpush1.xpose.msra.mxu0 0.0
    %4373 = vmatprep.subr.mxu0 0.0
    %4374 = vmatpush1.xpose.msra.mxu0 0.0
    %4375 = vmatprep.subr.mxu0 0.0
    %4376 = vmatpush1.xpose.msra.mxu0 0.0
    %4377 = vmatprep.mubr.f32.mxu0 0.0
    %4378 = vmatmul.mubr.f32.gmra.mrb[0].mxu0 %v4311
    %v4379 = vpop.f32.mrb[0].mxu0
    %v4380 = vadd.f32 0.0, %v4379
    %v4381 = vpop.f32.mrb[0].mxu0
    %4382 = vdwg.mxu0
    %v4383 = vsel %vm2248, %v4380, -1e+30
    %v4384 = vsel %vm2515, %v4383, -inf
    %4385 = vmax.xlane.f32.xlu0 %v4384
    %v4386 = vpop.xlane.xlu0 %4385
    %v4387 = vsub.f32 %v4383, %v4386
    %v4388 = vmul.f32 %v4387, 1.442695
    %v4389 = vpow.pop %v4388
    %v4390 = vsel %vm2515, %v4389, 0.0
    %4391 = vadd.xlane.f32.xlu0 %v4390
    %v4392 = vpop.xlane.xlu0 %4391
    %v4393 = vrcp.pop %v4392
    %v4394 = vmul.f32 %v4389, %v4393
    %v4396 = vsel %vm2527, %v4394, 0
    %4398 = vmatprep.subr.mxu0 0.0
    %4399 = vmatpush1.msra.mxu0 %v2220
    %4400 = vmatprep.subr.mxu0 0.0
    %4401 = vmatpush1.msra.mxu0 0.0
    %4402 = vmatprep.subr.mxu0 0.0
    %4403 = vmatpush1.msra.mxu0 0.0
    %4404 = vmatprep.subr.mxu0 0.0
    %4405 = vmatpush1.msra.mxu0 0.0
    %4406 = vmatprep.subr.mxu0 0.0
    %4407 = vmatpush1.msra.mxu0 0.0
    %4408 = vmatprep.subr.mxu0 0.0
    %4409 = vmatpush1.msra.mxu0 0.0
    %4410 = vmatprep.subr.mxu0 0.0
    %4411 = vmatpush1.msra.mxu0 0.0
    %4412 = vmatprep.subr.mxu0 0.0
    %4413 = vmatpush1.msra.mxu0 0.0
    %4414 = vmatprep.subr.mxu0 0.0
    %4415 = vmatpush1.msra.mxu0 0.0
    %4416 = vmatprep.subr.mxu0 0.0
    %4417 = vmatpush1.msra.mxu0 0.0
    %4418 = vmatprep.subr.mxu0 0.0
    %4419 = vmatpush1.msra.mxu0 0.0
    %4420 = vmatprep.subr.mxu0 0.0
    %4421 = vmatpush1.msra.mxu0 0.0
    %4422 = vmatprep.subr.mxu0 0.0
    %4423 = vmatpush1.msra.mxu0 0.0
    %4424 = vmatprep.subr.mxu0 0.0
    %4425 = vmatpush1.msra.mxu0 0.0
    %4426 = vmatprep.subr.mxu0 0.0
    %4427 = vmatpush1.msra.mxu0 0.0
    %4428 = vmatprep.subr.mxu0 0.0
    %4429 = vmatpush1.msra.mxu0 0.0
    %4430 = vmatprep.subr.mxu0 0.0
    %4431 = vmatpush1.msra.mxu0 0.0
    %4432 = vmatprep.subr.mxu0 0.0
    %4433 = vmatpush1.msra.mxu0 0.0
    %4434 = vmatprep.subr.mxu0 0.0
    %4435 = vmatpush1.msra.mxu0 0.0
    %4436 = vmatprep.subr.mxu0 0.0
    %4437 = vmatpush1.msra.mxu0 0.0
    %4438 = vmatprep.subr.mxu0 0.0
    %4439 = vmatpush1.msra.mxu0 0.0
    %4440 = vmatprep.subr.mxu0 0.0
    %4441 = vmatpush1.msra.mxu0 0.0
    %4442 = vmatprep.subr.mxu0 0.0
    %4443 = vmatpush1.msra.mxu0 0.0
    %4444 = vmatprep.subr.mxu0 0.0
    %4445 = vmatpush1.msra.mxu0 0.0
    %4446 = vmatprep.subr.mxu0 0.0
    %4447 = vmatpush1.msra.mxu0 0.0
    %4448 = vmatprep.subr.mxu0 0.0
    %4449 = vmatpush1.msra.mxu0 0.0
    %4450 = vmatprep.subr.mxu0 0.0
    %4451 = vmatpush1.msra.mxu0 0.0
    %4452 = vmatprep.subr.mxu0 0.0
    %4453 = vmatpush1.msra.mxu0 0.0
    %4454 = vmatprep.subr.mxu0 0.0
    %4455 = vmatpush1.msra.mxu0 0.0
    %4456 = vmatprep.subr.mxu0 0.0
    %4457 = vmatpush1.msra.mxu0 0.0
    %4458 = vmatprep.subr.mxu0 0.0
    %4459 = vmatpush1.msra.mxu0 0.0
    %4460 = vmatprep.subr.mxu0 0.0
    %4461 = vmatpush1.msra.mxu0 0.0
    %4462 = vmatprep.mubr.f32.mxu0 0.0
    %4463 = vmatmul.mubr.f32.gmra.mrb[0].mxu0 %v4396
    %v4464 = vpop.f32.mrb[0].mxu0
    %v4465 = vadd.f32 0.0, %v4464
    %v4466 = vpop.f32.mrb[0].mxu0
    %4467 = vdwg.mxu0
    %v4469 = vsel %vm138, %v4465, 0
    %4471 = vmatprep.subr.mxu0 0.0
    %4472 = vmatpush1.msra.mxu0 %v2235
    %4473 = vmatprep.subr.mxu0 0.0
    %4474 = vmatpush1.msra.mxu0 %v2236
    %4475 = vmatprep.subr.mxu0 0.0
    %4476 = vmatpush1.msra.mxu0 %v2237
    %4477 = vmatprep.subr.mxu0 0.0
    %4478 = vmatpush1.msra.mxu0 %v2238
    %4479 = vmatprep.subr.mxu0 0.0
    %4480 = vmatpush1.msra.mxu0 0.0
    %4481 = vmatprep.subr.mxu0 0.0
    %4482 = vmatpush1.msra.mxu0 0.0
    %4483 = vmatprep.subr.mxu0 0.0
    %4484 = vmatpush1.msra.mxu0 0.0
    %4485 = vmatprep.subr.mxu0 0.0
    %4486 = vmatpush1.msra.mxu0 0.0
    %4487 = vmatprep.subr.mxu0 0.0
    %4488 = vmatpush1.msra.mxu0 0.0
    %4489 = vmatprep.subr.mxu0 0.0
    %4490 = vmatpush1.msra.mxu0 0.0
    %4491 = vmatprep.subr.mxu0 0.0
    %4492 = vmatpush1.msra.mxu0 0.0
    %4493 = vmatprep.subr.mxu0 0.0
    %4494 = vmatpush1.msra.mxu0 0.0
    %4495 = vmatprep.subr.mxu0 0.0
    %4496 = vmatpush1.msra.mxu0 0.0
    %4497 = vmatprep.subr.mxu0 0.0
    %4498 = vmatpush1.msra.mxu0 0.0
    %4499 = vmatprep.subr.mxu0 0.0
    %4500 = vmatpush1.msra.mxu0 0.0
    %4501 = vmatprep.subr.mxu0 0.0
    %4502 = vmatpush1.msra.mxu0 0.0
    %4503 = vmatprep.subr.mxu0 0.0
    %4504 = vmatpush1.msra.mxu0 0.0
    %4505 = vmatprep.subr.mxu0 0.0
    %4506 = vmatpush1.msra.mxu0 0.0
    %4507 = vmatprep.subr.mxu0 0.0
    %4508 = vmatpush1.msra.mxu0 0.0
    %4509 = vmatprep.subr.mxu0 0.0
    %4510 = vmatpush1.msra.mxu0 0.0
    %4511 = vmatprep.subr.mxu0 0.0
    %4512 = vmatpush1.msra.mxu0 0.0
    %4513 = vmatprep.subr.mxu0 0.0
    %4514 = vmatpush1.msra.mxu0 0.0
    %4515 = vmatprep.subr.mxu0 0.0
    %4516 = vmatpush1.msra.mxu0 0.0
    %4517 = vmatprep.subr.mxu0 0.0
    %4518 = vmatpush1.msra.mxu0 0.0
    %4519 = vmatprep.subr.mxu0 0.0
    %4520 = vmatpush1.msra.mxu0 0.0
    %4521 = vmatprep.subr.mxu0 0.0
    %4522 = vmatpush1.msra.mxu0 0.0
    %4523 = vmatprep.subr.mxu0 0.0
    %4524 = vmatpush1.msra.mxu0 0.0
    %4525 = vmatprep.subr.mxu0 0.0
    %4526 = vmatpush1.msra.mxu0 0.0
    %4527 = vmatprep.subr.mxu0 0.0
    %4528 = vmatpush1.msra.mxu0 0.0
    %4529 = vmatprep.subr.mxu0 0.0
    %4530 = vmatpush1.msra.mxu0 0.0
    %4531 = vmatprep.subr.mxu0 0.0
    %4532 = vmatpush1.msra.mxu0 0.0
    %4533 = vmatprep.subr.mxu0 0.0
    %4534 = vmatpush1.msra.mxu0 0.0
    %4535 = vmatprep.mubr.f32.mxu0 0.0
    %4536 = vmatmul.mubr.f32.gmra.mrb[0].mxu0 %v4469
    %v4537 = vpop.f32.mrb[0].mxu0
    %v4538 = vadd.f32 0.0, %v4537
    %v4539 = vpop.f32.mrb[0].mxu0
    %4540 = vdwg.mxu0
    %4541 = vmatprep.subr.mxu0 0.0
    %4542 = vmatpush1.msra.mxu0 %v2231
    %4543 = vmatprep.subr.mxu0 0.0
    %4544 = vmatpush1.msra.mxu0 %v2232
    %4545 = vmatprep.subr.mxu0 0.0
    %4546 = vmatpush1.msra.mxu0 %v2233
    %4547 = vmatprep.subr.mxu0 0.0
    %4548 = vmatpush1.msra.mxu0 %v2234
    %4549 = vmatprep.subr.mxu0 0.0
    %4550 = vmatpush1.msra.mxu0 0.0
    %4551 = vmatprep.subr.mxu0 0.0
    %4552 = vmatpush1.msra.mxu0 0.0
    %4553 = vmatprep.subr.mxu0 0.0
    %4554 = vmatpush1.msra.mxu0 0.0
    %4555 = vmatprep.subr.mxu0 0.0
    %4556 = vmatpush1.msra.mxu0 0.0
    %4557 = vmatprep.subr.mxu0 0.0
    %4558 = vmatpush1.msra.mxu0 0.0
    %4559 = vmatprep.subr.mxu0 0.0
    %4560 = vmatpush1.msra.mxu0 0.0
    %4561 = vmatprep.subr.mxu0 0.0
    %4562 = vmatpush1.msra.mxu0 0.0
    %4563 = vmatprep.subr.mxu0 0.0
    %4564 = vmatpush1.msra.mxu0 0.0
    %4565 = vmatprep.subr.mxu0 0.0
    %4566 = vmatpush1.msra.mxu0 0.0
    %4567 = vmatprep.subr.mxu0 0.0
    %4568 = vmatpush1.msra.mxu0 0.0
    %4569 = vmatprep.subr.mxu0 0.0
    %4570 = vmatpush1.msra.mxu0 0.0
    %4571 = vmatprep.subr.mxu0 0.0
    %4572 = vmatpush1.msra.mxu0 0.0
    %4573 = vmatprep.subr.mxu0 0.0
    %4574 = vmatpush1.msra.mxu0 0.0
    %4575 = vmatprep.subr.mxu0 0.0
    %4576 = vmatpush1.msra.mxu0 0.0
    %4577 = vmatprep.subr.mxu0 0.0
    %4578 = vmatpush1.msra.mxu0 0.0
    %4579 = vmatprep.subr.mxu0 0.0
    %4580 = vmatpush1.msra.mxu0 0.0
    %4581 = vmatprep.subr.mxu0 0.0
    %4582 = vmatpush1.msra.mxu0 0.0
    %4583 = vmatprep.subr.mxu0 0.0
    %4584 = vmatpush1.msra.mxu0 0.0
    %4585 = vmatprep.subr.mxu0 0.0
    %4586 = vmatpush1.msra.mxu0 0.0
    %4587 = vmatprep.subr.mxu0 0.0
    %4588 = vmatpush1.msra.mxu0 0.0
    %4589 = vmatprep.subr.mxu0 0.0
    %4590 = vmatpush1.msra.mxu0 0.0
    %4591 = vmatprep.subr.mxu0 0.0
    %4592 = vmatpush1.msra.mxu0 0.0
    %4593 = vmatprep.subr.mxu0 0.0
    %4594 = vmatpush1.msra.mxu0 0.0
    %4595 = vmatprep.subr.mxu0 0.0
    %4596 = vmatpush1.msra.mxu0 0.0
    %4597 = vmatprep.subr.mxu0 0.0
    %4598 = vmatpush1.msra.mxu0 0.0
    %4599 = vmatprep.subr.mxu0 0.0
    %4600 = vmatpush1.msra.mxu0 0.0
    %4601 = vmatprep.subr.mxu0 0.0
    %4602 = vmatpush1.msra.mxu0 0.0
    %4603 = vmatprep.subr.mxu0 0.0
    %4604 = vmatpush1.msra.mxu0 0.0
    %4605 = vmatprep.mubr.f32.mxu0 0.0
    %4606 = vmatmul.mubr.f32.gmra.mrb[0].mxu0 %v4311
    %v4607 = vpop.f32.mrb[0].mxu0
    %v4608 = vadd.f32 %v4538, %v4607
    %v4609 = vpop.f32.mrb[0].mxu0
    %4610 = vdwg.mxu0
    %v4611 = vadd.f32 %v4608, %v2239
    %v4612 = vtanh.pop %v4611
    %v4614 = vsel %vm138, %v4612, 0
    %4616 = vmatprep.subr.mxu0 0.0
    %4617 = vmatpush1.msra.mxu0 %v2240
    %4618 = vmatprep.subr.mxu0 0.0
    %4619 = vmatpush1.msra.mxu0 %v2241
    %4620 = vmatprep.subr.mxu0 0.0
    %4621 = vmatpush1.msra.mxu0 %v2242
    %4622 = vmatprep.subr.mxu0 0.0
    %4623 = vmatpush1.msra.mxu0 %v2243
    %4624 = vmatprep.subr.mxu0 0.0
    %4625 = vmatpush1.msra.mxu0 0.0
    %4626 = vmatprep.subr.mxu0 0.0
    %4627 = vmatpush1.msra.mxu0 0.0
    %4628 = vmatprep.subr.mxu0 0.0
    %4629 = vmatpush1.msra.mxu0 0.0
    %4630 = vmatprep.subr.mxu0 0.0
    %4631 = vmatpush1.msra.mxu0 0.0
    %4632 = vmatprep.subr.mxu0 0.0
    %4633 = vmatpush1.msra.mxu0 0.0
    %4634 = vmatprep.subr.mxu0 0.0
    %4635 = vmatpush1.msra.mxu0 0.0
    %4636 = vmatprep.subr.mxu0 0.0
    %4637 = vmatpush1.msra.mxu0 0.0
    %4638 = vmatprep.subr.mxu0 0.0
    %4639 = vmatpush1.msra.mxu0 0.0
    %4640 = vmatprep.subr.mxu0 0.0
    %4641 = vmatpush1.msra.mxu0 0.0
    %4642 = vmatprep.subr.mxu0 0.0
    %4643 = vmatpush1.msra.mxu0 0.0
    %4644 = vmatprep.subr.mxu0 0.0
    %4645 = vmatpush1.msra.mxu0 0.0
    %4646 = vmatprep.subr.mxu0 0.0
    %4647 = vmatpush1.msra.mxu0 0.0
    %4648 = vmatprep.subr.mxu0 0.0
    %4649 = vmatpush1.msra.mxu0 0.0
    %4650 = vmatprep.subr.mxu0 0.0
    %4651 = vmatpush1.msra.mxu0 0.0
    %4652 = vmatprep.subr.mxu0 0.0
    %4653 = vmatpush1.msra.mxu0 0.0
    %4654 = vmatprep.subr.mxu0 0.0
    %4655 = vmatpush1.msra.mxu0 0.0
    %4656 = vmatprep.subr.mxu0 0.0
    %4657 = vmatpush1.msra.mxu0 0.0
    %4658 = vmatprep.subr.mxu0 0.0
    %4659 = vmatpush1.msra.mxu0 0.0
    %4660 = vmatprep.subr.mxu0 0.0
    %4661 = vmatpush1.msra.mxu0 0.0
    %4662 = vmatprep.subr.mxu0 0.0
    %4663 = vmatpush1.msra.mxu0 0.0
    %4664 = vmatprep.subr.mxu0 0.0
    %4665 = vmatpush1.msra.mxu0 0.0
    %4666 = vmatprep.subr.mxu0 0.0
    %4667 = vmatpush1.msra.mxu0 0.0
    %4668 = vmatprep.subr.mxu0 0.0
    %4669 = vmatpush1.msra.mxu0 0.0
    %4670 = vmatprep.subr.mxu0 0.0
    %4671 = vmatpush1.msra.mxu0 0.0
    %4672 = vmatprep.subr.mxu0 0.0
    %4673 = vmatpush1.msra.mxu0 0.0
    %4674 = vmatprep.subr.mxu0 0.0
    %4675 = vmatpush1.msra.mxu0 0.0
    %4676 = vmatprep.subr.mxu0 0.0
    %4677 = vmatpush1.msra.mxu0 0.0
    %4678 = vmatprep.subr.mxu0 0.0
    %4679 = vmatpush1.msra.mxu0 0.0
    %4680 = vmatprep.mubr.f32.mxu0 0.0
    %4681 = vmatmul.mubr.f32.gmra.mrb[0].mxu0 %v4614
    %v4682 = vpop.f32.mrb[0].mxu0
    %v4683 = vadd.f32 %v2244, %v4682
    %v4684 = vpop.f32.mrb[0].mxu0
    %4685 = vdwg.mxu0
    %v4686 = vsel %vm2819, %v4683, -inf
    %4687 = vmax.xlane.f32.xlu0 %v4686
    %v4688 = vpop.xlane.xlu0 %4687
    %v4689 = vrot.slane %v4688, 4
    %v4690 = vmax.f32 %v4688, %v4689
    %v4691 = vrot.slane %v4690, 2
    %v4692 = vmax.f32 %v4690, %v4691
    %v4693 = vrot.slane %v4692, 1
    %v4694 = vmax.f32 %v4692, %v4693
    %s4695 = vtos %v4694
    %v4696 = vstv %s4695
    %v4697 = vsub.f32 %v4683, %v4696
    %v4698 = vmul.f32 %v4697, 1.442695
    %v4699 = vpow.pop %v4698
    %v4700 = vsel %vm2819, %v4699, 0.0
    %4701 = vadd.xlane.f32.xlu0 %v4700
    %v4702 = vpop.xlane.xlu0 %4701
    %v4703 = vrot.slane %v4702, 4
    %v4704 = vadd.f32 %v4702, %v4703
    %v4705 = vrot.slane %v4704, 2
    %v4706 = vadd.f32 %v4704, %v4705
    %v4707 = vrot.slane %v4706, 1
    %v4708 = vadd.f32 %v4706, %v4707
    %s4709 = vtos %v4708
    %v4710 = vstv %s4709
    %v4711 = vrcp.pop %v4710
    %s4712 = vtos %v4711
    %vm4713 = vcmp.eq.f32.partialorder %v4683, %v4696
    %v4714 = vsel %vm4713, %v2246, 128
    %v4715 = vsel %vm2819, %v4714, 2147483647
    %v4716 = vand.u32 %v4715, 65535
    %v4717 = vshra.s32 %v4715, 16
    %v4718 = vcvt.s32.f32 %v4716
    %v4719 = vcvt.s32.f32 %v4717
    %4720 = vmin.xlane.f32.xlu0 %v4719
    %v4721 = vpop.xlane.xlu0 %4720
    %vm4722 = vcmp.eq.f32.partialorder %v4719, %v4721
    %v4723 = vsel %vm4722, %v4718, inf
    %4724 = vmin.xlane.f32.xlu0 %v4723
    %v4725 = vpop.xlane.xlu0 %4724
    %v4726 = vcvt.f32.s32 %v4725
    %v4727 = vcvt.f32.s32 %v4721
    %v4728 = vshll.u32 %v4727, 16
    %v4729 = vadd.s32 %v4728, %v4726
    %v4730 = vrot.slane %v4729, 4
    %vm4731 = vcmp.lt.s32.totalorder %v4729, %v4730
    %v4732 = vsel %vm4731, %v4729, %v4730
    %v4733 = vrot.slane %v4732, 2
    %vm4734 = vcmp.lt.s32.totalorder %v4732, %v4733
    %v4735 = vsel %vm4734, %v4732, %v4733
    %v4736 = vrot.slane %v4735, 1
    %vm4737 = vcmp.lt.s32.totalorder %v4735, %v4736
    %v4738 = vsel %vm4737, %v4735, %v4736
    %s4739 = vtos %v4738
    %s4740 = scalar_lea.smem [#allocation15], 3
    %4741 = sst [smem:[%s4740]] %s4739
    %s4742 = scalar_lea.smem [#allocation16], 3
    %4743 = sst [smem:[%s4742]] %s4712
    %4744 = sst [smem:[%s2249]] %s4739
    %s4745 = sld [smem:[#allocation8]]
    %s4746 = scalar_lea.vmem %s2, %s4745
    %v4747 = vld [vmem:[%s4746] sm:$0x1]
    %v4749 = vsel %vm138, %v4747, 0
    %4751 = vmatprep.subr.mxu0 0.0
    %4752 = vmatpush1.msra.mxu0 %v2221
    %4753 = vmatprep.subr.mxu0 0.0
    %4754 = vmatpush1.msra.mxu0 %v2222
    %4755 = vmatprep.subr.mxu0 0.0
    %4756 = vmatpush1.msra.mxu0 %v2223
    %4757 = vmatprep.subr.mxu0 0.0
    %4758 = vmatpush1.msra.mxu0 %v2224
    %4759 = vmatprep.subr.mxu0 0.0
    %4760 = vmatpush1.msra.mxu0 0.0
    %4761 = vmatprep.subr.mxu0 0.0
    %4762 = vmatpush1.msra.mxu0 0.0
    %4763 = vmatprep.subr.mxu0 0.0
    %4764 = vmatpush1.msra.mxu0 0.0
    %4765 = vmatprep.subr.mxu0 0.0
    %4766 = vmatpush1.msra.mxu0 0.0
    %4767 = vmatprep.subr.mxu0 0.0
    %4768 = vmatpush1.msra.mxu0 0.0
    %4769 = vmatprep.subr.mxu0 0.0
    %4770 = vmatpush1.msra.mxu0 0.0
    %4771 = vmatprep.subr.mxu0 0.0
    %4772 = vmatpush1.msra.mxu0 0.0
    %4773 = vmatprep.subr.mxu0 0.0
    %4774 = vmatpush1.msra.mxu0 0.0
    %4775 = vmatprep.subr.mxu0 0.0
    %4776 = vmatpush1.msra.mxu0 0.0
    %4777 = vmatprep.subr.mxu0 0.0
    %4778 = vmatpush1.msra.mxu0 0.0
    %4779 = vmatprep.subr.mxu0 0.0
    %4780 = vmatpush1.msra.mxu0 0.0
    %4781 = vmatprep.subr.mxu0 0.0
    %4782 = vmatpush1.msra.mxu0 0.0
    %4783 = vmatprep.subr.mxu0 0.0
    %4784 = vmatpush1.msra.mxu0 0.0
    %4785 = vmatprep.subr.mxu0 0.0
    %4786 = vmatpush1.msra.mxu0 0.0
    %4787 = vmatprep.subr.mxu0 0.0
    %4788 = vmatpush1.msra.mxu0 0.0
    %4789 = vmatprep.subr.mxu0 0.0
    %4790 = vmatpush1.msra.mxu0 0.0
    %4791 = vmatprep.subr.mxu0 0.0
    %4792 = vmatpush1.msra.mxu0 0.0
    %4793 = vmatprep.subr.mxu0 0.0
    %4794 = vmatpush1.msra.mxu0 0.0
    %4795 = vmatprep.subr.mxu0 0.0
    %4796 = vmatpush1.msra.mxu0 0.0
    %4797 = vmatprep.subr.mxu0 0.0
    %4798 = vmatpush1.msra.mxu0 0.0
    %4799 = vmatprep.subr.mxu0 0.0
    %4800 = vmatpush1.msra.mxu0 0.0
    %4801 = vmatprep.subr.mxu0 0.0
    %4802 = vmatpush1.msra.mxu0 0.0
    %4803 = vmatprep.subr.mxu0 0.0
    %4804 = vmatpush1.msra.mxu0 0.0
    %4805 = vmatprep.subr.mxu0 0.0
    %4806 = vmatpush1.msra.mxu0 0.0
    %4807 = vmatprep.subr.mxu0 0.0
    %4808 = vmatpush1.msra.mxu0 0.0
    %4809 = vmatprep.subr.mxu0 0.0
    %4810 = vmatpush1.msra.mxu0 0.0
    %4811 = vmatprep.subr.mxu0 0.0
    %4812 = vmatpush1.msra.mxu0 0.0
    %4813 = vmatprep.subr.mxu0 0.0
    %4814 = vmatpush1.msra.mxu0 0.0
    %4815 = vmatprep.mubr.f32.mxu0 0.0
    %4816 = vmatmul.mubr.f32.gmra.mrb[0].mxu0 %v4749
    %v4817 = vpop.f32.mrb[0].mxu0
    %v4818 = vadd.f32 %v2229, %v4817
    %v4819 = vpop.f32.mrb[0].mxu0
    %4820 = vdwg.mxu0
    %v4821 = vld [vmem:[#allocation7] sm:$0x1]
    %v4823 = vsel %vm138, %v4821, 0
    %4825 = vmatprep.subr.mxu0 0.0
    %4826 = vmatpush1.msra.mxu0 %v2225
    %4827 = vmatprep.subr.mxu0 0.0
    %4828 = vmatpush1.msra.mxu0 %v2226
    %4829 = vmatprep.subr.mxu0 0.0
    %4830 = vmatpush1.msra.mxu0 %v2227
    %4831 = vmatprep.subr.mxu0 0.0
    %4832 = vmatpush1.msra.mxu0 %v2228
    %4833 = vmatprep.subr.mxu0 0.0
    %4834 = vmatpush1.msra.mxu0 0.0
    %4835 = vmatprep.subr.mxu0 0.0
    %4836 = vmatpush1.msra.mxu0 0.0
    %4837 = vmatprep.subr.mxu0 0.0
    %4838 = vmatpush1.msra.mxu0 0.0
    %4839 = vmatprep.subr.mxu0 0.0
    %4840 = vmatpush1.msra.mxu0 0.0
    %4841 = vmatprep.subr.mxu0 0.0
    %4842 = vmatpush1.msra.mxu0 0.0
    %4843 = vmatprep.subr.mxu0 0.0
    %4844 = vmatpush1.msra.mxu0 0.0
    %4845 = vmatprep.subr.mxu0 0.0
    %4846 = vmatpush1.msra.mxu0 0.0
    %4847 = vmatprep.subr.mxu0 0.0
    %4848 = vmatpush1.msra.mxu0 0.0
    %4849 = vmatprep.subr.mxu0 0.0
    %4850 = vmatpush1.msra.mxu0 0.0
    %4851 = vmatprep.subr.mxu0 0.0
    %4852 = vmatpush1.msra.mxu0 0.0
    %4853 = vmatprep.subr.mxu0 0.0
    %4854 = vmatpush1.msra.mxu0 0.0
    %4855 = vmatprep.subr.mxu0 0.0
    %4856 = vmatpush1.msra.mxu0 0.0
    %4857 = vmatprep.subr.mxu0 0.0
    %4858 = vmatpush1.msra.mxu0 0.0
    %4859 = vmatprep.subr.mxu0 0.0
    %4860 = vmatpush1.msra.mxu0 0.0
    %4861 = vmatprep.subr.mxu0 0.0
    %4862 = vmatpush1.msra.mxu0 0.0
    %4863 = vmatprep.subr.mxu0 0.0
    %4864 = vmatpush1.msra.mxu0 0.0
    %4865 = vmatprep.subr.mxu0 0.0
    %4866 = vmatpush1.msra.mxu0 0.0
    %4867 = vmatprep.subr.mxu0 0.0
    %4868 = vmatpush1.msra.mxu0 0.0
    %4869 = vmatprep.subr.mxu0 0.0
    %4870 = vmatpush1.msra.mxu0 0.0
    %4871 = vmatprep.subr.mxu0 0.0
    %4872 = vmatpush1.msra.mxu0 0.0
    %4873 = vmatprep.subr.mxu0 0.0
    %4874 = vmatpush1.msra.mxu0 0.0
    %4875 = vmatprep.subr.mxu0 0.0
    %4876 = vmatpush1.msra.mxu0 0.0
    %4877 = vmatprep.subr.mxu0 0.0
    %4878 = vmatpush1.msra.mxu0 0.0
    %4879 = vmatprep.subr.mxu0 0.0
    %4880 = vmatpush1.msra.mxu0 0.0
    %4881 = vmatprep.subr.mxu0 0.0
    %4882 = vmatpush1.msra.mxu0 0.0
    %4883 = vmatprep.subr.mxu0 0.0
    %4884 = vmatpush1.msra.mxu0 0.0
    %4885 = vmatprep.subr.mxu0 0.0
    %4886 = vmatpush1.msra.mxu0 0.0
    %4887 = vmatprep.subr.mxu0 0.0
    %4888 = vmatpush1.msra.mxu0 0.0
    %4889 = vmatprep.mubr.f32.mxu0 0.0
    %4890 = vmatmul.mubr.f32.gmra.mrb[0].mxu0 %v4823
    %v4891 = vpop.f32.mrb[0].mxu0
    %v4892 = vadd.f32 %v2230, %v4891
    %v4893 = vpop.f32.mrb[0].mxu0
    %4894 = vdwg.mxu0
    %v4895 = vadd.f32 %v4818, %v4892
    %v4896 = vxor.u32 %v4895, 2147483648
    %v4897 = vmul.f32 %v4896, 1.442695
    %v4898 = vpow.pop %v4897
    %v4899 = vadd.f32 %v4898, 1.0
    %v4900 = vrcp.pop %v4899
    %v4901 = vmul.f32 1.0, %v4900
    %4903 = vrot.lane.b32.xlu0 %v4892, 64
    %v4904 = vpop.permute.xlu0 %4903
    %v4906 = vmul.f32 %v4901, %v4904
    %4908 = vrot.lane.b32.xlu0 %v4906, 64
    %v4909 = vpop.permute.xlu0 %4908
    %v4911 = vadd.f32 %v4818, %v4909
    %v4912 = vtanh.pop %v4911
    %v4913 = vsub.f32 1.0, %v4901
    %4915 = vrot.lane.b32.xlu0 %v4912, 96
    %v4916 = vpop.permute.xlu0 %4915
    %v4918 = vmul.f32 %v4913, %v4916
    %v4919 = vlaneseq
    %v4920 = vshrl.u32 %v4919, 7
    %v4921 = vsub.s32 0, %v4920
    %v4922 = vrot.slane %v4821, %v4921
    %4923 = vrot.lane.b32.xlu0 %v4922, 32
    %v4924 = vpop.permute.xlu0 %4923
    %v4926 = vmul.f32 %v4901, %v4924
    %v4927 = vadd.f32 %v4918, %v4926
    %4929 = vrot.lane.b32.xlu0 %v4927, 96
    %v4930 = vpop.permute.xlu0 %4929
    %4932 = vst.msk [vmem:[#allocation7] sm:$0x1] %vm96, %v4930
    %v4933 = vsel %vm138, %v4930, 0
    %4935 = vmatprep.subr.mxu0 0.0
    %4936 = vmatpush1.xpose.msra.mxu0 %v2442
    %4937 = vmatprep.subr.mxu0 0.0
    %4938 = vmatpush1.xpose.msra.mxu0 0.0
    %4939 = vmatprep.subr.mxu0 0.0
    %4940 = vmatpush1.xpose.msra.mxu0 0.0
    %4941 = vmatprep.subr.mxu0 0.0
    %4942 = vmatpush1.xpose.msra.mxu0 0.0
    %4943 = vmatprep.subr.mxu0 0.0
    %4944 = vmatpush1.xpose.msra.mxu0 0.0
    %4945 = vmatprep.subr.mxu0 0.0
    %4946 = vmatpush1.xpose.msra.mxu0 0.0
    %4947 = vmatprep.subr.mxu0 0.0
    %4948 = vmatpush1.xpose.msra.mxu0 0.0
    %4949 = vmatprep.subr.mxu0 0.0
    %4950 = vmatpush1.xpose.msra.mxu0 0.0
    %4951 = vmatprep.subr.mxu0 0.0
    %4952 = vmatpush1.xpose.msra.mxu0 0.0
    %4953 = vmatprep.subr.mxu0 0.0
    %4954 = vmatpush1.xpose.msra.mxu0 0.0
    %4955 = vmatprep.subr.mxu0 0.0
    %4956 = vmatpush1.xpose.msra.mxu0 0.0
    %4957 = vmatprep.subr.mxu0 0.0
    %4958 = vmatpush1.xpose.msra.mxu0 0.0
    %4959 = vmatprep.subr.mxu0 0.0
    %4960 = vmatpush1.xpose.msra.mxu0 0.0
    %4961 = vmatprep.subr.mxu0 0.0
    %4962 = vmatpush1.xpose.msra.mxu0 0.0
    %4963 = vmatprep.subr.mxu0 0.0
    %4964 = vmatpush1.xpose.msra.mxu0 0.0
    %4965 = vmatprep.subr.mxu0 0.0
    %4966 = vmatpush1.xpose.msra.mxu0 0.0
    %4967 = vmatprep.subr.mxu0 0.0
    %4968 = vmatpush1.xpose.msra.mxu0 0.0
    %4969 = vmatprep.subr.mxu0 0.0
    %4970 = vmatpush1.xpose.msra.mxu0 0.0
    %4971 = vmatprep.subr.mxu0 0.0
    %4972 = vmatpush1.xpose.msra.mxu0 0.0
    %4973 = vmatprep.subr.mxu0 0.0
    %4974 = vmatpush1.xpose.msra.mxu0 0.0
    %4975 = vmatprep.subr.mxu0 0.0
    %4976 = vmatpush1.xpose.msra.mxu0 0.0
    %4977 = vmatprep.subr.mxu0 0.0
    %4978 = vmatpush1.xpose.msra.mxu0 0.0
    %4979 = vmatprep.subr.mxu0 0.0
    %4980 = vmatpush1.xpose.msra.mxu0 0.0
    %4981 = vmatprep.subr.mxu0 0.0
    %4982 = vmatpush1.xpose.msra.mxu0 0.0
    %4983 = vmatprep.subr.mxu0 0.0
    %4984 = vmatpush1.xpose.msra.mxu0 0.0
    %4985 = vmatprep.subr.mxu0 0.0
    %4986 = vmatpush1.xpose.msra.mxu0 0.0
    %4987 = vmatprep.subr.mxu0 0.0
    %4988 = vmatpush1.xpose.msra.mxu0 0.0
    %4989 = vmatprep.subr.mxu0 0.0
    %4990 = vmatpush1.xpose.msra.mxu0 0.0
    %4991 = vmatprep.subr.mxu0 0.0
    %4992 = vmatpush1.xpose.msra.mxu0 0.0
    %4993 = vmatprep.subr.mxu0 0.0
    %4994 = vmatpush1.xpose.msra.mxu0 0.0
    %4995 = vmatprep.subr.mxu0 0.0
    %4996 = vmatpush1.xpose.msra.mxu0 0.0
    %4997 = vmatprep.subr.mxu0 0.0
    %4998 = vmatpush1.xpose.msra.mxu0 0.0
    %4999 = vmatprep.mubr.f32.mxu0 0.0
    %5000 = vmatmul.mubr.f32.gmra.mrb[0].mxu0 %v4933
    %v5001 = vpop.f32.mrb[0].mxu0
    %v5002 = vadd.f32 0.0, %v5001
    %v5003 = vpop.f32.mrb[0].mxu0
    %5004 = vdwg.mxu0
    %v5005 = vsel %vm2248, %v5002, -1e+30
    %v5006 = vsel %vm2515, %v5005, -inf
    %5007 = vmax.xlane.f32.xlu0 %v5006
    %v5008 = vpop.xlane.xlu0 %5007
    %v5009 = vsub.f32 %v5005, %v5008
    %v5010 = vmul.f32 %v5009, 1.442695
    %v5011 = vpow.pop %v5010
    %v5012 = vsel %vm2515, %v5011, 0.0
    %5013 = vadd.xlane.f32.xlu0 %v5012
    %v5014 = vpop.xlane.xlu0 %5013
    %v5015 = vrcp.pop %v5014
    %v5016 = vmul.f32 %v5011, %v5015
    %v5018 = vsel %vm2527, %v5016, 0
    %5020 = vmatprep.subr.mxu0 0.0
    %5021 = vmatpush1.msra.mxu0 %v2220
    %5022 = vmatprep.subr.mxu0 0.0
    %5023 = vmatpush1.msra.mxu0 0.0
    %5024 = vmatprep.subr.mxu0 0.0
    %5025 = vmatpush1.msra.mxu0 0.0
    %5026 = vmatprep.subr.mxu0 0.0
    %5027 = vmatpush1.msra.mxu0 0.0
    %5028 = vmatprep.subr.mxu0 0.0
    %5029 = vmatpush1.msra.mxu0 0.0
    %5030 = vmatprep.subr.mxu0 0.0
    %5031 = vmatpush1.msra.mxu0 0.0
    %5032 = vmatprep.subr.mxu0 0.0
    %5033 = vmatpush1.msra.mxu0 0.0
    %5034 = vmatprep.subr.mxu0 0.0
    %5035 = vmatpush1.msra.mxu0 0.0
    %5036 = vmatprep.subr.mxu0 0.0
    %5037 = vmatpush1.msra.mxu0 0.0
    %5038 = vmatprep.subr.mxu0 0.0
    %5039 = vmatpush1.msra.mxu0 0.0
    %5040 = vmatprep.subr.mxu0 0.0
    %5041 = vmatpush1.msra.mxu0 0.0
    %5042 = vmatprep.subr.mxu0 0.0
    %5043 = vmatpush1.msra.mxu0 0.0
    %5044 = vmatprep.subr.mxu0 0.0
    %5045 = vmatpush1.msra.mxu0 0.0
    %5046 = vmatprep.subr.mxu0 0.0
    %5047 = vmatpush1.msra.mxu0 0.0
    %5048 = vmatprep.subr.mxu0 0.0
    %5049 = vmatpush1.msra.mxu0 0.0
    %5050 = vmatprep.subr.mxu0 0.0
    %5051 = vmatpush1.msra.mxu0 0.0
    %5052 = vmatprep.subr.mxu0 0.0
    %5053 = vmatpush1.msra.mxu0 0.0
    %5054 = vmatprep.subr.mxu0 0.0
    %5055 = vmatpush1.msra.mxu0 0.0
    %5056 = vmatprep.subr.mxu0 0.0
    %5057 = vmatpush1.msra.mxu0 0.0
    %5058 = vmatprep.subr.mxu0 0.0
    %5059 = vmatpush1.msra.mxu0 0.0
    %5060 = vmatprep.subr.mxu0 0.0
    %5061 = vmatpush1.msra.mxu0 0.0
    %5062 = vmatprep.subr.mxu0 0.0
    %5063 = vmatpush1.msra.mxu0 0.0
    %5064 = vmatprep.subr.mxu0 0.0
    %5065 = vmatpush1.msra.mxu0 0.0
    %5066 = vmatprep.subr.mxu0 0.0
    %5067 = vmatpush1.msra.mxu0 0.0
    %5068 = vmatprep.subr.mxu0 0.0
    %5069 = vmatpush1.msra.mxu0 0.0
    %5070 = vmatprep.subr.mxu0 0.0
    %5071 = vmatpush1.msra.mxu0 0.0
    %5072 = vmatprep.subr.mxu0 0.0
    %5073 = vmatpush1.msra.mxu0 0.0
    %5074 = vmatprep.subr.mxu0 0.0
    %5075 = vmatpush1.msra.mxu0 0.0
    %5076 = vmatprep.subr.mxu0 0.0
    %5077 = vmatpush1.msra.mxu0 0.0
    %5078 = vmatprep.subr.mxu0 0.0
    %5079 = vmatpush1.msra.mxu0 0.0
    %5080 = vmatprep.subr.mxu0 0.0
    %5081 = vmatpush1.msra.mxu0 0.0
    %5082 = vmatprep.subr.mxu0 0.0
    %5083 = vmatpush1.msra.mxu0 0.0
    %5084 = vmatprep.mubr.f32.mxu0 0.0
    %5085 = vmatmul.mubr.f32.gmra.mrb[0].mxu0 %v5018
    %v5086 = vpop.f32.mrb[0].mxu0
    %v5087 = vadd.f32 0.0, %v5086
    %v5088 = vpop.f32.mrb[0].mxu0
    %5089 = vdwg.mxu0
    %v5091 = vsel %vm138, %v5087, 0
    %5093 = vmatprep.subr.mxu0 0.0
    %5094 = vmatpush1.msra.mxu0 %v2235
    %5095 = vmatprep.subr.mxu0 0.0
    %5096 = vmatpush1.msra.mxu0 %v2236
    %5097 = vmatprep.subr.mxu0 0.0
    %5098 = vmatpush1.msra.mxu0 %v2237
    %5099 = vmatprep.subr.mxu0 0.0
    %5100 = vmatpush1.msra.mxu0 %v2238
    %5101 = vmatprep.subr.mxu0 0.0
    %5102 = vmatpush1.msra.mxu0 0.0
    %5103 = vmatprep.subr.mxu0 0.0
    %5104 = vmatpush1.msra.mxu0 0.0
    %5105 = vmatprep.subr.mxu0 0.0
    %5106 = vmatpush1.msra.mxu0 0.0
    %5107 = vmatprep.subr.mxu0 0.0
    %5108 = vmatpush1.msra.mxu0 0.0
    %5109 = vmatprep.subr.mxu0 0.0
    %5110 = vmatpush1.msra.mxu0 0.0
    %5111 = vmatprep.subr.mxu0 0.0
    %5112 = vmatpush1.msra.mxu0 0.0
    %5113 = vmatprep.subr.mxu0 0.0
    %5114 = vmatpush1.msra.mxu0 0.0
    %5115 = vmatprep.subr.mxu0 0.0
    %5116 = vmatpush1.msra.mxu0 0.0
    %5117 = vmatprep.subr.mxu0 0.0
    %5118 = vmatpush1.msra.mxu0 0.0
    %5119 = vmatprep.subr.mxu0 0.0
    %5120 = vmatpush1.msra.mxu0 0.0
    %5121 = vmatprep.subr.mxu0 0.0
    %5122 = vmatpush1.msra.mxu0 0.0
    %5123 = vmatprep.subr.mxu0 0.0
    %5124 = vmatpush1.msra.mxu0 0.0
    %5125 = vmatprep.subr.mxu0 0.0
    %5126 = vmatpush1.msra.mxu0 0.0
    %5127 = vmatprep.subr.mxu0 0.0
    %5128 = vmatpush1.msra.mxu0 0.0
    %5129 = vmatprep.subr.mxu0 0.0
    %5130 = vmatpush1.msra.mxu0 0.0
    %5131 = vmatprep.subr.mxu0 0.0
    %5132 = vmatpush1.msra.mxu0 0.0
    %5133 = vmatprep.subr.mxu0 0.0
    %5134 = vmatpush1.msra.mxu0 0.0
    %5135 = vmatprep.subr.mxu0 0.0
    %5136 = vmatpush1.msra.mxu0 0.0
    %5137 = vmatprep.subr.mxu0 0.0
    %5138 = vmatpush1.msra.mxu0 0.0
    %5139 = vmatprep.subr.mxu0 0.0
    %5140 = vmatpush1.msra.mxu0 0.0
    %5141 = vmatprep.subr.mxu0 0.0
    %5142 = vmatpush1.msra.mxu0 0.0
    %5143 = vmatprep.subr.mxu0 0.0
    %5144 = vmatpush1.msra.mxu0 0.0
    %5145 = vmatprep.subr.mxu0 0.0
    %5146 = vmatpush1.msra.mxu0 0.0
    %5147 = vmatprep.subr.mxu0 0.0
    %5148 = vmatpush1.msra.mxu0 0.0
    %5149 = vmatprep.subr.mxu0 0.0
    %5150 = vmatpush1.msra.mxu0 0.0
    %5151 = vmatprep.subr.mxu0 0.0
    %5152 = vmatpush1.msra.mxu0 0.0
    %5153 = vmatprep.subr.mxu0 0.0
    %5154 = vmatpush1.msra.mxu0 0.0
    %5155 = vmatprep.subr.mxu0 0.0
    %5156 = vmatpush1.msra.mxu0 0.0
    %5157 = vmatprep.mubr.f32.mxu0 0.0
    %5158 = vmatmul.mubr.f32.gmra.mrb[0].mxu0 %v5091
    %v5159 = vpop.f32.mrb[0].mxu0
    %v5160 = vadd.f32 0.0, %v5159
    %v5161 = vpop.f32.mrb[0].mxu0
    %5162 = vdwg.mxu0
    %5163 = vmatprep.subr.mxu0 0.0
    %5164 = vmatpush1.msra.mxu0 %v2231
    %5165 = vmatprep.subr.mxu0 0.0
    %5166 = vmatpush1.msra.mxu0 %v2232
    %5167 = vmatprep.subr.mxu0 0.0
    %5168 = vmatpush1.msra.mxu0 %v2233
    %5169 = vmatprep.subr.mxu0 0.0
    %5170 = vmatpush1.msra.mxu0 %v2234
    %5171 = vmatprep.subr.mxu0 0.0
    %5172 = vmatpush1.msra.mxu0 0.0
    %5173 = vmatprep.subr.mxu0 0.0
    %5174 = vmatpush1.msra.mxu0 0.0
    %5175 = vmatprep.subr.mxu0 0.0
    %5176 = vmatpush1.msra.mxu0 0.0
    %5177 = vmatprep.subr.mxu0 0.0
    %5178 = vmatpush1.msra.mxu0 0.0
    %5179 = vmatprep.subr.mxu0 0.0
    %5180 = vmatpush1.msra.mxu0 0.0
    %5181 = vmatprep.subr.mxu0 0.0
    %5182 = vmatpush1.msra.mxu0 0.0
    %5183 = vmatprep.subr.mxu0 0.0
    %5184 = vmatpush1.msra.mxu0 0.0
    %5185 = vmatprep.subr.mxu0 0.0
    %5186 = vmatpush1.msra.mxu0 0.0
    %5187 = vmatprep.subr.mxu0 0.0
    %5188 = vmatpush1.msra.mxu0 0.0
    %5189 = vmatprep.subr.mxu0 0.0
    %5190 = vmatpush1.msra.mxu0 0.0
    %5191 = vmatprep.subr.mxu0 0.0
    %5192 = vmatpush1.msra.mxu0 0.0
    %5193 = vmatprep.subr.mxu0 0.0
    %5194 = vmatpush1.msra.mxu0 0.0
    %5195 = vmatprep.subr.mxu0 0.0
    %5196 = vmatpush1.msra.mxu0 0.0
    %5197 = vmatprep.subr.mxu0 0.0
    %5198 = vmatpush1.msra.mxu0 0.0
    %5199 = vmatprep.subr.mxu0 0.0
    %5200 = vmatpush1.msra.mxu0 0.0
    %5201 = vmatprep.subr.mxu0 0.0
    %5202 = vmatpush1.msra.mxu0 0.0
    %5203 = vmatprep.subr.mxu0 0.0
    %5204 = vmatpush1.msra.mxu0 0.0
    %5205 = vmatprep.subr.mxu0 0.0
    %5206 = vmatpush1.msra.mxu0 0.0
    %5207 = vmatprep.subr.mxu0 0.0
    %5208 = vmatpush1.msra.mxu0 0.0
    %5209 = vmatprep.subr.mxu0 0.0
    %5210 = vmatpush1.msra.mxu0 0.0
    %5211 = vmatprep.subr.mxu0 0.0
    %5212 = vmatpush1.msra.mxu0 0.0
    %5213 = vmatprep.subr.mxu0 0.0
    %5214 = vmatpush1.msra.mxu0 0.0
    %5215 = vmatprep.subr.mxu0 0.0
    %5216 = vmatpush1.msra.mxu0 0.0
    %5217 = vmatprep.subr.mxu0 0.0
    %5218 = vmatpush1.msra.mxu0 0.0
    %5219 = vmatprep.subr.mxu0 0.0
    %5220 = vmatpush1.msra.mxu0 0.0
    %5221 = vmatprep.subr.mxu0 0.0
    %5222 = vmatpush1.msra.mxu0 0.0
    %5223 = vmatprep.subr.mxu0 0.0
    %5224 = vmatpush1.msra.mxu0 0.0
    %5225 = vmatprep.subr.mxu0 0.0
    %5226 = vmatpush1.msra.mxu0 0.0
    %5227 = vmatprep.mubr.f32.mxu0 0.0
    %5228 = vmatmul.mubr.f32.gmra.mrb[0].mxu0 %v4933
    %v5229 = vpop.f32.mrb[0].mxu0
    %v5230 = vadd.f32 %v5160, %v5229
    %v5231 = vpop.f32.mrb[0].mxu0
    %5232 = vdwg.mxu0
    %v5233 = vadd.f32 %v5230, %v2239
    %v5234 = vtanh.pop %v5233
    %v5236 = vsel %vm138, %v5234, 0
    %5238 = vmatprep.subr.mxu0 0.0
    %5239 = vmatpush1.msra.mxu0 %v2240
    %5240 = vmatprep.subr.mxu0 0.0
    %5241 = vmatpush1.msra.mxu0 %v2241
    %5242 = vmatprep.subr.mxu0 0.0
    %5243 = vmatpush1.msra.mxu0 %v2242
    %5244 = vmatprep.subr.mxu0 0.0
    %5245 = vmatpush1.msra.mxu0 %v2243
    %5246 = vmatprep.subr.mxu0 0.0
    %5247 = vmatpush1.msra.mxu0 0.0
    %5248 = vmatprep.subr.mxu0 0.0
    %5249 = vmatpush1.msra.mxu0 0.0
    %5250 = vmatprep.subr.mxu0 0.0
    %5251 = vmatpush1.msra.mxu0 0.0
    %5252 = vmatprep.subr.mxu0 0.0
    %5253 = vmatpush1.msra.mxu0 0.0
    %5254 = vmatprep.subr.mxu0 0.0
    %5255 = vmatpush1.msra.mxu0 0.0
    %5256 = vmatprep.subr.mxu0 0.0
    %5257 = vmatpush1.msra.mxu0 0.0
    %5258 = vmatprep.subr.mxu0 0.0
    %5259 = vmatpush1.msra.mxu0 0.0
    %5260 = vmatprep.subr.mxu0 0.0
    %5261 = vmatpush1.msra.mxu0 0.0
    %5262 = vmatprep.subr.mxu0 0.0
    %5263 = vmatpush1.msra.mxu0 0.0
    %5264 = vmatprep.subr.mxu0 0.0
    %5265 = vmatpush1.msra.mxu0 0.0
    %5266 = vmatprep.subr.mxu0 0.0
    %5267 = vmatpush1.msra.mxu0 0.0
    %5268 = vmatprep.subr.mxu0 0.0
    %5269 = vmatpush1.msra.mxu0 0.0
    %5270 = vmatprep.subr.mxu0 0.0
    %5271 = vmatpush1.msra.mxu0 0.0
    %5272 = vmatprep.subr.mxu0 0.0
    %5273 = vmatpush1.msra.mxu0 0.0
    %5274 = vmatprep.subr.mxu0 0.0
    %5275 = vmatpush1.msra.mxu0 0.0
    %5276 = vmatprep.subr.mxu0 0.0
    %5277 = vmatpush1.msra.mxu0 0.0
    %5278 = vmatprep.subr.mxu0 0.0
    %5279 = vmatpush1.msra.mxu0 0.0
    %5280 = vmatprep.subr.mxu0 0.0
    %5281 = vmatpush1.msra.mxu0 0.0
    %5282 = vmatprep.subr.mxu0 0.0
    %5283 = vmatpush1.msra.mxu0 0.0
    %5284 = vmatprep.subr.mxu0 0.0
    %5285 = vmatpush1.msra.mxu0 0.0
    %5286 = vmatprep.subr.mxu0 0.0
    %5287 = vmatpush1.msra.mxu0 0.0
    %5288 = vmatprep.subr.mxu0 0.0
    %5289 = vmatpush1.msra.mxu0 0.0
    %5290 = vmatprep.subr.mxu0 0.0
    %5291 = vmatpush1.msra.mxu0 0.0
    %5292 = vmatprep.subr.mxu0 0.0
    %5293 = vmatpush1.msra.mxu0 0.0
    %5294 = vmatprep.subr.mxu0 0.0
    %5295 = vmatpush1.msra.mxu0 0.0
    %5296 = vmatprep.subr.mxu0 0.0
    %5297 = vmatpush1.msra.mxu0 0.0
    %5298 = vmatprep.subr.mxu0 0.0
    %5299 = vmatpush1.msra.mxu0 0.0
    %5300 = vmatprep.subr.mxu0 0.0
    %5301 = vmatpush1.msra.mxu0 0.0
    %5302 = vmatprep.mubr.f32.mxu0 0.0
    %5303 = vmatmul.mubr.f32.gmra.mrb[0].mxu0 %v5236
    %v5304 = vpop.f32.mrb[0].mxu0
    %v5305 = vadd.f32 %v2244, %v5304
    %v5306 = vpop.f32.mrb[0].mxu0
    %5307 = vdwg.mxu0
    %v5308 = vsel %vm2819, %v5305, -inf
    %5309 = vmax.xlane.f32.xlu0 %v5308
    %v5310 = vpop.xlane.xlu0 %5309
    %v5311 = vrot.slane %v5310, 4
    %v5312 = vmax.f32 %v5310, %v5311
    %v5313 = vrot.slane %v5312, 2
    %v5314 = vmax.f32 %v5312, %v5313
    %v5315 = vrot.slane %v5314, 1
    %v5316 = vmax.f32 %v5314, %v5315
    %s5317 = vtos %v5316
    %v5318 = vstv %s5317
    %v5319 = vsub.f32 %v5305, %v5318
    %v5320 = vmul.f32 %v5319, 1.442695
    %v5321 = vpow.pop %v5320
    %v5322 = vsel %vm2819, %v5321, 0.0
    %5323 = vadd.xlane.f32.xlu0 %v5322
    %v5324 = vpop.xlane.xlu0 %5323
    %v5325 = vrot.slane %v5324, 4
    %v5326 = vadd.f32 %v5324, %v5325
    %v5327 = vrot.slane %v5326, 2
    %v5328 = vadd.f32 %v5326, %v5327
    %v5329 = vrot.slane %v5328, 1
    %v5330 = vadd.f32 %v5328, %v5329
    %s5331 = vtos %v5330
    %v5332 = vstv %s5331
    %v5333 = vrcp.pop %v5332
    %s5334 = vtos %v5333
    %vm5335 = vcmp.eq.f32.partialorder %v5305, %v5318
    %v5336 = vsel %vm5335, %v2246, 128
    %v5337 = vsel %vm2819, %v5336, 2147483647
    %v5338 = vand.u32 %v5337, 65535
    %v5339 = vshra.s32 %v5337, 16
    %v5340 = vcvt.s32.f32 %v5338
    %v5341 = vcvt.s32.f32 %v5339
    %5342 = vmin.xlane.f32.xlu0 %v5341
    %v5343 = vpop.xlane.xlu0 %5342
    %vm5344 = vcmp.eq.f32.partialorder %v5341, %v5343
    %v5345 = vsel %vm5344, %v5340, inf
    %5346 = vmin.xlane.f32.xlu0 %v5345
    %v5347 = vpop.xlane.xlu0 %5346
    %v5348 = vcvt.f32.s32 %v5347
    %v5349 = vcvt.f32.s32 %v5343
    %v5350 = vshll.u32 %v5349, 16
    %v5351 = vadd.s32 %v5350, %v5348
    %v5352 = vrot.slane %v5351, 4
    %vm5353 = vcmp.lt.s32.totalorder %v5351, %v5352
    %v5354 = vsel %vm5353, %v5351, %v5352
    %v5355 = vrot.slane %v5354, 2
    %vm5356 = vcmp.lt.s32.totalorder %v5354, %v5355
    %v5357 = vsel %vm5356, %v5354, %v5355
    %v5358 = vrot.slane %v5357, 1
    %vm5359 = vcmp.lt.s32.totalorder %v5357, %v5358
    %v5360 = vsel %vm5359, %v5357, %v5358
    %s5361 = vtos %v5360
    %s5362 = scalar_lea.smem [#allocation15], 4
    %5363 = sst [smem:[%s5362]] %s5361
    %s5364 = scalar_lea.smem [#allocation16], 4
    %5365 = sst [smem:[%s5364]] %s5334
    %5366 = sst [smem:[%s2249]] %s5361
    %s5367 = sld [smem:[#allocation8]]
    %s5368 = scalar_lea.vmem %s2, %s5367
    %v5369 = vld [vmem:[%s5368] sm:$0x1]
    %v5371 = vsel %vm138, %v5369, 0
    %5373 = vmatprep.subr.mxu0 0.0
    %5374 = vmatpush1.msra.mxu0 %v2221
    %5375 = vmatprep.subr.mxu0 0.0
    %5376 = vmatpush1.msra.mxu0 %v2222
    %5377 = vmatprep.subr.mxu0 0.0
    %5378 = vmatpush1.msra.mxu0 %v2223
    %5379 = vmatprep.subr.mxu0 0.0
    %5380 = vmatpush1.msra.mxu0 %v2224
    %5381 = vmatprep.subr.mxu0 0.0
    %5382 = vmatpush1.msra.mxu0 0.0
    %5383 = vmatprep.subr.mxu0 0.0
    %5384 = vmatpush1.msra.mxu0 0.0
    %5385 = vmatprep.subr.mxu0 0.0
    %5386 = vmatpush1.msra.mxu0 0.0
    %5387 = vmatprep.subr.mxu0 0.0
    %5388 = vmatpush1.msra.mxu0 0.0
    %5389 = vmatprep.subr.mxu0 0.0
    %5390 = vmatpush1.msra.mxu0 0.0
    %5391 = vmatprep.subr.mxu0 0.0
    %5392 = vmatpush1.msra.mxu0 0.0
    %5393 = vmatprep.subr.mxu0 0.0
    %5394 = vmatpush1.msra.mxu0 0.0
    %5395 = vmatprep.subr.mxu0 0.0
    %5396 = vmatpush1.msra.mxu0 0.0
    %5397 = vmatprep.subr.mxu0 0.0
    %5398 = vmatpush1.msra.mxu0 0.0
    %5399 = vmatprep.subr.mxu0 0.0
    %5400 = vmatpush1.msra.mxu0 0.0
    %5401 = vmatprep.subr.mxu0 0.0
    %5402 = vmatpush1.msra.mxu0 0.0
    %5403 = vmatprep.subr.mxu0 0.0
    %5404 = vmatpush1.msra.mxu0 0.0
    %5405 = vmatprep.subr.mxu0 0.0
    %5406 = vmatpush1.msra.mxu0 0.0
    %5407 = vmatprep.subr.mxu0 0.0
    %5408 = vmatpush1.msra.mxu0 0.0
    %5409 = vmatprep.subr.mxu0 0.0
    %5410 = vmatpush1.msra.mxu0 0.0
    %5411 = vmatprep.subr.mxu0 0.0
    %5412 = vmatpush1.msra.mxu0 0.0
    %5413 = vmatprep.subr.mxu0 0.0
    %5414 = vmatpush1.msra.mxu0 0.0
    %5415 = vmatprep.subr.mxu0 0.0
    %5416 = vmatpush1.msra.mxu0 0.0
    %5417 = vmatprep.subr.mxu0 0.0
    %5418 = vmatpush1.msra.mxu0 0.0
    %5419 = vmatprep.subr.mxu0 0.0
    %5420 = vmatpush1.msra.mxu0 0.0
    %5421 = vmatprep.subr.mxu0 0.0
    %5422 = vmatpush1.msra.mxu0 0.0
    %5423 = vmatprep.subr.mxu0 0.0
    %5424 = vmatpush1.msra.mxu0 0.0
    %5425 = vmatprep.subr.mxu0 0.0
    %5426 = vmatpush1.msra.mxu0 0.0
    %5427 = vmatprep.subr.mxu0 0.0
    %5428 = vmatpush1.msra.mxu0 0.0
    %5429 = vmatprep.subr.mxu0 0.0
    %5430 = vmatpush1.msra.mxu0 0.0
    %5431 = vmatprep.subr.mxu0 0.0
    %5432 = vmatpush1.msra.mxu0 0.0
    %5433 = vmatprep.subr.mxu0 0.0
    %5434 = vmatpush1.msra.mxu0 0.0
    %5435 = vmatprep.subr.mxu0 0.0
    %5436 = vmatpush1.msra.mxu0 0.0
    %5437 = vmatprep.mubr.f32.mxu0 0.0
    %5438 = vmatmul.mubr.f32.gmra.mrb[0].mxu0 %v5371
    %v5439 = vpop.f32.mrb[0].mxu0
    %v5440 = vadd.f32 %v2229, %v5439
    %v5441 = vpop.f32.mrb[0].mxu0
    %5442 = vdwg.mxu0
    %v5443 = vld [vmem:[#allocation7] sm:$0x1]
    %v5445 = vsel %vm138, %v5443, 0
    %5447 = vmatprep.subr.mxu0 0.0
    %5448 = vmatpush1.msra.mxu0 %v2225
    %5449 = vmatprep.subr.mxu0 0.0
    %5450 = vmatpush1.msra.mxu0 %v2226
    %5451 = vmatprep.subr.mxu0 0.0
    %5452 = vmatpush1.msra.mxu0 %v2227
    %5453 = vmatprep.subr.mxu0 0.0
    %5454 = vmatpush1.msra.mxu0 %v2228
    %5455 = vmatprep.subr.mxu0 0.0
    %5456 = vmatpush1.msra.mxu0 0.0
    %5457 = vmatprep.subr.mxu0 0.0
    %5458 = vmatpush1.msra.mxu0 0.0
    %5459 = vmatprep.subr.mxu0 0.0
    %5460 = vmatpush1.msra.mxu0 0.0
    %5461 = vmatprep.subr.mxu0 0.0
    %5462 = vmatpush1.msra.mxu0 0.0
    %5463 = vmatprep.subr.mxu0 0.0
    %5464 = vmatpush1.msra.mxu0 0.0
    %5465 = vmatprep.subr.mxu0 0.0
    %5466 = vmatpush1.msra.mxu0 0.0
    %5467 = vmatprep.subr.mxu0 0.0
    %5468 = vmatpush1.msra.mxu0 0.0
    %5469 = vmatprep.subr.mxu0 0.0
    %5470 = vmatpush1.msra.mxu0 0.0
    %5471 = vmatprep.subr.mxu0 0.0
    %5472 = vmatpush1.msra.mxu0 0.0
    %5473 = vmatprep.subr.mxu0 0.0
    %5474 = vmatpush1.msra.mxu0 0.0
    %5475 = vmatprep.subr.mxu0 0.0
    %5476 = vmatpush1.msra.mxu0 0.0
    %5477 = vmatprep.subr.mxu0 0.0
    %5478 = vmatpush1.msra.mxu0 0.0
    %5479 = vmatprep.subr.mxu0 0.0
    %5480 = vmatpush1.msra.mxu0 0.0
    %5481 = vmatprep.subr.mxu0 0.0
    %5482 = vmatpush1.msra.mxu0 0.0
    %5483 = vmatprep.subr.mxu0 0.0
    %5484 = vmatpush1.msra.mxu0 0.0
    %5485 = vmatprep.subr.mxu0 0.0
    %5486 = vmatpush1.msra.mxu0 0.0
    %5487 = vmatprep.subr.mxu0 0.0
    %5488 = vmatpush1.msra.mxu0 0.0
    %5489 = vmatprep.subr.mxu0 0.0
    %5490 = vmatpush1.msra.mxu0 0.0
    %5491 = vmatprep.subr.mxu0 0.0
    %5492 = vmatpush1.msra.mxu0 0.0
    %5493 = vmatprep.subr.mxu0 0.0
    %5494 = vmatpush1.msra.mxu0 0.0
    %5495 = vmatprep.subr.mxu0 0.0
    %5496 = vmatpush1.msra.mxu0 0.0
    %5497 = vmatprep.subr.mxu0 0.0
    %5498 = vmatpush1.msra.mxu0 0.0
    %5499 = vmatprep.subr.mxu0 0.0
    %5500 = vmatpush1.msra.mxu0 0.0
    %5501 = vmatprep.subr.mxu0 0.0
    %5502 = vmatpush1.msra.mxu0 0.0
    %5503 = vmatprep.subr.mxu0 0.0
    %5504 = vmatpush1.msra.mxu0 0.0
    %5505 = vmatprep.subr.mxu0 0.0
    %5506 = vmatpush1.msra.mxu0 0.0
    %5507 = vmatprep.subr.mxu0 0.0
    %5508 = vmatpush1.msra.mxu0 0.0
    %5509 = vmatprep.subr.mxu0 0.0
    %5510 = vmatpush1.msra.mxu0 0.0
    %5511 = vmatprep.mubr.f32.mxu0 0.0
    %5512 = vmatmul.mubr.f32.gmra.mrb[0].mxu0 %v5445
    %v5513 = vpop.f32.mrb[0].mxu0
    %v5514 = vadd.f32 %v2230, %v5513
    %v5515 = vpop.f32.mrb[0].mxu0
    %5516 = vdwg.mxu0
    %v5517 = vadd.f32 %v5440, %v5514
    %v5518 = vxor.u32 %v5517, 2147483648
    %v5519 = vmul.f32 %v5518, 1.442695
    %v5520 = vpow.pop %v5519
    %v5521 = vadd.f32 %v5520, 1.0
    %v5522 = vrcp.pop %v5521
    %v5523 = vmul.f32 1.0, %v5522
    %5525 = vrot.lane.b32.xlu0 %v5514, 64
    %v5526 = vpop.permute.xlu0 %5525
    %v5528 = vmul.f32 %v5523, %v5526
    %5530 = vrot.lane.b32.xlu0 %v5528, 64
    %v5531 = vpop.permute.xlu0 %5530
    %v5533 = vadd.f32 %v5440, %v5531
    %v5534 = vtanh.pop %v5533
    %v5535 = vsub.f32 1.0, %v5523
    %5537 = vrot.lane.b32.xlu0 %v5534, 96
    %v5538 = vpop.permute.xlu0 %5537
    %v5540 = vmul.f32 %v5535, %v5538
    %v5541 = vlaneseq
    %v5542 = vshrl.u32 %v5541, 7
    %v5543 = vsub.s32 0, %v5542
    %v5544 = vrot.slane %v5443, %v5543
    %5545 = vrot.lane.b32.xlu0 %v5544, 32
    %v5546 = vpop.permute.xlu0 %5545
    %v5548 = vmul.f32 %v5523, %v5546
    %v5549 = vadd.f32 %v5540, %v5548
    %5551 = vrot.lane.b32.xlu0 %v5549, 96
    %v5552 = vpop.permute.xlu0 %5551
    %5554 = vst.msk [vmem:[#allocation7] sm:$0x1] %vm96, %v5552
    %v5555 = vsel %vm138, %v5552, 0
    %5557 = vmatprep.subr.mxu0 0.0
    %5558 = vmatpush1.xpose.msra.mxu0 %v2442
    %5559 = vmatprep.subr.mxu0 0.0
    %5560 = vmatpush1.xpose.msra.mxu0 0.0
    %5561 = vmatprep.subr.mxu0 0.0
    %5562 = vmatpush1.xpose.msra.mxu0 0.0
    %5563 = vmatprep.subr.mxu0 0.0
    %5564 = vmatpush1.xpose.msra.mxu0 0.0
    %5565 = vmatprep.subr.mxu0 0.0
    %5566 = vmatpush1.xpose.msra.mxu0 0.0
    %5567 = vmatprep.subr.mxu0 0.0
    %5568 = vmatpush1.xpose.msra.mxu0 0.0
    %5569 = vmatprep.subr.mxu0 0.0
    %5570 = vmatpush1.xpose.msra.mxu0 0.0
    %5571 = vmatprep.subr.mxu0 0.0
    %5572 = vmatpush1.xpose.msra.mxu0 0.0
    %5573 = vmatprep.subr.mxu0 0.0
    %5574 = vmatpush1.xpose.msra.mxu0 0.0
    %5575 = vmatprep.subr.mxu0 0.0
    %5576 = vmatpush1.xpose.msra.mxu0 0.0
    %5577 = vmatprep.subr.mxu0 0.0
    %5578 = vmatpush1.xpose.msra.mxu0 0.0
    %5579 = vmatprep.subr.mxu0 0.0
    %5580 = vmatpush1.xpose.msra.mxu0 0.0
    %5581 = vmatprep.subr.mxu0 0.0
    %5582 = vmatpush1.xpose.msra.mxu0 0.0
    %5583 = vmatprep.subr.mxu0 0.0
    %5584 = vmatpush1.xpose.msra.mxu0 0.0
    %5585 = vmatprep.subr.mxu0 0.0
    %5586 = vmatpush1.xpose.msra.mxu0 0.0
    %5587 = vmatprep.subr.mxu0 0.0
    %5588 = vmatpush1.xpose.msra.mxu0 0.0
    %5589 = vmatprep.subr.mxu0 0.0
    %5590 = vmatpush1.xpose.msra.mxu0 0.0
    %5591 = vmatprep.subr.mxu0 0.0
    %5592 = vmatpush1.xpose.msra.mxu0 0.0
    %5593 = vmatprep.subr.mxu0 0.0
    %5594 = vmatpush1.xpose.msra.mxu0 0.0
    %5595 = vmatprep.subr.mxu0 0.0
    %5596 = vmatpush1.xpose.msra.mxu0 0.0
    %5597 = vmatprep.subr.mxu0 0.0
    %5598 = vmatpush1.xpose.msra.mxu0 0.0
    %5599 = vmatprep.subr.mxu0 0.0
    %5600 = vmatpush1.xpose.msra.mxu0 0.0
    %5601 = vmatprep.subr.mxu0 0.0
    %5602 = vmatpush1.xpose.msra.mxu0 0.0
    %5603 = vmatprep.subr.mxu0 0.0
    %5604 = vmatpush1.xpose.msra.mxu0 0.0
    %5605 = vmatprep.subr.mxu0 0.0
    %5606 = vmatpush1.xpose.msra.mxu0 0.0
    %5607 = vmatprep.subr.mxu0 0.0
    %5608 = vmatpush1.xpose.msra.mxu0 0.0
    %5609 = vmatprep.subr.mxu0 0.0
    %5610 = vmatpush1.xpose.msra.mxu0 0.0
    %5611 = vmatprep.subr.mxu0 0.0
    %5612 = vmatpush1.xpose.msra.mxu0 0.0
    %5613 = vmatprep.subr.mxu0 0.0
    %5614 = vmatpush1.xpose.msra.mxu0 0.0
    %5615 = vmatprep.subr.mxu0 0.0
    %5616 = vmatpush1.xpose.msra.mxu0 0.0
    %5617 = vmatprep.subr.mxu0 0.0
    %5618 = vmatpush1.xpose.msra.mxu0 0.0
    %5619 = vmatprep.subr.mxu0 0.0
    %5620 = vmatpush1.xpose.msra.mxu0 0.0
    %5621 = vmatprep.mubr.f32.mxu0 0.0
    %5622 = vmatmul.mubr.f32.gmra.mrb[0].mxu0 %v5555
    %v5623 = vpop.f32.mrb[0].mxu0
    %v5624 = vadd.f32 0.0, %v5623
    %v5625 = vpop.f32.mrb[0].mxu0
    %5626 = vdwg.mxu0
    %v5627 = vsel %vm2248, %v5624, -1e+30
    %v5628 = vsel %vm2515, %v5627, -inf
    %5629 = vmax.xlane.f32.xlu0 %v5628
    %v5630 = vpop.xlane.xlu0 %5629
    %v5631 = vsub.f32 %v5627, %v5630
    %v5632 = vmul.f32 %v5631, 1.442695
    %v5633 = vpow.pop %v5632
    %v5634 = vsel %vm2515, %v5633, 0.0
    %5635 = vadd.xlane.f32.xlu0 %v5634
    %v5636 = vpop.xlane.xlu0 %5635
    %v5637 = vrcp.pop %v5636
    %v5638 = vmul.f32 %v5633, %v5637
    %v5640 = vsel %vm2527, %v5638, 0
    %5642 = vmatprep.subr.mxu0 0.0
    %5643 = vmatpush1.msra.mxu0 %v2220
    %5644 = vmatprep.subr.mxu0 0.0
    %5645 = vmatpush1.msra.mxu0 0.0
    %5646 = vmatprep.subr.mxu0 0.0
    %5647 = vmatpush1.msra.mxu0 0.0
    %5648 = vmatprep.subr.mxu0 0.0
    %5649 = vmatpush1.msra.mxu0 0.0
    %5650 = vmatprep.subr.mxu0 0.0
    %5651 = vmatpush1.msra.mxu0 0.0
    %5652 = vmatprep.subr.mxu0 0.0
    %5653 = vmatpush1.msra.mxu0 0.0
    %5654 = vmatprep.subr.mxu0 0.0
    %5655 = vmatpush1.msra.mxu0 0.0
    %5656 = vmatprep.subr.mxu0 0.0
    %5657 = vmatpush1.msra.mxu0 0.0
    %5658 = vmatprep.subr.mxu0 0.0
    %5659 = vmatpush1.msra.mxu0 0.0
    %5660 = vmatprep.subr.mxu0 0.0
    %5661 = vmatpush1.msra.mxu0 0.0
    %5662 = vmatprep.subr.mxu0 0.0
    %5663 = vmatpush1.msra.mxu0 0.0
    %5664 = vmatprep.subr.mxu0 0.0
    %5665 = vmatpush1.msra.mxu0 0.0
    %5666 = vmatprep.subr.mxu0 0.0
    %5667 = vmatpush1.msra.mxu0 0.0
    %5668 = vmatprep.subr.mxu0 0.0
    %5669 = vmatpush1.msra.mxu0 0.0
    %5670 = vmatprep.subr.mxu0 0.0
    %5671 = vmatpush1.msra.mxu0 0.0
    %5672 = vmatprep.subr.mxu0 0.0
    %5673 = vmatpush1.msra.mxu0 0.0
    %5674 = vmatprep.subr.mxu0 0.0
    %5675 = vmatpush1.msra.mxu0 0.0
    %5676 = vmatprep.subr.mxu0 0.0
    %5677 = vmatpush1.msra.mxu0 0.0
    %5678 = vmatprep.subr.mxu0 0.0
    %5679 = vmatpush1.msra.mxu0 0.0
    %5680 = vmatprep.subr.mxu0 0.0
    %5681 = vmatpush1.msra.mxu0 0.0
    %5682 = vmatprep.subr.mxu0 0.0
    %5683 = vmatpush1.msra.mxu0 0.0
    %5684 = vmatprep.subr.mxu0 0.0
    %5685 = vmatpush1.msra.mxu0 0.0
    %5686 = vmatprep.subr.mxu0 0.0
    %5687 = vmatpush1.msra.mxu0 0.0
    %5688 = vmatprep.subr.mxu0 0.0
    %5689 = vmatpush1.msra.mxu0 0.0
    %5690 = vmatprep.subr.mxu0 0.0
    %5691 = vmatpush1.msra.mxu0 0.0
    %5692 = vmatprep.subr.mxu0 0.0
    %5693 = vmatpush1.msra.mxu0 0.0
    %5694 = vmatprep.subr.mxu0 0.0
    %5695 = vmatpush1.msra.mxu0 0.0
    %5696 = vmatprep.subr.mxu0 0.0
    %5697 = vmatpush1.msra.mxu0 0.0
    %5698 = vmatprep.subr.mxu0 0.0
    %5699 = vmatpush1.msra.mxu0 0.0
    %5700 = vmatprep.subr.mxu0 0.0
    %5701 = vmatpush1.msra.mxu0 0.0
    %5702 = vmatprep.subr.mxu0 0.0
    %5703 = vmatpush1.msra.mxu0 0.0
    %5704 = vmatprep.subr.mxu0 0.0
    %5705 = vmatpush1.msra.mxu0 0.0
    %5706 = vmatprep.mubr.f32.mxu0 0.0
    %5707 = vmatmul.mubr.f32.gmra.mrb[0].mxu0 %v5640
    %v5708 = vpop.f32.mrb[0].mxu0
    %v5709 = vadd.f32 0.0, %v5708
    %v5710 = vpop.f32.mrb[0].mxu0
    %5711 = vdwg.mxu0
    %v5713 = vsel %vm138, %v5709, 0
    %5715 = vmatprep.subr.mxu0 0.0
    %5716 = vmatpush1.msra.mxu0 %v2235
    %5717 = vmatprep.subr.mxu0 0.0
    %5718 = vmatpush1.msra.mxu0 %v2236
    %5719 = vmatprep.subr.mxu0 0.0
    %5720 = vmatpush1.msra.mxu0 %v2237
    %5721 = vmatprep.subr.mxu0 0.0
    %5722 = vmatpush1.msra.mxu0 %v2238
    %5723 = vmatprep.subr.mxu0 0.0
    %5724 = vmatpush1.msra.mxu0 0.0
    %5725 = vmatprep.subr.mxu0 0.0
    %5726 = vmatpush1.msra.mxu0 0.0
    %5727 = vmatprep.subr.mxu0 0.0
    %5728 = vmatpush1.msra.mxu0 0.0
    %5729 = vmatprep.subr.mxu0 0.0
    %5730 = vmatpush1.msra.mxu0 0.0
    %5731 = vmatprep.subr.mxu0 0.0
    %5732 = vmatpush1.msra.mxu0 0.0
    %5733 = vmatprep.subr.mxu0 0.0
    %5734 = vmatpush1.msra.mxu0 0.0
    %5735 = vmatprep.subr.mxu0 0.0
    %5736 = vmatpush1.msra.mxu0 0.0
    %5737 = vmatprep.subr.mxu0 0.0
    %5738 = vmatpush1.msra.mxu0 0.0
    %5739 = vmatprep.subr.mxu0 0.0
    %5740 = vmatpush1.msra.mxu0 0.0
    %5741 = vmatprep.subr.mxu0 0.0
    %5742 = vmatpush1.msra.mxu0 0.0
    %5743 = vmatprep.subr.mxu0 0.0
    %5744 = vmatpush1.msra.mxu0 0.0
    %5745 = vmatprep.subr.mxu0 0.0
    %5746 = vmatpush1.msra.mxu0 0.0
    %5747 = vmatprep.subr.mxu0 0.0
    %5748 = vmatpush1.msra.mxu0 0.0
    %5749 = vmatprep.subr.mxu0 0.0
    %5750 = vmatpush1.msra.mxu0 0.0
    %5751 = vmatprep.subr.mxu0 0.0
    %5752 = vmatpush1.msra.mxu0 0.0
    %5753 = vmatprep.subr.mxu0 0.0
    %5754 = vmatpush1.msra.mxu0 0.0
    %5755 = vmatprep.subr.mxu0 0.0
    %5756 = vmatpush1.msra.mxu0 0.0
    %5757 = vmatprep.subr.mxu0 0.0
    %5758 = vmatpush1.msra.mxu0 0.0
    %5759 = vmatprep.subr.mxu0 0.0
    %5760 = vmatpush1.msra.mxu0 0.0
    %5761 = vmatprep.subr.mxu0 0.0
    %5762 = vmatpush1.msra.mxu0 0.0
    %5763 = vmatprep.subr.mxu0 0.0
    %5764 = vmatpush1.msra.mxu0 0.0
    %5765 = vmatprep.subr.mxu0 0.0
    %5766 = vmatpush1.msra.mxu0 0.0
    %5767 = vmatprep.subr.mxu0 0.0
    %5768 = vmatpush1.msra.mxu0 0.0
    %5769 = vmatprep.subr.mxu0 0.0
    %5770 = vmatpush1.msra.mxu0 0.0
    %5771 = vmatprep.subr.mxu0 0.0
    %5772 = vmatpush1.msra.mxu0 0.0
    %5773 = vmatprep.subr.mxu0 0.0
    %5774 = vmatpush1.msra.mxu0 0.0
    %5775 = vmatprep.subr.mxu0 0.0
    %5776 = vmatpush1.msra.mxu0 0.0
    %5777 = vmatprep.subr.mxu0 0.0
    %5778 = vmatpush1.msra.mxu0 0.0
    %5779 = vmatprep.mubr.f32.mxu0 0.0
    %5780 = vmatmul.mubr.f32.gmra.mrb[0].mxu0 %v5713
    %v5781 = vpop.f32.mrb[0].mxu0
    %v5782 = vadd.f32 0.0, %v5781
    %v5783 = vpop.f32.mrb[0].mxu0
    %5784 = vdwg.mxu0
    %5785 = vmatprep.subr.mxu0 0.0
    %5786 = vmatpush1.msra.mxu0 %v2231
    %5787 = vmatprep.subr.mxu0 0.0
    %5788 = vmatpush1.msra.mxu0 %v2232
    %5789 = vmatprep.subr.mxu0 0.0
    %5790 = vmatpush1.msra.mxu0 %v2233
    %5791 = vmatprep.subr.mxu0 0.0
    %5792 = vmatpush1.msra.mxu0 %v2234
    %5793 = vmatprep.subr.mxu0 0.0
    %5794 = vmatpush1.msra.mxu0 0.0
    %5795 = vmatprep.subr.mxu0 0.0
    %5796 = vmatpush1.msra.mxu0 0.0
    %5797 = vmatprep.subr.mxu0 0.0
    %5798 = vmatpush1.msra.mxu0 0.0
    %5799 = vmatprep.subr.mxu0 0.0
    %5800 = vmatpush1.msra.mxu0 0.0
    %5801 = vmatprep.subr.mxu0 0.0
    %5802 = vmatpush1.msra.mxu0 0.0
    %5803 = vmatprep.subr.mxu0 0.0
    %5804 = vmatpush1.msra.mxu0 0.0
    %5805 = vmatprep.subr.mxu0 0.0
    %5806 = vmatpush1.msra.mxu0 0.0
    %5807 = vmatprep.subr.mxu0 0.0
    %5808 = vmatpush1.msra.mxu0 0.0
    %5809 = vmatprep.subr.mxu0 0.0
    %5810 = vmatpush1.msra.mxu0 0.0
    %5811 = vmatprep.subr.mxu0 0.0
    %5812 = vmatpush1.msra.mxu0 0.0
    %5813 = vmatprep.subr.mxu0 0.0
    %5814 = vmatpush1.msra.mxu0 0.0
    %5815 = vmatprep.subr.mxu0 0.0
    %5816 = vmatpush1.msra.mxu0 0.0
    %5817 = vmatprep.subr.mxu0 0.0
    %5818 = vmatpush1.msra.mxu0 0.0
    %5819 = vmatprep.subr.mxu0 0.0
    %5820 = vmatpush1.msra.mxu0 0.0
    %5821 = vmatprep.subr.mxu0 0.0
    %5822 = vmatpush1.msra.mxu0 0.0
    %5823 = vmatprep.subr.mxu0 0.0
    %5824 = vmatpush1.msra.mxu0 0.0
    %5825 = vmatprep.subr.mxu0 0.0
    %5826 = vmatpush1.msra.mxu0 0.0
    %5827 = vmatprep.subr.mxu0 0.0
    %5828 = vmatpush1.msra.mxu0 0.0
    %5829 = vmatprep.subr.mxu0 0.0
    %5830 = vmatpush1.msra.mxu0 0.0
    %5831 = vmatprep.subr.mxu0 0.0
    %5832 = vmatpush1.msra.mxu0 0.0
    %5833 = vmatprep.subr.mxu0 0.0
    %5834 = vmatpush1.msra.mxu0 0.0
    %5835 = vmatprep.subr.mxu0 0.0
    %5836 = vmatpush1.msra.mxu0 0.0
    %5837 = vmatprep.subr.mxu0 0.0
    %5838 = vmatpush1.msra.mxu0 0.0
    %5839 = vmatprep.subr.mxu0 0.0
    %5840 = vmatpush1.msra.mxu0 0.0
    %5841 = vmatprep.subr.mxu0 0.0
    %5842 = vmatpush1.msra.mxu0 0.0
    %5843 = vmatprep.subr.mxu0 0.0
    %5844 = vmatpush1.msra.mxu0 0.0
    %5845 = vmatprep.subr.mxu0 0.0
    %5846 = vmatpush1.msra.mxu0 0.0
    %5847 = vmatprep.subr.mxu0 0.0
    %5848 = vmatpush1.msra.mxu0 0.0
    %5849 = vmatprep.mubr.f32.mxu0 0.0
    %5850 = vmatmul.mubr.f32.gmra.mrb[0].mxu0 %v5555
    %v5851 = vpop.f32.mrb[0].mxu0
    %v5852 = vadd.f32 %v5782, %v5851
    %v5853 = vpop.f32.mrb[0].mxu0
    %5854 = vdwg.mxu0
    %v5855 = vadd.f32 %v5852, %v2239
    %v5856 = vtanh.pop %v5855
    %v5858 = vsel %vm138, %v5856, 0
    %5860 = vmatprep.subr.mxu0 0.0
    %5861 = vmatpush1.msra.mxu0 %v2240
    %5862 = vmatprep.subr.mxu0 0.0
    %5863 = vmatpush1.msra.mxu0 %v2241
    %5864 = vmatprep.subr.mxu0 0.0
    %5865 = vmatpush1.msra.mxu0 %v2242
    %5866 = vmatprep.subr.mxu0 0.0
    %5867 = vmatpush1.msra.mxu0 %v2243
    %5868 = vmatprep.subr.mxu0 0.0
    %5869 = vmatpush1.msra.mxu0 0.0
    %5870 = vmatprep.subr.mxu0 0.0
    %5871 = vmatpush1.msra.mxu0 0.0
    %5872 = vmatprep.subr.mxu0 0.0
    %5873 = vmatpush1.msra.mxu0 0.0
    %5874 = vmatprep.subr.mxu0 0.0
    %5875 = vmatpush1.msra.mxu0 0.0
    %5876 = vmatprep.subr.mxu0 0.0
    %5877 = vmatpush1.msra.mxu0 0.0
    %5878 = vmatprep.subr.mxu0 0.0
    %5879 = vmatpush1.msra.mxu0 0.0
    %5880 = vmatprep.subr.mxu0 0.0
    %5881 = vmatpush1.msra.mxu0 0.0
    %5882 = vmatprep.subr.mxu0 0.0
    %5883 = vmatpush1.msra.mxu0 0.0
    %5884 = vmatprep.subr.mxu0 0.0
    %5885 = vmatpush1.msra.mxu0 0.0
    %5886 = vmatprep.subr.mxu0 0.0
    %5887 = vmatpush1.msra.mxu0 0.0
    %5888 = vmatprep.subr.mxu0 0.0
    %5889 = vmatpush1.msra.mxu0 0.0
    %5890 = vmatprep.subr.mxu0 0.0
    %5891 = vmatpush1.msra.mxu0 0.0
    %5892 = vmatprep.subr.mxu0 0.0
    %5893 = vmatpush1.msra.mxu0 0.0
    %5894 = vmatprep.subr.mxu0 0.0
    %5895 = vmatpush1.msra.mxu0 0.0
    %5896 = vmatprep.subr.mxu0 0.0
    %5897 = vmatpush1.msra.mxu0 0.0
    %5898 = vmatprep.subr.mxu0 0.0
    %5899 = vmatpush1.msra.mxu0 0.0
    %5900 = vmatprep.subr.mxu0 0.0
    %5901 = vmatpush1.msra.mxu0 0.0
    %5902 = vmatprep.subr.mxu0 0.0
    %5903 = vmatpush1.msra.mxu0 0.0
    %5904 = vmatprep.subr.mxu0 0.0
    %5905 = vmatpush1.msra.mxu0 0.0
    %5906 = vmatprep.subr.mxu0 0.0
    %5907 = vmatpush1.msra.mxu0 0.0
    %5908 = vmatprep.subr.mxu0 0.0
    %5909 = vmatpush1.msra.mxu0 0.0
    %5910 = vmatprep.subr.mxu0 0.0
    %5911 = vmatpush1.msra.mxu0 0.0
    %5912 = vmatprep.subr.mxu0 0.0
    %5913 = vmatpush1.msra.mxu0 0.0
    %5914 = vmatprep.subr.mxu0 0.0
    %5915 = vmatpush1.msra.mxu0 0.0
    %5916 = vmatprep.subr.mxu0 0.0
    %5917 = vmatpush1.msra.mxu0 0.0
    %5918 = vmatprep.subr.mxu0 0.0
    %5919 = vmatpush1.msra.mxu0 0.0
    %5920 = vmatprep.subr.mxu0 0.0
    %5921 = vmatpush1.msra.mxu0 0.0
    %5922 = vmatprep.subr.mxu0 0.0
    %5923 = vmatpush1.msra.mxu0 0.0
    %5924 = vmatprep.mubr.f32.mxu0 0.0
    %5925 = vmatmul.mubr.f32.gmra.mrb[0].mxu0 %v5858
    %v5926 = vpop.f32.mrb[0].mxu0
    %v5927 = vadd.f32 %v2244, %v5926
    %v5928 = vpop.f32.mrb[0].mxu0
    %5929 = vdwg.mxu0
    %v5930 = vsel %vm2819, %v5927, -inf
    %5931 = vmax.xlane.f32.xlu0 %v5930
    %v5932 = vpop.xlane.xlu0 %5931
    %v5933 = vrot.slane %v5932, 4
    %v5934 = vmax.f32 %v5932, %v5933
    %v5935 = vrot.slane %v5934, 2
    %v5936 = vmax.f32 %v5934, %v5935
    %v5937 = vrot.slane %v5936, 1
    %v5938 = vmax.f32 %v5936, %v5937
    %s5939 = vtos %v5938
    %v5940 = vstv %s5939
    %v5941 = vsub.f32 %v5927, %v5940
    %v5942 = vmul.f32 %v5941, 1.442695
    %v5943 = vpow.pop %v5942
    %v5944 = vsel %vm2819, %v5943, 0.0
    %5945 = vadd.xlane.f32.xlu0 %v5944
    %v5946 = vpop.xlane.xlu0 %5945
    %v5947 = vrot.slane %v5946, 4
    %v5948 = vadd.f32 %v5946, %v5947
    %v5949 = vrot.slane %v5948, 2
    %v5950 = vadd.f32 %v5948, %v5949
    %v5951 = vrot.slane %v5950, 1
    %v5952 = vadd.f32 %v5950, %v5951
    %s5953 = vtos %v5952
    %v5954 = vstv %s5953
    %v5955 = vrcp.pop %v5954
    %s5956 = vtos %v5955
    %vm5957 = vcmp.eq.f32.partialorder %v5927, %v5940
    %v5958 = vsel %vm5957, %v2246, 128
    %v5959 = vsel %vm2819, %v5958, 2147483647
    %v5960 = vand.u32 %v5959, 65535
    %v5961 = vshra.s32 %v5959, 16
    %v5962 = vcvt.s32.f32 %v5960
    %v5963 = vcvt.s32.f32 %v5961
    %5964 = vmin.xlane.f32.xlu0 %v5963
    %v5965 = vpop.xlane.xlu0 %5964
    %vm5966 = vcmp.eq.f32.partialorder %v5963, %v5965
    %v5967 = vsel %vm5966, %v5962, inf
    %5968 = vmin.xlane.f32.xlu0 %v5967
    %v5969 = vpop.xlane.xlu0 %5968
    %v5970 = vcvt.f32.s32 %v5969
    %v5971 = vcvt.f32.s32 %v5965
    %v5972 = vshll.u32 %v5971, 16
    %v5973 = vadd.s32 %v5972, %v5970
    %v5974 = vrot.slane %v5973, 4
    %vm5975 = vcmp.lt.s32.totalorder %v5973, %v5974
    %v5976 = vsel %vm5975, %v5973, %v5974
    %v5977 = vrot.slane %v5976, 2
    %vm5978 = vcmp.lt.s32.totalorder %v5976, %v5977
    %v5979 = vsel %vm5978, %v5976, %v5977
    %v5980 = vrot.slane %v5979, 1
    %vm5981 = vcmp.lt.s32.totalorder %v5979, %v5980
    %v5982 = vsel %vm5981, %v5979, %v5980
    %s5983 = vtos %v5982
    %s5984 = scalar_lea.smem [#allocation15], 5
    %5985 = sst [smem:[%s5984]] %s5983
    %s5986 = scalar_lea.smem [#allocation16], 5
    %5987 = sst [smem:[%s5986]] %s5956
    %5988 = sst [smem:[%s2249]] %s5983
    %s5989 = sld [smem:[#allocation8]]
    %s5990 = scalar_lea.vmem %s2, %s5989
    %v5991 = vld [vmem:[%s5990] sm:$0x1]
    %v5993 = vsel %vm138, %v5991, 0
    %5995 = vmatprep.subr.mxu0 0.0
    %5996 = vmatpush1.msra.mxu0 %v2221
    %5997 = vmatprep.subr.mxu0 0.0
    %5998 = vmatpush1.msra.mxu0 %v2222
    %5999 = vmatprep.subr.mxu0 0.0
    %6000 = vmatpush1.msra.mxu0 %v2223
    %6001 = vmatprep.subr.mxu0 0.0
    %6002 = vmatpush1.msra.mxu0 %v2224
    %6003 = vmatprep.subr.mxu0 0.0
    %6004 = vmatpush1.msra.mxu0 0.0
    %6005 = vmatprep.subr.mxu0 0.0
    %6006 = vmatpush1.msra.mxu0 0.0
    %6007 = vmatprep.subr.mxu0 0.0
    %6008 = vmatpush1.msra.mxu0 0.0
    %6009 = vmatprep.subr.mxu0 0.0
    %6010 = vmatpush1.msra.mxu0 0.0
    %6011 = vmatprep.subr.mxu0 0.0
    %6012 = vmatpush1.msra.mxu0 0.0
    %6013 = vmatprep.subr.mxu0 0.0
    %6014 = vmatpush1.msra.mxu0 0.0
    %6015 = vmatprep.subr.mxu0 0.0
    %6016 = vmatpush1.msra.mxu0 0.0
    %6017 = vmatprep.subr.mxu0 0.0
    %6018 = vmatpush1.msra.mxu0 0.0
    %6019 = vmatprep.subr.mxu0 0.0
    %6020 = vmatpush1.msra.mxu0 0.0
    %6021 = vmatprep.subr.mxu0 0.0
    %6022 = vmatpush1.msra.mxu0 0.0
    %6023 = vmatprep.subr.mxu0 0.0
    %6024 = vmatpush1.msra.mxu0 0.0
    %6025 = vmatprep.subr.mxu0 0.0
    %6026 = vmatpush1.msra.mxu0 0.0
    %6027 = vmatprep.subr.mxu0 0.0
    %6028 = vmatpush1.msra.mxu0 0.0
    %6029 = vmatprep.subr.mxu0 0.0
    %6030 = vmatpush1.msra.mxu0 0.0
    %6031 = vmatprep.subr.mxu0 0.0
    %6032 = vmatpush1.msra.mxu0 0.0
    %6033 = vmatprep.subr.mxu0 0.0
    %6034 = vmatpush1.msra.mxu0 0.0
    %6035 = vmatprep.subr.mxu0 0.0
    %6036 = vmatpush1.msra.mxu0 0.0
    %6037 = vmatprep.subr.mxu0 0.0
    %6038 = vmatpush1.msra.mxu0 0.0
    %6039 = vmatprep.subr.mxu0 0.0
    %6040 = vmatpush1.msra.mxu0 0.0
    %6041 = vmatprep.subr.mxu0 0.0
    %6042 = vmatpush1.msra.mxu0 0.0
    %6043 = vmatprep.subr.mxu0 0.0
    %6044 = vmatpush1.msra.mxu0 0.0
    %6045 = vmatprep.subr.mxu0 0.0
    %6046 = vmatpush1.msra.mxu0 0.0
    %6047 = vmatprep.subr.mxu0 0.0
    %6048 = vmatpush1.msra.mxu0 0.0
    %6049 = vmatprep.subr.mxu0 0.0
    %6050 = vmatpush1.msra.mxu0 0.0
    %6051 = vmatprep.subr.mxu0 0.0
    %6052 = vmatpush1.msra.mxu0 0.0
    %6053 = vmatprep.subr.mxu0 0.0
    %6054 = vmatpush1.msra.mxu0 0.0
    %6055 = vmatprep.subr.mxu0 0.0
    %6056 = vmatpush1.msra.mxu0 0.0
    %6057 = vmatprep.subr.mxu0 0.0
    %6058 = vmatpush1.msra.mxu0 0.0
    %6059 = vmatprep.mubr.f32.mxu0 0.0
    %6060 = vmatmul.mubr.f32.gmra.mrb[0].mxu0 %v5993
    %v6061 = vpop.f32.mrb[0].mxu0
    %v6062 = vadd.f32 %v2229, %v6061
    %v6063 = vpop.f32.mrb[0].mxu0
    %6064 = vdwg.mxu0
    %v6065 = vld [vmem:[#allocation7] sm:$0x1]
    %v6067 = vsel %vm138, %v6065, 0
    %6069 = vmatprep.subr.mxu0 0.0
    %6070 = vmatpush1.msra.mxu0 %v2225
    %6071 = vmatprep.subr.mxu0 0.0
    %6072 = vmatpush1.msra.mxu0 %v2226
    %6073 = vmatprep.subr.mxu0 0.0
    %6074 = vmatpush1.msra.mxu0 %v2227
    %6075 = vmatprep.subr.mxu0 0.0
    %6076 = vmatpush1.msra.mxu0 %v2228
    %6077 = vmatprep.subr.mxu0 0.0
    %6078 = vmatpush1.msra.mxu0 0.0
    %6079 = vmatprep.subr.mxu0 0.0
    %6080 = vmatpush1.msra.mxu0 0.0
    %6081 = vmatprep.subr.mxu0 0.0
    %6082 = vmatpush1.msra.mxu0 0.0
    %6083 = vmatprep.subr.mxu0 0.0
    %6084 = vmatpush1.msra.mxu0 0.0
    %6085 = vmatprep.subr.mxu0 0.0
    %6086 = vmatpush1.msra.mxu0 0.0
    %6087 = vmatprep.subr.mxu0 0.0
    %6088 = vmatpush1.msra.mxu0 0.0
    %6089 = vmatprep.subr.mxu0 0.0
    %6090 = vmatpush1.msra.mxu0 0.0
    %6091 = vmatprep.subr.mxu0 0.0
    %6092 = vmatpush1.msra.mxu0 0.0
    %6093 = vmatprep.subr.mxu0 0.0
    %6094 = vmatpush1.msra.mxu0 0.0
    %6095 = vmatprep.subr.mxu0 0.0
    %6096 = vmatpush1.msra.mxu0 0.0
    %6097 = vmatprep.subr.mxu0 0.0
    %6098 = vmatpush1.msra.mxu0 0.0
    %6099 = vmatprep.subr.mxu0 0.0
    %6100 = vmatpush1.msra.mxu0 0.0
    %6101 = vmatprep.subr.mxu0 0.0
    %6102 = vmatpush1.msra.mxu0 0.0
    %6103 = vmatprep.subr.mxu0 0.0
    %6104 = vmatpush1.msra.mxu0 0.0
    %6105 = vmatprep.subr.mxu0 0.0
    %6106 = vmatpush1.msra.mxu0 0.0
    %6107 = vmatprep.subr.mxu0 0.0
    %6108 = vmatpush1.msra.mxu0 0.0
    %6109 = vmatprep.subr.mxu0 0.0
    %6110 = vmatpush1.msra.mxu0 0.0
    %6111 = vmatprep.subr.mxu0 0.0
    %6112 = vmatpush1.msra.mxu0 0.0
    %6113 = vmatprep.subr.mxu0 0.0
    %6114 = vmatpush1.msra.mxu0 0.0
    %6115 = vmatprep.subr.mxu0 0.0
    %6116 = vmatpush1.msra.mxu0 0.0
    %6117 = vmatprep.subr.mxu0 0.0
    %6118 = vmatpush1.msra.mxu0 0.0
    %6119 = vmatprep.subr.mxu0 0.0
    %6120 = vmatpush1.msra.mxu0 0.0
    %6121 = vmatprep.subr.mxu0 0.0
    %6122 = vmatpush1.msra.mxu0 0.0
    %6123 = vmatprep.subr.mxu0 0.0
    %6124 = vmatpush1.msra.mxu0 0.0
    %6125 = vmatprep.subr.mxu0 0.0
    %6126 = vmatpush1.msra.mxu0 0.0
    %6127 = vmatprep.subr.mxu0 0.0
    %6128 = vmatpush1.msra.mxu0 0.0
    %6129 = vmatprep.subr.mxu0 0.0
    %6130 = vmatpush1.msra.mxu0 0.0
    %6131 = vmatprep.subr.mxu0 0.0
    %6132 = vmatpush1.msra.mxu0 0.0
    %6133 = vmatprep.mubr.f32.mxu0 0.0
    %6134 = vmatmul.mubr.f32.gmra.mrb[0].mxu0 %v6067
    %v6135 = vpop.f32.mrb[0].mxu0
    %v6136 = vadd.f32 %v2230, %v6135
    %v6137 = vpop.f32.mrb[0].mxu0
    %6138 = vdwg.mxu0
    %v6139 = vadd.f32 %v6062, %v6136
    %v6140 = vxor.u32 %v6139, 2147483648
    %v6141 = vmul.f32 %v6140, 1.442695
    %v6142 = vpow.pop %v6141
    %v6143 = vadd.f32 %v6142, 1.0
    %v6144 = vrcp.pop %v6143
    %v6145 = vmul.f32 1.0, %v6144
    %6147 = vrot.lane.b32.xlu0 %v6136, 64
    %v6148 = vpop.permute.xlu0 %6147
    %v6150 = vmul.f32 %v6145, %v6148
    %6152 = vrot.lane.b32.xlu0 %v6150, 64
    %v6153 = vpop.permute.xlu0 %6152
    %v6155 = vadd.f32 %v6062, %v6153
    %v6156 = vtanh.pop %v6155
    %v6157 = vsub.f32 1.0, %v6145
    %6159 = vrot.lane.b32.xlu0 %v6156, 96
    %v6160 = vpop.permute.xlu0 %6159
    %v6162 = vmul.f32 %v6157, %v6160
    %v6163 = vlaneseq
    %v6164 = vshrl.u32 %v6163, 7
    %v6165 = vsub.s32 0, %v6164
    %v6166 = vrot.slane %v6065, %v6165
    %6167 = vrot.lane.b32.xlu0 %v6166, 32
    %v6168 = vpop.permute.xlu0 %6167
    %v6170 = vmul.f32 %v6145, %v6168
    %v6171 = vadd.f32 %v6162, %v6170
    %6173 = vrot.lane.b32.xlu0 %v6171, 96
    %v6174 = vpop.permute.xlu0 %6173
    %6176 = vst.msk [vmem:[#allocation7] sm:$0x1] %vm96, %v6174
    %v6177 = vsel %vm138, %v6174, 0
    %6179 = vmatprep.subr.mxu0 0.0
    %6180 = vmatpush1.xpose.msra.mxu0 %v2442
    %6181 = vmatprep.subr.mxu0 0.0
    %6182 = vmatpush1.xpose.msra.mxu0 0.0
    %6183 = vmatprep.subr.mxu0 0.0
    %6184 = vmatpush1.xpose.msra.mxu0 0.0
    %6185 = vmatprep.subr.mxu0 0.0
    %6186 = vmatpush1.xpose.msra.mxu0 0.0
    %6187 = vmatprep.subr.mxu0 0.0
    %6188 = vmatpush1.xpose.msra.mxu0 0.0
    %6189 = vmatprep.subr.mxu0 0.0
    %6190 = vmatpush1.xpose.msra.mxu0 0.0
    %6191 = vmatprep.subr.mxu0 0.0
    %6192 = vmatpush1.xpose.msra.mxu0 0.0
    %6193 = vmatprep.subr.mxu0 0.0
    %6194 = vmatpush1.xpose.msra.mxu0 0.0
    %6195 = vmatprep.subr.mxu0 0.0
    %6196 = vmatpush1.xpose.msra.mxu0 0.0
    %6197 = vmatprep.subr.mxu0 0.0
    %6198 = vmatpush1.xpose.msra.mxu0 0.0
    %6199 = vmatprep.subr.mxu0 0.0
    %6200 = vmatpush1.xpose.msra.mxu0 0.0
    %6201 = vmatprep.subr.mxu0 0.0
    %6202 = vmatpush1.xpose.msra.mxu0 0.0
    %6203 = vmatprep.subr.mxu0 0.0
    %6204 = vmatpush1.xpose.msra.mxu0 0.0
    %6205 = vmatprep.subr.mxu0 0.0
    %6206 = vmatpush1.xpose.msra.mxu0 0.0
    %6207 = vmatprep.subr.mxu0 0.0
    %6208 = vmatpush1.xpose.msra.mxu0 0.0
    %6209 = vmatprep.subr.mxu0 0.0
    %6210 = vmatpush1.xpose.msra.mxu0 0.0
    %6211 = vmatprep.subr.mxu0 0.0
    %6212 = vmatpush1.xpose.msra.mxu0 0.0
    %6213 = vmatprep.subr.mxu0 0.0
    %6214 = vmatpush1.xpose.msra.mxu0 0.0
    %6215 = vmatprep.subr.mxu0 0.0
    %6216 = vmatpush1.xpose.msra.mxu0 0.0
    %6217 = vmatprep.subr.mxu0 0.0
    %6218 = vmatpush1.xpose.msra.mxu0 0.0
    %6219 = vmatprep.subr.mxu0 0.0
    %6220 = vmatpush1.xpose.msra.mxu0 0.0
    %6221 = vmatprep.subr.mxu0 0.0
    %6222 = vmatpush1.xpose.msra.mxu0 0.0
    %6223 = vmatprep.subr.mxu0 0.0
    %6224 = vmatpush1.xpose.msra.mxu0 0.0
    %6225 = vmatprep.subr.mxu0 0.0
    %6226 = vmatpush1.xpose.msra.mxu0 0.0
    %6227 = vmatprep.subr.mxu0 0.0
    %6228 = vmatpush1.xpose.msra.mxu0 0.0
    %6229 = vmatprep.subr.mxu0 0.0
    %6230 = vmatpush1.xpose.msra.mxu0 0.0
    %6231 = vmatprep.subr.mxu0 0.0
    %6232 = vmatpush1.xpose.msra.mxu0 0.0
    %6233 = vmatprep.subr.mxu0 0.0
    %6234 = vmatpush1.xpose.msra.mxu0 0.0
    %6235 = vmatprep.subr.mxu0 0.0
    %6236 = vmatpush1.xpose.msra.mxu0 0.0
    %6237 = vmatprep.subr.mxu0 0.0
    %6238 = vmatpush1.xpose.msra.mxu0 0.0
    %6239 = vmatprep.subr.mxu0 0.0
    %6240 = vmatpush1.xpose.msra.mxu0 0.0
    %6241 = vmatprep.subr.mxu0 0.0
    %6242 = vmatpush1.xpose.msra.mxu0 0.0
    %6243 = vmatprep.mubr.f32.mxu0 0.0
    %6244 = vmatmul.mubr.f32.gmra.mrb[0].mxu0 %v6177
    %v6245 = vpop.f32.mrb[0].mxu0
    %v6246 = vadd.f32 0.0, %v6245
    %v6247 = vpop.f32.mrb[0].mxu0
    %6248 = vdwg.mxu0
    %v6249 = vsel %vm2248, %v6246, -1e+30
    %v6250 = vsel %vm2515, %v6249, -inf
    %6251 = vmax.xlane.f32.xlu0 %v6250
    %v6252 = vpop.xlane.xlu0 %6251
    %v6253 = vsub.f32 %v6249, %v6252
    %v6254 = vmul.f32 %v6253, 1.442695
    %v6255 = vpow.pop %v6254
    %v6256 = vsel %vm2515, %v6255, 0.0
    %6257 = vadd.xlane.f32.xlu0 %v6256
    %v6258 = vpop.xlane.xlu0 %6257
    %v6259 = vrcp.pop %v6258
    %v6260 = vmul.f32 %v6255, %v6259
    %v6262 = vsel %vm2527, %v6260, 0
    %6264 = vmatprep.subr.mxu0 0.0
    %6265 = vmatpush1.msra.mxu0 %v2220
    %6266 = vmatprep.subr.mxu0 0.0
    %6267 = vmatpush1.msra.mxu0 0.0
    %6268 = vmatprep.subr.mxu0 0.0
    %6269 = vmatpush1.msra.mxu0 0.0
    %6270 = vmatprep.subr.mxu0 0.0
    %6271 = vmatpush1.msra.mxu0 0.0
    %6272 = vmatprep.subr.mxu0 0.0
    %6273 = vmatpush1.msra.mxu0 0.0
    %6274 = vmatprep.subr.mxu0 0.0
    %6275 = vmatpush1.msra.mxu0 0.0
    %6276 = vmatprep.subr.mxu0 0.0
    %6277 = vmatpush1.msra.mxu0 0.0
    %6278 = vmatprep.subr.mxu0 0.0
    %6279 = vmatpush1.msra.mxu0 0.0
    %6280 = vmatprep.subr.mxu0 0.0
    %6281 = vmatpush1.msra.mxu0 0.0
    %6282 = vmatprep.subr.mxu0 0.0
    %6283 = vmatpush1.msra.mxu0 0.0
    %6284 = vmatprep.subr.mxu0 0.0
    %6285 = vmatpush1.msra.mxu0 0.0
    %6286 = vmatprep.subr.mxu0 0.0
    %6287 = vmatpush1.msra.mxu0 0.0
    %6288 = vmatprep.subr.mxu0 0.0
    %6289 = vmatpush1.msra.mxu0 0.0
    %6290 = vmatprep.subr.mxu0 0.0
    %6291 = vmatpush1.msra.mxu0 0.0
    %6292 = vmatprep.subr.mxu0 0.0
    %6293 = vmatpush1.msra.mxu0 0.0
    %6294 = vmatprep.subr.mxu0 0.0
    %6295 = vmatpush1.msra.mxu0 0.0
    %6296 = vmatprep.subr.mxu0 0.0
    %6297 = vmatpush1.msra.mxu0 0.0
    %6298 = vmatprep.subr.mxu0 0.0
    %6299 = vmatpush1.msra.mxu0 0.0
    %6300 = vmatprep.subr.mxu0 0.0
    %6301 = vmatpush1.msra.mxu0 0.0
    %6302 = vmatprep.subr.mxu0 0.0
    %6303 = vmatpush1.msra.mxu0 0.0
    %6304 = vmatprep.subr.mxu0 0.0
    %6305 = vmatpush1.msra.mxu0 0.0
    %6306 = vmatprep.subr.mxu0 0.0
    %6307 = vmatpush1.msra.mxu0 0.0
    %6308 = vmatprep.subr.mxu0 0.0
    %6309 = vmatpush1.msra.mxu0 0.0
    %6310 = vmatprep.subr.mxu0 0.0
    %6311 = vmatpush1.msra.mxu0 0.0
    %6312 = vmatprep.subr.mxu0 0.0
    %6313 = vmatpush1.msra.mxu0 0.0
    %6314 = vmatprep.subr.mxu0 0.0
    %6315 = vmatpush1.msra.mxu0 0.0
    %6316 = vmatprep.subr.mxu0 0.0
    %6317 = vmatpush1.msra.mxu0 0.0
    %6318 = vmatprep.subr.mxu0 0.0
    %6319 = vmatpush1.msra.mxu0 0.0
    %6320 = vmatprep.subr.mxu0 0.0
    %6321 = vmatpush1.msra.mxu0 0.0
    %6322 = vmatprep.subr.mxu0 0.0
    %6323 = vmatpush1.msra.mxu0 0.0
    %6324 = vmatprep.subr.mxu0 0.0
    %6325 = vmatpush1.msra.mxu0 0.0
    %6326 = vmatprep.subr.mxu0 0.0
    %6327 = vmatpush1.msra.mxu0 0.0
    %6328 = vmatprep.mubr.f32.mxu0 0.0
    %6329 = vmatmul.mubr.f32.gmra.mrb[0].mxu0 %v6262
    %v6330 = vpop.f32.mrb[0].mxu0
    %v6331 = vadd.f32 0.0, %v6330
    %v6332 = vpop.f32.mrb[0].mxu0
    %6333 = vdwg.mxu0
    %v6335 = vsel %vm138, %v6331, 0
    %6337 = vmatprep.subr.mxu0 0.0
    %6338 = vmatpush1.msra.mxu0 %v2235
    %6339 = vmatprep.subr.mxu0 0.0
    %6340 = vmatpush1.msra.mxu0 %v2236
    %6341 = vmatprep.subr.mxu0 0.0
    %6342 = vmatpush1.msra.mxu0 %v2237
    %6343 = vmatprep.subr.mxu0 0.0
    %6344 = vmatpush1.msra.mxu0 %v2238
    %6345 = vmatprep.subr.mxu0 0.0
    %6346 = vmatpush1.msra.mxu0 0.0
    %6347 = vmatprep.subr.mxu0 0.0
    %6348 = vmatpush1.msra.mxu0 0.0
    %6349 = vmatprep.subr.mxu0 0.0
    %6350 = vmatpush1.msra.mxu0 0.0
    %6351 = vmatprep.subr.mxu0 0.0
    %6352 = vmatpush1.msra.mxu0 0.0
    %6353 = vmatprep.subr.mxu0 0.0
    %6354 = vmatpush1.msra.mxu0 0.0
    %6355 = vmatprep.subr.mxu0 0.0
    %6356 = vmatpush1.msra.mxu0 0.0
    %6357 = vmatprep.subr.mxu0 0.0
    %6358 = vmatpush1.msra.mxu0 0.0
    %6359 = vmatprep.subr.mxu0 0.0
    %6360 = vmatpush1.msra.mxu0 0.0
    %6361 = vmatprep.subr.mxu0 0.0
    %6362 = vmatpush1.msra.mxu0 0.0
    %6363 = vmatprep.subr.mxu0 0.0
    %6364 = vmatpush1.msra.mxu0 0.0
    %6365 = vmatprep.subr.mxu0 0.0
    %6366 = vmatpush1.msra.mxu0 0.0
    %6367 = vmatprep.subr.mxu0 0.0
    %6368 = vmatpush1.msra.mxu0 0.0
    %6369 = vmatprep.subr.mxu0 0.0
    %6370 = vmatpush1.msra.mxu0 0.0
    %6371 = vmatprep.subr.mxu0 0.0
    %6372 = vmatpush1.msra.mxu0 0.0
    %6373 = vmatprep.subr.mxu0 0.0
    %6374 = vmatpush1.msra.mxu0 0.0
    %6375 = vmatprep.subr.mxu0 0.0
    %6376 = vmatpush1.msra.mxu0 0.0
    %6377 = vmatprep.subr.mxu0 0.0
    %6378 = vmatpush1.msra.mxu0 0.0
    %6379 = vmatprep.subr.mxu0 0.0
    %6380 = vmatpush1.msra.mxu0 0.0
    %6381 = vmatprep.subr.mxu0 0.0
    %6382 = vmatpush1.msra.mxu0 0.0
    %6383 = vmatprep.subr.mxu0 0.0
    %6384 = vmatpush1.msra.mxu0 0.0
    %6385 = vmatprep.subr.mxu0 0.0
    %6386 = vmatpush1.msra.mxu0 0.0
    %6387 = vmatprep.subr.mxu0 0.0
    %6388 = vmatpush1.msra.mxu0 0.0
    %6389 = vmatprep.subr.mxu0 0.0
    %6390 = vmatpush1.msra.mxu0 0.0
    %6391 = vmatprep.subr.mxu0 0.0
    %6392 = vmatpush1.msra.mxu0 0.0
    %6393 = vmatprep.subr.mxu0 0.0
    %6394 = vmatpush1.msra.mxu0 0.0
    %6395 = vmatprep.subr.mxu0 0.0
    %6396 = vmatpush1.msra.mxu0 0.0
    %6397 = vmatprep.subr.mxu0 0.0
    %6398 = vmatpush1.msra.mxu0 0.0
    %6399 = vmatprep.subr.mxu0 0.0
    %6400 = vmatpush1.msra.mxu0 0.0
    %6401 = vmatprep.mubr.f32.mxu0 0.0
    %6402 = vmatmul.mubr.f32.gmra.mrb[0].mxu0 %v6335
    %v6403 = vpop.f32.mrb[0].mxu0
    %v6404 = vadd.f32 0.0, %v6403
    %v6405 = vpop.f32.mrb[0].mxu0
    %6406 = vdwg.mxu0
    %6407 = vmatprep.subr.mxu0 0.0
    %6408 = vmatpush1.msra.mxu0 %v2231
    %6409 = vmatprep.subr.mxu0 0.0
    %6410 = vmatpush1.msra.mxu0 %v2232
    %6411 = vmatprep.subr.mxu0 0.0
    %6412 = vmatpush1.msra.mxu0 %v2233
    %6413 = vmatprep.subr.mxu0 0.0
    %6414 = vmatpush1.msra.mxu0 %v2234
    %6415 = vmatprep.subr.mxu0 0.0
    %6416 = vmatpush1.msra.mxu0 0.0
    %6417 = vmatprep.subr.mxu0 0.0
    %6418 = vmatpush1.msra.mxu0 0.0
    %6419 = vmatprep.subr.mxu0 0.0
    %6420 = vmatpush1.msra.mxu0 0.0
    %6421 = vmatprep.subr.mxu0 0.0
    %6422 = vmatpush1.msra.mxu0 0.0
    %6423 = vmatprep.subr.mxu0 0.0
    %6424 = vmatpush1.msra.mxu0 0.0
    %6425 = vmatprep.subr.mxu0 0.0
    %6426 = vmatpush1.msra.mxu0 0.0
    %6427 = vmatprep.subr.mxu0 0.0
    %6428 = vmatpush1.msra.mxu0 0.0
    %6429 = vmatprep.subr.mxu0 0.0
    %6430 = vmatpush1.msra.mxu0 0.0
    %6431 = vmatprep.subr.mxu0 0.0
    %6432 = vmatpush1.msra.mxu0 0.0
    %6433 = vmatprep.subr.mxu0 0.0
    %6434 = vmatpush1.msra.mxu0 0.0
    %6435 = vmatprep.subr.mxu0 0.0
    %6436 = vmatpush1.msra.mxu0 0.0
    %6437 = vmatprep.subr.mxu0 0.0
    %6438 = vmatpush1.msra.mxu0 0.0
    %6439 = vmatprep.subr.mxu0 0.0
    %6440 = vmatpush1.msra.mxu0 0.0
    %6441 = vmatprep.subr.mxu0 0.0
    %6442 = vmatpush1.msra.mxu0 0.0
    %6443 = vmatprep.subr.mxu0 0.0
    %6444 = vmatpush1.msra.mxu0 0.0
    %6445 = vmatprep.subr.mxu0 0.0
    %6446 = vmatpush1.msra.mxu0 0.0
    %6447 = vmatprep.subr.mxu0 0.0
    %6448 = vmatpush1.msra.mxu0 0.0
    %6449 = vmatprep.subr.mxu0 0.0
    %6450 = vmatpush1.msra.mxu0 0.0
    %6451 = vmatprep.subr.mxu0 0.0
    %6452 = vmatpush1.msra.mxu0 0.0
    %6453 = vmatprep.subr.mxu0 0.0
    %6454 = vmatpush1.msra.mxu0 0.0
    %6455 = vmatprep.subr.mxu0 0.0
    %6456 = vmatpush1.msra.mxu0 0.0
    %6457 = vmatprep.subr.mxu0 0.0
    %6458 = vmatpush1.msra.mxu0 0.0
    %6459 = vmatprep.subr.mxu0 0.0
    %6460 = vmatpush1.msra.mxu0 0.0
    %6461 = vmatprep.subr.mxu0 0.0
    %6462 = vmatpush1.msra.mxu0 0.0
    %6463 = vmatprep.subr.mxu0 0.0
    %6464 = vmatpush1.msra.mxu0 0.0
    %6465 = vmatprep.subr.mxu0 0.0
    %6466 = vmatpush1.msra.mxu0 0.0
    %6467 = vmatprep.subr.mxu0 0.0
    %6468 = vmatpush1.msra.mxu0 0.0
    %6469 = vmatprep.subr.mxu0 0.0
    %6470 = vmatpush1.msra.mxu0 0.0
    %6471 = vmatprep.mubr.f32.mxu0 0.0
    %6472 = vmatmul.mubr.f32.gmra.mrb[0].mxu0 %v6177
    %v6473 = vpop.f32.mrb[0].mxu0
    %v6474 = vadd.f32 %v6404, %v6473
    %v6475 = vpop.f32.mrb[0].mxu0
    %6476 = vdwg.mxu0
    %v6477 = vadd.f32 %v6474, %v2239
    %v6478 = vtanh.pop %v6477
    %v6480 = vsel %vm138, %v6478, 0
    %6482 = vmatprep.subr.mxu0 0.0
    %6483 = vmatpush1.msra.mxu0 %v2240
    %6484 = vmatprep.subr.mxu0 0.0
    %6485 = vmatpush1.msra.mxu0 %v2241
    %6486 = vmatprep.subr.mxu0 0.0
    %6487 = vmatpush1.msra.mxu0 %v2242
    %6488 = vmatprep.subr.mxu0 0.0
    %6489 = vmatpush1.msra.mxu0 %v2243
    %6490 = vmatprep.subr.mxu0 0.0
    %6491 = vmatpush1.msra.mxu0 0.0
    %6492 = vmatprep.subr.mxu0 0.0
    %6493 = vmatpush1.msra.mxu0 0.0
    %6494 = vmatprep.subr.mxu0 0.0
    %6495 = vmatpush1.msra.mxu0 0.0
    %6496 = vmatprep.subr.mxu0 0.0
    %6497 = vmatpush1.msra.mxu0 0.0
    %6498 = vmatprep.subr.mxu0 0.0
    %6499 = vmatpush1.msra.mxu0 0.0
    %6500 = vmatprep.subr.mxu0 0.0
    %6501 = vmatpush1.msra.mxu0 0.0
    %6502 = vmatprep.subr.mxu0 0.0
    %6503 = vmatpush1.msra.mxu0 0.0
    %6504 = vmatprep.subr.mxu0 0.0
    %6505 = vmatpush1.msra.mxu0 0.0
    %6506 = vmatprep.subr.mxu0 0.0
    %6507 = vmatpush1.msra.mxu0 0.0
    %6508 = vmatprep.subr.mxu0 0.0
    %6509 = vmatpush1.msra.mxu0 0.0
    %6510 = vmatprep.subr.mxu0 0.0
    %6511 = vmatpush1.msra.mxu0 0.0
    %6512 = vmatprep.subr.mxu0 0.0
    %6513 = vmatpush1.msra.mxu0 0.0
    %6514 = vmatprep.subr.mxu0 0.0
    %6515 = vmatpush1.msra.mxu0 0.0
    %6516 = vmatprep.subr.mxu0 0.0
    %6517 = vmatpush1.msra.mxu0 0.0
    %6518 = vmatprep.subr.mxu0 0.0
    %6519 = vmatpush1.msra.mxu0 0.0
    %6520 = vmatprep.subr.mxu0 0.0
    %6521 = vmatpush1.msra.mxu0 0.0
    %6522 = vmatprep.subr.mxu0 0.0
    %6523 = vmatpush1.msra.mxu0 0.0
    %6524 = vmatprep.subr.mxu0 0.0
    %6525 = vmatpush1.msra.mxu0 0.0
    %6526 = vmatprep.subr.mxu0 0.0
    %6527 = vmatpush1.msra.mxu0 0.0
    %6528 = vmatprep.subr.mxu0 0.0
    %6529 = vmatpush1.msra.mxu0 0.0
    %6530 = vmatprep.subr.mxu0 0.0
    %6531 = vmatpush1.msra.mxu0 0.0
    %6532 = vmatprep.subr.mxu0 0.0
    %6533 = vmatpush1.msra.mxu0 0.0
    %6534 = vmatprep.subr.mxu0 0.0
    %6535 = vmatpush1.msra.mxu0 0.0
    %6536 = vmatprep.subr.mxu0 0.0
    %6537 = vmatpush1.msra.mxu0 0.0
    %6538 = vmatprep.subr.mxu0 0.0
    %6539 = vmatpush1.msra.mxu0 0.0
    %6540 = vmatprep.subr.mxu0 0.0
    %6541 = vmatpush1.msra.mxu0 0.0
    %6542 = vmatprep.subr.mxu0 0.0
    %6543 = vmatpush1.msra.mxu0 0.0
    %6544 = vmatprep.subr.mxu0 0.0
    %6545 = vmatpush1.msra.mxu0 0.0
    %6546 = vmatprep.mubr.f32.mxu0 0.0
    %6547 = vmatmul.mubr.f32.gmra.mrb[0].mxu0 %v6480
    %v6548 = vpop.f32.mrb[0].mxu0
    %v6549 = vadd.f32 %v2244, %v6548
    %v6550 = vpop.f32.mrb[0].mxu0
    %6551 = vdwg.mxu0
    %v6552 = vsel %vm2819, %v6549, -inf
    %6553 = vmax.xlane.f32.xlu0 %v6552
    %v6554 = vpop.xlane.xlu0 %6553
    %v6555 = vrot.slane %v6554, 4
    %v6556 = vmax.f32 %v6554, %v6555
    %v6557 = vrot.slane %v6556, 2
    %v6558 = vmax.f32 %v6556, %v6557
    %v6559 = vrot.slane %v6558, 1
    %v6560 = vmax.f32 %v6558, %v6559
    %s6561 = vtos %v6560
    %v6562 = vstv %s6561
    %v6563 = vsub.f32 %v6549, %v6562
    %v6564 = vmul.f32 %v6563, 1.442695
    %v6565 = vpow.pop %v6564
    %v6566 = vsel %vm2819, %v6565, 0.0
    %6567 = vadd.xlane.f32.xlu0 %v6566
    %v6568 = vpop.xlane.xlu0 %6567
    %v6569 = vrot.slane %v6568, 4
    %v6570 = vadd.f32 %v6568, %v6569
    %v6571 = vrot.slane %v6570, 2
    %v6572 = vadd.f32 %v6570, %v6571
    %v6573 = vrot.slane %v6572, 1
    %v6574 = vadd.f32 %v6572, %v6573
    %s6575 = vtos %v6574
    %v6576 = vstv %s6575
    %v6577 = vrcp.pop %v6576
    %s6578 = vtos %v6577
    %vm6579 = vcmp.eq.f32.partialorder %v6549, %v6562
    %v6580 = vsel %vm6579, %v2246, 128
    %v6581 = vsel %vm2819, %v6580, 2147483647
    %v6582 = vand.u32 %v6581, 65535
    %v6583 = vshra.s32 %v6581, 16
    %v6584 = vcvt.s32.f32 %v6582
    %v6585 = vcvt.s32.f32 %v6583
    %6586 = vmin.xlane.f32.xlu0 %v6585
    %v6587 = vpop.xlane.xlu0 %6586
    %vm6588 = vcmp.eq.f32.partialorder %v6585, %v6587
    %v6589 = vsel %vm6588, %v6584, inf
    %6590 = vmin.xlane.f32.xlu0 %v6589
    %v6591 = vpop.xlane.xlu0 %6590
    %v6592 = vcvt.f32.s32 %v6591
    %v6593 = vcvt.f32.s32 %v6587
    %v6594 = vshll.u32 %v6593, 16
    %v6595 = vadd.s32 %v6594, %v6592
    %v6596 = vrot.slane %v6595, 4
    %vm6597 = vcmp.lt.s32.totalorder %v6595, %v6596
    %v6598 = vsel %vm6597, %v6595, %v6596
    %v6599 = vrot.slane %v6598, 2
    %vm6600 = vcmp.lt.s32.totalorder %v6598, %v6599
    %v6601 = vsel %vm6600, %v6598, %v6599
    %v6602 = vrot.slane %v6601, 1
    %vm6603 = vcmp.lt.s32.totalorder %v6601, %v6602
    %v6604 = vsel %vm6603, %v6601, %v6602
    %s6605 = vtos %v6604
    %s6606 = scalar_lea.smem [#allocation15], 6
    %6607 = sst [smem:[%s6606]] %s6605
    %s6608 = scalar_lea.smem [#allocation16], 6
    %6609 = sst [smem:[%s6608]] %s6578
    %6610 = sst [smem:[%s2249]] %s6605
    %s6611 = sld [smem:[#allocation8]]
    %s6612 = scalar_lea.vmem %s2, %s6611
    %v6613 = vld [vmem:[%s6612] sm:$0x1]
    %v6615 = vsel %vm138, %v6613, 0
    %6617 = vmatprep.subr.mxu0 0.0
    %6618 = vmatpush1.msra.mxu0 %v2221
    %6619 = vmatprep.subr.mxu0 0.0
    %6620 = vmatpush1.msra.mxu0 %v2222
    %6621 = vmatprep.subr.mxu0 0.0
    %6622 = vmatpush1.msra.mxu0 %v2223
    %6623 = vmatprep.subr.mxu0 0.0
    %6624 = vmatpush1.msra.mxu0 %v2224
    %6625 = vmatprep.subr.mxu0 0.0
    %6626 = vmatpush1.msra.mxu0 0.0
    %6627 = vmatprep.subr.mxu0 0.0
    %6628 = vmatpush1.msra.mxu0 0.0
    %6629 = vmatprep.subr.mxu0 0.0
    %6630 = vmatpush1.msra.mxu0 0.0
    %6631 = vmatprep.subr.mxu0 0.0
    %6632 = vmatpush1.msra.mxu0 0.0
    %6633 = vmatprep.subr.mxu0 0.0
    %6634 = vmatpush1.msra.mxu0 0.0
    %6635 = vmatprep.subr.mxu0 0.0
    %6636 = vmatpush1.msra.mxu0 0.0
    %6637 = vmatprep.subr.mxu0 0.0
    %6638 = vmatpush1.msra.mxu0 0.0
    %6639 = vmatprep.subr.mxu0 0.0
    %6640 = vmatpush1.msra.mxu0 0.0
    %6641 = vmatprep.subr.mxu0 0.0
    %6642 = vmatpush1.msra.mxu0 0.0
    %6643 = vmatprep.subr.mxu0 0.0
    %6644 = vmatpush1.msra.mxu0 0.0
    %6645 = vmatprep.subr.mxu0 0.0
    %6646 = vmatpush1.msra.mxu0 0.0
    %6647 = vmatprep.subr.mxu0 0.0
    %6648 = vmatpush1.msra.mxu0 0.0
    %6649 = vmatprep.subr.mxu0 0.0
    %6650 = vmatpush1.msra.mxu0 0.0
    %6651 = vmatprep.subr.mxu0 0.0
    %6652 = vmatpush1.msra.mxu0 0.0
    %6653 = vmatprep.subr.mxu0 0.0
    %6654 = vmatpush1.msra.mxu0 0.0
    %6655 = vmatprep.subr.mxu0 0.0
    %6656 = vmatpush1.msra.mxu0 0.0
    %6657 = vmatprep.subr.mxu0 0.0
    %6658 = vmatpush1.msra.mxu0 0.0
    %6659 = vmatprep.subr.mxu0 0.0
    %6660 = vmatpush1.msra.mxu0 0.0
    %6661 = vmatprep.subr.mxu0 0.0
    %6662 = vmatpush1.msra.mxu0 0.0
    %6663 = vmatprep.subr.mxu0 0.0
    %6664 = vmatpush1.msra.mxu0 0.0
    %6665 = vmatprep.subr.mxu0 0.0
    %6666 = vmatpush1.msra.mxu0 0.0
    %6667 = vmatprep.subr.mxu0 0.0
    %6668 = vmatpush1.msra.mxu0 0.0
    %6669 = vmatprep.subr.mxu0 0.0
    %6670 = vmatpush1.msra.mxu0 0.0
    %6671 = vmatprep.subr.mxu0 0.0
    %6672 = vmatpush1.msra.mxu0 0.0
    %6673 = vmatprep.subr.mxu0 0.0
    %6674 = vmatpush1.msra.mxu0 0.0
    %6675 = vmatprep.subr.mxu0 0.0
    %6676 = vmatpush1.msra.mxu0 0.0
    %6677 = vmatprep.subr.mxu0 0.0
    %6678 = vmatpush1.msra.mxu0 0.0
    %6679 = vmatprep.subr.mxu0 0.0
    %6680 = vmatpush1.msra.mxu0 0.0
    %6681 = vmatprep.mubr.f32.mxu0 0.0
    %6682 = vmatmul.mubr.f32.gmra.mrb[0].mxu0 %v6615
    %v6683 = vpop.f32.mrb[0].mxu0
    %v6684 = vadd.f32 %v2229, %v6683
    %v6685 = vpop.f32.mrb[0].mxu0
    %6686 = vdwg.mxu0
    %v6687 = vld [vmem:[#allocation7] sm:$0x1]
    %v6689 = vsel %vm138, %v6687, 0
    %6691 = vmatprep.subr.mxu0 0.0
    %6692 = vmatpush1.msra.mxu0 %v2225
    %6693 = vmatprep.subr.mxu0 0.0
    %6694 = vmatpush1.msra.mxu0 %v2226
    %6695 = vmatprep.subr.mxu0 0.0
    %6696 = vmatpush1.msra.mxu0 %v2227
    %6697 = vmatprep.subr.mxu0 0.0
    %6698 = vmatpush1.msra.mxu0 %v2228
    %6699 = vmatprep.subr.mxu0 0.0
    %6700 = vmatpush1.msra.mxu0 0.0
    %6701 = vmatprep.subr.mxu0 0.0
    %6702 = vmatpush1.msra.mxu0 0.0
    %6703 = vmatprep.subr.mxu0 0.0
    %6704 = vmatpush1.msra.mxu0 0.0
    %6705 = vmatprep.subr.mxu0 0.0
    %6706 = vmatpush1.msra.mxu0 0.0
    %6707 = vmatprep.subr.mxu0 0.0
    %6708 = vmatpush1.msra.mxu0 0.0
    %6709 = vmatprep.subr.mxu0 0.0
    %6710 = vmatpush1.msra.mxu0 0.0
    %6711 = vmatprep.subr.mxu0 0.0
    %6712 = vmatpush1.msra.mxu0 0.0
    %6713 = vmatprep.subr.mxu0 0.0
    %6714 = vmatpush1.msra.mxu0 0.0
    %6715 = vmatprep.subr.mxu0 0.0
    %6716 = vmatpush1.msra.mxu0 0.0
    %6717 = vmatprep.subr.mxu0 0.0
    %6718 = vmatpush1.msra.mxu0 0.0
    %6719 = vmatprep.subr.mxu0 0.0
    %6720 = vmatpush1.msra.mxu0 0.0
    %6721 = vmatprep.subr.mxu0 0.0
    %6722 = vmatpush1.msra.mxu0 0.0
    %6723 = vmatprep.subr.mxu0 0.0
    %6724 = vmatpush1.msra.mxu0 0.0
    %6725 = vmatprep.subr.mxu0 0.0
    %6726 = vmatpush1.msra.mxu0 0.0
    %6727 = vmatprep.subr.mxu0 0.0
    %6728 = vmatpush1.msra.mxu0 0.0
    %6729 = vmatprep.subr.mxu0 0.0
    %6730 = vmatpush1.msra.mxu0 0.0
    %6731 = vmatprep.subr.mxu0 0.0
    %6732 = vmatpush1.msra.mxu0 0.0
    %6733 = vmatprep.subr.mxu0 0.0
    %6734 = vmatpush1.msra.mxu0 0.0
    %6735 = vmatprep.subr.mxu0 0.0
    %6736 = vmatpush1.msra.mxu0 0.0
    %6737 = vmatprep.subr.mxu0 0.0
    %6738 = vmatpush1.msra.mxu0 0.0
    %6739 = vmatprep.subr.mxu0 0.0
    %6740 = vmatpush1.msra.mxu0 0.0
    %6741 = vmatprep.subr.mxu0 0.0
    %6742 = vmatpush1.msra.mxu0 0.0
    %6743 = vmatprep.subr.mxu0 0.0
    %6744 = vmatpush1.msra.mxu0 0.0
    %6745 = vmatprep.subr.mxu0 0.0
    %6746 = vmatpush1.msra.mxu0 0.0
    %6747 = vmatprep.subr.mxu0 0.0
    %6748 = vmatpush1.msra.mxu0 0.0
    %6749 = vmatprep.subr.mxu0 0.0
    %6750 = vmatpush1.msra.mxu0 0.0
    %6751 = vmatprep.subr.mxu0 0.0
    %6752 = vmatpush1.msra.mxu0 0.0
    %6753 = vmatprep.subr.mxu0 0.0
    %6754 = vmatpush1.msra.mxu0 0.0
    %6755 = vmatprep.mubr.f32.mxu0 0.0
    %6756 = vmatmul.mubr.f32.gmra.mrb[0].mxu0 %v6689
    %v6757 = vpop.f32.mrb[0].mxu0
    %v6758 = vadd.f32 %v2230, %v6757
    %v6759 = vpop.f32.mrb[0].mxu0
    %6760 = vdwg.mxu0
    %v6761 = vadd.f32 %v6684, %v6758
    %v6762 = vxor.u32 %v6761, 2147483648
    %v6763 = vmul.f32 %v6762, 1.442695
    %v6764 = vpow.pop %v6763
    %v6765 = vadd.f32 %v6764, 1.0
    %v6766 = vrcp.pop %v6765
    %v6767 = vmul.f32 1.0, %v6766
    %6769 = vrot.lane.b32.xlu0 %v6758, 64
    %v6770 = vpop.permute.xlu0 %6769
    %v6772 = vmul.f32 %v6767, %v6770
    %6774 = vrot.lane.b32.xlu0 %v6772, 64
    %v6775 = vpop.permute.xlu0 %6774
    %v6777 = vadd.f32 %v6684, %v6775
    %v6778 = vtanh.pop %v6777
    %v6779 = vsub.f32 1.0, %v6767
    %6781 = vrot.lane.b32.xlu0 %v6778, 96
    %v6782 = vpop.permute.xlu0 %6781
    %v6784 = vmul.f32 %v6779, %v6782
    %v6785 = vlaneseq
    %v6786 = vshrl.u32 %v6785, 7
    %v6787 = vsub.s32 0, %v6786
    %v6788 = vrot.slane %v6687, %v6787
    %6789 = vrot.lane.b32.xlu0 %v6788, 32
    %v6790 = vpop.permute.xlu0 %6789
    %v6792 = vmul.f32 %v6767, %v6790
    %v6793 = vadd.f32 %v6784, %v6792
    %6795 = vrot.lane.b32.xlu0 %v6793, 96
    %v6796 = vpop.permute.xlu0 %6795
    %6798 = vst.msk [vmem:[#allocation7] sm:$0x1] %vm96, %v6796
    %v6799 = vsel %vm138, %v6796, 0
    %6801 = vmatprep.subr.mxu0 0.0
    %6802 = vmatpush1.xpose.msra.mxu0 %v2442
    %6803 = vmatprep.subr.mxu0 0.0
    %6804 = vmatpush1.xpose.msra.mxu0 0.0
    %6805 = vmatprep.subr.mxu0 0.0
    %6806 = vmatpush1.xpose.msra.mxu0 0.0
    %6807 = vmatprep.subr.mxu0 0.0
    %6808 = vmatpush1.xpose.msra.mxu0 0.0
    %6809 = vmatprep.subr.mxu0 0.0
    %6810 = vmatpush1.xpose.msra.mxu0 0.0
    %6811 = vmatprep.subr.mxu0 0.0
    %6812 = vmatpush1.xpose.msra.mxu0 0.0
    %6813 = vmatprep.subr.mxu0 0.0
    %6814 = vmatpush1.xpose.msra.mxu0 0.0
    %6815 = vmatprep.subr.mxu0 0.0
    %6816 = vmatpush1.xpose.msra.mxu0 0.0
    %6817 = vmatprep.subr.mxu0 0.0
    %6818 = vmatpush1.xpose.msra.mxu0 0.0
    %6819 = vmatprep.subr.mxu0 0.0
    %6820 = vmatpush1.xpose.msra.mxu0 0.0
    %6821 = vmatprep.subr.mxu0 0.0
    %6822 = vmatpush1.xpose.msra.mxu0 0.0
    %6823 = vmatprep.subr.mxu0 0.0
    %6824 = vmatpush1.xpose.msra.mxu0 0.0
    %6825 = vmatprep.subr.mxu0 0.0
    %6826 = vmatpush1.xpose.msra.mxu0 0.0
    %6827 = vmatprep.subr.mxu0 0.0
    %6828 = vmatpush1.xpose.msra.mxu0 0.0
    %6829 = vmatprep.subr.mxu0 0.0
    %6830 = vmatpush1.xpose.msra.mxu0 0.0
    %6831 = vmatprep.subr.mxu0 0.0
    %6832 = vmatpush1.xpose.msra.mxu0 0.0
    %6833 = vmatprep.subr.mxu0 0.0
    %6834 = vmatpush1.xpose.msra.mxu0 0.0
    %6835 = vmatprep.subr.mxu0 0.0
    %6836 = vmatpush1.xpose.msra.mxu0 0.0
    %6837 = vmatprep.subr.mxu0 0.0
    %6838 = vmatpush1.xpose.msra.mxu0 0.0
    %6839 = vmatprep.subr.mxu0 0.0
    %6840 = vmatpush1.xpose.msra.mxu0 0.0
    %6841 = vmatprep.subr.mxu0 0.0
    %6842 = vmatpush1.xpose.msra.mxu0 0.0
    %6843 = vmatprep.subr.mxu0 0.0
    %6844 = vmatpush1.xpose.msra.mxu0 0.0
    %6845 = vmatprep.subr.mxu0 0.0
    %6846 = vmatpush1.xpose.msra.mxu0 0.0
    %6847 = vmatprep.subr.mxu0 0.0
    %6848 = vmatpush1.xpose.msra.mxu0 0.0
    %6849 = vmatprep.subr.mxu0 0.0
    %6850 = vmatpush1.xpose.msra.mxu0 0.0
    %6851 = vmatprep.subr.mxu0 0.0
    %6852 = vmatpush1.xpose.msra.mxu0 0.0
    %6853 = vmatprep.subr.mxu0 0.0
    %6854 = vmatpush1.xpose.msra.mxu0 0.0
    %6855 = vmatprep.subr.mxu0 0.0
    %6856 = vmatpush1.xpose.msra.mxu0 0.0
    %6857 = vmatprep.subr.mxu0 0.0
    %6858 = vmatpush1.xpose.msra.mxu0 0.0
    %6859 = vmatprep.subr.mxu0 0.0
    %6860 = vmatpush1.xpose.msra.mxu0 0.0
    %6861 = vmatprep.subr.mxu0 0.0
    %6862 = vmatpush1.xpose.msra.mxu0 0.0
    %6863 = vmatprep.subr.mxu0 0.0
    %6864 = vmatpush1.xpose.msra.mxu0 0.0
    %6865 = vmatprep.mubr.f32.mxu0 0.0
    %6866 = vmatmul.mubr.f32.gmra.mrb[0].mxu0 %v6799
    %v6867 = vpop.f32.mrb[0].mxu0
    %v6868 = vadd.f32 0.0, %v6867
    %v6869 = vpop.f32.mrb[0].mxu0
    %6870 = vdwg.mxu0
    %v6871 = vsel %vm2248, %v6868, -1e+30
    %v6872 = vsel %vm2515, %v6871, -inf
    %6873 = vmax.xlane.f32.xlu0 %v6872
    %v6874 = vpop.xlane.xlu0 %6873
    %v6875 = vsub.f32 %v6871, %v6874
    %v6876 = vmul.f32 %v6875, 1.442695
    %v6877 = vpow.pop %v6876
    %v6878 = vsel %vm2515, %v6877, 0.0
    %6879 = vadd.xlane.f32.xlu0 %v6878
    %v6880 = vpop.xlane.xlu0 %6879
    %v6881 = vrcp.pop %v6880
    %v6882 = vmul.f32 %v6877, %v6881
    %v6884 = vsel %vm2527, %v6882, 0
    %6886 = vmatprep.subr.mxu0 0.0
    %6887 = vmatpush1.msra.mxu0 %v2220
    %6888 = vmatprep.subr.mxu0 0.0
    %6889 = vmatpush1.msra.mxu0 0.0
    %6890 = vmatprep.subr.mxu0 0.0
    %6891 = vmatpush1.msra.mxu0 0.0
    %6892 = vmatprep.subr.mxu0 0.0
    %6893 = vmatpush1.msra.mxu0 0.0
    %6894 = vmatprep.subr.mxu0 0.0
    %6895 = vmatpush1.msra.mxu0 0.0
    %6896 = vmatprep.subr.mxu0 0.0
    %6897 = vmatpush1.msra.mxu0 0.0
    %6898 = vmatprep.subr.mxu0 0.0
    %6899 = vmatpush1.msra.mxu0 0.0
    %6900 = vmatprep.subr.mxu0 0.0
    %6901 = vmatpush1.msra.mxu0 0.0
    %6902 = vmatprep.subr.mxu0 0.0
    %6903 = vmatpush1.msra.mxu0 0.0
    %6904 = vmatprep.subr.mxu0 0.0
    %6905 = vmatpush1.msra.mxu0 0.0
    %6906 = vmatprep.subr.mxu0 0.0
    %6907 = vmatpush1.msra.mxu0 0.0
    %6908 = vmatprep.subr.mxu0 0.0
    %6909 = vmatpush1.msra.mxu0 0.0
    %6910 = vmatprep.subr.mxu0 0.0
    %6911 = vmatpush1.msra.mxu0 0.0
    %6912 = vmatprep.subr.mxu0 0.0
    %6913 = vmatpush1.msra.mxu0 0.0
    %6914 = vmatprep.subr.mxu0 0.0
    %6915 = vmatpush1.msra.mxu0 0.0
    %6916 = vmatprep.subr.mxu0 0.0
    %6917 = vmatpush1.msra.mxu0 0.0
    %6918 = vmatprep.subr.mxu0 0.0
    %6919 = vmatpush1.msra.mxu0 0.0
    %6920 = vmatprep.subr.mxu0 0.0
    %6921 = vmatpush1.msra.mxu0 0.0
    %6922 = vmatprep.subr.mxu0 0.0
    %6923 = vmatpush1.msra.mxu0 0.0
    %6924 = vmatprep.subr.mxu0 0.0
    %6925 = vmatpush1.msra.mxu0 0.0
    %6926 = vmatprep.subr.mxu0 0.0
    %6927 = vmatpush1.msra.mxu0 0.0
    %6928 = vmatprep.subr.mxu0 0.0
    %6929 = vmatpush1.msra.mxu0 0.0
    %6930 = vmatprep.subr.mxu0 0.0
    %6931 = vmatpush1.msra.mxu0 0.0
    %6932 = vmatprep.subr.mxu0 0.0
    %6933 = vmatpush1.msra.mxu0 0.0
    %6934 = vmatprep.subr.mxu0 0.0
    %6935 = vmatpush1.msra.mxu0 0.0
    %6936 = vmatprep.subr.mxu0 0.0
    %6937 = vmatpush1.msra.mxu0 0.0
    %6938 = vmatprep.subr.mxu0 0.0
    %6939 = vmatpush1.msra.mxu0 0.0
    %6940 = vmatprep.subr.mxu0 0.0
    %6941 = vmatpush1.msra.mxu0 0.0
    %6942 = vmatprep.subr.mxu0 0.0
    %6943 = vmatpush1.msra.mxu0 0.0
    %6944 = vmatprep.subr.mxu0 0.0
    %6945 = vmatpush1.msra.mxu0 0.0
    %6946 = vmatprep.subr.mxu0 0.0
    %6947 = vmatpush1.msra.mxu0 0.0
    %6948 = vmatprep.subr.mxu0 0.0
    %6949 = vmatpush1.msra.mxu0 0.0
    %6950 = vmatprep.mubr.f32.mxu0 0.0
    %6951 = vmatmul.mubr.f32.gmra.mrb[0].mxu0 %v6884
    %v6952 = vpop.f32.mrb[0].mxu0
    %v6953 = vadd.f32 0.0, %v6952
    %v6954 = vpop.f32.mrb[0].mxu0
    %6955 = vdwg.mxu0
    %v6957 = vsel %vm138, %v6953, 0
    %6959 = vmatprep.subr.mxu0 0.0
    %6960 = vmatpush1.msra.mxu0 %v2235
    %6961 = vmatprep.subr.mxu0 0.0
    %6962 = vmatpush1.msra.mxu0 %v2236
    %6963 = vmatprep.subr.mxu0 0.0
    %6964 = vmatpush1.msra.mxu0 %v2237
    %6965 = vmatprep.subr.mxu0 0.0
    %6966 = vmatpush1.msra.mxu0 %v2238
    %6967 = vmatprep.subr.mxu0 0.0
    %6968 = vmatpush1.msra.mxu0 0.0
    %6969 = vmatprep.subr.mxu0 0.0
    %6970 = vmatpush1.msra.mxu0 0.0
    %6971 = vmatprep.subr.mxu0 0.0
    %6972 = vmatpush1.msra.mxu0 0.0
    %6973 = vmatprep.subr.mxu0 0.0
    %6974 = vmatpush1.msra.mxu0 0.0
    %6975 = vmatprep.subr.mxu0 0.0
    %6976 = vmatpush1.msra.mxu0 0.0
    %6977 = vmatprep.subr.mxu0 0.0
    %6978 = vmatpush1.msra.mxu0 0.0
    %6979 = vmatprep.subr.mxu0 0.0
    %6980 = vmatpush1.msra.mxu0 0.0
    %6981 = vmatprep.subr.mxu0 0.0
    %6982 = vmatpush1.msra.mxu0 0.0
    %6983 = vmatprep.subr.mxu0 0.0
    %6984 = vmatpush1.msra.mxu0 0.0
    %6985 = vmatprep.subr.mxu0 0.0
    %6986 = vmatpush1.msra.mxu0 0.0
    %6987 = vmatprep.subr.mxu0 0.0
    %6988 = vmatpush1.msra.mxu0 0.0
    %6989 = vmatprep.subr.mxu0 0.0
    %6990 = vmatpush1.msra.mxu0 0.0
    %6991 = vmatprep.subr.mxu0 0.0
    %6992 = vmatpush1.msra.mxu0 0.0
    %6993 = vmatprep.subr.mxu0 0.0
    %6994 = vmatpush1.msra.mxu0 0.0
    %6995 = vmatprep.subr.mxu0 0.0
    %6996 = vmatpush1.msra.mxu0 0.0
    %6997 = vmatprep.subr.mxu0 0.0
    %6998 = vmatpush1.msra.mxu0 0.0
    %6999 = vmatprep.subr.mxu0 0.0
    %7000 = vmatpush1.msra.mxu0 0.0
    %7001 = vmatprep.subr.mxu0 0.0
    %7002 = vmatpush1.msra.mxu0 0.0
    %7003 = vmatprep.subr.mxu0 0.0
    %7004 = vmatpush1.msra.mxu0 0.0
    %7005 = vmatprep.subr.mxu0 0.0
    %7006 = vmatpush1.msra.mxu0 0.0
    %7007 = vmatprep.subr.mxu0 0.0
    %7008 = vmatpush1.msra.mxu0 0.0
    %7009 = vmatprep.subr.mxu0 0.0
    %7010 = vmatpush1.msra.mxu0 0.0
    %7011 = vmatprep.subr.mxu0 0.0
    %7012 = vmatpush1.msra.mxu0 0.0
    %7013 = vmatprep.subr.mxu0 0.0
    %7014 = vmatpush1.msra.mxu0 0.0
    %7015 = vmatprep.subr.mxu0 0.0
    %7016 = vmatpush1.msra.mxu0 0.0
    %7017 = vmatprep.subr.mxu0 0.0
    %7018 = vmatpush1.msra.mxu0 0.0
    %7019 = vmatprep.subr.mxu0 0.0
    %7020 = vmatpush1.msra.mxu0 0.0
    %7021 = vmatprep.subr.mxu0 0.0
    %7022 = vmatpush1.msra.mxu0 0.0
    %7023 = vmatprep.mubr.f32.mxu0 0.0
    %7024 = vmatmul.mubr.f32.gmra.mrb[0].mxu0 %v6957
    %v7025 = vpop.f32.mrb[0].mxu0
    %v7026 = vadd.f32 0.0, %v7025
    %v7027 = vpop.f32.mrb[0].mxu0
    %7028 = vdwg.mxu0
    %7029 = vmatprep.subr.mxu0 0.0
    %7030 = vmatpush1.msra.mxu0 %v2231
    %7031 = vmatprep.subr.mxu0 0.0
    %7032 = vmatpush1.msra.mxu0 %v2232
    %7033 = vmatprep.subr.mxu0 0.0
    %7034 = vmatpush1.msra.mxu0 %v2233
    %7035 = vmatprep.subr.mxu0 0.0
    %7036 = vmatpush1.msra.mxu0 %v2234
    %7037 = vmatprep.subr.mxu0 0.0
    %7038 = vmatpush1.msra.mxu0 0.0
    %7039 = vmatprep.subr.mxu0 0.0
    %7040 = vmatpush1.msra.mxu0 0.0
    %7041 = vmatprep.subr.mxu0 0.0
    %7042 = vmatpush1.msra.mxu0 0.0
    %7043 = vmatprep.subr.mxu0 0.0
    %7044 = vmatpush1.msra.mxu0 0.0
    %7045 = vmatprep.subr.mxu0 0.0
    %7046 = vmatpush1.msra.mxu0 0.0
    %7047 = vmatprep.subr.mxu0 0.0
    %7048 = vmatpush1.msra.mxu0 0.0
    %7049 = vmatprep.subr.mxu0 0.0
    %7050 = vmatpush1.msra.mxu0 0.0
    %7051 = vmatprep.subr.mxu0 0.0
    %7052 = vmatpush1.msra.mxu0 0.0
    %7053 = vmatprep.subr.mxu0 0.0
    %7054 = vmatpush1.msra.mxu0 0.0
    %7055 = vmatprep.subr.mxu0 0.0
    %7056 = vmatpush1.msra.mxu0 0.0
    %7057 = vmatprep.subr.mxu0 0.0
    %7058 = vmatpush1.msra.mxu0 0.0
    %7059 = vmatprep.subr.mxu0 0.0
    %7060 = vmatpush1.msra.mxu0 0.0
    %7061 = vmatprep.subr.mxu0 0.0
    %7062 = vmatpush1.msra.mxu0 0.0
    %7063 = vmatprep.subr.mxu0 0.0
    %7064 = vmatpush1.msra.mxu0 0.0
    %7065 = vmatprep.subr.mxu0 0.0
    %7066 = vmatpush1.msra.mxu0 0.0
    %7067 = vmatprep.subr.mxu0 0.0
    %7068 = vmatpush1.msra.mxu0 0.0
    %7069 = vmatprep.subr.mxu0 0.0
    %7070 = vmatpush1.msra.mxu0 0.0
    %7071 = vmatprep.subr.mxu0 0.0
    %7072 = vmatpush1.msra.mxu0 0.0
    %7073 = vmatprep.subr.mxu0 0.0
    %7074 = vmatpush1.msra.mxu0 0.0
    %7075 = vmatprep.subr.mxu0 0.0
    %7076 = vmatpush1.msra.mxu0 0.0
    %7077 = vmatprep.subr.mxu0 0.0
    %7078 = vmatpush1.msra.mxu0 0.0
    %7079 = vmatprep.subr.mxu0 0.0
    %7080 = vmatpush1.msra.mxu0 0.0
    %7081 = vmatprep.subr.mxu0 0.0
    %7082 = vmatpush1.msra.mxu0 0.0
    %7083 = vmatprep.subr.mxu0 0.0
    %7084 = vmatpush1.msra.mxu0 0.0
    %7085 = vmatprep.subr.mxu0 0.0
    %7086 = vmatpush1.msra.mxu0 0.0
    %7087 = vmatprep.subr.mxu0 0.0
    %7088 = vmatpush1.msra.mxu0 0.0
    %7089 = vmatprep.subr.mxu0 0.0
    %7090 = vmatpush1.msra.mxu0 0.0
    %7091 = vmatprep.subr.mxu0 0.0
    %7092 = vmatpush1.msra.mxu0 0.0
    %7093 = vmatprep.mubr.f32.mxu0 0.0
    %7094 = vmatmul.mubr.f32.gmra.mrb[0].mxu0 %v6799
    %v7095 = vpop.f32.mrb[0].mxu0
    %v7096 = vadd.f32 %v7026, %v7095
    %v7097 = vpop.f32.mrb[0].mxu0
    %7098 = vdwg.mxu0
    %v7099 = vadd.f32 %v7096, %v2239
    %v7100 = vtanh.pop %v7099
    %v7102 = vsel %vm138, %v7100, 0
    %7104 = vmatprep.subr.mxu0 0.0
    %7105 = vmatpush1.msra.mxu0 %v2240
    %7106 = vmatprep.subr.mxu0 0.0
    %7107 = vmatpush1.msra.mxu0 %v2241
    %7108 = vmatprep.subr.mxu0 0.0
    %7109 = vmatpush1.msra.mxu0 %v2242
    %7110 = vmatprep.subr.mxu0 0.0
    %7111 = vmatpush1.msra.mxu0 %v2243
    %7112 = vmatprep.subr.mxu0 0.0
    %7113 = vmatpush1.msra.mxu0 0.0
    %7114 = vmatprep.subr.mxu0 0.0
    %7115 = vmatpush1.msra.mxu0 0.0
    %7116 = vmatprep.subr.mxu0 0.0
    %7117 = vmatpush1.msra.mxu0 0.0
    %7118 = vmatprep.subr.mxu0 0.0
    %7119 = vmatpush1.msra.mxu0 0.0
    %7120 = vmatprep.subr.mxu0 0.0
    %7121 = vmatpush1.msra.mxu0 0.0
    %7122 = vmatprep.subr.mxu0 0.0
    %7123 = vmatpush1.msra.mxu0 0.0
    %7124 = vmatprep.subr.mxu0 0.0
    %7125 = vmatpush1.msra.mxu0 0.0
    %7126 = vmatprep.subr.mxu0 0.0
    %7127 = vmatpush1.msra.mxu0 0.0
    %7128 = vmatprep.subr.mxu0 0.0
    %7129 = vmatpush1.msra.mxu0 0.0
    %7130 = vmatprep.subr.mxu0 0.0
    %7131 = vmatpush1.msra.mxu0 0.0
    %7132 = vmatprep.subr.mxu0 0.0
    %7133 = vmatpush1.msra.mxu0 0.0
    %7134 = vmatprep.subr.mxu0 0.0
    %7135 = vmatpush1.msra.mxu0 0.0
    %7136 = vmatprep.subr.mxu0 0.0
    %7137 = vmatpush1.msra.mxu0 0.0
    %7138 = vmatprep.subr.mxu0 0.0
    %7139 = vmatpush1.msra.mxu0 0.0
    %7140 = vmatprep.subr.mxu0 0.0
    %7141 = vmatpush1.msra.mxu0 0.0
    %7142 = vmatprep.subr.mxu0 0.0
    %7143 = vmatpush1.msra.mxu0 0.0
    %7144 = vmatprep.subr.mxu0 0.0
    %7145 = vmatpush1.msra.mxu0 0.0
    %7146 = vmatprep.subr.mxu0 0.0
    %7147 = vmatpush1.msra.mxu0 0.0
    %7148 = vmatprep.subr.mxu0 0.0
    %7149 = vmatpush1.msra.mxu0 0.0
    %7150 = vmatprep.subr.mxu0 0.0
    %7151 = vmatpush1.msra.mxu0 0.0
    %7152 = vmatprep.subr.mxu0 0.0
    %7153 = vmatpush1.msra.mxu0 0.0
    %7154 = vmatprep.subr.mxu0 0.0
    %7155 = vmatpush1.msra.mxu0 0.0
    %7156 = vmatprep.subr.mxu0 0.0
    %7157 = vmatpush1.msra.mxu0 0.0
    %7158 = vmatprep.subr.mxu0 0.0
    %7159 = vmatpush1.msra.mxu0 0.0
    %7160 = vmatprep.subr.mxu0 0.0
    %7161 = vmatpush1.msra.mxu0 0.0
    %7162 = vmatprep.subr.mxu0 0.0
    %7163 = vmatpush1.msra.mxu0 0.0
    %7164 = vmatprep.subr.mxu0 0.0
    %7165 = vmatpush1.msra.mxu0 0.0
    %7166 = vmatprep.subr.mxu0 0.0
    %7167 = vmatpush1.msra.mxu0 0.0
    %7168 = vmatprep.mubr.f32.mxu0 0.0
    %7169 = vmatmul.mubr.f32.gmra.mrb[0].mxu0 %v7102
    %v7170 = vpop.f32.mrb[0].mxu0
    %v7171 = vadd.f32 %v2244, %v7170
    %v7172 = vpop.f32.mrb[0].mxu0
    %7173 = vdwg.mxu0
    %v7174 = vsel %vm2819, %v7171, -inf
    %7175 = vmax.xlane.f32.xlu0 %v7174
    %v7176 = vpop.xlane.xlu0 %7175
    %v7177 = vrot.slane %v7176, 4
    %v7178 = vmax.f32 %v7176, %v7177
    %v7179 = vrot.slane %v7178, 2
    %v7180 = vmax.f32 %v7178, %v7179
    %v7181 = vrot.slane %v7180, 1
    %v7182 = vmax.f32 %v7180, %v7181
    %s7183 = vtos %v7182
    %v7184 = vstv %s7183
    %v7185 = vsub.f32 %v7171, %v7184
    %v7186 = vmul.f32 %v7185, 1.442695
    %v7187 = vpow.pop %v7186
    %v7188 = vsel %vm2819, %v7187, 0.0
    %7189 = vadd.xlane.f32.xlu0 %v7188
    %v7190 = vpop.xlane.xlu0 %7189
    %v7191 = vrot.slane %v7190, 4
    %v7192 = vadd.f32 %v7190, %v7191
    %v7193 = vrot.slane %v7192, 2
    %v7194 = vadd.f32 %v7192, %v7193
    %v7195 = vrot.slane %v7194, 1
    %v7196 = vadd.f32 %v7194, %v7195
    %s7197 = vtos %v7196
    %v7198 = vstv %s7197
    %v7199 = vrcp.pop %v7198
    %s7200 = vtos %v7199
    %vm7201 = vcmp.eq.f32.partialorder %v7171, %v7184
    %v7202 = vsel %vm7201, %v2246, 128
    %v7203 = vsel %vm2819, %v7202, 2147483647
    %v7204 = vand.u32 %v7203, 65535
    %v7205 = vshra.s32 %v7203, 16
    %v7206 = vcvt.s32.f32 %v7204
    %v7207 = vcvt.s32.f32 %v7205
    %7208 = vmin.xlane.f32.xlu0 %v7207
    %v7209 = vpop.xlane.xlu0 %7208
    %vm7210 = vcmp.eq.f32.partialorder %v7207, %v7209
    %v7211 = vsel %vm7210, %v7206, inf
    %7212 = vmin.xlane.f32.xlu0 %v7211
    %v7213 = vpop.xlane.xlu0 %7212
    %v7214 = vcvt.f32.s32 %v7213
    %v7215 = vcvt.f32.s32 %v7209
    %v7216 = vshll.u32 %v7215, 16
    %v7217 = vadd.s32 %v7216, %v7214
    %v7218 = vrot.slane %v7217, 4
    %vm7219 = vcmp.lt.s32.totalorder %v7217, %v7218
    %v7220 = vsel %vm7219, %v7217, %v7218
    %v7221 = vrot.slane %v7220, 2
    %vm7222 = vcmp.lt.s32.totalorder %v7220, %v7221
    %v7223 = vsel %vm7222, %v7220, %v7221
    %v7224 = vrot.slane %v7223, 1
    %vm7225 = vcmp.lt.s32.totalorder %v7223, %v7224
    %v7226 = vsel %vm7225, %v7223, %v7224
    %s7227 = vtos %v7226
    %s7228 = scalar_lea.smem [#allocation15], 7
    %7229 = sst [smem:[%s7228]] %s7227
    %s7230 = scalar_lea.smem [#allocation16], 7
    %7231 = sst [smem:[%s7230]] %s7200
    %7232 = sst [smem:[%s2249]] %s7227
    // Predicated region
    $region150: #{_run_greedy_search.1} parent=1 // pred_check
      _
    $region151: #{_run_greedy_search.1} parent=1 // pred_check_branch
      %7234 = sbr.rel (0) target = $region153
    $region152: #{_run_greedy_search.1} parent=1 // pred_region
      %s7236 = ssub.s32 16, 16
      %7237 = vsyncadd [#allocation12], %s7236
      %7240 = dma.smem_to_hbm [#allocation15], 16, %s19, [#allocation12]
    $region153: #{_run_greedy_search.1} parent=1 // pred_fallthru
      _
    // Predicated region
    $region154: #{_run_greedy_search.1} parent=1 // pred_check
      _
    $region155: #{_run_greedy_search.1} parent=1 // pred_check_branch
      %7242 = sbr.rel (0) target = $region157
    $region156: #{_run_greedy_search.1} parent=1 // pred_region
      %s7244 = ssub.s32 16, 16
      %7245 = vsyncadd [#allocation17], %s7244
      %7248 = dma.smem_to_hbm [#allocation16], 16, %s20, [#allocation17]
    $region157: #{_run_greedy_search.1} parent=1 // pred_fallthru
      _
    // Predicated region
    $region158: #{_run_greedy_search.1} parent=1 // pred_check
      _
    $region159: #{_run_greedy_search.1} parent=1 // pred_check_branch
      %7250 = sbr.rel (0) target = $region161
    $region160: #{_run_greedy_search.1} parent=1 // pred_region
      %7251 = dma.done [#allocation12], 16
    $region161: #{_run_greedy_search.1} parent=1 // pred_fallthru
      _
    // Predicated region
    $region162: #{_run_greedy_search.1} parent=1 // pred_check
      _
    $region163: #{_run_greedy_search.1} parent=1 // pred_check_branch
      %7253 = sbr.rel (0) target = $region165
    $region164: #{_run_greedy_search.1} parent=1 // pred_region
      %7254 = dma.done [#allocation17], 16
    $region165: #{_run_greedy_search.1} parent=1 // pred_fallthru
      _
    %7255 = sfence
    %7256 = vsyncpa [#allocation11], 1
    %7257 = vsyncpa [#allocation12], 1
    %7258 = vsyncpa [#allocation17], 1
    %7259 = vsyncpa [#allocation13], 1

</llo_original>
